<compile_context>
chip_gen: v7x
topology: tpu7x:2x2x1
jax: 0.10.0
libtpu: 0.0.40
codegen_flags: <defaults>
</compile_context>

<pallas_src>
import functools
import math

import numpy as np

import jax
import jax.numpy as jnp
from jax.experimental import pallas as pl
from jax.experimental.pallas import tpu as pltpu

P = 128  # lane padding per (stream, hidden) slot -> vreg-aligned gate slices


def hepps_gru_kernel(x_ref, w0x_ref, b0_ref, bhhn0_ref,
                     wf_ref, b1_ref, bhhn1_ref,
                     wl_ref, bl_ref, bhhnl_ref,
                     fcw_ref, fcb_ref, out_ref, gi0_ref, *, L):
    T = x_ref.shape[1]
    B = x_ref.shape[2]
    G = bhhn0_ref.shape[1]          # one gate block spans both streams: 2*P lanes

    # ---------------- hoisted, loop-invariant loads / broadcasts ----------------
    w0x = w0x_ref[...]              # (2, 3G)  layer-0 input weights (lane-packed)
    b0 = b0_ref[...]                # (1, 3G)  layer-0 folded biases
    bhhn0_b = jnp.broadcast_to(bhhn0_ref[...], (B, G))
    Wf = wf_ref[...]                # (2G, 7G) fused [layer-0 hh | layer-1 ih+hh]
    b1_b = jnp.broadcast_to(b1_ref[...], (B, 4 * G))
    bhhn1_b = jnp.broadcast_to(bhhn1_ref[...], (B, G))

    if L > 2:                       # deeper layers keep their own fused weights
        Wls = [wl_ref[l] for l in range(L - 2)]
        bl_all = bl_ref[...]
        bhhnl_all = bhhnl_ref[...]
        bl_b = [jnp.broadcast_to(bl_all[i:i + 1, :], (B, 4 * G))
                for i in range(L - 2)]
        bhhnl_b = [jnp.broadcast_to(bhhnl_all[i:i + 1, :], (B, G))
                   for i in range(L - 2)]
    else:
        Wls, bl_b, bhhnl_b = [], [], []

    # ------- layer-0 input gates for the whole sequence (one vectorized op) -----
    # gi0[t] layout: [r (w|f) | z (w|f) | n (w|f)], each slot 128-lane padded.
    xw = x_ref[0]                   # (T, B, 1)  w stream
    xf = x_ref[1]                   # (T, B, 1)  f stream
    gi0_ref[...] = xw * w0x[0:1][None] + xf * w0x[1:2][None] + b0[None]

    def cell_split(gi, gh, bhhn, h):
        # layer 0: ih part precomputed, hh part from the fused matmul
        r = jax.nn.sigmoid(gi[:, 0:G] + gh[:, 0:G])
        z = jax.nn.sigmoid(gi[:, G:2 * G] + gh[:, G:2 * G])
        n = jnp.tanh(gi[:, 2 * G:3 * G] + r * (gh[:, 2 * G:3 * G] + bhhn))
        return (1.0 - z) * n + z * h

    def cell_fused(g4, bhhn, h):
        # layers >= 1: cols = [r(ih+hh) | z(ih+hh) | gi_n | gh_n], biases folded
        r = jax.nn.sigmoid(g4[:, 0:G])
        z = jax.nn.sigmoid(g4[:, G:2 * G])
        n = jnp.tanh(g4[:, 2 * G:3 * G] + r * (g4[:, 3 * G:4 * G] + bhhn))
        return (1.0 - z) * n + z * h

    # ---------------------------- serial recurrence -----------------------------
    h = [jnp.zeros((B, G), jnp.float32) for _ in range(L)]
    gh0_t = jnp.zeros((B, 3 * G), jnp.float32)     # h0(-1) == 0  =>  gh0(0) == 0

    for t in range(T):
        # layer-0 cell; its hh gates came from the previous step's fused matmul
        h[0] = cell_split(gi0_ref[t], gh0_t, bhhn0_b, h[0])

        # ONE fused matmul: layer-0 hh gates for step t+1 + layer-1 gates for t
        zin = jnp.concatenate([h[0], h[1]], axis=1)                  # (B, 2G)
        g = jnp.dot(zin, Wf, preferred_element_type=jnp.float32)     # (B, 7G)
        gh0_t = g[:, 0:3 * G]
        h[1] = cell_fused(g[:, 3 * G:7 * G] + b1_b, bhhn1_b, h[1])

        layer_in = h[1]
        for l in range(2, L):
            zl = jnp.concatenate([layer_in, h[l]], axis=1)           # (B, 2G)
            gl = (jnp.dot(zl, Wls[l - 2], preferred_element_type=jnp.float32)
                  + bl_b[l - 2])                                     # (B, 4G)
            h[l] = cell_fused(gl, bhhnl_b[l - 2], h[l])
            layer_in = h[l]

    # ------------- fused fc: concat([last_w, last_f]) @ W + b -------------------
    logits = (jnp.dot(h[L - 1], fcw_ref[...], preferred_element_type=jnp.float32)
              + fcb_ref[...])                                        # (B, O)

    # LogSoftmax(dim=1), numerically stable
    m = jnp.max(logits, axis=1, keepdims=True)
    lse = m + jnp.log(jnp.sum(jnp.exp(logits - m), axis=1, keepdims=True))
    out_ref[...] = logits - lse


def pack_params(p, pad=P):
    """Host-side packing: fused / lane-padded / bias-folded weights for the kernel."""
    wih0 = np.asarray(p["wih0"], np.float32)     # (2, 3, 1, H)
    wih = np.asarray(p["wih"], np.float32)       # (2, L, 3, H, H)  layer-0 slot unused
    whh = np.asarray(p["whh"], np.float32)       # (2, L, 3, H, H)
    bih = np.asarray(p["bih"], np.float32)       # (2, L, 3, 1, H)
    bhh = np.asarray(p["bhh"], np.float32)       # (2, L, 3, 1, H)
    fcw_raw = np.asarray(p["fcw"], np.float32)   # (2, H, O)
    fcb = np.asarray(p["fcb"], np.float32)       # (1, O)
    _, L, _, H, _ = whh.shape
    O = fcw_raw.shape[-1]
    assert L >= 2, "kernel pipelines layer-0 hh with layer-1; needs layer_dim >= 2"
    assert H <= pad
    G = 2 * pad                      # one gate block: [w half (pad) | f half (pad)]

    # ---- layer 0: input weights / folded biases / hh weights ----
    w0x = np.zeros((2, 3 * G), np.float32)
    b0 = np.zeros((1, 3 * G), np.float32)
    W0h = np.zeros((G, 3 * G), np.float32)
    bhhn0 = np.zeros((1, G), np.float32)
    for s in range(2):
        for g in range(3):
            col = g * G + s * pad
            w0x[s, col:col + H] = wih0[s, g, 0]
            W0h[s * pad:s * pad + H, col:col + H] = whh[s, 0, g]
            if g < 2:
                b0[0, col:col + H] = bih[s, 0, g, 0] + bhh[s, 0, g, 0]
            else:
                b0[0, col:col + H] = bih[s, 0, g, 0]
        bhhn0[0, s * pad:s * pad + H] = bhh[s, 0, 2, 0]

    # ---- fused weight: rows = [h0 (w|f) | h1 (w|f)],
    #      cols = [layer-0 hh gates (3G) | layer-1 r | z | gi_n | gh_n (4G)] ----
    Wf = np.zeros((2 * G, 7 * G), np.float32)
    Wf[0:G, 0:3 * G] = W0h
    b1 = np.zeros((1, 4 * G), np.float32)
    bhhn1 = np.zeros((1, G), np.float32)
    for s in range(2):
        rin = s * pad                 # h0 rows (layer-1 input / layer-0 hidden)
        rh = G + s * pad              # h1 rows
        for g in range(2):            # r, z: ih and hh fused into one output slot
            col = 3 * G + g * G + s * pad
            Wf[rin:rin + H, col:col + H] = wih[s, 1, g]
            Wf[rh:rh + H, col:col + H] = whh[s, 1, g]
            b1[0, g * G + s * pad:g * G + s * pad + H] = (bih[s, 1, g, 0]
                                                          + bhh[s, 1, g, 0])
        cin = 3 * G + 2 * G + s * pad      # gi_n slot
        chh = 3 * G + 3 * G + s * pad      # gh_n slot
        Wf[rin:rin + H, cin:cin + H] = wih[s, 1, 2]
        Wf[rh:rh + H, chh:chh + H] = whh[s, 1, 2]
        b1[0, 2 * G + s * pad:2 * G + s * pad + H] = bih[s, 1, 2, 0]
        bhhn1[0, s * pad:s * pad + H] = bhh[s, 1, 2, 0]

    # ---- layers >= 2: rows = [layer_in (w|f) | hidden (w|f)],
    #      cols = [r fused | z fused | gi_n | gh_n].  Tiny dummies when L == 2. ----
    if L > 2:
        nD = L - 2
        Wl = np.zeros((nD, 2 * G, 4 * G), np.float32)
        bl = np.zeros((nD, 4 * G), np.float32)
        bhhnl = np.zeros((nD, G), np.float32)
        for l in range(2, L):
            li = l - 2
            for s in range(2):
                rin = s * pad
                rh = G + s * pad
                for g in range(2):
                    col = g * G + s * pad
                    Wl[li, rin:rin + H, col:col + H] = wih[s, l, g]
                    Wl[li, rh:rh + H, col:col + H] = whh[s, l, g]
                    bl[li, col:col + H] = bih[s, l, g, 0] + bhh[s, l, g, 0]
                cin = 2 * G + s * pad
                chh = 3 * G + s * pad
                Wl[li, rin:rin + H, cin:cin + H] = wih[s, l, 2]
                Wl[li, rh:rh + H, chh:chh + H] = whh[s, l, 2]
                bl[li, cin:cin + H] = bih[s, l, 2, 0]
                bhhnl[li, s * pad:s * pad + H] = bhh[s, l, 2, 0]
    else:
        Wl = np.zeros((1, 8, 128), np.float32)
        bl = np.zeros((1, 128), np.float32)
        bhhnl = np.zeros((1, 128), np.float32)

    # ---- fused fc: [last_w_pad | last_f_pad] @ fcw ----
    fcw = np.zeros((G, O), np.float32)
    fcw[0:H, :] = fcw_raw[0]
    fcw[pad:pad + H, :] = fcw_raw[1]

    return dict(
        w0x=jnp.asarray(w0x), b0=jnp.asarray(b0), bhhn0=jnp.asarray(bhhn0),
        Wf=jnp.asarray(Wf), b1=jnp.asarray(b1), bhhn1=jnp.asarray(bhhn1),
        Wl=jnp.asarray(Wl), bl=jnp.asarray(bl), bhhnl=jnp.asarray(bhhnl),
        fcw=jnp.asarray(fcw), fcb=jnp.asarray(fcb), L=int(L))


def hepps_gru_forward(x, packed):
    B, T, F = x.shape
    assert F >= 2, "forward slices x[..., 0] and x[..., 1]"
    L = packed["L"]
    O = packed["fcb"].shape[-1]
    G = packed["bhhn0"].shape[-1]
    # stream-major input, read once in the kernel: (2, T, B, 1)
    x_s = jnp.transpose(x[..., :2], (2, 1, 0))[..., None].astype(jnp.float32)
    kernel = functools.partial(hepps_gru_kernel, L=L)
    n_in = 12
    return pl.pallas_call(
        kernel,
        out_shape=jax.ShapeDtypeStruct((B, O), jnp.float32),
        in_specs=[pl.BlockSpec(memory_space=pltpu.MemorySpace.VMEM)] * n_in,
        out_specs=pl.BlockSpec(memory_space=pltpu.MemorySpace.VMEM),
        scratch_shapes=[pltpu.VMEM((T, B, 3 * G), jnp.float32)],
    )(x_s, packed["w0x"], packed["b0"], packed["bhhn0"],
      packed["Wf"], packed["b1"], packed["bhhn1"],
      packed["Wl"], packed["bl"], packed["bhhnl"],
      packed["fcw"], packed["fcb"])


def init_params(key, hidden_dim, layer_dim, output_dim):
    """Deterministic synthetic params (PyTorch-style uniform(-1/sqrt(fan), ...))."""
    H, L, O = hidden_dim, layer_dim, output_dim
    k_gru = 1.0 / math.sqrt(H)
    k_fc = 1.0 / math.sqrt(2 * H)
    keys = jax.random.split(key, 7)
    u = lambda k, shape, s: jax.random.uniform(k, shape, jnp.float32, -s, s)
    return dict(
        wih0=u(keys[0], (2, 3, 1, H), k_gru),
        wih=u(keys[1], (2, L, 3, H, H), k_gru),     # layer-0 slot unused
        whh=u(keys[2], (2, L, 3, H, H), k_gru),
        bih=u(keys[3], (2, L, 3, 1, H), k_gru),
        bhh=u(keys[4], (2, L, 3, 1, H), k_gru),
        fcw=u(keys[5], (2, H, O), k_fc),
        fcb=u(keys[6], (1, O), k_fc),
    )


def hepps_gru_reference(x, params):
    """Pure-JAX reference mirroring torch.nn.GRU + Linear + LogSoftmax semantics."""
    B, T, _ = x.shape
    L, H = params["whh"].shape[1], params["whh"].shape[-1]
    lasts = []
    for s in range(2):
        seq = x[..., s].astype(jnp.float32)                      # (B, T)
        h = [jnp.zeros((B, H), jnp.float32) for _ in range(L)]
        for t in range(T):
            x_t = seq[:, t][:, None]                             # (B, 1)
            layer_in = x_t
            for l in range(L):
                if l == 0:
                    gi = [x_t * params["wih0"][s, g] + params["bih"][s, l, g]
                          for g in range(3)]
                else:
                    gi = [layer_in @ params["wih"][s, l, g] + params["bih"][s, l, g]
                          for g in range(3)]
                gh = [h[l] @ params["whh"][s, l, g] for g in range(3)]
                r = jax.nn.sigmoid(gi[0] + gh[0] + params["bhh"][s, l, 0])
                z = jax.nn.sigmoid(gi[1] + gh[1] + params["bhh"][s, l, 1])
                n = jnp.tanh(gi[2] + r * (gh[2] + params["bhh"][s, l, 2]))
                h[l] = (1.0 - z) * n + z * h[l]
                layer_in = h[l]
        lasts.append(h[-1])
    logits = lasts[0] @ params["fcw"][0] + lasts[1] @ params["fcw"][1] + params["fcb"]
    return jax.nn.log_softmax(logits, axis=1)


if __name__ == "__main__":
    # Module config implied by forward(): GRU input_dim must be 1 (x[..., i] slices).
    B, T, F = 2, 8, 2
    HIDDEN_DIM, LAYER_DIM, OUTPUT_DIM = 32, 2, 4

    key = jax.random.PRNGKey(0)
    kx, kp = jax.random.split(key)
    x = jax.random.normal(kx, (B, T, F), jnp.float32)
    params = init_params(kp, HIDDEN_DIM, LAYER_DIM, OUTPUT_DIM)
    packed = pack_params(params)

    out = jax.block_until_ready(hepps_gru_forward(x, packed))
    ref = hepps_gru_reference(x, params)

    assert out.shape == (B, OUTPUT_DIM)
    assert bool(jnp.allclose(out, ref, atol=1e-4, rtol=1e-4)), (out, ref)
    print("KERNEL_OK")
</pallas_src>

<mosaic_0001>
module attributes {stable_mosaic.version = 11 : i64} {
  func.func @hepps_gru_kernel(%arg0: memref<2x8x2x1xf32, #tpu.memory_space<vmem>>, %arg1: memref<2x768xf32, #tpu.memory_space<vmem>>, %arg2: memref<1x768xf32, #tpu.memory_space<vmem>>, %arg3: memref<1x256xf32, #tpu.memory_space<vmem>>, %arg4: memref<512x1792xf32, #tpu.memory_space<vmem>>, %arg5: memref<1x1024xf32, #tpu.memory_space<vmem>>, %arg6: memref<1x256xf32, #tpu.memory_space<vmem>>, %arg7: memref<1x8x128xf32, #tpu.memory_space<vmem>>, %arg8: memref<1x128xf32, #tpu.memory_space<vmem>>, %arg9: memref<1x128xf32, #tpu.memory_space<vmem>>, %arg10: memref<256x4xf32, #tpu.memory_space<vmem>>, %arg11: memref<1x4xf32, #tpu.memory_space<vmem>>, %arg12: memref<2x4xf32, #tpu.memory_space<vmem>>, %arg13: memref<8x2x768xf32, #tpu.memory_space<vmem>>) attributes {dimension_semantics = [], scalar_prefetch = 0 : i64, scratch_operands = 1 : i64, tpu.core_type = #tpu.core_type<tc>} {
    %c0 = arith.constant 0 : index
    %c0_0 = arith.constant 0 : index
    %0 = vector.load %arg1[%c0, %c0_0] : memref<2x768xf32, #tpu.memory_space<vmem>>, vector<2x768xf32>
    %c0_1 = arith.constant 0 : index
    %c0_2 = arith.constant 0 : index
    %1 = vector.load %arg2[%c0_1, %c0_2] : memref<1x768xf32, #tpu.memory_space<vmem>>, vector<1x768xf32>
    %c0_3 = arith.constant 0 : index
    %c0_4 = arith.constant 0 : index
    %2 = vector.load %arg3[%c0_3, %c0_4] : memref<1x256xf32, #tpu.memory_space<vmem>>, vector<1x256xf32>
    %3 = vector.shape_cast %2 : vector<1x256xf32> to vector<1x256xf32>
    %4 = vector.broadcast %3 : vector<1x256xf32> to vector<2x256xf32>
    %c0_5 = arith.constant 0 : index
    %c0_6 = arith.constant 0 : index
    %5 = vector.load %arg4[%c0_5, %c0_6] : memref<512x1792xf32, #tpu.memory_space<vmem>>, vector<512x1792xf32>
    %c0_7 = arith.constant 0 : index
    %c0_8 = arith.constant 0 : index
    %6 = vector.load %arg5[%c0_7, %c0_8] : memref<1x1024xf32, #tpu.memory_space<vmem>>, vector<1x1024xf32>
    %7 = vector.shape_cast %6 : vector<1x1024xf32> to vector<1x1024xf32>
    %8 = vector.broadcast %7 : vector<1x1024xf32> to vector<2x1024xf32>
    %c0_9 = arith.constant 0 : index
    %c0_10 = arith.constant 0 : index
    %9 = vector.load %arg6[%c0_9, %c0_10] : memref<1x256xf32, #tpu.memory_space<vmem>>, vector<1x256xf32>
    %10 = vector.shape_cast %9 : vector<1x256xf32> to vector<1x256xf32>
    %11 = vector.broadcast %10 : vector<1x256xf32> to vector<2x256xf32>
    %c0_11 = arith.constant 0 : index
    %c0_12 = arith.constant 0 : index
    %c0_13 = arith.constant 0 : index
    %c0_14 = arith.constant 0 : index
    %12 = vector.load %arg0[%c0_11, %c0_12, %c0_13, %c0_14] : memref<2x8x2x1xf32, #tpu.memory_space<vmem>>, vector<1x8x2x1xf32>
    %13 = vector.shape_cast %12 : vector<1x8x2x1xf32> to vector<8x2x1xf32>
    %c1 = arith.constant 1 : index
    %c0_15 = arith.constant 0 : index
    %c0_16 = arith.constant 0 : index
    %c0_17 = arith.constant 0 : index
    %14 = vector.load %arg0[%c1, %c0_15, %c0_16, %c0_17] : memref<2x8x2x1xf32, #tpu.memory_space<vmem>>, vector<1x8x2x1xf32>
    %15 = vector.shape_cast %14 : vector<1x8x2x1xf32> to vector<8x2x1xf32>
    %16 = vector.extract_strided_slice %0 {offsets = [0, 0], sizes = [1, 768], strides = [1, 1]} : vector<2x768xf32> to vector<1x768xf32>
    %17 = vector.shape_cast %16 : vector<1x768xf32> to vector<1x1x768xf32>
    %18 = vector.broadcast %13 : vector<8x2x1xf32> to vector<8x2x768xf32>
    %19 = vector.broadcast %17 : vector<1x1x768xf32> to vector<8x2x768xf32>
    %20 = arith.mulf %18, %19 : vector<8x2x768xf32>
    %21 = vector.extract_strided_slice %0 {offsets = [1, 0], sizes = [1, 768], strides = [1, 1]} : vector<2x768xf32> to vector<1x768xf32>
    %22 = vector.shape_cast %21 : vector<1x768xf32> to vector<1x1x768xf32>
    %23 = vector.broadcast %15 : vector<8x2x1xf32> to vector<8x2x768xf32>
    %24 = vector.broadcast %22 : vector<1x1x768xf32> to vector<8x2x768xf32>
    %25 = arith.mulf %23, %24 : vector<8x2x768xf32>
    %26 = arith.addf %20, %25 : vector<8x2x768xf32>
    %27 = vector.shape_cast %1 : vector<1x768xf32> to vector<1x1x768xf32>
    %28 = vector.broadcast %27 : vector<1x1x768xf32> to vector<8x2x768xf32>
    %29 = arith.addf %26, %28 : vector<8x2x768xf32>
    %c0_18 = arith.constant 0 : index
    %c0_19 = arith.constant 0 : index
    %c0_20 = arith.constant 0 : index
    %30 = vector.load %arg13[%c0_18, %c0_19, %c0_20] : memref<8x2x768xf32, #tpu.memory_space<vmem>>, vector<8x2x768xf32>
    tpu.vector_store %arg13[%c0_18, %c0_19, %c0_20], %29 {strides = array<i32>} : memref<8x2x768xf32, #tpu.memory_space<vmem>>, vector<8x2x768xf32>,
    %cst = arith.constant 0.000000e+00 : f32
    %31 = vector.broadcast %cst : f32 to vector<2x256xf32>
    %cst_21 = arith.constant 0.000000e+00 : f32
    %32 = vector.broadcast %cst_21 : f32 to vector<2x256xf32>
    %cst_22 = arith.constant 0.000000e+00 : f32
    %33 = vector.broadcast %cst_22 : f32 to vector<2x768xf32>
    %c0_23 = arith.constant 0 : index
    %c0_24 = arith.constant 0 : index
    %c0_25 = arith.constant 0 : index
    %34 = vector.load %arg13[%c0_23, %c0_24, %c0_25] : memref<8x2x768xf32, #tpu.memory_space<vmem>>, vector<1x2x768xf32>
    %35 = vector.shape_cast %34 : vector<1x2x768xf32> to vector<2x768xf32>
    %36 = vector.extract_strided_slice %35 {offsets = [0, 0], sizes = [2, 256], strides = [1, 1]} : vector<2x768xf32> to vector<2x256xf32>
    %37 = vector.extract_strided_slice %33 {offsets = [0, 0], sizes = [2, 256], strides = [1, 1]} : vector<2x768xf32> to vector<2x256xf32>
    %38 = arith.addf %36, %37 : vector<2x256xf32>
    %39 = arith.negf %38 : vector<2x256xf32>
    %40 = math.exp %39 : vector<2x256xf32>
    %cst_26 = arith.constant 1.000000e+00 : f32
    %41 = vector.broadcast %cst_26 : f32 to vector<2x256xf32>
    %42 = arith.addf %41, %40 : vector<2x256xf32>
    %43 = arith.divf %41, %42 : vector<2x256xf32>
    %44 = vector.extract_strided_slice %35 {offsets = [0, 256], sizes = [2, 256], strides = [1, 1]} : vector<2x768xf32> to vector<2x256xf32>
    %45 = vector.extract_strided_slice %33 {offsets = [0, 256], sizes = [2, 256], strides = [1, 1]} : vector<2x768xf32> to vector<2x256xf32>
    %46 = arith.addf %44, %45 : vector<2x256xf32>
    %47 = arith.negf %46 : vector<2x256xf32>
    %48 = math.exp %47 : vector<2x256xf32>
    %cst_27 = arith.constant 1.000000e+00 : f32
    %49 = vector.broadcast %cst_27 : f32 to vector<2x256xf32>
    %50 = arith.addf %49, %48 : vector<2x256xf32>
    %51 = arith.divf %49, %50 : vector<2x256xf32>
    %52 = vector.extract_strided_slice %35 {offsets = [0, 512], sizes = [2, 256], strides = [1, 1]} : vector<2x768xf32> to vector<2x256xf32>
    %53 = vector.extract_strided_slice %33 {offsets = [0, 512], sizes = [2, 256], strides = [1, 1]} : vector<2x768xf32> to vector<2x256xf32>
    %54 = arith.addf %53, %4 : vector<2x256xf32>
    %55 = arith.mulf %43, %54 : vector<2x256xf32>
    %56 = arith.addf %52, %55 : vector<2x256xf32>
    %57 = math.tanh %56 : vector<2x256xf32>
    %cst_28 = arith.constant 1.000000e+00 : f32
    %58 = vector.broadcast %cst_28 : f32 to vector<2x256xf32>
    %59 = arith.subf %58, %51 : vector<2x256xf32>
    %60 = arith.mulf %59, %57 : vector<2x256xf32>
    %61 = arith.mulf %51, %31 : vector<2x256xf32>
    %62 = arith.addf %60, %61 : vector<2x256xf32>
    %63 = tpu.concatenate %62, %32 in 1 : vector<2x256xf32>, vector<2x256xf32> -> vector<2x512xf32>
    %cst_29 = arith.constant dense<0.000000e+00> : vector<2x1792xf32>
    %64 = tpu.matmul %63, %5, %cst_29 {dimension_numbers = #tpu.dot_dimension_numbers<[1], [0], [0], [1], [0, 0, 1, 1], [], []>} : vector<2x512xf32>, vector<512x1792xf32>, vector<2x1792xf32> -> vector<2x1792xf32>
    %65 = vector.extract_strided_slice %64 {offsets = [0, 0], sizes = [2, 768], strides = [1, 1]} : vector<2x1792xf32> to vector<2x768xf32>
    %66 = vector.extract_strided_slice %64 {offsets = [0, 768], sizes = [2, 1024], strides = [1, 1]} : vector<2x1792xf32> to vector<2x1024xf32>
    %67 = arith.addf %66, %8 : vector<2x1024xf32>
    %68 = vector.extract_strided_slice %67 {offsets = [0, 0], sizes = [2, 256], strides = [1, 1]} : vector<2x1024xf32> to vector<2x256xf32>
    %69 = arith.negf %68 : vector<2x256xf32>
    %70 = math.exp %69 : vector<2x256xf32>
    %cst_30 = arith.constant 1.000000e+00 : f32
    %71 = vector.broadcast %cst_30 : f32 to vector<2x256xf32>
    %72 = arith.addf %71, %70 : vector<2x256xf32>
    %73 = arith.divf %71, %72 : vector<2x256xf32>
    %74 = vector.extract_strided_slice %67 {offsets = [0, 256], sizes = [2, 256], strides = [1, 1]} : vector<2x1024xf32> to vector<2x256xf32>
    %75 = arith.negf %74 : vector<2x256xf32>
    %76 = math.exp %75 : vector<2x256xf32>
    %cst_31 = arith.constant 1.000000e+00 : f32
    %77 = vector.broadcast %cst_31 : f32 to vector<2x256xf32>
    %78 = arith.addf %77, %76 : vector<2x256xf32>
    %79 = arith.divf %77, %78 : vector<2x256xf32>
    %80 = vector.extract_strided_slice %67 {offsets = [0, 512], sizes = [2, 256], strides = [1, 1]} : vector<2x1024xf32> to vector<2x256xf32>
    %81 = vector.extract_strided_slice %67 {offsets = [0, 768], sizes = [2, 256], strides = [1, 1]} : vector<2x1024xf32> to vector<2x256xf32>
    %82 = arith.addf %81, %11 : vector<2x256xf32>
    %83 = arith.mulf %73, %82 : vector<2x256xf32>
    %84 = arith.addf %80, %83 : vector<2x256xf32>
    %85 = math.tanh %84 : vector<2x256xf32>
    %cst_32 = arith.constant 1.000000e+00 : f32
    %86 = vector.broadcast %cst_32 : f32 to vector<2x256xf32>
    %87 = arith.subf %86, %79 : vector<2x256xf32>
    %88 = arith.mulf %87, %85 : vector<2x256xf32>
    %89 = arith.mulf %79, %32 : vector<2x256xf32>
    %90 = arith.addf %88, %89 : vector<2x256xf32>
    %c1_33 = arith.constant 1 : index
    %c0_34 = arith.constant 0 : index
    %c0_35 = arith.constant 0 : index
    %91 = vector.load %arg13[%c1_33, %c0_34, %c0_35] : memref<8x2x768xf32, #tpu.memory_space<vmem>>, vector<1x2x768xf32>
    %92 = vector.shape_cast %91 : vector<1x2x768xf32> to vector<2x768xf32>
    %93 = vector.extract_strided_slice %92 {offsets = [0, 0], sizes = [2, 256], strides = [1, 1]} : vector<2x768xf32> to vector<2x256xf32>
    %94 = vector.extract_strided_slice %65 {offsets = [0, 0], sizes = [2, 256], strides = [1, 1]} : vector<2x768xf32> to vector<2x256xf32>
    %95 = arith.addf %93, %94 : vector<2x256xf32>
    %96 = arith.negf %95 : vector<2x256xf32>
    %97 = math.exp %96 : vector<2x256xf32>
    %cst_36 = arith.constant 1.000000e+00 : f32
    %98 = vector.broadcast %cst_36 : f32 to vector<2x256xf32>
    %99 = arith.addf %98, %97 : vector<2x256xf32>
    %100 = arith.divf %98, %99 : vector<2x256xf32>
    %101 = vector.extract_strided_slice %92 {offsets = [0, 256], sizes = [2, 256], strides = [1, 1]} : vector<2x768xf32> to vector<2x256xf32>
    %102 = vector.extract_strided_slice %65 {offsets = [0, 256], sizes = [2, 256], strides = [1, 1]} : vector<2x768xf32> to vector<2x256xf32>
    %103 = arith.addf %101, %102 : vector<2x256xf32>
    %104 = arith.negf %103 : vector<2x256xf32>
    %105 = math.exp %104 : vector<2x256xf32>
    %cst_37 = arith.constant 1.000000e+00 : f32
    %106 = vector.broadcast %cst_37 : f32 to vector<2x256xf32>
    %107 = arith.addf %106, %105 : vector<2x256xf32>
    %108 = arith.divf %106, %107 : vector<2x256xf32>
    %109 = vector.extract_strided_slice %92 {offsets = [0, 512], sizes = [2, 256], strides = [1, 1]} : vector<2x768xf32> to vector<2x256xf32>
    %110 = vector.extract_strided_slice %65 {offsets = [0, 512], sizes = [2, 256], strides = [1, 1]} : vector<2x768xf32> to vector<2x256xf32>
    %111 = arith.addf %110, %4 : vector<2x256xf32>
    %112 = arith.mulf %100, %111 : vector<2x256xf32>
    %113 = arith.addf %109, %112 : vector<2x256xf32>
    %114 = math.tanh %113 : vector<2x256xf32>
    %cst_38 = arith.constant 1.000000e+00 : f32
    %115 = vector.broadcast %cst_38 : f32 to vector<2x256xf32>
    %116 = arith.subf %115, %108 : vector<2x256xf32>
    %117 = arith.mulf %116, %114 : vector<2x256xf32>
    %118 = arith.mulf %108, %62 : vector<2x256xf32>
    %119 = arith.addf %117, %118 : vector<2x256xf32>
    %120 = tpu.concatenate %119, %90 in 1 : vector<2x256xf32>, vector<2x256xf32> -> vector<2x512xf32>
    %cst_39 = arith.constant dense<0.000000e+00> : vector<2x1792xf32>
    %121 = tpu.matmul %120, %5, %cst_39 {dimension_numbers = #tpu.dot_dimension_numbers<[1], [0], [0], [1], [0, 0, 1, 1], [], []>} : vector<2x512xf32>, vector<512x1792xf32>, vector<2x1792xf32> -> vector<2x1792xf32>
    %122 = vector.extract_strided_slice %121 {offsets = [0, 0], sizes = [2, 768], strides = [1, 1]} : vector<2x1792xf32> to vector<2x768xf32>
    %123 = vector.extract_strided_slice %121 {offsets = [0, 768], sizes = [2, 1024], strides = [1, 1]} : vector<2x1792xf32> to vector<2x1024xf32>
    %124 = arith.addf %123, %8 : vector<2x1024xf32>
    %125 = vector.extract_strided_slice %124 {offsets = [0, 0], sizes = [2, 256], strides = [1, 1]} : vector<2x1024xf32> to vector<2x256xf32>
    %126 = arith.negf %125 : vector<2x256xf32>
    %127 = math.exp %126 : vector<2x256xf32>
    %cst_40 = arith.constant 1.000000e+00 : f32
    %128 = vector.broadcast %cst_40 : f32 to vector<2x256xf32>
    %129 = arith.addf %128, %127 : vector<2x256xf32>
    %130 = arith.divf %128, %129 : vector<2x256xf32>
    %131 = vector.extract_strided_slice %124 {offsets = [0, 256], sizes = [2, 256], strides = [1, 1]} : vector<2x1024xf32> to vector<2x256xf32>
    %132 = arith.negf %131 : vector<2x256xf32>
    %133 = math.exp %132 : vector<2x256xf32>
    %cst_41 = arith.constant 1.000000e+00 : f32
    %134 = vector.broadcast %cst_41 : f32 to vector<2x256xf32>
    %135 = arith.addf %134, %133 : vector<2x256xf32>
    %136 = arith.divf %134, %135 : vector<2x256xf32>
    %137 = vector.extract_strided_slice %124 {offsets = [0, 512], sizes = [2, 256], strides = [1, 1]} : vector<2x1024xf32> to vector<2x256xf32>
    %138 = vector.extract_strided_slice %124 {offsets = [0, 768], sizes = [2, 256], strides = [1, 1]} : vector<2x1024xf32> to vector<2x256xf32>
    %139 = arith.addf %138, %11 : vector<2x256xf32>
    %140 = arith.mulf %130, %139 : vector<2x256xf32>
    %141 = arith.addf %137, %140 : vector<2x256xf32>
    %142 = math.tanh %141 : vector<2x256xf32>
    %cst_42 = arith.constant 1.000000e+00 : f32
    %143 = vector.broadcast %cst_42 : f32 to vector<2x256xf32>
    %144 = arith.subf %143, %136 : vector<2x256xf32>
    %145 = arith.mulf %144, %142 : vector<2x256xf32>
    %146 = arith.mulf %136, %90 : vector<2x256xf32>
    %147 = arith.addf %145, %146 : vector<2x256xf32>
    %c2 = arith.constant 2 : index
    %c0_43 = arith.constant 0 : index
    %c0_44 = arith.constant 0 : index
    %148 = vector.load %arg13[%c2, %c0_43, %c0_44] : memref<8x2x768xf32, #tpu.memory_space<vmem>>, vector<1x2x768xf32>
    %149 = vector.shape_cast %148 : vector<1x2x768xf32> to vector<2x768xf32>
    %150 = vector.extract_strided_slice %149 {offsets = [0, 0], sizes = [2, 256], strides = [1, 1]} : vector<2x768xf32> to vector<2x256xf32>
    %151 = vector.extract_strided_slice %122 {offsets = [0, 0], sizes = [2, 256], strides = [1, 1]} : vector<2x768xf32> to vector<2x256xf32>
    %152 = arith.addf %150, %151 : vector<2x256xf32>
    %153 = arith.negf %152 : vector<2x256xf32>
    %154 = math.exp %153 : vector<2x256xf32>
    %cst_45 = arith.constant 1.000000e+00 : f32
    %155 = vector.broadcast %cst_45 : f32 to vector<2x256xf32>
    %156 = arith.addf %155, %154 : vector<2x256xf32>
    %157 = arith.divf %155, %156 : vector<2x256xf32>
    %158 = vector.extract_strided_slice %149 {offsets = [0, 256], sizes = [2, 256], strides = [1, 1]} : vector<2x768xf32> to vector<2x256xf32>
    %159 = vector.extract_strided_slice %122 {offsets = [0, 256], sizes = [2, 256], strides = [1, 1]} : vector<2x768xf32> to vector<2x256xf32>
    %160 = arith.addf %158, %159 : vector<2x256xf32>
    %161 = arith.negf %160 : vector<2x256xf32>
    %162 = math.exp %161 : vector<2x256xf32>
    %cst_46 = arith.constant 1.000000e+00 : f32
    %163 = vector.broadcast %cst_46 : f32 to vector<2x256xf32>
    %164 = arith.addf %163, %162 : vector<2x256xf32>
    %165 = arith.divf %163, %164 : vector<2x256xf32>
    %166 = vector.extract_strided_slice %149 {offsets = [0, 512], sizes = [2, 256], strides = [1, 1]} : vector<2x768xf32> to vector<2x256xf32>
    %167 = vector.extract_strided_slice %122 {offsets = [0, 512], sizes = [2, 256], strides = [1, 1]} : vector<2x768xf32> to vector<2x256xf32>
    %168 = arith.addf %167, %4 : vector<2x256xf32>
    %169 = arith.mulf %157, %168 : vector<2x256xf32>
    %170 = arith.addf %166, %169 : vector<2x256xf32>
    %171 = math.tanh %170 : vector<2x256xf32>
    %cst_47 = arith.constant 1.000000e+00 : f32
    %172 = vector.broadcast %cst_47 : f32 to vector<2x256xf32>
    %173 = arith.subf %172, %165 : vector<2x256xf32>
    %174 = arith.mulf %173, %171 : vector<2x256xf32>
    %175 = arith.mulf %165, %119 : vector<2x256xf32>
    %176 = arith.addf %174, %175 : vector<2x256xf32>
    %177 = tpu.concatenate %176, %147 in 1 : vector<2x256xf32>, vector<2x256xf32> -> vector<2x512xf32>
    %cst_48 = arith.constant dense<0.000000e+00> : vector<2x1792xf32>
    %178 = tpu.matmul %177, %5, %cst_48 {dimension_numbers = #tpu.dot_dimension_numbers<[1], [0], [0], [1], [0, 0, 1, 1], [], []>} : vector<2x512xf32>, vector<512x1792xf32>, vector<2x1792xf32> -> vector<2x1792xf32>
    %179 = vector.extract_strided_slice %178 {offsets = [0, 0], sizes = [2, 768], strides = [1, 1]} : vector<2x1792xf32> to vector<2x768xf32>
    %180 = vector.extract_strided_slice %178 {offsets = [0, 768], sizes = [2, 1024], strides = [1, 1]} : vector<2x1792xf32> to vector<2x1024xf32>
    %181 = arith.addf %180, %8 : vector<2x1024xf32>
    %182 = vector.extract_strided_slice %181 {offsets = [0, 0], sizes = [2, 256], strides = [1, 1]} : vector<2x1024xf32> to vector<2x256xf32>
    %183 = arith.negf %182 : vector<2x256xf32>
    %184 = math.exp %183 : vector<2x256xf32>
    %cst_49 = arith.constant 1.000000e+00 : f32
    %185 = vector.broadcast %cst_49 : f32 to vector<2x256xf32>
    %186 = arith.addf %185, %184 : vector<2x256xf32>
    %187 = arith.divf %185, %186 : vector<2x256xf32>
    %188 = vector.extract_strided_slice %181 {offsets = [0, 256], sizes = [2, 256], strides = [1, 1]} : vector<2x1024xf32> to vector<2x256xf32>
    %189 = arith.negf %188 : vector<2x256xf32>
    %190 = math.exp %189 : vector<2x256xf32>
    %cst_50 = arith.constant 1.000000e+00 : f32
    %191 = vector.broadcast %cst_50 : f32 to vector<2x256xf32>
    %192 = arith.addf %191, %190 : vector<2x256xf32>
    %193 = arith.divf %191, %192 : vector<2x256xf32>
    %194 = vector.extract_strided_slice %181 {offsets = [0, 512], sizes = [2, 256], strides = [1, 1]} : vector<2x1024xf32> to vector<2x256xf32>
    %195 = vector.extract_strided_slice %181 {offsets = [0, 768], sizes = [2, 256], strides = [1, 1]} : vector<2x1024xf32> to vector<2x256xf32>
    %196 = arith.addf %195, %11 : vector<2x256xf32>
    %197 = arith.mulf %187, %196 : vector<2x256xf32>
    %198 = arith.addf %194, %197 : vector<2x256xf32>
    %199 = math.tanh %198 : vector<2x256xf32>
    %cst_51 = arith.constant 1.000000e+00 : f32
    %200 = vector.broadcast %cst_51 : f32 to vector<2x256xf32>
    %201 = arith.subf %200, %193 : vector<2x256xf32>
    %202 = arith.mulf %201, %199 : vector<2x256xf32>
    %203 = arith.mulf %193, %147 : vector<2x256xf32>
    %204 = arith.addf %202, %203 : vector<2x256xf32>
    %c3 = arith.constant 3 : index
    %c0_52 = arith.constant 0 : index
    %c0_53 = arith.constant 0 : index
    %205 = vector.load %arg13[%c3, %c0_52, %c0_53] : memref<8x2x768xf32, #tpu.memory_space<vmem>>, vector<1x2x768xf32>
    %206 = vector.shape_cast %205 : vector<1x2x768xf32> to vector<2x768xf32>
    %207 = vector.extract_strided_slice %206 {offsets = [0, 0], sizes = [2, 256], strides = [1, 1]} : vector<2x768xf32> to vector<2x256xf32>
    %208 = vector.extract_strided_slice %179 {offsets = [0, 0], sizes = [2, 256], strides = [1, 1]} : vector<2x768xf32> to vector<2x256xf32>
    %209 = arith.addf %207, %208 : vector<2x256xf32>
    %210 = arith.negf %209 : vector<2x256xf32>
    %211 = math.exp %210 : vector<2x256xf32>
    %cst_54 = arith.constant 1.000000e+00 : f32
    %212 = vector.broadcast %cst_54 : f32 to vector<2x256xf32>
    %213 = arith.addf %212, %211 : vector<2x256xf32>
    %214 = arith.divf %212, %213 : vector<2x256xf32>
    %215 = vector.extract_strided_slice %206 {offsets = [0, 256], sizes = [2, 256], strides = [1, 1]} : vector<2x768xf32> to vector<2x256xf32>
    %216 = vector.extract_strided_slice %179 {offsets = [0, 256], sizes = [2, 256], strides = [1, 1]} : vector<2x768xf32> to vector<2x256xf32>
    %217 = arith.addf %215, %216 : vector<2x256xf32>
    %218 = arith.negf %217 : vector<2x256xf32>
    %219 = math.exp %218 : vector<2x256xf32>
    %cst_55 = arith.constant 1.000000e+00 : f32
    %220 = vector.broadcast %cst_55 : f32 to vector<2x256xf32>
    %221 = arith.addf %220, %219 : vector<2x256xf32>
    %222 = arith.divf %220, %221 : vector<2x256xf32>
    %223 = vector.extract_strided_slice %206 {offsets = [0, 512], sizes = [2, 256], strides = [1, 1]} : vector<2x768xf32> to vector<2x256xf32>
    %224 = vector.extract_strided_slice %179 {offsets = [0, 512], sizes = [2, 256], strides = [1, 1]} : vector<2x768xf32> to vector<2x256xf32>
    %225 = arith.addf %224, %4 : vector<2x256xf32>
    %226 = arith.mulf %214, %225 : vector<2x256xf32>
    %227 = arith.addf %223, %226 : vector<2x256xf32>
    %228 = math.tanh %227 : vector<2x256xf32>
    %cst_56 = arith.constant 1.000000e+00 : f32
    %229 = vector.broadcast %cst_56 : f32 to vector<2x256xf32>
    %230 = arith.subf %229, %222 : vector<2x256xf32>
    %231 = arith.mulf %230, %228 : vector<2x256xf32>
    %232 = arith.mulf %222, %176 : vector<2x256xf32>
    %233 = arith.addf %231, %232 : vector<2x256xf32>
    %234 = tpu.concatenate %233, %204 in 1 : vector<2x256xf32>, vector<2x256xf32> -> vector<2x512xf32>
    %cst_57 = arith.constant dense<0.000000e+00> : vector<2x1792xf32>
    %235 = tpu.matmul %234, %5, %cst_57 {dimension_numbers = #tpu.dot_dimension_numbers<[1], [0], [0], [1], [0, 0, 1, 1], [], []>} : vector<2x512xf32>, vector<512x1792xf32>, vector<2x1792xf32> -> vector<2x1792xf32>
    %236 = vector.extract_strided_slice %235 {offsets = [0, 0], sizes = [2, 768], strides = [1, 1]} : vector<2x1792xf32> to vector<2x768xf32>
    %237 = vector.extract_strided_slice %235 {offsets = [0, 768], sizes = [2, 1024], strides = [1, 1]} : vector<2x1792xf32> to vector<2x1024xf32>
    %238 = arith.addf %237, %8 : vector<2x1024xf32>
    %239 = vector.extract_strided_slice %238 {offsets = [0, 0], sizes = [2, 256], strides = [1, 1]} : vector<2x1024xf32> to vector<2x256xf32>
    %240 = arith.negf %239 : vector<2x256xf32>
    %241 = math.exp %240 : vector<2x256xf32>
    %cst_58 = arith.constant 1.000000e+00 : f32
    %242 = vector.broadcast %cst_58 : f32 to vector<2x256xf32>
    %243 = arith.addf %242, %241 : vector<2x256xf32>
    %244 = arith.divf %242, %243 : vector<2x256xf32>
    %245 = vector.extract_strided_slice %238 {offsets = [0, 256], sizes = [2, 256], strides = [1, 1]} : vector<2x1024xf32> to vector<2x256xf32>
    %246 = arith.negf %245 : vector<2x256xf32>
    %247 = math.exp %246 : vector<2x256xf32>
    %cst_59 = arith.constant 1.000000e+00 : f32
    %248 = vector.broadcast %cst_59 : f32 to vector<2x256xf32>
    %249 = arith.addf %248, %247 : vector<2x256xf32>
    %250 = arith.divf %248, %249 : vector<2x256xf32>
    %251 = vector.extract_strided_slice %238 {offsets = [0, 512], sizes = [2, 256], strides = [1, 1]} : vector<2x1024xf32> to vector<2x256xf32>
    %252 = vector.extract_strided_slice %238 {offsets = [0, 768], sizes = [2, 256], strides = [1, 1]} : vector<2x1024xf32> to vector<2x256xf32>
    %253 = arith.addf %252, %11 : vector<2x256xf32>
    %254 = arith.mulf %244, %253 : vector<2x256xf32>
    %255 = arith.addf %251, %254 : vector<2x256xf32>
    %256 = math.tanh %255 : vector<2x256xf32>
    %cst_60 = arith.constant 1.000000e+00 : f32
    %257 = vector.broadcast %cst_60 : f32 to vector<2x256xf32>
    %258 = arith.subf %257, %250 : vector<2x256xf32>
    %259 = arith.mulf %258, %256 : vector<2x256xf32>
    %260 = arith.mulf %250, %204 : vector<2x256xf32>
    %261 = arith.addf %259, %260 : vector<2x256xf32>
    %c4 = arith.constant 4 : index
    %c0_61 = arith.constant 0 : index
    %c0_62 = arith.constant 0 : index
    %262 = vector.load %arg13[%c4, %c0_61, %c0_62] : memref<8x2x768xf32, #tpu.memory_space<vmem>>, vector<1x2x768xf32>
    %263 = vector.shape_cast %262 : vector<1x2x768xf32> to vector<2x768xf32>
    %264 = vector.extract_strided_slice %263 {offsets = [0, 0], sizes = [2, 256], strides = [1, 1]} : vector<2x768xf32> to vector<2x256xf32>
    %265 = vector.extract_strided_slice %236 {offsets = [0, 0], sizes = [2, 256], strides = [1, 1]} : vector<2x768xf32> to vector<2x256xf32>
    %266 = arith.addf %264, %265 : vector<2x256xf32>
    %267 = arith.negf %266 : vector<2x256xf32>
    %268 = math.exp %267 : vector<2x256xf32>
    %cst_63 = arith.constant 1.000000e+00 : f32
    %269 = vector.broadcast %cst_63 : f32 to vector<2x256xf32>
    %270 = arith.addf %269, %268 : vector<2x256xf32>
    %271 = arith.divf %269, %270 : vector<2x256xf32>
    %272 = vector.extract_strided_slice %263 {offsets = [0, 256], sizes = [2, 256], strides = [1, 1]} : vector<2x768xf32> to vector<2x256xf32>
    %273 = vector.extract_strided_slice %236 {offsets = [0, 256], sizes = [2, 256], strides = [1, 1]} : vector<2x768xf32> to vector<2x256xf32>
    %274 = arith.addf %272, %273 : vector<2x256xf32>
    %275 = arith.negf %274 : vector<2x256xf32>
    %276 = math.exp %275 : vector<2x256xf32>
    %cst_64 = arith.constant 1.000000e+00 : f32
    %277 = vector.broadcast %cst_64 : f32 to vector<2x256xf32>
    %278 = arith.addf %277, %276 : vector<2x256xf32>
    %279 = arith.divf %277, %278 : vector<2x256xf32>
    %280 = vector.extract_strided_slice %263 {offsets = [0, 512], sizes = [2, 256], strides = [1, 1]} : vector<2x768xf32> to vector<2x256xf32>
    %281 = vector.extract_strided_slice %236 {offsets = [0, 512], sizes = [2, 256], strides = [1, 1]} : vector<2x768xf32> to vector<2x256xf32>
    %282 = arith.addf %281, %4 : vector<2x256xf32>
    %283 = arith.mulf %271, %282 : vector<2x256xf32>
    %284 = arith.addf %280, %283 : vector<2x256xf32>
    %285 = math.tanh %284 : vector<2x256xf32>
    %cst_65 = arith.constant 1.000000e+00 : f32
    %286 = vector.broadcast %cst_65 : f32 to vector<2x256xf32>
    %287 = arith.subf %286, %279 : vector<2x256xf32>
    %288 = arith.mulf %287, %285 : vector<2x256xf32>
    %289 = arith.mulf %279, %233 : vector<2x256xf32>
    %290 = arith.addf %288, %289 : vector<2x256xf32>
    %291 = tpu.concatenate %290, %261 in 1 : vector<2x256xf32>, vector<2x256xf32> -> vector<2x512xf32>
    %cst_66 = arith.constant dense<0.000000e+00> : vector<2x1792xf32>
    %292 = tpu.matmul %291, %5, %cst_66 {dimension_numbers = #tpu.dot_dimension_numbers<[1], [0], [0], [1], [0, 0, 1, 1], [], []>} : vector<2x512xf32>, vector<512x1792xf32>, vector<2x1792xf32> -> vector<2x1792xf32>
    %293 = vector.extract_strided_slice %292 {offsets = [0, 0], sizes = [2, 768], strides = [1, 1]} : vector<2x1792xf32> to vector<2x768xf32>
    %294 = vector.extract_strided_slice %292 {offsets = [0, 768], sizes = [2, 1024], strides = [1, 1]} : vector<2x1792xf32> to vector<2x1024xf32>
    %295 = arith.addf %294, %8 : vector<2x1024xf32>
    %296 = vector.extract_strided_slice %295 {offsets = [0, 0], sizes = [2, 256], strides = [1, 1]} : vector<2x1024xf32> to vector<2x256xf32>
    %297 = arith.negf %296 : vector<2x256xf32>
    %298 = math.exp %297 : vector<2x256xf32>
    %cst_67 = arith.constant 1.000000e+00 : f32
    %299 = vector.broadcast %cst_67 : f32 to vector<2x256xf32>
    %300 = arith.addf %299, %298 : vector<2x256xf32>
    %301 = arith.divf %299, %300 : vector<2x256xf32>
    %302 = vector.extract_strided_slice %295 {offsets = [0, 256], sizes = [2, 256], strides = [1, 1]} : vector<2x1024xf32> to vector<2x256xf32>
    %303 = arith.negf %302 : vector<2x256xf32>
    %304 = math.exp %303 : vector<2x256xf32>
    %cst_68 = arith.constant 1.000000e+00 : f32
    %305 = vector.broadcast %cst_68 : f32 to vector<2x256xf32>
    %306 = arith.addf %305, %304 : vector<2x256xf32>
    %307 = arith.divf %305, %306 : vector<2x256xf32>
    %308 = vector.extract_strided_slice %295 {offsets = [0, 512], sizes = [2, 256], strides = [1, 1]} : vector<2x1024xf32> to vector<2x256xf32>
    %309 = vector.extract_strided_slice %295 {offsets = [0, 768], sizes = [2, 256], strides = [1, 1]} : vector<2x1024xf32> to vector<2x256xf32>
    %310 = arith.addf %309, %11 : vector<2x256xf32>
    %311 = arith.mulf %301, %310 : vector<2x256xf32>
    %312 = arith.addf %308, %311 : vector<2x256xf32>
    %313 = math.tanh %312 : vector<2x256xf32>
    %cst_69 = arith.constant 1.000000e+00 : f32
    %314 = vector.broadcast %cst_69 : f32 to vector<2x256xf32>
    %315 = arith.subf %314, %307 : vector<2x256xf32>
    %316 = arith.mulf %315, %313 : vector<2x256xf32>
    %317 = arith.mulf %307, %261 : vector<2x256xf32>
    %318 = arith.addf %316, %317 : vector<2x256xf32>
    %c5 = arith.constant 5 : index
    %c0_70 = arith.constant 0 : index
    %c0_71 = arith.constant 0 : index
    %319 = vector.load %arg13[%c5, %c0_70, %c0_71] : memref<8x2x768xf32, #tpu.memory_space<vmem>>, vector<1x2x768xf32>
    %320 = vector.shape_cast %319 : vector<1x2x768xf32> to vector<2x768xf32>
    %321 = vector.extract_strided_slice %320 {offsets = [0, 0], sizes = [2, 256], strides = [1, 1]} : vector<2x768xf32> to vector<2x256xf32>
    %322 = vector.extract_strided_slice %293 {offsets = [0, 0], sizes = [2, 256], strides = [1, 1]} : vector<2x768xf32> to vector<2x256xf32>
    %323 = arith.addf %321, %322 : vector<2x256xf32>
    %324 = arith.negf %323 : vector<2x256xf32>
    %325 = math.exp %324 : vector<2x256xf32>
    %cst_72 = arith.constant 1.000000e+00 : f32
    %326 = vector.broadcast %cst_72 : f32 to vector<2x256xf32>
    %327 = arith.addf %326, %325 : vector<2x256xf32>
    %328 = arith.divf %326, %327 : vector<2x256xf32>
    %329 = vector.extract_strided_slice %320 {offsets = [0, 256], sizes = [2, 256], strides = [1, 1]} : vector<2x768xf32> to vector<2x256xf32>
    %330 = vector.extract_strided_slice %293 {offsets = [0, 256], sizes = [2, 256], strides = [1, 1]} : vector<2x768xf32> to vector<2x256xf32>
    %331 = arith.addf %329, %330 : vector<2x256xf32>
    %332 = arith.negf %331 : vector<2x256xf32>
    %333 = math.exp %332 : vector<2x256xf32>
    %cst_73 = arith.constant 1.000000e+00 : f32
    %334 = vector.broadcast %cst_73 : f32 to vector<2x256xf32>
    %335 = arith.addf %334, %333 : vector<2x256xf32>
    %336 = arith.divf %334, %335 : vector<2x256xf32>
    %337 = vector.extract_strided_slice %320 {offsets = [0, 512], sizes = [2, 256], strides = [1, 1]} : vector<2x768xf32> to vector<2x256xf32>
    %338 = vector.extract_strided_slice %293 {offsets = [0, 512], sizes = [2, 256], strides = [1, 1]} : vector<2x768xf32> to vector<2x256xf32>
    %339 = arith.addf %338, %4 : vector<2x256xf32>
    %340 = arith.mulf %328, %339 : vector<2x256xf32>
    %341 = arith.addf %337, %340 : vector<2x256xf32>
    %342 = math.tanh %341 : vector<2x256xf32>
    %cst_74 = arith.constant 1.000000e+00 : f32
    %343 = vector.broadcast %cst_74 : f32 to vector<2x256xf32>
    %344 = arith.subf %343, %336 : vector<2x256xf32>
    %345 = arith.mulf %344, %342 : vector<2x256xf32>
    %346 = arith.mulf %336, %290 : vector<2x256xf32>
    %347 = arith.addf %345, %346 : vector<2x256xf32>
    %348 = tpu.concatenate %347, %318 in 1 : vector<2x256xf32>, vector<2x256xf32> -> vector<2x512xf32>
    %cst_75 = arith.constant dense<0.000000e+00> : vector<2x1792xf32>
    %349 = tpu.matmul %348, %5, %cst_75 {dimension_numbers = #tpu.dot_dimension_numbers<[1], [0], [0], [1], [0, 0, 1, 1], [], []>} : vector<2x512xf32>, vector<512x1792xf32>, vector<2x1792xf32> -> vector<2x1792xf32>
    %350 = vector.extract_strided_slice %349 {offsets = [0, 0], sizes = [2, 768], strides = [1, 1]} : vector<2x1792xf32> to vector<2x768xf32>
    %351 = vector.extract_strided_slice %349 {offsets = [0, 768], sizes = [2, 1024], strides = [1, 1]} : vector<2x1792xf32> to vector<2x1024xf32>
    %352 = arith.addf %351, %8 : vector<2x1024xf32>
    %353 = vector.extract_strided_slice %352 {offsets = [0, 0], sizes = [2, 256], strides = [1, 1]} : vector<2x1024xf32> to vector<2x256xf32>
    %354 = arith.negf %353 : vector<2x256xf32>
    %355 = math.exp %354 : vector<2x256xf32>
    %cst_76 = arith.constant 1.000000e+00 : f32
    %356 = vector.broadcast %cst_76 : f32 to vector<2x256xf32>
    %357 = arith.addf %356, %355 : vector<2x256xf32>
    %358 = arith.divf %356, %357 : vector<2x256xf32>
    %359 = vector.extract_strided_slice %352 {offsets = [0, 256], sizes = [2, 256], strides = [1, 1]} : vector<2x1024xf32> to vector<2x256xf32>
    %360 = arith.negf %359 : vector<2x256xf32>
    %361 = math.exp %360 : vector<2x256xf32>
    %cst_77 = arith.constant 1.000000e+00 : f32
    %362 = vector.broadcast %cst_77 : f32 to vector<2x256xf32>
    %363 = arith.addf %362, %361 : vector<2x256xf32>
    %364 = arith.divf %362, %363 : vector<2x256xf32>
    %365 = vector.extract_strided_slice %352 {offsets = [0, 512], sizes = [2, 256], strides = [1, 1]} : vector<2x1024xf32> to vector<2x256xf32>
    %366 = vector.extract_strided_slice %352 {offsets = [0, 768], sizes = [2, 256], strides = [1, 1]} : vector<2x1024xf32> to vector<2x256xf32>
    %367 = arith.addf %366, %11 : vector<2x256xf32>
    %368 = arith.mulf %358, %367 : vector<2x256xf32>
    %369 = arith.addf %365, %368 : vector<2x256xf32>
    %370 = math.tanh %369 : vector<2x256xf32>
    %cst_78 = arith.constant 1.000000e+00 : f32
    %371 = vector.broadcast %cst_78 : f32 to vector<2x256xf32>
    %372 = arith.subf %371, %364 : vector<2x256xf32>
    %373 = arith.mulf %372, %370 : vector<2x256xf32>
    %374 = arith.mulf %364, %318 : vector<2x256xf32>
    %375 = arith.addf %373, %374 : vector<2x256xf32>
    %c6 = arith.constant 6 : index
    %c0_79 = arith.constant 0 : index
    %c0_80 = arith.constant 0 : index
    %376 = vector.load %arg13[%c6, %c0_79, %c0_80] : memref<8x2x768xf32, #tpu.memory_space<vmem>>, vector<1x2x768xf32>
    %377 = vector.shape_cast %376 : vector<1x2x768xf32> to vector<2x768xf32>
    %378 = vector.extract_strided_slice %377 {offsets = [0, 0], sizes = [2, 256], strides = [1, 1]} : vector<2x768xf32> to vector<2x256xf32>
    %379 = vector.extract_strided_slice %350 {offsets = [0, 0], sizes = [2, 256], strides = [1, 1]} : vector<2x768xf32> to vector<2x256xf32>
    %380 = arith.addf %378, %379 : vector<2x256xf32>
    %381 = arith.negf %380 : vector<2x256xf32>
    %382 = math.exp %381 : vector<2x256xf32>
    %cst_81 = arith.constant 1.000000e+00 : f32
    %383 = vector.broadcast %cst_81 : f32 to vector<2x256xf32>
    %384 = arith.addf %383, %382 : vector<2x256xf32>
    %385 = arith.divf %383, %384 : vector<2x256xf32>
    %386 = vector.extract_strided_slice %377 {offsets = [0, 256], sizes = [2, 256], strides = [1, 1]} : vector<2x768xf32> to vector<2x256xf32>
    %387 = vector.extract_strided_slice %350 {offsets = [0, 256], sizes = [2, 256], strides = [1, 1]} : vector<2x768xf32> to vector<2x256xf32>
    %388 = arith.addf %386, %387 : vector<2x256xf32>
    %389 = arith.negf %388 : vector<2x256xf32>
    %390 = math.exp %389 : vector<2x256xf32>
    %cst_82 = arith.constant 1.000000e+00 : f32
    %391 = vector.broadcast %cst_82 : f32 to vector<2x256xf32>
    %392 = arith.addf %391, %390 : vector<2x256xf32>
    %393 = arith.divf %391, %392 : vector<2x256xf32>
    %394 = vector.extract_strided_slice %377 {offsets = [0, 512], sizes = [2, 256], strides = [1, 1]} : vector<2x768xf32> to vector<2x256xf32>
    %395 = vector.extract_strided_slice %350 {offsets = [0, 512], sizes = [2, 256], strides = [1, 1]} : vector<2x768xf32> to vector<2x256xf32>
    %396 = arith.addf %395, %4 : vector<2x256xf32>
    %397 = arith.mulf %385, %396 : vector<2x256xf32>
    %398 = arith.addf %394, %397 : vector<2x256xf32>
    %399 = math.tanh %398 : vector<2x256xf32>
    %cst_83 = arith.constant 1.000000e+00 : f32
    %400 = vector.broadcast %cst_83 : f32 to vector<2x256xf32>
    %401 = arith.subf %400, %393 : vector<2x256xf32>
    %402 = arith.mulf %401, %399 : vector<2x256xf32>
    %403 = arith.mulf %393, %347 : vector<2x256xf32>
    %404 = arith.addf %402, %403 : vector<2x256xf32>
    %405 = tpu.concatenate %404, %375 in 1 : vector<2x256xf32>, vector<2x256xf32> -> vector<2x512xf32>
    %cst_84 = arith.constant dense<0.000000e+00> : vector<2x1792xf32>
    %406 = tpu.matmul %405, %5, %cst_84 {dimension_numbers = #tpu.dot_dimension_numbers<[1], [0], [0], [1], [0, 0, 1, 1], [], []>} : vector<2x512xf32>, vector<512x1792xf32>, vector<2x1792xf32> -> vector<2x1792xf32>
    %407 = vector.extract_strided_slice %406 {offsets = [0, 0], sizes = [2, 768], strides = [1, 1]} : vector<2x1792xf32> to vector<2x768xf32>
    %408 = vector.extract_strided_slice %406 {offsets = [0, 768], sizes = [2, 1024], strides = [1, 1]} : vector<2x1792xf32> to vector<2x1024xf32>
    %409 = arith.addf %408, %8 : vector<2x1024xf32>
    %410 = vector.extract_strided_slice %409 {offsets = [0, 0], sizes = [2, 256], strides = [1, 1]} : vector<2x1024xf32> to vector<2x256xf32>
    %411 = arith.negf %410 : vector<2x256xf32>
    %412 = math.exp %411 : vector<2x256xf32>
    %cst_85 = arith.constant 1.000000e+00 : f32
    %413 = vector.broadcast %cst_85 : f32 to vector<2x256xf32>
    %414 = arith.addf %413, %412 : vector<2x256xf32>
    %415 = arith.divf %413, %414 : vector<2x256xf32>
    %416 = vector.extract_strided_slice %409 {offsets = [0, 256], sizes = [2, 256], strides = [1, 1]} : vector<2x1024xf32> to vector<2x256xf32>
    %417 = arith.negf %416 : vector<2x256xf32>
    %418 = math.exp %417 : vector<2x256xf32>
    %cst_86 = arith.constant 1.000000e+00 : f32
    %419 = vector.broadcast %cst_86 : f32 to vector<2x256xf32>
    %420 = arith.addf %419, %418 : vector<2x256xf32>
    %421 = arith.divf %419, %420 : vector<2x256xf32>
    %422 = vector.extract_strided_slice %409 {offsets = [0, 512], sizes = [2, 256], strides = [1, 1]} : vector<2x1024xf32> to vector<2x256xf32>
    %423 = vector.extract_strided_slice %409 {offsets = [0, 768], sizes = [2, 256], strides = [1, 1]} : vector<2x1024xf32> to vector<2x256xf32>
    %424 = arith.addf %423, %11 : vector<2x256xf32>
    %425 = arith.mulf %415, %424 : vector<2x256xf32>
    %426 = arith.addf %422, %425 : vector<2x256xf32>
    %427 = math.tanh %426 : vector<2x256xf32>
    %cst_87 = arith.constant 1.000000e+00 : f32
    %428 = vector.broadcast %cst_87 : f32 to vector<2x256xf32>
    %429 = arith.subf %428, %421 : vector<2x256xf32>
    %430 = arith.mulf %429, %427 : vector<2x256xf32>
    %431 = arith.mulf %421, %375 : vector<2x256xf32>
    %432 = arith.addf %430, %431 : vector<2x256xf32>
    %c7 = arith.constant 7 : index
    %c0_88 = arith.constant 0 : index
    %c0_89 = arith.constant 0 : index
    %433 = vector.load %arg13[%c7, %c0_88, %c0_89] : memref<8x2x768xf32, #tpu.memory_space<vmem>>, vector<1x2x768xf32>
    %434 = vector.shape_cast %433 : vector<1x2x768xf32> to vector<2x768xf32>
    %435 = vector.extract_strided_slice %434 {offsets = [0, 0], sizes = [2, 256], strides = [1, 1]} : vector<2x768xf32> to vector<2x256xf32>
    %436 = vector.extract_strided_slice %407 {offsets = [0, 0], sizes = [2, 256], strides = [1, 1]} : vector<2x768xf32> to vector<2x256xf32>
    %437 = arith.addf %435, %436 : vector<2x256xf32>
    %438 = arith.negf %437 : vector<2x256xf32>
    %439 = math.exp %438 : vector<2x256xf32>
    %cst_90 = arith.constant 1.000000e+00 : f32
    %440 = vector.broadcast %cst_90 : f32 to vector<2x256xf32>
    %441 = arith.addf %440, %439 : vector<2x256xf32>
    %442 = arith.divf %440, %441 : vector<2x256xf32>
    %443 = vector.extract_strided_slice %434 {offsets = [0, 256], sizes = [2, 256], strides = [1, 1]} : vector<2x768xf32> to vector<2x256xf32>
    %444 = vector.extract_strided_slice %407 {offsets = [0, 256], sizes = [2, 256], strides = [1, 1]} : vector<2x768xf32> to vector<2x256xf32>
    %445 = arith.addf %443, %444 : vector<2x256xf32>
    %446 = arith.negf %445 : vector<2x256xf32>
    %447 = math.exp %446 : vector<2x256xf32>
    %cst_91 = arith.constant 1.000000e+00 : f32
    %448 = vector.broadcast %cst_91 : f32 to vector<2x256xf32>
    %449 = arith.addf %448, %447 : vector<2x256xf32>
    %450 = arith.divf %448, %449 : vector<2x256xf32>
    %451 = vector.extract_strided_slice %434 {offsets = [0, 512], sizes = [2, 256], strides = [1, 1]} : vector<2x768xf32> to vector<2x256xf32>
    %452 = vector.extract_strided_slice %407 {offsets = [0, 512], sizes = [2, 256], strides = [1, 1]} : vector<2x768xf32> to vector<2x256xf32>
    %453 = arith.addf %452, %4 : vector<2x256xf32>
    %454 = arith.mulf %442, %453 : vector<2x256xf32>
    %455 = arith.addf %451, %454 : vector<2x256xf32>
    %456 = math.tanh %455 : vector<2x256xf32>
    %cst_92 = arith.constant 1.000000e+00 : f32
    %457 = vector.broadcast %cst_92 : f32 to vector<2x256xf32>
    %458 = arith.subf %457, %450 : vector<2x256xf32>
    %459 = arith.mulf %458, %456 : vector<2x256xf32>
    %460 = arith.mulf %450, %404 : vector<2x256xf32>
    %461 = arith.addf %459, %460 : vector<2x256xf32>
    %462 = tpu.concatenate %461, %432 in 1 : vector<2x256xf32>, vector<2x256xf32> -> vector<2x512xf32>
    %cst_93 = arith.constant dense<0.000000e+00> : vector<2x1792xf32>
    %463 = tpu.matmul %462, %5, %cst_93 {dimension_numbers = #tpu.dot_dimension_numbers<[1], [0], [0], [1], [0, 0, 1, 1], [], []>} : vector<2x512xf32>, vector<512x1792xf32>, vector<2x1792xf32> -> vector<2x1792xf32>
    %464 = vector.extract_strided_slice %463 {offsets = [0, 768], sizes = [2, 1024], strides = [1, 1]} : vector<2x1792xf32> to vector<2x1024xf32>
    %465 = arith.addf %464, %8 : vector<2x1024xf32>
    %466 = vector.extract_strided_slice %465 {offsets = [0, 0], sizes = [2, 256], strides = [1, 1]} : vector<2x1024xf32> to vector<2x256xf32>
    %467 = arith.negf %466 : vector<2x256xf32>
    %468 = math.exp %467 : vector<2x256xf32>
    %cst_94 = arith.constant 1.000000e+00 : f32
    %469 = vector.broadcast %cst_94 : f32 to vector<2x256xf32>
    %470 = arith.addf %469, %468 : vector<2x256xf32>
    %471 = arith.divf %469, %470 : vector<2x256xf32>
    %472 = vector.extract_strided_slice %465 {offsets = [0, 256], sizes = [2, 256], strides = [1, 1]} : vector<2x1024xf32> to vector<2x256xf32>
    %473 = arith.negf %472 : vector<2x256xf32>
    %474 = math.exp %473 : vector<2x256xf32>
    %cst_95 = arith.constant 1.000000e+00 : f32
    %475 = vector.broadcast %cst_95 : f32 to vector<2x256xf32>
    %476 = arith.addf %475, %474 : vector<2x256xf32>
    %477 = arith.divf %475, %476 : vector<2x256xf32>
    %478 = vector.extract_strided_slice %465 {offsets = [0, 512], sizes = [2, 256], strides = [1, 1]} : vector<2x1024xf32> to vector<2x256xf32>
    %479 = vector.extract_strided_slice %465 {offsets = [0, 768], sizes = [2, 256], strides = [1, 1]} : vector<2x1024xf32> to vector<2x256xf32>
    %480 = arith.addf %479, %11 : vector<2x256xf32>
    %481 = arith.mulf %471, %480 : vector<2x256xf32>
    %482 = arith.addf %478, %481 : vector<2x256xf32>
    %483 = math.tanh %482 : vector<2x256xf32>
    %cst_96 = arith.constant 1.000000e+00 : f32
    %484 = vector.broadcast %cst_96 : f32 to vector<2x256xf32>
    %485 = arith.subf %484, %477 : vector<2x256xf32>
    %486 = arith.mulf %485, %483 : vector<2x256xf32>
    %487 = arith.mulf %477, %432 : vector<2x256xf32>
    %488 = arith.addf %486, %487 : vector<2x256xf32>
    %c0_97 = arith.constant 0 : index
    %c0_98 = arith.constant 0 : index
    %489 = vector.load %arg10[%c0_97, %c0_98] : memref<256x4xf32, #tpu.memory_space<vmem>>, vector<256x4xf32>
    %cst_99 = arith.constant dense<0.000000e+00> : vector<2x4xf32>
    %490 = tpu.matmul %488, %489, %cst_99 {dimension_numbers = #tpu.dot_dimension_numbers<[1], [0], [0], [1], [0, 0, 1, 1], [], []>} : vector<2x256xf32>, vector<256x4xf32>, vector<2x4xf32> -> vector<2x4xf32>
    %c0_100 = arith.constant 0 : index
    %c0_101 = arith.constant 0 : index
    %491 = vector.load %arg11[%c0_100, %c0_101] : memref<1x4xf32, #tpu.memory_space<vmem>>, vector<1x4xf32>
    %492 = vector.broadcast %491 : vector<1x4xf32> to vector<2x4xf32>
    %493 = arith.addf %490, %492 : vector<2x4xf32>
    %cst_102 = arith.constant dense<0xFF800000> : vector<2xf32>
    %494 = vector.multi_reduction <maximumf>, %493, %cst_102 [1] : vector<2x4xf32> to vector<2xf32>
    %495 = vector.shape_cast %494 : vector<2xf32> to vector<2x1xf32>
    %496 = vector.broadcast %495 : vector<2x1xf32> to vector<2x4xf32>
    %497 = arith.subf %493, %496 : vector<2x4xf32>
    %498 = math.exp %497 : vector<2x4xf32>
    %cst_103 = arith.constant dense<0.000000e+00> : vector<2xf32>
    %499 = vector.multi_reduction <add>, %498, %cst_103 [1] : vector<2x4xf32> to vector<2xf32>
    %500 = vector.shape_cast %499 : vector<2xf32> to vector<2x1xf32>
    %501 = math.log %500 : vector<2x1xf32>
    %502 = arith.addf %495, %501 : vector<2x1xf32>
    %503 = vector.broadcast %502 : vector<2x1xf32> to vector<2x4xf32>
    %504 = arith.subf %493, %503 : vector<2x4xf32>
    %c0_104 = arith.constant 0 : index
    %c0_105 = arith.constant 0 : index
    %505 = vector.load %arg12[%c0_104, %c0_105] : memref<2x4xf32, #tpu.memory_space<vmem>>, vector<2x4xf32>
    tpu.vector_store %arg12[%c0_104, %c0_105], %504 {strides = array<i32>} : memref<2x4xf32, #tpu.memory_space<vmem>>, vector<2x4xf32>,
    return
  }
}

</mosaic_0001>

<llo_original>
// kernel: tpu_custom_call.1
$region0: #{tpu_custom_call.1}
  #allocation0 [shape = 'u32[]', space=smem, size = 0x4, offset = 0x4, fixed_abs, tag = 'smem constant byte address 0x4 - core index']
  #allocation1 [shape = 'u32[144,128]{1,0:T(1,128)}', space=vmem, size = 0x12000, scoped, tag = 'internal scratch']
  #allocation2 [shape = 'f32[8,2,768]{2,1,0:T(2,128)}', space=vmem, size = 0xc000, scoped, tag = 'scratch operand']
  %s0 = inlined_call_operand.vmem [shape: f32[2,8,2,1], index: 0, kind: input, shape index: {}]
  %s1 = inlined_call_operand.hbm [shape: f32[2,768], index: 1, kind: input, shape index: {}]
  %s2 = inlined_call_operand.hbm [shape: f32[1,768], index: 2, kind: input, shape index: {}]
  %s3 = inlined_call_operand.hbm [shape: f32[1,256], index: 3, kind: input, shape index: {}]
  %s4 = inlined_call_operand.hbm [shape: f32[512,1792], index: 4, kind: input, shape index: {}]
  %s5 = inlined_call_operand.hbm [shape: f32[1,1024], index: 5, kind: input, shape index: {}]
  %s6 = inlined_call_operand.hbm [shape: f32[1,256], index: 6, kind: input, shape index: {}]
  %s7 = inlined_call_operand.hbm [shape: f32[1,8,128], index: 7, kind: input, shape index: {}]
  %s8 = inlined_call_operand.hbm [shape: f32[1,128], index: 8, kind: input, shape index: {}]
  %s9 = inlined_call_operand.hbm [shape: f32[1,128], index: 9, kind: input, shape index: {}]
  %s10 = inlined_call_operand.vmem [shape: f32[256,4], index: 10, kind: input, shape index: {}]
  %s11 = inlined_call_operand.hbm [shape: f32[1,4], index: 11, kind: input, shape index: {}]
  %s12 = inlined_call_operand.hbm [shape: f32[2,4], index: 12, kind: output, shape index: {}]
  %s13 = sld [smem:[#allocation0]]
  $region98: #{tpu_custom_call.1} parent=0
    _
  %s15 = ssub.s32 1, %s13
  %s16 = scalar_select 0, %s15, %s13
  $region1: #{tpu_custom_call.1} parent=0
    #allocation3 [shape = 'u8[6144]{0}', space=vmem, size = 0x1800, scoped, tag = 'input window, operand 1, single buffered']
    #allocation4 [shape = 's32[1]{0}', space=sflag, size = 0x4, scoped, tag = 'scoped memory for tpu_custom_call.1']
    #allocation5 [shape = 's32[1]{0}', space=sflag, size = 0x4, scoped, tag = 'scoped memory for tpu_custom_call.1']
    #allocation6 [shape = 'u8[3072]{0}', space=vmem, size = 0xc00, scoped, tag = 'input window, operand 2, single buffered']
    #allocation7 [shape = 's32[1]{0}', space=sflag, size = 0x4, scoped, tag = 'scoped memory for tpu_custom_call.1']
    #allocation8 [shape = 'u8[1024]{0}', space=vmem, size = 0x400, scoped, tag = 'input window, operand 3, single buffered']
    #allocation9 [shape = 'u8[3670016]{0}', space=vmem, size = 0x380000, scoped, tag = 'input window, operand 4, single buffered']
    #allocation10 [shape = 's32[1]{0}', space=sflag, size = 0x4, scoped, tag = 'scoped memory for tpu_custom_call.1']
    #allocation11 [shape = 'u8[4096]{0}', space=vmem, size = 0x1000, scoped, tag = 'input window, operand 5, single buffered']
    #allocation12 [shape = 'u8[1024]{0}', space=vmem, size = 0x400, scoped, tag = 'input window, operand 6, single buffered']
    #allocation13 [shape = 's32[1]{0}', space=sflag, size = 0x4, scoped, tag = 'scoped memory for tpu_custom_call.1']
    #allocation14 [shape = 'u8[4096]{0}', space=vmem, size = 0x1000, scoped, tag = 'input window, operand 7, single buffered']
    #allocation15 [shape = 'u8[512]{0}', space=vmem, size = 0x400, scoped, tag = 'input window, operand 8, single buffered']
    #allocation16 [shape = 's32[1]{0}', space=sflag, size = 0x4, scoped, tag = 'scoped memory for tpu_custom_call.1']
    #allocation17 [shape = 'u8[512]{0}', space=vmem, size = 0x400, scoped, tag = 'input window, operand 9, single buffered']
    #allocation18 [shape = 'u8[512]{0}', space=vmem, size = 0x400, scoped, tag = 'input window, operand 11, single buffered']
    #allocation19 [shape = 's32[1]{0}', space=sflag, size = 0x4, scoped, tag = 'scoped memory for tpu_custom_call.1']
    #allocation20 [shape = 'u8[1024]{0}', space=vmem, size = 0x400, scoped, tag = 'output window, operand 0, single buffered']
    %17 = vsyncpa [#allocation4], 0
    %18 = vsyncpa [#allocation7], 0
    %19 = vsyncpa [#allocation10], 0
    %20 = vsyncpa [#allocation13], 0
    %21 = vsyncpa [#allocation16], 0
    %22 = vsyncpa [#allocation19], 0
    %23 = vsyncpa [#allocation5], 0
    // Predicated region
    $region2: #{tpu_custom_call.1} parent=1 // pred_check
      _
    $region3: #{tpu_custom_call.1} parent=1 // pred_check_branch
      %25 = sbr.rel (0) target = $region5
    $region4: #{tpu_custom_call.1} parent=1 // pred_region
      _
    $region5: #{tpu_custom_call.1} parent=1 // pred_fallthru
      _
    // Predicated region
    $region6: #{tpu_custom_call.1} parent=1 // pred_check
      _
    $region7: #{tpu_custom_call.1} parent=1 // pred_check_branch
      %27 = sbr.rel (0) target = $region9
    $region8: #{tpu_custom_call.1} parent=1 // pred_region
      %s29 = ssub.s32 192, 192
      %30 = vsyncadd [#allocation4], %s29
      %s32 = sshll.u32 [#allocation3], 4
      %s33 = int_to_ptr.vmem [resolvable:$true] %s32
      %35 = dma.hbm_to_vmem [thread:$0]  %s1, 192, %s33, [#allocation4]
    $region9: #{tpu_custom_call.1} parent=1 // pred_fallthru
      _
    // Predicated region
    $region10: #{tpu_custom_call.1} parent=1 // pred_check
      _
    $region11: #{tpu_custom_call.1} parent=1 // pred_check_branch
      %37 = sbr.rel (0) target = $region13
    $region12: #{tpu_custom_call.1} parent=1 // pred_region
      %s39 = ssub.s32 96, 96
      %40 = vsyncadd [#allocation7], %s39
      %s42 = sshll.u32 [#allocation6], 4
      %s43 = int_to_ptr.vmem [resolvable:$true] %s42
      %45 = dma.hbm_to_vmem [thread:$0]  %s2, 96, %s43, [#allocation7]
    $region13: #{tpu_custom_call.1} parent=1 // pred_fallthru
      _
    // Predicated region
    $region14: #{tpu_custom_call.1} parent=1 // pred_check
      _
    $region15: #{tpu_custom_call.1} parent=1 // pred_check_branch
      %47 = sbr.rel (0) target = $region17
    $region16: #{tpu_custom_call.1} parent=1 // pred_region
      %s49 = ssub.s32 32, 32
      %50 = vsyncadd [#allocation7], %s49
      %s52 = sshll.u32 [#allocation8], 4
      %s53 = int_to_ptr.vmem [resolvable:$true] %s52
      %55 = dma.hbm_to_vmem [thread:$0]  %s3, 32, %s53, [#allocation7]
    $region17: #{tpu_custom_call.1} parent=1 // pred_fallthru
      _
    // Predicated region
    $region18: #{tpu_custom_call.1} parent=1 // pred_check
      _
    $region19: #{tpu_custom_call.1} parent=1 // pred_check_branch
      %57 = sbr.rel (0) target = $region21
    $region20: #{tpu_custom_call.1} parent=1 // pred_region
      %s59 = ssub.s32 114688, 114688
      %60 = vsyncadd [#allocation10], %s59
      %s61 = sshll.u32 [#allocation9], 4
      %s62 = int_to_ptr.vmem [resolvable:$true] %s61
      %67 = dma.hbm_to_vmem [thread:$0]  %s4, 114688, %s62, [#allocation10], 1792, 1792, 112
    $region21: #{tpu_custom_call.1} parent=1 // pred_fallthru
      _
    // Predicated region
    $region22: #{tpu_custom_call.1} parent=1 // pred_check
      _
    $region23: #{tpu_custom_call.1} parent=1 // pred_check_branch
      %69 = sbr.rel (0) target = $region25
    $region24: #{tpu_custom_call.1} parent=1 // pred_region
      %s71 = ssub.s32 128, 128
      %72 = vsyncadd [#allocation10], %s71
      %s74 = sshll.u32 [#allocation11], 4
      %s75 = int_to_ptr.vmem [resolvable:$true] %s74
      %77 = dma.hbm_to_vmem [thread:$0]  %s5, 128, %s75, [#allocation10]
    $region25: #{tpu_custom_call.1} parent=1 // pred_fallthru
      _
    // Predicated region
    $region26: #{tpu_custom_call.1} parent=1 // pred_check
      _
    $region27: #{tpu_custom_call.1} parent=1 // pred_check_branch
      %79 = sbr.rel (0) target = $region29
    $region28: #{tpu_custom_call.1} parent=1 // pred_region
      %s81 = ssub.s32 32, 32
      %82 = vsyncadd [#allocation13], %s81
      %s84 = sshll.u32 [#allocation12], 4
      %s85 = int_to_ptr.vmem [resolvable:$true] %s84
      %87 = dma.hbm_to_vmem [thread:$0]  %s6, 32, %s85, [#allocation13]
    $region29: #{tpu_custom_call.1} parent=1 // pred_fallthru
      _
    // Predicated region
    $region30: #{tpu_custom_call.1} parent=1 // pred_check
      _
    $region31: #{tpu_custom_call.1} parent=1 // pred_check_branch
      %89 = sbr.rel (0) target = $region33
    $region32: #{tpu_custom_call.1} parent=1 // pred_region
      %s91 = ssub.s32 128, 128
      %92 = vsyncadd [#allocation13], %s91
      %s94 = sshll.u32 [#allocation14], 4
      %s95 = int_to_ptr.vmem [resolvable:$true] %s94
      %97 = dma.hbm_to_vmem [thread:$0]  %s7, 128, %s95, [#allocation13]
    $region33: #{tpu_custom_call.1} parent=1 // pred_fallthru
      _
    // Predicated region
    $region34: #{tpu_custom_call.1} parent=1 // pred_check
      _
    $region35: #{tpu_custom_call.1} parent=1 // pred_check_branch
      %99 = sbr.rel (0) target = $region37
    $region36: #{tpu_custom_call.1} parent=1 // pred_region
      %s101 = ssub.s32 16, 16
      %102 = vsyncadd [#allocation16], %s101
      %s104 = sshll.u32 [#allocation15], 4
      %s105 = int_to_ptr.vmem [resolvable:$true] %s104
      %107 = dma.hbm_to_vmem [thread:$0]  %s8, 16, %s105, [#allocation16]
    $region37: #{tpu_custom_call.1} parent=1 // pred_fallthru
      _
    // Predicated region
    $region38: #{tpu_custom_call.1} parent=1 // pred_check
      _
    $region39: #{tpu_custom_call.1} parent=1 // pred_check_branch
      %109 = sbr.rel (0) target = $region41
    $region40: #{tpu_custom_call.1} parent=1 // pred_region
      %s111 = ssub.s32 16, 16
      %112 = vsyncadd [#allocation16], %s111
      %s114 = sshll.u32 [#allocation17], 4
      %s115 = int_to_ptr.vmem [resolvable:$true] %s114
      %117 = dma.hbm_to_vmem [thread:$0]  %s9, 16, %s115, [#allocation16]
    $region41: #{tpu_custom_call.1} parent=1 // pred_fallthru
      _
    // Predicated region
    $region42: #{tpu_custom_call.1} parent=1 // pred_check
      _
    $region43: #{tpu_custom_call.1} parent=1 // pred_check_branch
      %119 = sbr.rel (0) target = $region45
    $region44: #{tpu_custom_call.1} parent=1 // pred_region
      _
    $region45: #{tpu_custom_call.1} parent=1 // pred_fallthru
      _
    // Predicated region
    $region46: #{tpu_custom_call.1} parent=1 // pred_check
      _
    $region47: #{tpu_custom_call.1} parent=1 // pred_check_branch
      %121 = sbr.rel (0) target = $region49
    $region48: #{tpu_custom_call.1} parent=1 // pred_region
      %s123 = ssub.s32 16, 16
      %124 = vsyncadd [#allocation19], %s123
      %s126 = sshll.u32 [#allocation18], 4
      %s127 = int_to_ptr.vmem [resolvable:$true] %s126
      %129 = dma.hbm_to_vmem [thread:$0]  %s11, 16, %s127, [#allocation19]
    $region49: #{tpu_custom_call.1} parent=1 // pred_fallthru
      _
    // Predicated region
    $region50: #{tpu_custom_call.1} parent=1 // pred_check
      _
    $region51: #{tpu_custom_call.1} parent=1 // pred_check_branch
      %131 = sbr.rel (0) target = $region53
    $region52: #{tpu_custom_call.1} parent=1 // pred_region
      %132 = dma.done [#allocation4], 192
    $region53: #{tpu_custom_call.1} parent=1 // pred_fallthru
      _
    // Predicated region
    $region54: #{tpu_custom_call.1} parent=1 // pred_check
      _
    $region55: #{tpu_custom_call.1} parent=1 // pred_check_branch
      %134 = sbr.rel (0) target = $region57
    $region56: #{tpu_custom_call.1} parent=1 // pred_region
      %135 = dma.done [#allocation7], 96
    $region57: #{tpu_custom_call.1} parent=1 // pred_fallthru
      _
    // Predicated region
    $region58: #{tpu_custom_call.1} parent=1 // pred_check
      _
    $region59: #{tpu_custom_call.1} parent=1 // pred_check_branch
      %137 = sbr.rel (0) target = $region61
    $region60: #{tpu_custom_call.1} parent=1 // pred_region
      %138 = dma.done [#allocation7], 32
    $region61: #{tpu_custom_call.1} parent=1 // pred_fallthru
      _
    // Predicated region
    $region62: #{tpu_custom_call.1} parent=1 // pred_check
      _
    $region63: #{tpu_custom_call.1} parent=1 // pred_check_branch
      %140 = sbr.rel (0) target = $region65
    $region64: #{tpu_custom_call.1} parent=1 // pred_region
      %141 = dma.done [#allocation10], 114688
    $region65: #{tpu_custom_call.1} parent=1 // pred_fallthru
      _
    // Predicated region
    $region66: #{tpu_custom_call.1} parent=1 // pred_check
      _
    $region67: #{tpu_custom_call.1} parent=1 // pred_check_branch
      %143 = sbr.rel (0) target = $region69
    $region68: #{tpu_custom_call.1} parent=1 // pred_region
      %144 = dma.done [#allocation10], 128
    $region69: #{tpu_custom_call.1} parent=1 // pred_fallthru
      _
    // Predicated region
    $region70: #{tpu_custom_call.1} parent=1 // pred_check
      _
    $region71: #{tpu_custom_call.1} parent=1 // pred_check_branch
      %146 = sbr.rel (0) target = $region73
    $region72: #{tpu_custom_call.1} parent=1 // pred_region
      %147 = dma.done [#allocation13], 32
    $region73: #{tpu_custom_call.1} parent=1 // pred_fallthru
      _
    // Predicated region
    $region74: #{tpu_custom_call.1} parent=1 // pred_check
      _
    $region75: #{tpu_custom_call.1} parent=1 // pred_check_branch
      %149 = sbr.rel (0) target = $region77
    $region76: #{tpu_custom_call.1} parent=1 // pred_region
      %150 = dma.done [#allocation13], 128
    $region77: #{tpu_custom_call.1} parent=1 // pred_fallthru
      _
    // Predicated region
    $region78: #{tpu_custom_call.1} parent=1 // pred_check
      _
    $region79: #{tpu_custom_call.1} parent=1 // pred_check_branch
      %152 = sbr.rel (0) target = $region81
    $region80: #{tpu_custom_call.1} parent=1 // pred_region
      %153 = dma.done [#allocation16], 16
    $region81: #{tpu_custom_call.1} parent=1 // pred_fallthru
      _
    // Predicated region
    $region82: #{tpu_custom_call.1} parent=1 // pred_check
      _
    $region83: #{tpu_custom_call.1} parent=1 // pred_check_branch
      %155 = sbr.rel (0) target = $region85
    $region84: #{tpu_custom_call.1} parent=1 // pred_region
      %156 = dma.done [#allocation16], 16
    $region85: #{tpu_custom_call.1} parent=1 // pred_fallthru
      _
    // Predicated region
    $region86: #{tpu_custom_call.1} parent=1 // pred_check
      _
    $region87: #{tpu_custom_call.1} parent=1 // pred_check_branch
      %158 = sbr.rel (0) target = $region89
    $region88: #{tpu_custom_call.1} parent=1 // pred_region
      %159 = dma.done [#allocation19], 16
    $region89: #{tpu_custom_call.1} parent=1 // pred_fallthru
      _
    %v160 = vld [vmem:[#allocation3] sm:$0xff]
    %v161 = vld [vmem:[#allocation3 + $0x8] sm:$0xf]
    %v162 = vld [vmem:[#allocation6] sm:$0x3f]
    %v163 = vld [vmem:[#allocation8] sm:$0x3]
    %v165 = vlaneseq
    %v166 = vshrl.u32 %v165, 7
    %v167 = vsub.s32 0, %v166
    %v168 = vrot.slane %v163, %v167
    %v169 = vlaneseq
    %v170 = vshrl.u32 %v169, 7
    %v171 = vsub.s32 1, %v170
    %v172 = vrot.slane %v163, %v171
    %v175 = vld [vmem:[#allocation9] sm:$0xff]
    %v176 = vld [vmem:[#allocation9 + $0x8] sm:$0xff]
    %v177 = vld [vmem:[#allocation9 + $0x10] sm:$0xff]
    %v178 = vld [vmem:[#allocation9 + $0x18] sm:$0xff]
    %v179 = vld [vmem:[#allocation9 + $0x20] sm:$0xff]
    %v180 = vld [vmem:[#allocation9 + $0x28] sm:$0xff]
    %v181 = vld [vmem:[#allocation9 + $0x30] sm:$0xff]
    %v182 = vld [vmem:[#allocation9 + $0x38] sm:$0xff]
    %v183 = vld [vmem:[#allocation9 + $0x40] sm:$0xff]
    %v184 = vld [vmem:[#allocation9 + $0x48] sm:$0xff]
    %v185 = vld [vmem:[#allocation9 + $0x50] sm:$0xff]
    %v186 = vld [vmem:[#allocation9 + $0x58] sm:$0xff]
    %v187 = vld [vmem:[#allocation9 + $0x60] sm:$0xff]
    %v188 = vld [vmem:[#allocation9 + $0x68] sm:$0xff]
    %v189 = vld [vmem:[#allocation9 + $0x70] sm:$0xff]
    %v190 = vld [vmem:[#allocation9 + $0x78] sm:$0xff]
    %v191 = vld [vmem:[#allocation9 + $0x80] sm:$0xff]
    %v192 = vld [vmem:[#allocation9 + $0x88] sm:$0xff]
    %v193 = vld [vmem:[#allocation9 + $0x90] sm:$0xff]
    %v194 = vld [vmem:[#allocation9 + $0x98] sm:$0xff]
    %v195 = vld [vmem:[#allocation9 + $0xa0] sm:$0xff]
    %v196 = vld [vmem:[#allocation9 + $0xa8] sm:$0xff]
    %v197 = vld [vmem:[#allocation9 + $0xb0] sm:$0xff]
    %v198 = vld [vmem:[#allocation9 + $0xb8] sm:$0xff]
    %v199 = vld [vmem:[#allocation9 + $0xc0] sm:$0xff]
    %v200 = vld [vmem:[#allocation9 + $0xc8] sm:$0xff]
    %v201 = vld [vmem:[#allocation9 + $0xd0] sm:$0xff]
    %v202 = vld [vmem:[#allocation9 + $0xd8] sm:$0xff]
    %v203 = vld [vmem:[#allocation9 + $0xe0] sm:$0xff]
    %v204 = vld [vmem:[#allocation9 + $0xe8] sm:$0xff]
    %v205 = vld [vmem:[#allocation9 + $0xf0] sm:$0xff]
    %v206 = vld [vmem:[#allocation9 + $0xf8] sm:$0xff]
    %v207 = vld [vmem:[#allocation9 + $0x100] sm:$0xff]
    %v208 = vld [vmem:[#allocation9 + $0x108] sm:$0xff]
    %v209 = vld [vmem:[#allocation9 + $0x110] sm:$0xff]
    %v210 = vld [vmem:[#allocation9 + $0x118] sm:$0xff]
    %v211 = vld [vmem:[#allocation9 + $0x120] sm:$0xff]
    %v212 = vld [vmem:[#allocation9 + $0x128] sm:$0xff]
    %v213 = vld [vmem:[#allocation9 + $0x130] sm:$0xff]
    %v214 = vld [vmem:[#allocation9 + $0x138] sm:$0xff]
    %v215 = vld [vmem:[#allocation9 + $0x140] sm:$0xff]
    %v216 = vld [vmem:[#allocation9 + $0x148] sm:$0xff]
    %v217 = vld [vmem:[#allocation9 + $0x150] sm:$0xff]
    %v218 = vld [vmem:[#allocation9 + $0x158] sm:$0xff]
    %v219 = vld [vmem:[#allocation9 + $0x160] sm:$0xff]
    %v220 = vld [vmem:[#allocation9 + $0x168] sm:$0xff]
    %v221 = vld [vmem:[#allocation9 + $0x170] sm:$0xff]
    %v222 = vld [vmem:[#allocation9 + $0x178] sm:$0xff]
    %v223 = vld [vmem:[#allocation9 + $0x180] sm:$0xff]
    %v224 = vld [vmem:[#allocation9 + $0x188] sm:$0xff]
    %v225 = vld [vmem:[#allocation9 + $0x190] sm:$0xff]
    %v226 = vld [vmem:[#allocation9 + $0x198] sm:$0xff]
    %v227 = vld [vmem:[#allocation9 + $0x1a0] sm:$0xff]
    %v228 = vld [vmem:[#allocation9 + $0x1a8] sm:$0xff]
    %v229 = vld [vmem:[#allocation9 + $0x1b0] sm:$0xff]
    %v230 = vld [vmem:[#allocation9 + $0x1b8] sm:$0xff]
    %v231 = vld [vmem:[#allocation9 + $0x1c0] sm:$0xff]
    %v232 = vld [vmem:[#allocation9 + $0x1c8] sm:$0xff]
    %v233 = vld [vmem:[#allocation9 + $0x1d0] sm:$0xff]
    %v234 = vld [vmem:[#allocation9 + $0x1d8] sm:$0xff]
    %v235 = vld [vmem:[#allocation9 + $0x1e0] sm:$0xff]
    %v236 = vld [vmem:[#allocation9 + $0x1e8] sm:$0xff]
    %v237 = vld [vmem:[#allocation9 + $0x1f0] sm:$0xff]
    %v238 = vld [vmem:[#allocation9 + $0x1f8] sm:$0xff]
    %v239 = vld [vmem:[#allocation9 + $0x200] sm:$0xff]
    %v240 = vld [vmem:[#allocation9 + $0x208] sm:$0xff]
    %v241 = vld [vmem:[#allocation9 + $0x210] sm:$0xff]
    %v242 = vld [vmem:[#allocation9 + $0x218] sm:$0xff]
    %v243 = vld [vmem:[#allocation9 + $0x220] sm:$0xff]
    %v244 = vld [vmem:[#allocation9 + $0x228] sm:$0xff]
    %v245 = vld [vmem:[#allocation9 + $0x230] sm:$0xff]
    %v246 = vld [vmem:[#allocation9 + $0x238] sm:$0xff]
    %v247 = vld [vmem:[#allocation9 + $0x240] sm:$0xff]
    %v248 = vld [vmem:[#allocation9 + $0x248] sm:$0xff]
    %v249 = vld [vmem:[#allocation9 + $0x250] sm:$0xff]
    %v250 = vld [vmem:[#allocation9 + $0x258] sm:$0xff]
    %v251 = vld [vmem:[#allocation9 + $0x260] sm:$0xff]
    %v252 = vld [vmem:[#allocation9 + $0x268] sm:$0xff]
    %v253 = vld [vmem:[#allocation9 + $0x270] sm:$0xff]
    %v254 = vld [vmem:[#allocation9 + $0x278] sm:$0xff]
    %v255 = vld [vmem:[#allocation9 + $0x280] sm:$0xff]
    %v256 = vld [vmem:[#allocation9 + $0x288] sm:$0xff]
    %v257 = vld [vmem:[#allocation9 + $0x290] sm:$0xff]
    %v258 = vld [vmem:[#allocation9 + $0x298] sm:$0xff]
    %v259 = vld [vmem:[#allocation9 + $0x2a0] sm:$0xff]
    %v260 = vld [vmem:[#allocation9 + $0x2a8] sm:$0xff]
    %v261 = vld [vmem:[#allocation9 + $0x2b0] sm:$0xff]
    %v262 = vld [vmem:[#allocation9 + $0x2b8] sm:$0xff]
    %v263 = vld [vmem:[#allocation9 + $0x2c0] sm:$0xff]
    %v264 = vld [vmem:[#allocation9 + $0x2c8] sm:$0xff]
    %v265 = vld [vmem:[#allocation9 + $0x2d0] sm:$0xff]
    %v266 = vld [vmem:[#allocation9 + $0x2d8] sm:$0xff]
    %v267 = vld [vmem:[#allocation9 + $0x2e0] sm:$0xff]
    %v268 = vld [vmem:[#allocation9 + $0x2e8] sm:$0xff]
    %v269 = vld [vmem:[#allocation9 + $0x2f0] sm:$0xff]
    %v270 = vld [vmem:[#allocation9 + $0x2f8] sm:$0xff]
    %v271 = vld [vmem:[#allocation9 + $0x300] sm:$0xff]
    %v272 = vld [vmem:[#allocation9 + $0x308] sm:$0xff]
    %v273 = vld [vmem:[#allocation9 + $0x310] sm:$0xff]
    %v274 = vld [vmem:[#allocation9 + $0x318] sm:$0xff]
    %v275 = vld [vmem:[#allocation9 + $0x320] sm:$0xff]
    %v276 = vld [vmem:[#allocation9 + $0x328] sm:$0xff]
    %v277 = vld [vmem:[#allocation9 + $0x330] sm:$0xff]
    %v278 = vld [vmem:[#allocation9 + $0x338] sm:$0xff]
    %v279 = vld [vmem:[#allocation9 + $0x340] sm:$0xff]
    %v280 = vld [vmem:[#allocation9 + $0x348] sm:$0xff]
    %v281 = vld [vmem:[#allocation9 + $0x350] sm:$0xff]
    %v282 = vld [vmem:[#allocation9 + $0x358] sm:$0xff]
    %v283 = vld [vmem:[#allocation9 + $0x360] sm:$0xff]
    %v284 = vld [vmem:[#allocation9 + $0x368] sm:$0xff]
    %v285 = vld [vmem:[#allocation9 + $0x370] sm:$0xff]
    %v286 = vld [vmem:[#allocation9 + $0x378] sm:$0xff]
    %v287 = vld [vmem:[#allocation9 + $0x380] sm:$0xff]
    %v288 = vld [vmem:[#allocation9 + $0x388] sm:$0xff]
    %v289 = vld [vmem:[#allocation9 + $0x390] sm:$0xff]
    %v290 = vld [vmem:[#allocation9 + $0x398] sm:$0xff]
    %v291 = vld [vmem:[#allocation9 + $0x3a0] sm:$0xff]
    %v292 = vld [vmem:[#allocation9 + $0x3a8] sm:$0xff]
    %v293 = vld [vmem:[#allocation9 + $0x3b0] sm:$0xff]
    %v294 = vld [vmem:[#allocation9 + $0x3b8] sm:$0xff]
    %v295 = vld [vmem:[#allocation9 + $0x3c0] sm:$0xff]
    %v296 = vld [vmem:[#allocation9 + $0x3c8] sm:$0xff]
    %v297 = vld [vmem:[#allocation9 + $0x3d0] sm:$0xff]
    %v298 = vld [vmem:[#allocation9 + $0x3d8] sm:$0xff]
    %v299 = vld [vmem:[#allocation9 + $0x3e0] sm:$0xff]
    %v300 = vld [vmem:[#allocation9 + $0x3e8] sm:$0xff]
    %v301 = vld [vmem:[#allocation9 + $0x3f0] sm:$0xff]
    %v302 = vld [vmem:[#allocation9 + $0x3f8] sm:$0xff]
    %v303 = vld [vmem:[#allocation9 + $0x400] sm:$0xff]
    %v304 = vld [vmem:[#allocation9 + $0x408] sm:$0xff]
    %v305 = vld [vmem:[#allocation9 + $0x410] sm:$0xff]
    %v306 = vld [vmem:[#allocation9 + $0x418] sm:$0xff]
    %v307 = vld [vmem:[#allocation9 + $0x420] sm:$0xff]
    %v308 = vld [vmem:[#allocation9 + $0x428] sm:$0xff]
    %v309 = vld [vmem:[#allocation9 + $0x430] sm:$0xff]
    %v310 = vld [vmem:[#allocation9 + $0x438] sm:$0xff]
    %v311 = vld [vmem:[#allocation9 + $0x440] sm:$0xff]
    %v312 = vld [vmem:[#allocation9 + $0x448] sm:$0xff]
    %v313 = vld [vmem:[#allocation9 + $0x450] sm:$0xff]
    %v314 = vld [vmem:[#allocation9 + $0x458] sm:$0xff]
    %v315 = vld [vmem:[#allocation9 + $0x460] sm:$0xff]
    %v316 = vld [vmem:[#allocation9 + $0x468] sm:$0xff]
    %v317 = vld [vmem:[#allocation9 + $0x470] sm:$0xff]
    %v318 = vld [vmem:[#allocation9 + $0x478] sm:$0xff]
    %v319 = vld [vmem:[#allocation9 + $0x480] sm:$0xff]
    %v320 = vld [vmem:[#allocation9 + $0x488] sm:$0xff]
    %v321 = vld [vmem:[#allocation9 + $0x490] sm:$0xff]
    %v322 = vld [vmem:[#allocation9 + $0x498] sm:$0xff]
    %v323 = vld [vmem:[#allocation9 + $0x4a0] sm:$0xff]
    %v324 = vld [vmem:[#allocation9 + $0x4a8] sm:$0xff]
    %v325 = vld [vmem:[#allocation9 + $0x4b0] sm:$0xff]
    %v326 = vld [vmem:[#allocation9 + $0x4b8] sm:$0xff]
    %v327 = vld [vmem:[#allocation9 + $0x4c0] sm:$0xff]
    %v328 = vld [vmem:[#allocation9 + $0x4c8] sm:$0xff]
    %v329 = vld [vmem:[#allocation9 + $0x4d0] sm:$0xff]
    %v330 = vld [vmem:[#allocation9 + $0x4d8] sm:$0xff]
    %v331 = vld [vmem:[#allocation9 + $0x4e0] sm:$0xff]
    %v332 = vld [vmem:[#allocation9 + $0x4e8] sm:$0xff]
    %v333 = vld [vmem:[#allocation9 + $0x4f0] sm:$0xff]
    %v334 = vld [vmem:[#allocation9 + $0x4f8] sm:$0xff]
    %v335 = vld [vmem:[#allocation9 + $0x500] sm:$0xff]
    %v336 = vld [vmem:[#allocation9 + $0x508] sm:$0xff]
    %v337 = vld [vmem:[#allocation9 + $0x510] sm:$0xff]
    %v338 = vld [vmem:[#allocation9 + $0x518] sm:$0xff]
    %v339 = vld [vmem:[#allocation9 + $0x520] sm:$0xff]
    %v340 = vld [vmem:[#allocation9 + $0x528] sm:$0xff]
    %v341 = vld [vmem:[#allocation9 + $0x530] sm:$0xff]
    %v342 = vld [vmem:[#allocation9 + $0x538] sm:$0xff]
    %v343 = vld [vmem:[#allocation9 + $0x540] sm:$0xff]
    %v344 = vld [vmem:[#allocation9 + $0x548] sm:$0xff]
    %v345 = vld [vmem:[#allocation9 + $0x550] sm:$0xff]
    %v346 = vld [vmem:[#allocation9 + $0x558] sm:$0xff]
    %v347 = vld [vmem:[#allocation9 + $0x560] sm:$0xff]
    %v348 = vld [vmem:[#allocation9 + $0x568] sm:$0xff]
    %v349 = vld [vmem:[#allocation9 + $0x570] sm:$0xff]
    %v350 = vld [vmem:[#allocation9 + $0x578] sm:$0xff]
    %v351 = vld [vmem:[#allocation9 + $0x580] sm:$0xff]
    %v352 = vld [vmem:[#allocation9 + $0x588] sm:$0xff]
    %v353 = vld [vmem:[#allocation9 + $0x590] sm:$0xff]
    %v354 = vld [vmem:[#allocation9 + $0x598] sm:$0xff]
    %v355 = vld [vmem:[#allocation9 + $0x5a0] sm:$0xff]
    %v356 = vld [vmem:[#allocation9 + $0x5a8] sm:$0xff]
    %v357 = vld [vmem:[#allocation9 + $0x5b0] sm:$0xff]
    %v358 = vld [vmem:[#allocation9 + $0x5b8] sm:$0xff]
    %v359 = vld [vmem:[#allocation9 + $0x5c0] sm:$0xff]
    %v360 = vld [vmem:[#allocation9 + $0x5c8] sm:$0xff]
    %v361 = vld [vmem:[#allocation9 + $0x5d0] sm:$0xff]
    %v362 = vld [vmem:[#allocation9 + $0x5d8] sm:$0xff]
    %v363 = vld [vmem:[#allocation9 + $0x5e0] sm:$0xff]
    %v364 = vld [vmem:[#allocation9 + $0x5e8] sm:$0xff]
    %v365 = vld [vmem:[#allocation9 + $0x5f0] sm:$0xff]
    %v366 = vld [vmem:[#allocation9 + $0x5f8] sm:$0xff]
    %v367 = vld [vmem:[#allocation9 + $0x600] sm:$0xff]
    %v368 = vld [vmem:[#allocation9 + $0x608] sm:$0xff]
    %v369 = vld [vmem:[#allocation9 + $0x610] sm:$0xff]
    %v370 = vld [vmem:[#allocation9 + $0x618] sm:$0xff]
    %v371 = vld [vmem:[#allocation9 + $0x620] sm:$0xff]
    %v372 = vld [vmem:[#allocation9 + $0x628] sm:$0xff]
    %v373 = vld [vmem:[#allocation9 + $0x630] sm:$0xff]
    %v374 = vld [vmem:[#allocation9 + $0x638] sm:$0xff]
    %v375 = vld [vmem:[#allocation9 + $0x640] sm:$0xff]
    %v376 = vld [vmem:[#allocation9 + $0x648] sm:$0xff]
    %v377 = vld [vmem:[#allocation9 + $0x650] sm:$0xff]
    %v378 = vld [vmem:[#allocation9 + $0x658] sm:$0xff]
    %v379 = vld [vmem:[#allocation9 + $0x660] sm:$0xff]
    %v380 = vld [vmem:[#allocation9 + $0x668] sm:$0xff]
    %v381 = vld [vmem:[#allocation9 + $0x670] sm:$0xff]
    %v382 = vld [vmem:[#allocation9 + $0x678] sm:$0xff]
    %v383 = vld [vmem:[#allocation9 + $0x680] sm:$0xff]
    %v384 = vld [vmem:[#allocation9 + $0x688] sm:$0xff]
    %v385 = vld [vmem:[#allocation9 + $0x690] sm:$0xff]
    %v386 = vld [vmem:[#allocation9 + $0x698] sm:$0xff]
    %v387 = vld [vmem:[#allocation9 + $0x6a0] sm:$0xff]
    %v388 = vld [vmem:[#allocation9 + $0x6a8] sm:$0xff]
    %v389 = vld [vmem:[#allocation9 + $0x6b0] sm:$0xff]
    %v390 = vld [vmem:[#allocation9 + $0x6b8] sm:$0xff]
    %v391 = vld [vmem:[#allocation9 + $0x6c0] sm:$0xff]
    %v392 = vld [vmem:[#allocation9 + $0x6c8] sm:$0xff]
    %v393 = vld [vmem:[#allocation9 + $0x6d0] sm:$0xff]
    %v394 = vld [vmem:[#allocation9 + $0x6d8] sm:$0xff]
    %v395 = vld [vmem:[#allocation9 + $0x6e0] sm:$0xff]
    %v396 = vld [vmem:[#allocation9 + $0x6e8] sm:$0xff]
    %v397 = vld [vmem:[#allocation9 + $0x6f0] sm:$0xff]
    %v398 = vld [vmem:[#allocation9 + $0x6f8] sm:$0xff]
    %v399 = vld [vmem:[#allocation9 + $0x700] sm:$0xff]
    %v400 = vld [vmem:[#allocation9 + $0x708] sm:$0xff]
    %v401 = vld [vmem:[#allocation9 + $0x710] sm:$0xff]
    %v402 = vld [vmem:[#allocation9 + $0x718] sm:$0xff]
    %v403 = vld [vmem:[#allocation9 + $0x720] sm:$0xff]
    %v404 = vld [vmem:[#allocation9 + $0x728] sm:$0xff]
    %v405 = vld [vmem:[#allocation9 + $0x730] sm:$0xff]
    %v406 = vld [vmem:[#allocation9 + $0x738] sm:$0xff]
    %v407 = vld [vmem:[#allocation9 + $0x740] sm:$0xff]
    %v408 = vld [vmem:[#allocation9 + $0x748] sm:$0xff]
    %v409 = vld [vmem:[#allocation9 + $0x750] sm:$0xff]
    %v410 = vld [vmem:[#allocation9 + $0x758] sm:$0xff]
    %v411 = vld [vmem:[#allocation9 + $0x760] sm:$0xff]
    %v412 = vld [vmem:[#allocation9 + $0x768] sm:$0xff]
    %v413 = vld [vmem:[#allocation9 + $0x770] sm:$0xff]
    %v414 = vld [vmem:[#allocation9 + $0x778] sm:$0xff]
    %v415 = vld [vmem:[#allocation9 + $0x780] sm:$0xff]
    %v416 = vld [vmem:[#allocation9 + $0x788] sm:$0xff]
    %v417 = vld [vmem:[#allocation9 + $0x790] sm:$0xff]
    %v418 = vld [vmem:[#allocation9 + $0x798] sm:$0xff]
    %v419 = vld [vmem:[#allocation9 + $0x7a0] sm:$0xff]
    %v420 = vld [vmem:[#allocation9 + $0x7a8] sm:$0xff]
    %v421 = vld [vmem:[#allocation9 + $0x7b0] sm:$0xff]
    %v422 = vld [vmem:[#allocation9 + $0x7b8] sm:$0xff]
    %v423 = vld [vmem:[#allocation9 + $0x7c0] sm:$0xff]
    %v424 = vld [vmem:[#allocation9 + $0x7c8] sm:$0xff]
    %v425 = vld [vmem:[#allocation9 + $0x7d0] sm:$0xff]
    %v426 = vld [vmem:[#allocation9 + $0x7d8] sm:$0xff]
    %v427 = vld [vmem:[#allocation9 + $0x7e0] sm:$0xff]
    %v428 = vld [vmem:[#allocation9 + $0x7e8] sm:$0xff]
    %v429 = vld [vmem:[#allocation9 + $0x7f0] sm:$0xff]
    %v430 = vld [vmem:[#allocation9 + $0x7f8] sm:$0xff]
    %v431 = vld [vmem:[#allocation9 + $0x800] sm:$0xff]
    %v432 = vld [vmem:[#allocation9 + $0x808] sm:$0xff]
    %v433 = vld [vmem:[#allocation9 + $0x810] sm:$0xff]
    %v434 = vld [vmem:[#allocation9 + $0x818] sm:$0xff]
    %v435 = vld [vmem:[#allocation9 + $0x820] sm:$0xff]
    %v436 = vld [vmem:[#allocation9 + $0x828] sm:$0xff]
    %v437 = vld [vmem:[#allocation9 + $0x830] sm:$0xff]
    %v438 = vld [vmem:[#allocation9 + $0x838] sm:$0xff]
    %v439 = vld [vmem:[#allocation9 + $0x840] sm:$0xff]
    %v440 = vld [vmem:[#allocation9 + $0x848] sm:$0xff]
    %v441 = vld [vmem:[#allocation9 + $0x850] sm:$0xff]
    %v442 = vld [vmem:[#allocation9 + $0x858] sm:$0xff]
    %v443 = vld [vmem:[#allocation9 + $0x860] sm:$0xff]
    %v444 = vld [vmem:[#allocation9 + $0x868] sm:$0xff]
    %v445 = vld [vmem:[#allocation9 + $0x870] sm:$0xff]
    %v446 = vld [vmem:[#allocation9 + $0x878] sm:$0xff]
    %v447 = vld [vmem:[#allocation9 + $0x880] sm:$0xff]
    %v448 = vld [vmem:[#allocation9 + $0x888] sm:$0xff]
    %v449 = vld [vmem:[#allocation9 + $0x890] sm:$0xff]
    %v450 = vld [vmem:[#allocation9 + $0x898] sm:$0xff]
    %v451 = vld [vmem:[#allocation9 + $0x8a0] sm:$0xff]
    %v452 = vld [vmem:[#allocation9 + $0x8a8] sm:$0xff]
    %v453 = vld [vmem:[#allocation9 + $0x8b0] sm:$0xff]
    %v454 = vld [vmem:[#allocation9 + $0x8b8] sm:$0xff]
    %v455 = vld [vmem:[#allocation9 + $0x8c0] sm:$0xff]
    %v456 = vld [vmem:[#allocation9 + $0x8c8] sm:$0xff]
    %v457 = vld [vmem:[#allocation9 + $0x8d0] sm:$0xff]
    %v458 = vld [vmem:[#allocation9 + $0x8d8] sm:$0xff]
    %v459 = vld [vmem:[#allocation9 + $0x8e0] sm:$0xff]
    %v460 = vld [vmem:[#allocation9 + $0x8e8] sm:$0xff]
    %v461 = vld [vmem:[#allocation9 + $0x8f0] sm:$0xff]
    %v462 = vld [vmem:[#allocation9 + $0x8f8] sm:$0xff]
    %v463 = vld [vmem:[#allocation9 + $0x900] sm:$0xff]
    %v464 = vld [vmem:[#allocation9 + $0x908] sm:$0xff]
    %v465 = vld [vmem:[#allocation9 + $0x910] sm:$0xff]
    %v466 = vld [vmem:[#allocation9 + $0x918] sm:$0xff]
    %v467 = vld [vmem:[#allocation9 + $0x920] sm:$0xff]
    %v468 = vld [vmem:[#allocation9 + $0x928] sm:$0xff]
    %v469 = vld [vmem:[#allocation9 + $0x930] sm:$0xff]
    %v470 = vld [vmem:[#allocation9 + $0x938] sm:$0xff]
    %v471 = vld [vmem:[#allocation9 + $0x940] sm:$0xff]
    %v472 = vld [vmem:[#allocation9 + $0x948] sm:$0xff]
    %v473 = vld [vmem:[#allocation9 + $0x950] sm:$0xff]
    %v474 = vld [vmem:[#allocation9 + $0x958] sm:$0xff]
    %v475 = vld [vmem:[#allocation9 + $0x960] sm:$0xff]
    %v476 = vld [vmem:[#allocation9 + $0x968] sm:$0xff]
    %v477 = vld [vmem:[#allocation9 + $0x970] sm:$0xff]
    %v478 = vld [vmem:[#allocation9 + $0x978] sm:$0xff]
    %v479 = vld [vmem:[#allocation9 + $0x980] sm:$0xff]
    %v480 = vld [vmem:[#allocation9 + $0x988] sm:$0xff]
    %v481 = vld [vmem:[#allocation9 + $0x990] sm:$0xff]
    %v482 = vld [vmem:[#allocation9 + $0x998] sm:$0xff]
    %v483 = vld [vmem:[#allocation9 + $0x9a0] sm:$0xff]
    %v484 = vld [vmem:[#allocation9 + $0x9a8] sm:$0xff]
    %v485 = vld [vmem:[#allocation9 + $0x9b0] sm:$0xff]
    %v486 = vld [vmem:[#allocation9 + $0x9b8] sm:$0xff]
    %v487 = vld [vmem:[#allocation9 + $0x9c0] sm:$0xff]
    %v488 = vld [vmem:[#allocation9 + $0x9c8] sm:$0xff]
    %v489 = vld [vmem:[#allocation9 + $0x9d0] sm:$0xff]
    %v490 = vld [vmem:[#allocation9 + $0x9d8] sm:$0xff]
    %v491 = vld [vmem:[#allocation9 + $0x9e0] sm:$0xff]
    %v492 = vld [vmem:[#allocation9 + $0x9e8] sm:$0xff]
    %v493 = vld [vmem:[#allocation9 + $0x9f0] sm:$0xff]
    %v494 = vld [vmem:[#allocation9 + $0x9f8] sm:$0xff]
    %v495 = vld [vmem:[#allocation9 + $0xa00] sm:$0xff]
    %v496 = vld [vmem:[#allocation9 + $0xa08] sm:$0xff]
    %v497 = vld [vmem:[#allocation9 + $0xa10] sm:$0xff]
    %v498 = vld [vmem:[#allocation9 + $0xa18] sm:$0xff]
    %v499 = vld [vmem:[#allocation9 + $0xa20] sm:$0xff]
    %v500 = vld [vmem:[#allocation9 + $0xa28] sm:$0xff]
    %v501 = vld [vmem:[#allocation9 + $0xa30] sm:$0xff]
    %v502 = vld [vmem:[#allocation9 + $0xa38] sm:$0xff]
    %v503 = vld [vmem:[#allocation9 + $0xa40] sm:$0xff]
    %v504 = vld [vmem:[#allocation9 + $0xa48] sm:$0xff]
    %v505 = vld [vmem:[#allocation9 + $0xa50] sm:$0xff]
    %v506 = vld [vmem:[#allocation9 + $0xa58] sm:$0xff]
    %v507 = vld [vmem:[#allocation9 + $0xa60] sm:$0xff]
    %v508 = vld [vmem:[#allocation9 + $0xa68] sm:$0xff]
    %v509 = vld [vmem:[#allocation9 + $0xa70] sm:$0xff]
    %v510 = vld [vmem:[#allocation9 + $0xa78] sm:$0xff]
    %v511 = vld [vmem:[#allocation9 + $0xa80] sm:$0xff]
    %v512 = vld [vmem:[#allocation9 + $0xa88] sm:$0xff]
    %v513 = vld [vmem:[#allocation9 + $0xa90] sm:$0xff]
    %v514 = vld [vmem:[#allocation9 + $0xa98] sm:$0xff]
    %v515 = vld [vmem:[#allocation9 + $0xaa0] sm:$0xff]
    %v516 = vld [vmem:[#allocation9 + $0xaa8] sm:$0xff]
    %v517 = vld [vmem:[#allocation9 + $0xab0] sm:$0xff]
    %v518 = vld [vmem:[#allocation9 + $0xab8] sm:$0xff]
    %v519 = vld [vmem:[#allocation9 + $0xac0] sm:$0xff]
    %v520 = vld [vmem:[#allocation9 + $0xac8] sm:$0xff]
    %v521 = vld [vmem:[#allocation9 + $0xad0] sm:$0xff]
    %v522 = vld [vmem:[#allocation9 + $0xad8] sm:$0xff]
    %v523 = vld [vmem:[#allocation9 + $0xae0] sm:$0xff]
    %v524 = vld [vmem:[#allocation9 + $0xae8] sm:$0xff]
    %v525 = vld [vmem:[#allocation9 + $0xaf0] sm:$0xff]
    %v526 = vld [vmem:[#allocation9 + $0xaf8] sm:$0xff]
    %v527 = vld [vmem:[#allocation9 + $0xb00] sm:$0xff]
    %v528 = vld [vmem:[#allocation9 + $0xb08] sm:$0xff]
    %v529 = vld [vmem:[#allocation9 + $0xb10] sm:$0xff]
    %v530 = vld [vmem:[#allocation9 + $0xb18] sm:$0xff]
    %v531 = vld [vmem:[#allocation9 + $0xb20] sm:$0xff]
    %v532 = vld [vmem:[#allocation9 + $0xb28] sm:$0xff]
    %v533 = vld [vmem:[#allocation9 + $0xb30] sm:$0xff]
    %v534 = vld [vmem:[#allocation9 + $0xb38] sm:$0xff]
    %v535 = vld [vmem:[#allocation9 + $0xb40] sm:$0xff]
    %v536 = vld [vmem:[#allocation9 + $0xb48] sm:$0xff]
    %v537 = vld [vmem:[#allocation9 + $0xb50] sm:$0xff]
    %v538 = vld [vmem:[#allocation9 + $0xb58] sm:$0xff]
    %v539 = vld [vmem:[#allocation9 + $0xb60] sm:$0xff]
    %v540 = vld [vmem:[#allocation9 + $0xb68] sm:$0xff]
    %v541 = vld [vmem:[#allocation9 + $0xb70] sm:$0xff]
    %v542 = vld [vmem:[#allocation9 + $0xb78] sm:$0xff]
    %v543 = vld [vmem:[#allocation9 + $0xb80] sm:$0xff]
    %v544 = vld [vmem:[#allocation9 + $0xb88] sm:$0xff]
    %v545 = vld [vmem:[#allocation9 + $0xb90] sm:$0xff]
    %v546 = vld [vmem:[#allocation9 + $0xb98] sm:$0xff]
    %v547 = vld [vmem:[#allocation9 + $0xba0] sm:$0xff]
    %v548 = vld [vmem:[#allocation9 + $0xba8] sm:$0xff]
    %v549 = vld [vmem:[#allocation9 + $0xbb0] sm:$0xff]
    %v550 = vld [vmem:[#allocation9 + $0xbb8] sm:$0xff]
    %v551 = vld [vmem:[#allocation9 + $0xbc0] sm:$0xff]
    %v552 = vld [vmem:[#allocation9 + $0xbc8] sm:$0xff]
    %v553 = vld [vmem:[#allocation9 + $0xbd0] sm:$0xff]
    %v554 = vld [vmem:[#allocation9 + $0xbd8] sm:$0xff]
    %v555 = vld [vmem:[#allocation9 + $0xbe0] sm:$0xff]
    %v556 = vld [vmem:[#allocation9 + $0xbe8] sm:$0xff]
    %v557 = vld [vmem:[#allocation9 + $0xbf0] sm:$0xff]
    %v558 = vld [vmem:[#allocation9 + $0xbf8] sm:$0xff]
    %v559 = vld [vmem:[#allocation9 + $0xc00] sm:$0xff]
    %v560 = vld [vmem:[#allocation9 + $0xc08] sm:$0xff]
    %v561 = vld [vmem:[#allocation9 + $0xc10] sm:$0xff]
    %v562 = vld [vmem:[#allocation9 + $0xc18] sm:$0xff]
    %v563 = vld [vmem:[#allocation9 + $0xc20] sm:$0xff]
    %v564 = vld [vmem:[#allocation9 + $0xc28] sm:$0xff]
    %v565 = vld [vmem:[#allocation9 + $0xc30] sm:$0xff]
    %v566 = vld [vmem:[#allocation9 + $0xc38] sm:$0xff]
    %v567 = vld [vmem:[#allocation9 + $0xc40] sm:$0xff]
    %v568 = vld [vmem:[#allocation9 + $0xc48] sm:$0xff]
    %v569 = vld [vmem:[#allocation9 + $0xc50] sm:$0xff]
    %v570 = vld [vmem:[#allocation9 + $0xc58] sm:$0xff]
    %v571 = vld [vmem:[#allocation9 + $0xc60] sm:$0xff]
    %v572 = vld [vmem:[#allocation9 + $0xc68] sm:$0xff]
    %v573 = vld [vmem:[#allocation9 + $0xc70] sm:$0xff]
    %v574 = vld [vmem:[#allocation9 + $0xc78] sm:$0xff]
    %v575 = vld [vmem:[#allocation9 + $0xc80] sm:$0xff]
    %v576 = vld [vmem:[#allocation9 + $0xc88] sm:$0xff]
    %v577 = vld [vmem:[#allocation9 + $0xc90] sm:$0xff]
    %v578 = vld [vmem:[#allocation9 + $0xc98] sm:$0xff]
    %v579 = vld [vmem:[#allocation9 + $0xca0] sm:$0xff]
    %v580 = vld [vmem:[#allocation9 + $0xca8] sm:$0xff]
    %v581 = vld [vmem:[#allocation9 + $0xcb0] sm:$0xff]
    %v582 = vld [vmem:[#allocation9 + $0xcb8] sm:$0xff]
    %v583 = vld [vmem:[#allocation9 + $0xcc0] sm:$0xff]
    %v584 = vld [vmem:[#allocation9 + $0xcc8] sm:$0xff]
    %v585 = vld [vmem:[#allocation9 + $0xcd0] sm:$0xff]
    %v586 = vld [vmem:[#allocation9 + $0xcd8] sm:$0xff]
    %v587 = vld [vmem:[#allocation9 + $0xce0] sm:$0xff]
    %v588 = vld [vmem:[#allocation9 + $0xce8] sm:$0xff]
    %v589 = vld [vmem:[#allocation9 + $0xcf0] sm:$0xff]
    %v590 = vld [vmem:[#allocation9 + $0xcf8] sm:$0xff]
    %v591 = vld [vmem:[#allocation9 + $0xd00] sm:$0xff]
    %v592 = vld [vmem:[#allocation9 + $0xd08] sm:$0xff]
    %v593 = vld [vmem:[#allocation9 + $0xd10] sm:$0xff]
    %v594 = vld [vmem:[#allocation9 + $0xd18] sm:$0xff]
    %v595 = vld [vmem:[#allocation9 + $0xd20] sm:$0xff]
    %v596 = vld [vmem:[#allocation9 + $0xd28] sm:$0xff]
    %v597 = vld [vmem:[#allocation9 + $0xd30] sm:$0xff]
    %v598 = vld [vmem:[#allocation9 + $0xd38] sm:$0xff]
    %v599 = vld [vmem:[#allocation9 + $0xd40] sm:$0xff]
    %v600 = vld [vmem:[#allocation9 + $0xd48] sm:$0xff]
    %v601 = vld [vmem:[#allocation9 + $0xd50] sm:$0xff]
    %v602 = vld [vmem:[#allocation9 + $0xd58] sm:$0xff]
    %v603 = vld [vmem:[#allocation9 + $0xd60] sm:$0xff]
    %v604 = vld [vmem:[#allocation9 + $0xd68] sm:$0xff]
    %v605 = vld [vmem:[#allocation9 + $0xd70] sm:$0xff]
    %v606 = vld [vmem:[#allocation9 + $0xd78] sm:$0xff]
    %v607 = vld [vmem:[#allocation9 + $0xd80] sm:$0xff]
    %v608 = vld [vmem:[#allocation9 + $0xd88] sm:$0xff]
    %v609 = vld [vmem:[#allocation9 + $0xd90] sm:$0xff]
    %v610 = vld [vmem:[#allocation9 + $0xd98] sm:$0xff]
    %v611 = vld [vmem:[#allocation9 + $0xda0] sm:$0xff]
    %v612 = vld [vmem:[#allocation9 + $0xda8] sm:$0xff]
    %v613 = vld [vmem:[#allocation9 + $0xdb0] sm:$0xff]
    %v614 = vld [vmem:[#allocation9 + $0xdb8] sm:$0xff]
    %v615 = vld [vmem:[#allocation9 + $0xdc0] sm:$0xff]
    %v616 = vld [vmem:[#allocation9 + $0xdc8] sm:$0xff]
    %v617 = vld [vmem:[#allocation9 + $0xdd0] sm:$0xff]
    %v618 = vld [vmem:[#allocation9 + $0xdd8] sm:$0xff]
    %v619 = vld [vmem:[#allocation9 + $0xde0] sm:$0xff]
    %v620 = vld [vmem:[#allocation9 + $0xde8] sm:$0xff]
    %v621 = vld [vmem:[#allocation9 + $0xdf0] sm:$0xff]
    %v622 = vld [vmem:[#allocation9 + $0xdf8] sm:$0xff]
    %v623 = vld [vmem:[#allocation9 + $0xe00] sm:$0xff]
    %v624 = vld [vmem:[#allocation9 + $0xe08] sm:$0xff]
    %v625 = vld [vmem:[#allocation9 + $0xe10] sm:$0xff]
    %v626 = vld [vmem:[#allocation9 + $0xe18] sm:$0xff]
    %v627 = vld [vmem:[#allocation9 + $0xe20] sm:$0xff]
    %v628 = vld [vmem:[#allocation9 + $0xe28] sm:$0xff]
    %v629 = vld [vmem:[#allocation9 + $0xe30] sm:$0xff]
    %v630 = vld [vmem:[#allocation9 + $0xe38] sm:$0xff]
    %v631 = vld [vmem:[#allocation9 + $0xe40] sm:$0xff]
    %v632 = vld [vmem:[#allocation9 + $0xe48] sm:$0xff]
    %v633 = vld [vmem:[#allocation9 + $0xe50] sm:$0xff]
    %v634 = vld [vmem:[#allocation9 + $0xe58] sm:$0xff]
    %v635 = vld [vmem:[#allocation9 + $0xe60] sm:$0xff]
    %v636 = vld [vmem:[#allocation9 + $0xe68] sm:$0xff]
    %v637 = vld [vmem:[#allocation9 + $0xe70] sm:$0xff]
    %v638 = vld [vmem:[#allocation9 + $0xe78] sm:$0xff]
    %v639 = vld [vmem:[#allocation9 + $0xe80] sm:$0xff]
    %v640 = vld [vmem:[#allocation9 + $0xe88] sm:$0xff]
    %v641 = vld [vmem:[#allocation9 + $0xe90] sm:$0xff]
    %v642 = vld [vmem:[#allocation9 + $0xe98] sm:$0xff]
    %v643 = vld [vmem:[#allocation9 + $0xea0] sm:$0xff]
    %v644 = vld [vmem:[#allocation9 + $0xea8] sm:$0xff]
    %v645 = vld [vmem:[#allocation9 + $0xeb0] sm:$0xff]
    %v646 = vld [vmem:[#allocation9 + $0xeb8] sm:$0xff]
    %v647 = vld [vmem:[#allocation9 + $0xec0] sm:$0xff]
    %v648 = vld [vmem:[#allocation9 + $0xec8] sm:$0xff]
    %v649 = vld [vmem:[#allocation9 + $0xed0] sm:$0xff]
    %v650 = vld [vmem:[#allocation9 + $0xed8] sm:$0xff]
    %v651 = vld [vmem:[#allocation9 + $0xee0] sm:$0xff]
    %v652 = vld [vmem:[#allocation9 + $0xee8] sm:$0xff]
    %v653 = vld [vmem:[#allocation9 + $0xef0] sm:$0xff]
    %v654 = vld [vmem:[#allocation9 + $0xef8] sm:$0xff]
    %v655 = vld [vmem:[#allocation9 + $0xf00] sm:$0xff]
    %v656 = vld [vmem:[#allocation9 + $0xf08] sm:$0xff]
    %v657 = vld [vmem:[#allocation9 + $0xf10] sm:$0xff]
    %v658 = vld [vmem:[#allocation9 + $0xf18] sm:$0xff]
    %v659 = vld [vmem:[#allocation9 + $0xf20] sm:$0xff]
    %v660 = vld [vmem:[#allocation9 + $0xf28] sm:$0xff]
    %v661 = vld [vmem:[#allocation9 + $0xf30] sm:$0xff]
    %v662 = vld [vmem:[#allocation9 + $0xf38] sm:$0xff]
    %v663 = vld [vmem:[#allocation9 + $0xf40] sm:$0xff]
    %v664 = vld [vmem:[#allocation9 + $0xf48] sm:$0xff]
    %v665 = vld [vmem:[#allocation9 + $0xf50] sm:$0xff]
    %v666 = vld [vmem:[#allocation9 + $0xf58] sm:$0xff]
    %v667 = vld [vmem:[#allocation9 + $0xf60] sm:$0xff]
    %v668 = vld [vmem:[#allocation9 + $0xf68] sm:$0xff]
    %v669 = vld [vmem:[#allocation9 + $0xf70] sm:$0xff]
    %v670 = vld [vmem:[#allocation9 + $0xf78] sm:$0xff]
    %v671 = vld [vmem:[#allocation9 + $0xf80] sm:$0xff]
    %v672 = vld [vmem:[#allocation9 + $0xf88] sm:$0xff]
    %v673 = vld [vmem:[#allocation9 + $0xf90] sm:$0xff]
    %v674 = vld [vmem:[#allocation9 + $0xf98] sm:$0xff]
    %v675 = vld [vmem:[#allocation9 + $0xfa0] sm:$0xff]
    %v676 = vld [vmem:[#allocation9 + $0xfa8] sm:$0xff]
    %v677 = vld [vmem:[#allocation9 + $0xfb0] sm:$0xff]
    %v678 = vld [vmem:[#allocation9 + $0xfb8] sm:$0xff]
    %v679 = vld [vmem:[#allocation9 + $0xfc0] sm:$0xff]
    %v680 = vld [vmem:[#allocation9 + $0xfc8] sm:$0xff]
    %v681 = vld [vmem:[#allocation9 + $0xfd0] sm:$0xff]
    %v682 = vld [vmem:[#allocation9 + $0xfd8] sm:$0xff]
    %v683 = vld [vmem:[#allocation9 + $0xfe0] sm:$0xff]
    %v684 = vld [vmem:[#allocation9 + $0xfe8] sm:$0xff]
    %v685 = vld [vmem:[#allocation9 + $0xff0] sm:$0xff]
    %v686 = vld [vmem:[#allocation9 + $0xff8] sm:$0xff]
    %v687 = vld [vmem:[#allocation9 + $0x1000] sm:$0xff]
    %v688 = vld [vmem:[#allocation9 + $0x1008] sm:$0xff]
    %v689 = vld [vmem:[#allocation9 + $0x1010] sm:$0xff]
    %v690 = vld [vmem:[#allocation9 + $0x1018] sm:$0xff]
    %v691 = vld [vmem:[#allocation9 + $0x1020] sm:$0xff]
    %v692 = vld [vmem:[#allocation9 + $0x1028] sm:$0xff]
    %v693 = vld [vmem:[#allocation9 + $0x1030] sm:$0xff]
    %v694 = vld [vmem:[#allocation9 + $0x1038] sm:$0xff]
    %v695 = vld [vmem:[#allocation9 + $0x1040] sm:$0xff]
    %v696 = vld [vmem:[#allocation9 + $0x1048] sm:$0xff]
    %v697 = vld [vmem:[#allocation9 + $0x1050] sm:$0xff]
    %v698 = vld [vmem:[#allocation9 + $0x1058] sm:$0xff]
    %v699 = vld [vmem:[#allocation9 + $0x1060] sm:$0xff]
    %v700 = vld [vmem:[#allocation9 + $0x1068] sm:$0xff]
    %v701 = vld [vmem:[#allocation9 + $0x1070] sm:$0xff]
    %v702 = vld [vmem:[#allocation9 + $0x1078] sm:$0xff]
    %v703 = vld [vmem:[#allocation9 + $0x1080] sm:$0xff]
    %v704 = vld [vmem:[#allocation9 + $0x1088] sm:$0xff]
    %v705 = vld [vmem:[#allocation9 + $0x1090] sm:$0xff]
    %v706 = vld [vmem:[#allocation9 + $0x1098] sm:$0xff]
    %v707 = vld [vmem:[#allocation9 + $0x10a0] sm:$0xff]
    %v708 = vld [vmem:[#allocation9 + $0x10a8] sm:$0xff]
    %v709 = vld [vmem:[#allocation9 + $0x10b0] sm:$0xff]
    %v710 = vld [vmem:[#allocation9 + $0x10b8] sm:$0xff]
    %v711 = vld [vmem:[#allocation9 + $0x10c0] sm:$0xff]
    %v712 = vld [vmem:[#allocation9 + $0x10c8] sm:$0xff]
    %v713 = vld [vmem:[#allocation9 + $0x10d0] sm:$0xff]
    %v714 = vld [vmem:[#allocation9 + $0x10d8] sm:$0xff]
    %v715 = vld [vmem:[#allocation9 + $0x10e0] sm:$0xff]
    %v716 = vld [vmem:[#allocation9 + $0x10e8] sm:$0xff]
    %v717 = vld [vmem:[#allocation9 + $0x10f0] sm:$0xff]
    %v718 = vld [vmem:[#allocation9 + $0x10f8] sm:$0xff]
    %v719 = vld [vmem:[#allocation9 + $0x1100] sm:$0xff]
    %v720 = vld [vmem:[#allocation9 + $0x1108] sm:$0xff]
    %v721 = vld [vmem:[#allocation9 + $0x1110] sm:$0xff]
    %v722 = vld [vmem:[#allocation9 + $0x1118] sm:$0xff]
    %v723 = vld [vmem:[#allocation9 + $0x1120] sm:$0xff]
    %v724 = vld [vmem:[#allocation9 + $0x1128] sm:$0xff]
    %v725 = vld [vmem:[#allocation9 + $0x1130] sm:$0xff]
    %v726 = vld [vmem:[#allocation9 + $0x1138] sm:$0xff]
    %v727 = vld [vmem:[#allocation9 + $0x1140] sm:$0xff]
    %v728 = vld [vmem:[#allocation9 + $0x1148] sm:$0xff]
    %v729 = vld [vmem:[#allocation9 + $0x1150] sm:$0xff]
    %v730 = vld [vmem:[#allocation9 + $0x1158] sm:$0xff]
    %v731 = vld [vmem:[#allocation9 + $0x1160] sm:$0xff]
    %v732 = vld [vmem:[#allocation9 + $0x1168] sm:$0xff]
    %v733 = vld [vmem:[#allocation9 + $0x1170] sm:$0xff]
    %v734 = vld [vmem:[#allocation9 + $0x1178] sm:$0xff]
    %v735 = vld [vmem:[#allocation9 + $0x1180] sm:$0xff]
    %v736 = vld [vmem:[#allocation9 + $0x1188] sm:$0xff]
    %v737 = vld [vmem:[#allocation9 + $0x1190] sm:$0xff]
    %v738 = vld [vmem:[#allocation9 + $0x1198] sm:$0xff]
    %v739 = vld [vmem:[#allocation9 + $0x11a0] sm:$0xff]
    %v740 = vld [vmem:[#allocation9 + $0x11a8] sm:$0xff]
    %v741 = vld [vmem:[#allocation9 + $0x11b0] sm:$0xff]
    %v742 = vld [vmem:[#allocation9 + $0x11b8] sm:$0xff]
    %v743 = vld [vmem:[#allocation9 + $0x11c0] sm:$0xff]
    %v744 = vld [vmem:[#allocation9 + $0x11c8] sm:$0xff]
    %v745 = vld [vmem:[#allocation9 + $0x11d0] sm:$0xff]
    %v746 = vld [vmem:[#allocation9 + $0x11d8] sm:$0xff]
    %v747 = vld [vmem:[#allocation9 + $0x11e0] sm:$0xff]
    %v748 = vld [vmem:[#allocation9 + $0x11e8] sm:$0xff]
    %v749 = vld [vmem:[#allocation9 + $0x11f0] sm:$0xff]
    %v750 = vld [vmem:[#allocation9 + $0x11f8] sm:$0xff]
    %v751 = vld [vmem:[#allocation9 + $0x1200] sm:$0xff]
    %v752 = vld [vmem:[#allocation9 + $0x1208] sm:$0xff]
    %v753 = vld [vmem:[#allocation9 + $0x1210] sm:$0xff]
    %v754 = vld [vmem:[#allocation9 + $0x1218] sm:$0xff]
    %v755 = vld [vmem:[#allocation9 + $0x1220] sm:$0xff]
    %v756 = vld [vmem:[#allocation9 + $0x1228] sm:$0xff]
    %v757 = vld [vmem:[#allocation9 + $0x1230] sm:$0xff]
    %v758 = vld [vmem:[#allocation9 + $0x1238] sm:$0xff]
    %v759 = vld [vmem:[#allocation9 + $0x1240] sm:$0xff]
    %v760 = vld [vmem:[#allocation9 + $0x1248] sm:$0xff]
    %v761 = vld [vmem:[#allocation9 + $0x1250] sm:$0xff]
    %v762 = vld [vmem:[#allocation9 + $0x1258] sm:$0xff]
    %v763 = vld [vmem:[#allocation9 + $0x1260] sm:$0xff]
    %v764 = vld [vmem:[#allocation9 + $0x1268] sm:$0xff]
    %v765 = vld [vmem:[#allocation9 + $0x1270] sm:$0xff]
    %v766 = vld [vmem:[#allocation9 + $0x1278] sm:$0xff]
    %v767 = vld [vmem:[#allocation9 + $0x1280] sm:$0xff]
    %v768 = vld [vmem:[#allocation9 + $0x1288] sm:$0xff]
    %v769 = vld [vmem:[#allocation9 + $0x1290] sm:$0xff]
    %v770 = vld [vmem:[#allocation9 + $0x1298] sm:$0xff]
    %v771 = vld [vmem:[#allocation9 + $0x12a0] sm:$0xff]
    %v772 = vld [vmem:[#allocation9 + $0x12a8] sm:$0xff]
    %v773 = vld [vmem:[#allocation9 + $0x12b0] sm:$0xff]
    %v774 = vld [vmem:[#allocation9 + $0x12b8] sm:$0xff]
    %v775 = vld [vmem:[#allocation9 + $0x12c0] sm:$0xff]
    %v776 = vld [vmem:[#allocation9 + $0x12c8] sm:$0xff]
    %v777 = vld [vmem:[#allocation9 + $0x12d0] sm:$0xff]
    %v778 = vld [vmem:[#allocation9 + $0x12d8] sm:$0xff]
    %v779 = vld [vmem:[#allocation9 + $0x12e0] sm:$0xff]
    %v780 = vld [vmem:[#allocation9 + $0x12e8] sm:$0xff]
    %v781 = vld [vmem:[#allocation9 + $0x12f0] sm:$0xff]
    %v782 = vld [vmem:[#allocation9 + $0x12f8] sm:$0xff]
    %v783 = vld [vmem:[#allocation9 + $0x1300] sm:$0xff]
    %v784 = vld [vmem:[#allocation9 + $0x1308] sm:$0xff]
    %v785 = vld [vmem:[#allocation9 + $0x1310] sm:$0xff]
    %v786 = vld [vmem:[#allocation9 + $0x1318] sm:$0xff]
    %v787 = vld [vmem:[#allocation9 + $0x1320] sm:$0xff]
    %v788 = vld [vmem:[#allocation9 + $0x1328] sm:$0xff]
    %v789 = vld [vmem:[#allocation9 + $0x1330] sm:$0xff]
    %v790 = vld [vmem:[#allocation9 + $0x1338] sm:$0xff]
    %v791 = vld [vmem:[#allocation9 + $0x1340] sm:$0xff]
    %v792 = vld [vmem:[#allocation9 + $0x1348] sm:$0xff]
    %v793 = vld [vmem:[#allocation9 + $0x1350] sm:$0xff]
    %v794 = vld [vmem:[#allocation9 + $0x1358] sm:$0xff]
    %v795 = vld [vmem:[#allocation9 + $0x1360] sm:$0xff]
    %v796 = vld [vmem:[#allocation9 + $0x1368] sm:$0xff]
    %v797 = vld [vmem:[#allocation9 + $0x1370] sm:$0xff]
    %v798 = vld [vmem:[#allocation9 + $0x1378] sm:$0xff]
    %v799 = vld [vmem:[#allocation9 + $0x1380] sm:$0xff]
    %v800 = vld [vmem:[#allocation9 + $0x1388] sm:$0xff]
    %v801 = vld [vmem:[#allocation9 + $0x1390] sm:$0xff]
    %v802 = vld [vmem:[#allocation9 + $0x1398] sm:$0xff]
    %v803 = vld [vmem:[#allocation9 + $0x13a0] sm:$0xff]
    %v804 = vld [vmem:[#allocation9 + $0x13a8] sm:$0xff]
    %v805 = vld [vmem:[#allocation9 + $0x13b0] sm:$0xff]
    %v806 = vld [vmem:[#allocation9 + $0x13b8] sm:$0xff]
    %v807 = vld [vmem:[#allocation9 + $0x13c0] sm:$0xff]
    %v808 = vld [vmem:[#allocation9 + $0x13c8] sm:$0xff]
    %v809 = vld [vmem:[#allocation9 + $0x13d0] sm:$0xff]
    %v810 = vld [vmem:[#allocation9 + $0x13d8] sm:$0xff]
    %v811 = vld [vmem:[#allocation9 + $0x13e0] sm:$0xff]
    %v812 = vld [vmem:[#allocation9 + $0x13e8] sm:$0xff]
    %v813 = vld [vmem:[#allocation9 + $0x13f0] sm:$0xff]
    %v814 = vld [vmem:[#allocation9 + $0x13f8] sm:$0xff]
    %v815 = vld [vmem:[#allocation9 + $0x1400] sm:$0xff]
    %v816 = vld [vmem:[#allocation9 + $0x1408] sm:$0xff]
    %v817 = vld [vmem:[#allocation9 + $0x1410] sm:$0xff]
    %v818 = vld [vmem:[#allocation9 + $0x1418] sm:$0xff]
    %v819 = vld [vmem:[#allocation9 + $0x1420] sm:$0xff]
    %v820 = vld [vmem:[#allocation9 + $0x1428] sm:$0xff]
    %v821 = vld [vmem:[#allocation9 + $0x1430] sm:$0xff]
    %v822 = vld [vmem:[#allocation9 + $0x1438] sm:$0xff]
    %v823 = vld [vmem:[#allocation9 + $0x1440] sm:$0xff]
    %v824 = vld [vmem:[#allocation9 + $0x1448] sm:$0xff]
    %v825 = vld [vmem:[#allocation9 + $0x1450] sm:$0xff]
    %v826 = vld [vmem:[#allocation9 + $0x1458] sm:$0xff]
    %v827 = vld [vmem:[#allocation9 + $0x1460] sm:$0xff]
    %v828 = vld [vmem:[#allocation9 + $0x1468] sm:$0xff]
    %v829 = vld [vmem:[#allocation9 + $0x1470] sm:$0xff]
    %v830 = vld [vmem:[#allocation9 + $0x1478] sm:$0xff]
    %v831 = vld [vmem:[#allocation9 + $0x1480] sm:$0xff]
    %v832 = vld [vmem:[#allocation9 + $0x1488] sm:$0xff]
    %v833 = vld [vmem:[#allocation9 + $0x1490] sm:$0xff]
    %v834 = vld [vmem:[#allocation9 + $0x1498] sm:$0xff]
    %v835 = vld [vmem:[#allocation9 + $0x14a0] sm:$0xff]
    %v836 = vld [vmem:[#allocation9 + $0x14a8] sm:$0xff]
    %v837 = vld [vmem:[#allocation9 + $0x14b0] sm:$0xff]
    %v838 = vld [vmem:[#allocation9 + $0x14b8] sm:$0xff]
    %v839 = vld [vmem:[#allocation9 + $0x14c0] sm:$0xff]
    %v840 = vld [vmem:[#allocation9 + $0x14c8] sm:$0xff]
    %v841 = vld [vmem:[#allocation9 + $0x14d0] sm:$0xff]
    %v842 = vld [vmem:[#allocation9 + $0x14d8] sm:$0xff]
    %v843 = vld [vmem:[#allocation9 + $0x14e0] sm:$0xff]
    %v844 = vld [vmem:[#allocation9 + $0x14e8] sm:$0xff]
    %v845 = vld [vmem:[#allocation9 + $0x14f0] sm:$0xff]
    %v846 = vld [vmem:[#allocation9 + $0x14f8] sm:$0xff]
    %v847 = vld [vmem:[#allocation9 + $0x1500] sm:$0xff]
    %v848 = vld [vmem:[#allocation9 + $0x1508] sm:$0xff]
    %v849 = vld [vmem:[#allocation9 + $0x1510] sm:$0xff]
    %v850 = vld [vmem:[#allocation9 + $0x1518] sm:$0xff]
    %v851 = vld [vmem:[#allocation9 + $0x1520] sm:$0xff]
    %v852 = vld [vmem:[#allocation9 + $0x1528] sm:$0xff]
    %v853 = vld [vmem:[#allocation9 + $0x1530] sm:$0xff]
    %v854 = vld [vmem:[#allocation9 + $0x1538] sm:$0xff]
    %v855 = vld [vmem:[#allocation9 + $0x1540] sm:$0xff]
    %v856 = vld [vmem:[#allocation9 + $0x1548] sm:$0xff]
    %v857 = vld [vmem:[#allocation9 + $0x1550] sm:$0xff]
    %v858 = vld [vmem:[#allocation9 + $0x1558] sm:$0xff]
    %v859 = vld [vmem:[#allocation9 + $0x1560] sm:$0xff]
    %v860 = vld [vmem:[#allocation9 + $0x1568] sm:$0xff]
    %v861 = vld [vmem:[#allocation9 + $0x1570] sm:$0xff]
    %v862 = vld [vmem:[#allocation9 + $0x1578] sm:$0xff]
    %v863 = vld [vmem:[#allocation9 + $0x1580] sm:$0xff]
    %v864 = vld [vmem:[#allocation9 + $0x1588] sm:$0xff]
    %v865 = vld [vmem:[#allocation9 + $0x1590] sm:$0xff]
    %v866 = vld [vmem:[#allocation9 + $0x1598] sm:$0xff]
    %v867 = vld [vmem:[#allocation9 + $0x15a0] sm:$0xff]
    %v868 = vld [vmem:[#allocation9 + $0x15a8] sm:$0xff]
    %v869 = vld [vmem:[#allocation9 + $0x15b0] sm:$0xff]
    %v870 = vld [vmem:[#allocation9 + $0x15b8] sm:$0xff]
    %v871 = vld [vmem:[#allocation9 + $0x15c0] sm:$0xff]
    %v872 = vld [vmem:[#allocation9 + $0x15c8] sm:$0xff]
    %v873 = vld [vmem:[#allocation9 + $0x15d0] sm:$0xff]
    %v874 = vld [vmem:[#allocation9 + $0x15d8] sm:$0xff]
    %v875 = vld [vmem:[#allocation9 + $0x15e0] sm:$0xff]
    %v876 = vld [vmem:[#allocation9 + $0x15e8] sm:$0xff]
    %v877 = vld [vmem:[#allocation9 + $0x15f0] sm:$0xff]
    %v878 = vld [vmem:[#allocation9 + $0x15f8] sm:$0xff]
    %v879 = vld [vmem:[#allocation9 + $0x1600] sm:$0xff]
    %v880 = vld [vmem:[#allocation9 + $0x1608] sm:$0xff]
    %v881 = vld [vmem:[#allocation9 + $0x1610] sm:$0xff]
    %v882 = vld [vmem:[#allocation9 + $0x1618] sm:$0xff]
    %v883 = vld [vmem:[#allocation9 + $0x1620] sm:$0xff]
    %v884 = vld [vmem:[#allocation9 + $0x1628] sm:$0xff]
    %v885 = vld [vmem:[#allocation9 + $0x1630] sm:$0xff]
    %v886 = vld [vmem:[#allocation9 + $0x1638] sm:$0xff]
    %v887 = vld [vmem:[#allocation9 + $0x1640] sm:$0xff]
    %v888 = vld [vmem:[#allocation9 + $0x1648] sm:$0xff]
    %v889 = vld [vmem:[#allocation9 + $0x1650] sm:$0xff]
    %v890 = vld [vmem:[#allocation9 + $0x1658] sm:$0xff]
    %v891 = vld [vmem:[#allocation9 + $0x1660] sm:$0xff]
    %v892 = vld [vmem:[#allocation9 + $0x1668] sm:$0xff]
    %v893 = vld [vmem:[#allocation9 + $0x1670] sm:$0xff]
    %v894 = vld [vmem:[#allocation9 + $0x1678] sm:$0xff]
    %v895 = vld [vmem:[#allocation9 + $0x1680] sm:$0xff]
    %v896 = vld [vmem:[#allocation9 + $0x1688] sm:$0xff]
    %v897 = vld [vmem:[#allocation9 + $0x1690] sm:$0xff]
    %v898 = vld [vmem:[#allocation9 + $0x1698] sm:$0xff]
    %v899 = vld [vmem:[#allocation9 + $0x16a0] sm:$0xff]
    %v900 = vld [vmem:[#allocation9 + $0x16a8] sm:$0xff]
    %v901 = vld [vmem:[#allocation9 + $0x16b0] sm:$0xff]
    %v902 = vld [vmem:[#allocation9 + $0x16b8] sm:$0xff]
    %v903 = vld [vmem:[#allocation9 + $0x16c0] sm:$0xff]
    %v904 = vld [vmem:[#allocation9 + $0x16c8] sm:$0xff]
    %v905 = vld [vmem:[#allocation9 + $0x16d0] sm:$0xff]
    %v906 = vld [vmem:[#allocation9 + $0x16d8] sm:$0xff]
    %v907 = vld [vmem:[#allocation9 + $0x16e0] sm:$0xff]
    %v908 = vld [vmem:[#allocation9 + $0x16e8] sm:$0xff]
    %v909 = vld [vmem:[#allocation9 + $0x16f0] sm:$0xff]
    %v910 = vld [vmem:[#allocation9 + $0x16f8] sm:$0xff]
    %v911 = vld [vmem:[#allocation9 + $0x1700] sm:$0xff]
    %v912 = vld [vmem:[#allocation9 + $0x1708] sm:$0xff]
    %v913 = vld [vmem:[#allocation9 + $0x1710] sm:$0xff]
    %v914 = vld [vmem:[#allocation9 + $0x1718] sm:$0xff]
    %v915 = vld [vmem:[#allocation9 + $0x1720] sm:$0xff]
    %v916 = vld [vmem:[#allocation9 + $0x1728] sm:$0xff]
    %v917 = vld [vmem:[#allocation9 + $0x1730] sm:$0xff]
    %v918 = vld [vmem:[#allocation9 + $0x1738] sm:$0xff]
    %v919 = vld [vmem:[#allocation9 + $0x1740] sm:$0xff]
    %v920 = vld [vmem:[#allocation9 + $0x1748] sm:$0xff]
    %v921 = vld [vmem:[#allocation9 + $0x1750] sm:$0xff]
    %v922 = vld [vmem:[#allocation9 + $0x1758] sm:$0xff]
    %v923 = vld [vmem:[#allocation9 + $0x1760] sm:$0xff]
    %v924 = vld [vmem:[#allocation9 + $0x1768] sm:$0xff]
    %v925 = vld [vmem:[#allocation9 + $0x1770] sm:$0xff]
    %v926 = vld [vmem:[#allocation9 + $0x1778] sm:$0xff]
    %v927 = vld [vmem:[#allocation9 + $0x1780] sm:$0xff]
    %v928 = vld [vmem:[#allocation9 + $0x1788] sm:$0xff]
    %v929 = vld [vmem:[#allocation9 + $0x1790] sm:$0xff]
    %v930 = vld [vmem:[#allocation9 + $0x1798] sm:$0xff]
    %v931 = vld [vmem:[#allocation9 + $0x17a0] sm:$0xff]
    %v932 = vld [vmem:[#allocation9 + $0x17a8] sm:$0xff]
    %v933 = vld [vmem:[#allocation9 + $0x17b0] sm:$0xff]
    %v934 = vld [vmem:[#allocation9 + $0x17b8] sm:$0xff]
    %v935 = vld [vmem:[#allocation9 + $0x17c0] sm:$0xff]
    %v936 = vld [vmem:[#allocation9 + $0x17c8] sm:$0xff]
    %v937 = vld [vmem:[#allocation9 + $0x17d0] sm:$0xff]
    %v938 = vld [vmem:[#allocation9 + $0x17d8] sm:$0xff]
    %v939 = vld [vmem:[#allocation9 + $0x17e0] sm:$0xff]
    %v940 = vld [vmem:[#allocation9 + $0x17e8] sm:$0xff]
    %v941 = vld [vmem:[#allocation9 + $0x17f0] sm:$0xff]
    %v942 = vld [vmem:[#allocation9 + $0x17f8] sm:$0xff]
    %v943 = vld [vmem:[#allocation9 + $0x1800] sm:$0xff]
    %v944 = vld [vmem:[#allocation9 + $0x1808] sm:$0xff]
    %v945 = vld [vmem:[#allocation9 + $0x1810] sm:$0xff]
    %v946 = vld [vmem:[#allocation9 + $0x1818] sm:$0xff]
    %v947 = vld [vmem:[#allocation9 + $0x1820] sm:$0xff]
    %v948 = vld [vmem:[#allocation9 + $0x1828] sm:$0xff]
    %v949 = vld [vmem:[#allocation9 + $0x1830] sm:$0xff]
    %v950 = vld [vmem:[#allocation9 + $0x1838] sm:$0xff]
    %v951 = vld [vmem:[#allocation9 + $0x1840] sm:$0xff]
    %v952 = vld [vmem:[#allocation9 + $0x1848] sm:$0xff]
    %v953 = vld [vmem:[#allocation9 + $0x1850] sm:$0xff]
    %v954 = vld [vmem:[#allocation9 + $0x1858] sm:$0xff]
    %v955 = vld [vmem:[#allocation9 + $0x1860] sm:$0xff]
    %v956 = vld [vmem:[#allocation9 + $0x1868] sm:$0xff]
    %v957 = vld [vmem:[#allocation9 + $0x1870] sm:$0xff]
    %v958 = vld [vmem:[#allocation9 + $0x1878] sm:$0xff]
    %v959 = vld [vmem:[#allocation9 + $0x1880] sm:$0xff]
    %v960 = vld [vmem:[#allocation9 + $0x1888] sm:$0xff]
    %v961 = vld [vmem:[#allocation9 + $0x1890] sm:$0xff]
    %v962 = vld [vmem:[#allocation9 + $0x1898] sm:$0xff]
    %v963 = vld [vmem:[#allocation9 + $0x18a0] sm:$0xff]
    %v964 = vld [vmem:[#allocation9 + $0x18a8] sm:$0xff]
    %v965 = vld [vmem:[#allocation9 + $0x18b0] sm:$0xff]
    %v966 = vld [vmem:[#allocation9 + $0x18b8] sm:$0xff]
    %v967 = vld [vmem:[#allocation9 + $0x18c0] sm:$0xff]
    %v968 = vld [vmem:[#allocation9 + $0x18c8] sm:$0xff]
    %v969 = vld [vmem:[#allocation9 + $0x18d0] sm:$0xff]
    %v970 = vld [vmem:[#allocation9 + $0x18d8] sm:$0xff]
    %v971 = vld [vmem:[#allocation9 + $0x18e0] sm:$0xff]
    %v972 = vld [vmem:[#allocation9 + $0x18e8] sm:$0xff]
    %v973 = vld [vmem:[#allocation9 + $0x18f0] sm:$0xff]
    %v974 = vld [vmem:[#allocation9 + $0x18f8] sm:$0xff]
    %v975 = vld [vmem:[#allocation9 + $0x1900] sm:$0xff]
    %v976 = vld [vmem:[#allocation9 + $0x1908] sm:$0xff]
    %v977 = vld [vmem:[#allocation9 + $0x1910] sm:$0xff]
    %v978 = vld [vmem:[#allocation9 + $0x1918] sm:$0xff]
    %v979 = vld [vmem:[#allocation9 + $0x1920] sm:$0xff]
    %v980 = vld [vmem:[#allocation9 + $0x1928] sm:$0xff]
    %v981 = vld [vmem:[#allocation9 + $0x1930] sm:$0xff]
    %v982 = vld [vmem:[#allocation9 + $0x1938] sm:$0xff]
    %v983 = vld [vmem:[#allocation9 + $0x1940] sm:$0xff]
    %v984 = vld [vmem:[#allocation9 + $0x1948] sm:$0xff]
    %v985 = vld [vmem:[#allocation9 + $0x1950] sm:$0xff]
    %v986 = vld [vmem:[#allocation9 + $0x1958] sm:$0xff]
    %v987 = vld [vmem:[#allocation9 + $0x1960] sm:$0xff]
    %v988 = vld [vmem:[#allocation9 + $0x1968] sm:$0xff]
    %v989 = vld [vmem:[#allocation9 + $0x1970] sm:$0xff]
    %v990 = vld [vmem:[#allocation9 + $0x1978] sm:$0xff]
    %v991 = vld [vmem:[#allocation9 + $0x1980] sm:$0xff]
    %v992 = vld [vmem:[#allocation9 + $0x1988] sm:$0xff]
    %v993 = vld [vmem:[#allocation9 + $0x1990] sm:$0xff]
    %v994 = vld [vmem:[#allocation9 + $0x1998] sm:$0xff]
    %v995 = vld [vmem:[#allocation9 + $0x19a0] sm:$0xff]
    %v996 = vld [vmem:[#allocation9 + $0x19a8] sm:$0xff]
    %v997 = vld [vmem:[#allocation9 + $0x19b0] sm:$0xff]
    %v998 = vld [vmem:[#allocation9 + $0x19b8] sm:$0xff]
    %v999 = vld [vmem:[#allocation9 + $0x19c0] sm:$0xff]
    %v1000 = vld [vmem:[#allocation9 + $0x19c8] sm:$0xff]
    %v1001 = vld [vmem:[#allocation9 + $0x19d0] sm:$0xff]
    %v1002 = vld [vmem:[#allocation9 + $0x19d8] sm:$0xff]
    %v1003 = vld [vmem:[#allocation9 + $0x19e0] sm:$0xff]
    %v1004 = vld [vmem:[#allocation9 + $0x19e8] sm:$0xff]
    %v1005 = vld [vmem:[#allocation9 + $0x19f0] sm:$0xff]
    %v1006 = vld [vmem:[#allocation9 + $0x19f8] sm:$0xff]
    %v1007 = vld [vmem:[#allocation9 + $0x1a00] sm:$0xff]
    %v1008 = vld [vmem:[#allocation9 + $0x1a08] sm:$0xff]
    %v1009 = vld [vmem:[#allocation9 + $0x1a10] sm:$0xff]
    %v1010 = vld [vmem:[#allocation9 + $0x1a18] sm:$0xff]
    %v1011 = vld [vmem:[#allocation9 + $0x1a20] sm:$0xff]
    %v1012 = vld [vmem:[#allocation9 + $0x1a28] sm:$0xff]
    %v1013 = vld [vmem:[#allocation9 + $0x1a30] sm:$0xff]
    %v1014 = vld [vmem:[#allocation9 + $0x1a38] sm:$0xff]
    %v1015 = vld [vmem:[#allocation9 + $0x1a40] sm:$0xff]
    %v1016 = vld [vmem:[#allocation9 + $0x1a48] sm:$0xff]
    %v1017 = vld [vmem:[#allocation9 + $0x1a50] sm:$0xff]
    %v1018 = vld [vmem:[#allocation9 + $0x1a58] sm:$0xff]
    %v1019 = vld [vmem:[#allocation9 + $0x1a60] sm:$0xff]
    %v1020 = vld [vmem:[#allocation9 + $0x1a68] sm:$0xff]
    %v1021 = vld [vmem:[#allocation9 + $0x1a70] sm:$0xff]
    %v1022 = vld [vmem:[#allocation9 + $0x1a78] sm:$0xff]
    %v1023 = vld [vmem:[#allocation9 + $0x1a80] sm:$0xff]
    %v1024 = vld [vmem:[#allocation9 + $0x1a88] sm:$0xff]
    %v1025 = vld [vmem:[#allocation9 + $0x1a90] sm:$0xff]
    %v1026 = vld [vmem:[#allocation9 + $0x1a98] sm:$0xff]
    %v1027 = vld [vmem:[#allocation9 + $0x1aa0] sm:$0xff]
    %v1028 = vld [vmem:[#allocation9 + $0x1aa8] sm:$0xff]
    %v1029 = vld [vmem:[#allocation9 + $0x1ab0] sm:$0xff]
    %v1030 = vld [vmem:[#allocation9 + $0x1ab8] sm:$0xff]
    %v1031 = vld [vmem:[#allocation9 + $0x1ac0] sm:$0xff]
    %v1032 = vld [vmem:[#allocation9 + $0x1ac8] sm:$0xff]
    %v1033 = vld [vmem:[#allocation9 + $0x1ad0] sm:$0xff]
    %v1034 = vld [vmem:[#allocation9 + $0x1ad8] sm:$0xff]
    %v1035 = vld [vmem:[#allocation9 + $0x1ae0] sm:$0xff]
    %v1036 = vld [vmem:[#allocation9 + $0x1ae8] sm:$0xff]
    %v1037 = vld [vmem:[#allocation9 + $0x1af0] sm:$0xff]
    %v1038 = vld [vmem:[#allocation9 + $0x1af8] sm:$0xff]
    %v1039 = vld [vmem:[#allocation9 + $0x1b00] sm:$0xff]
    %v1040 = vld [vmem:[#allocation9 + $0x1b08] sm:$0xff]
    %v1041 = vld [vmem:[#allocation9 + $0x1b10] sm:$0xff]
    %v1042 = vld [vmem:[#allocation9 + $0x1b18] sm:$0xff]
    %v1043 = vld [vmem:[#allocation9 + $0x1b20] sm:$0xff]
    %v1044 = vld [vmem:[#allocation9 + $0x1b28] sm:$0xff]
    %v1045 = vld [vmem:[#allocation9 + $0x1b30] sm:$0xff]
    %v1046 = vld [vmem:[#allocation9 + $0x1b38] sm:$0xff]
    %v1047 = vld [vmem:[#allocation9 + $0x1b40] sm:$0xff]
    %v1048 = vld [vmem:[#allocation9 + $0x1b48] sm:$0xff]
    %v1049 = vld [vmem:[#allocation9 + $0x1b50] sm:$0xff]
    %v1050 = vld [vmem:[#allocation9 + $0x1b58] sm:$0xff]
    %v1051 = vld [vmem:[#allocation9 + $0x1b60] sm:$0xff]
    %v1052 = vld [vmem:[#allocation9 + $0x1b68] sm:$0xff]
    %v1053 = vld [vmem:[#allocation9 + $0x1b70] sm:$0xff]
    %v1054 = vld [vmem:[#allocation9 + $0x1b78] sm:$0xff]
    %v1055 = vld [vmem:[#allocation9 + $0x1b80] sm:$0xff]
    %v1056 = vld [vmem:[#allocation9 + $0x1b88] sm:$0xff]
    %v1057 = vld [vmem:[#allocation9 + $0x1b90] sm:$0xff]
    %v1058 = vld [vmem:[#allocation9 + $0x1b98] sm:$0xff]
    %v1059 = vld [vmem:[#allocation9 + $0x1ba0] sm:$0xff]
    %v1060 = vld [vmem:[#allocation9 + $0x1ba8] sm:$0xff]
    %v1061 = vld [vmem:[#allocation9 + $0x1bb0] sm:$0xff]
    %v1062 = vld [vmem:[#allocation9 + $0x1bb8] sm:$0xff]
    %v1063 = vld [vmem:[#allocation9 + $0x1bc0] sm:$0xff]
    %v1064 = vld [vmem:[#allocation9 + $0x1bc8] sm:$0xff]
    %v1065 = vld [vmem:[#allocation9 + $0x1bd0] sm:$0xff]
    %v1066 = vld [vmem:[#allocation9 + $0x1bd8] sm:$0xff]
    %v1067 = vld [vmem:[#allocation9 + $0x1be0] sm:$0xff]
    %v1068 = vld [vmem:[#allocation9 + $0x1be8] sm:$0xff]
    %v1069 = vld [vmem:[#allocation9 + $0x1bf0] sm:$0xff]
    %v1070 = vld [vmem:[#allocation9 + $0x1bf8] sm:$0xff]
    %v1071 = vld [vmem:[#allocation11] sm:$0xff]
    %v1073 = vlaneseq
    %v1074 = vshrl.u32 %v1073, 7
    %v1075 = vsub.s32 0, %v1074
    %v1076 = vrot.slane %v1071, %v1075
    %v1077 = vlaneseq
    %v1078 = vshrl.u32 %v1077, 7
    %v1079 = vsub.s32 1, %v1078
    %v1080 = vrot.slane %v1071, %v1079
    %v1081 = vlaneseq
    %v1082 = vshrl.u32 %v1081, 7
    %v1083 = vsub.s32 2, %v1082
    %v1084 = vrot.slane %v1071, %v1083
    %v1085 = vlaneseq
    %v1086 = vshrl.u32 %v1085, 7
    %v1087 = vsub.s32 3, %v1086
    %v1088 = vrot.slane %v1071, %v1087
    %v1089 = vlaneseq
    %v1090 = vshrl.u32 %v1089, 7
    %v1091 = vsub.s32 4, %v1090
    %v1092 = vrot.slane %v1071, %v1091
    %v1093 = vlaneseq
    %v1094 = vshrl.u32 %v1093, 7
    %v1095 = vsub.s32 5, %v1094
    %v1096 = vrot.slane %v1071, %v1095
    %v1097 = vlaneseq
    %v1098 = vshrl.u32 %v1097, 7
    %v1099 = vsub.s32 6, %v1098
    %v1100 = vrot.slane %v1071, %v1099
    %v1101 = vlaneseq
    %v1102 = vshrl.u32 %v1101, 7
    %v1103 = vsub.s32 7, %v1102
    %v1104 = vrot.slane %v1071, %v1103
    %v1113 = vld [vmem:[#allocation12] sm:$0x3]
    %v1115 = vlaneseq
    %v1116 = vshrl.u32 %v1115, 7
    %v1117 = vsub.s32 0, %v1116
    %v1118 = vrot.slane %v1113, %v1117
    %v1119 = vlaneseq
    %v1120 = vshrl.u32 %v1119, 7
    %v1121 = vsub.s32 1, %v1120
    %v1122 = vrot.slane %v1113, %v1121
    %v1125 = vld [vmem:[%s0] sm:$0x3]
    %v1126 = vld [vmem:[%s0 + $0x2] sm:$0x3]
    %v1127 = vld [vmem:[%s0 + $0x4] sm:$0x3]
    %v1128 = vld [vmem:[%s0 + $0x6] sm:$0x3]
    %v1129 = vld [vmem:[%s0 + $0x8] sm:$0x3]
    %v1130 = vld [vmem:[%s0 + $0xa] sm:$0x3]
    %v1131 = vld [vmem:[%s0 + $0xc] sm:$0x3]
    %v1132 = vld [vmem:[%s0 + $0xe] sm:$0x3]
    %s1133 = scalar_lea.vmem %s0, 16
    %v1134 = vld [vmem:[%s1133] sm:$0x3]
    %v1135 = vld [vmem:[%s1133 + $0x2] sm:$0x3]
    %v1136 = vld [vmem:[%s1133 + $0x4] sm:$0x3]
    %v1137 = vld [vmem:[%s1133 + $0x6] sm:$0x3]
    %v1138 = vld [vmem:[%s1133 + $0x8] sm:$0x3]
    %v1139 = vld [vmem:[%s1133 + $0xa] sm:$0x3]
    %v1140 = vld [vmem:[%s1133 + $0xc] sm:$0x3]
    %v1141 = vld [vmem:[%s1133 + $0xe] sm:$0x3]
    %1143 = vset.pattern.permute.xlu0 0
    %1144 = vperm.xlu0 %1143, %v1125
    %v1145 = vpop.permute.xlu0 %1144
    %1148 = vset.pattern.permute.xlu0 0
    %1149 = vperm.xlu0 %1148, %v1126
    %v1150 = vpop.permute.xlu0 %1149
    %1153 = vset.pattern.permute.xlu0 0
    %1154 = vperm.xlu0 %1153, %v1127
    %v1155 = vpop.permute.xlu0 %1154
    %1158 = vset.pattern.permute.xlu0 0
    %1159 = vperm.xlu0 %1158, %v1128
    %v1160 = vpop.permute.xlu0 %1159
    %1163 = vset.pattern.permute.xlu0 0
    %1164 = vperm.xlu0 %1163, %v1129
    %v1165 = vpop.permute.xlu0 %1164
    %1168 = vset.pattern.permute.xlu0 0
    %1169 = vperm.xlu0 %1168, %v1130
    %v1170 = vpop.permute.xlu0 %1169
    %1173 = vset.pattern.permute.xlu0 0
    %1174 = vperm.xlu0 %1173, %v1131
    %v1175 = vpop.permute.xlu0 %1174
    %1178 = vset.pattern.permute.xlu0 0
    %1179 = vperm.xlu0 %1178, %v1132
    %v1180 = vpop.permute.xlu0 %1179
    %v1184 = vlaneseq
    %v1185 = vshrl.u32 %v1184, 7
    %v1186 = vsub.s32 0, %v1185
    %v1187 = vrot.slane %v160, %v1186
    %v1188 = vlaneseq
    %v1189 = vshrl.u32 %v1188, 7
    %v1190 = vsub.s32 2, %v1189
    %v1191 = vrot.slane %v160, %v1190
    %v1192 = vlaneseq
    %v1193 = vshrl.u32 %v1192, 7
    %v1194 = vsub.s32 4, %v1193
    %v1195 = vrot.slane %v160, %v1194
    %v1196 = vlaneseq
    %v1197 = vshrl.u32 %v1196, 7
    %v1198 = vsub.s32 6, %v1197
    %v1199 = vrot.slane %v160, %v1198
    %v1200 = vlaneseq
    %v1201 = vshrl.u32 %v1200, 7
    %v1202 = vsub.s32 0, %v1201
    %v1203 = vrot.slane %v161, %v1202
    %v1204 = vlaneseq
    %v1205 = vshrl.u32 %v1204, 7
    %v1206 = vsub.s32 2, %v1205
    %v1207 = vrot.slane %v161, %v1206
    %v1214 = vlaneseq
    %v1215 = vshrl.u32 %v1214, 7
    %v1216 = vsub.s32 0, %v1215
    %v1217 = vrot.slane %v1187, %v1216
    %v1218 = vlaneseq
    %v1219 = vshrl.u32 %v1218, 7
    %v1220 = vsub.s32 0, %v1219
    %v1221 = vrot.slane %v1191, %v1220
    %v1222 = vlaneseq
    %v1223 = vshrl.u32 %v1222, 7
    %v1224 = vsub.s32 0, %v1223
    %v1225 = vrot.slane %v1195, %v1224
    %v1226 = vlaneseq
    %v1227 = vshrl.u32 %v1226, 7
    %v1228 = vsub.s32 0, %v1227
    %v1229 = vrot.slane %v1199, %v1228
    %v1230 = vlaneseq
    %v1231 = vshrl.u32 %v1230, 7
    %v1232 = vsub.s32 0, %v1231
    %v1233 = vrot.slane %v1203, %v1232
    %v1234 = vlaneseq
    %v1235 = vshrl.u32 %v1234, 7
    %v1236 = vsub.s32 0, %v1235
    %v1237 = vrot.slane %v1207, %v1236
    %v1238 = vmul.f32 %v1145, %v1217
    %v1239 = vmul.f32 %v1145, %v1221
    %v1240 = vmul.f32 %v1145, %v1225
    %v1241 = vmul.f32 %v1145, %v1229
    %v1242 = vmul.f32 %v1145, %v1233
    %v1243 = vmul.f32 %v1145, %v1237
    %v1244 = vmul.f32 %v1150, %v1217
    %v1245 = vmul.f32 %v1150, %v1221
    %v1246 = vmul.f32 %v1150, %v1225
    %v1247 = vmul.f32 %v1150, %v1229
    %v1248 = vmul.f32 %v1150, %v1233
    %v1249 = vmul.f32 %v1150, %v1237
    %v1250 = vmul.f32 %v1155, %v1217
    %v1251 = vmul.f32 %v1155, %v1221
    %v1252 = vmul.f32 %v1155, %v1225
    %v1253 = vmul.f32 %v1155, %v1229
    %v1254 = vmul.f32 %v1155, %v1233
    %v1255 = vmul.f32 %v1155, %v1237
    %v1256 = vmul.f32 %v1160, %v1217
    %v1257 = vmul.f32 %v1160, %v1221
    %v1258 = vmul.f32 %v1160, %v1225
    %v1259 = vmul.f32 %v1160, %v1229
    %v1260 = vmul.f32 %v1160, %v1233
    %v1261 = vmul.f32 %v1160, %v1237
    %v1262 = vmul.f32 %v1165, %v1217
    %v1263 = vmul.f32 %v1165, %v1221
    %v1264 = vmul.f32 %v1165, %v1225
    %v1265 = vmul.f32 %v1165, %v1229
    %v1266 = vmul.f32 %v1165, %v1233
    %v1267 = vmul.f32 %v1165, %v1237
    %v1268 = vmul.f32 %v1170, %v1217
    %v1269 = vmul.f32 %v1170, %v1221
    %v1270 = vmul.f32 %v1170, %v1225
    %v1271 = vmul.f32 %v1170, %v1229
    %v1272 = vmul.f32 %v1170, %v1233
    %v1273 = vmul.f32 %v1170, %v1237
    %v1274 = vmul.f32 %v1175, %v1217
    %v1275 = vmul.f32 %v1175, %v1221
    %v1276 = vmul.f32 %v1175, %v1225
    %v1277 = vmul.f32 %v1175, %v1229
    %v1278 = vmul.f32 %v1175, %v1233
    %v1279 = vmul.f32 %v1175, %v1237
    %v1280 = vmul.f32 %v1180, %v1217
    %v1281 = vmul.f32 %v1180, %v1221
    %v1282 = vmul.f32 %v1180, %v1225
    %v1283 = vmul.f32 %v1180, %v1229
    %v1284 = vmul.f32 %v1180, %v1233
    %v1285 = vmul.f32 %v1180, %v1237
    %1287 = vset.pattern.permute.xlu0 0
    %1288 = vperm.xlu0 %1287, %v1134
    %v1289 = vpop.permute.xlu0 %1288
    %1292 = vset.pattern.permute.xlu0 0
    %1293 = vperm.xlu0 %1292, %v1135
    %v1294 = vpop.permute.xlu0 %1293
    %1297 = vset.pattern.permute.xlu0 0
    %1298 = vperm.xlu0 %1297, %v1136
    %v1299 = vpop.permute.xlu0 %1298
    %1302 = vset.pattern.permute.xlu0 0
    %1303 = vperm.xlu0 %1302, %v1137
    %v1304 = vpop.permute.xlu0 %1303
    %1307 = vset.pattern.permute.xlu0 0
    %1308 = vperm.xlu0 %1307, %v1138
    %v1309 = vpop.permute.xlu0 %1308
    %1312 = vset.pattern.permute.xlu0 0
    %1313 = vperm.xlu0 %1312, %v1139
    %v1314 = vpop.permute.xlu0 %1313
    %1317 = vset.pattern.permute.xlu0 0
    %1318 = vperm.xlu0 %1317, %v1140
    %v1319 = vpop.permute.xlu0 %1318
    %1322 = vset.pattern.permute.xlu0 0
    %1323 = vperm.xlu0 %1322, %v1141
    %v1324 = vpop.permute.xlu0 %1323
    %v1326 = vlaneseq
    %v1327 = vshrl.u32 %v1326, 7
    %v1328 = vsub.s32 1, %v1327
    %v1329 = vrot.slane %v160, %v1328
    %v1330 = vlaneseq
    %v1331 = vshrl.u32 %v1330, 7
    %v1332 = vsub.s32 3, %v1331
    %v1333 = vrot.slane %v160, %v1332
    %v1334 = vlaneseq
    %v1335 = vshrl.u32 %v1334, 7
    %v1336 = vsub.s32 5, %v1335
    %v1337 = vrot.slane %v160, %v1336
    %v1338 = vlaneseq
    %v1339 = vshrl.u32 %v1338, 7
    %v1340 = vsub.s32 7, %v1339
    %v1341 = vrot.slane %v160, %v1340
    %v1342 = vlaneseq
    %v1343 = vshrl.u32 %v1342, 7
    %v1344 = vsub.s32 1, %v1343
    %v1345 = vrot.slane %v161, %v1344
    %v1346 = vlaneseq
    %v1347 = vshrl.u32 %v1346, 7
    %v1348 = vsub.s32 3, %v1347
    %v1349 = vrot.slane %v161, %v1348
    %v1356 = vlaneseq
    %v1357 = vshrl.u32 %v1356, 7
    %v1358 = vsub.s32 1, %v1357
    %v1359 = vrot.slane %v1329, %v1358
    %v1360 = vlaneseq
    %v1361 = vshrl.u32 %v1360, 7
    %v1362 = vsub.s32 1, %v1361
    %v1363 = vrot.slane %v1333, %v1362
    %v1364 = vlaneseq
    %v1365 = vshrl.u32 %v1364, 7
    %v1366 = vsub.s32 1, %v1365
    %v1367 = vrot.slane %v1337, %v1366
    %v1368 = vlaneseq
    %v1369 = vshrl.u32 %v1368, 7
    %v1370 = vsub.s32 1, %v1369
    %v1371 = vrot.slane %v1341, %v1370
    %v1372 = vlaneseq
    %v1373 = vshrl.u32 %v1372, 7
    %v1374 = vsub.s32 1, %v1373
    %v1375 = vrot.slane %v1345, %v1374
    %v1376 = vlaneseq
    %v1377 = vshrl.u32 %v1376, 7
    %v1378 = vsub.s32 1, %v1377
    %v1379 = vrot.slane %v1349, %v1378
    %v1380 = vmul.f32 %v1289, %v1359
    %v1381 = vmul.f32 %v1289, %v1363
    %v1382 = vmul.f32 %v1289, %v1367
    %v1383 = vmul.f32 %v1289, %v1371
    %v1384 = vmul.f32 %v1289, %v1375
    %v1385 = vmul.f32 %v1289, %v1379
    %v1386 = vmul.f32 %v1294, %v1359
    %v1387 = vmul.f32 %v1294, %v1363
    %v1388 = vmul.f32 %v1294, %v1367
    %v1389 = vmul.f32 %v1294, %v1371
    %v1390 = vmul.f32 %v1294, %v1375
    %v1391 = vmul.f32 %v1294, %v1379
    %v1392 = vmul.f32 %v1299, %v1359
    %v1393 = vmul.f32 %v1299, %v1363
    %v1394 = vmul.f32 %v1299, %v1367
    %v1395 = vmul.f32 %v1299, %v1371
    %v1396 = vmul.f32 %v1299, %v1375
    %v1397 = vmul.f32 %v1299, %v1379
    %v1398 = vmul.f32 %v1304, %v1359
    %v1399 = vmul.f32 %v1304, %v1363
    %v1400 = vmul.f32 %v1304, %v1367
    %v1401 = vmul.f32 %v1304, %v1371
    %v1402 = vmul.f32 %v1304, %v1375
    %v1403 = vmul.f32 %v1304, %v1379
    %v1404 = vmul.f32 %v1309, %v1359
    %v1405 = vmul.f32 %v1309, %v1363
    %v1406 = vmul.f32 %v1309, %v1367
    %v1407 = vmul.f32 %v1309, %v1371
    %v1408 = vmul.f32 %v1309, %v1375
    %v1409 = vmul.f32 %v1309, %v1379
    %v1410 = vmul.f32 %v1314, %v1359
    %v1411 = vmul.f32 %v1314, %v1363
    %v1412 = vmul.f32 %v1314, %v1367
    %v1413 = vmul.f32 %v1314, %v1371
    %v1414 = vmul.f32 %v1314, %v1375
    %v1415 = vmul.f32 %v1314, %v1379
    %v1416 = vmul.f32 %v1319, %v1359
    %v1417 = vmul.f32 %v1319, %v1363
    %v1418 = vmul.f32 %v1319, %v1367
    %v1419 = vmul.f32 %v1319, %v1371
    %v1420 = vmul.f32 %v1319, %v1375
    %v1421 = vmul.f32 %v1319, %v1379
    %v1422 = vmul.f32 %v1324, %v1359
    %v1423 = vmul.f32 %v1324, %v1363
    %v1424 = vmul.f32 %v1324, %v1367
    %v1425 = vmul.f32 %v1324, %v1371
    %v1426 = vmul.f32 %v1324, %v1375
    %v1427 = vmul.f32 %v1324, %v1379
    %v1428 = vadd.f32 %v1238, %v1380
    %v1429 = vadd.f32 %v1239, %v1381
    %v1430 = vadd.f32 %v1240, %v1382
    %v1431 = vadd.f32 %v1241, %v1383
    %v1432 = vadd.f32 %v1242, %v1384
    %v1433 = vadd.f32 %v1243, %v1385
    %v1434 = vadd.f32 %v1244, %v1386
    %v1435 = vadd.f32 %v1245, %v1387
    %v1436 = vadd.f32 %v1246, %v1388
    %v1437 = vadd.f32 %v1247, %v1389
    %v1438 = vadd.f32 %v1248, %v1390
    %v1439 = vadd.f32 %v1249, %v1391
    %v1440 = vadd.f32 %v1250, %v1392
    %v1441 = vadd.f32 %v1251, %v1393
    %v1442 = vadd.f32 %v1252, %v1394
    %v1443 = vadd.f32 %v1253, %v1395
    %v1444 = vadd.f32 %v1254, %v1396
    %v1445 = vadd.f32 %v1255, %v1397
    %v1446 = vadd.f32 %v1256, %v1398
    %v1447 = vadd.f32 %v1257, %v1399
    %v1448 = vadd.f32 %v1258, %v1400
    %v1449 = vadd.f32 %v1259, %v1401
    %v1450 = vadd.f32 %v1260, %v1402
    %v1451 = vadd.f32 %v1261, %v1403
    %v1452 = vadd.f32 %v1262, %v1404
    %v1453 = vadd.f32 %v1263, %v1405
    %v1454 = vadd.f32 %v1264, %v1406
    %v1455 = vadd.f32 %v1265, %v1407
    %v1456 = vadd.f32 %v1266, %v1408
    %v1457 = vadd.f32 %v1267, %v1409
    %v1458 = vadd.f32 %v1268, %v1410
    %v1459 = vadd.f32 %v1269, %v1411
    %v1460 = vadd.f32 %v1270, %v1412
    %v1461 = vadd.f32 %v1271, %v1413
    %v1462 = vadd.f32 %v1272, %v1414
    %v1463 = vadd.f32 %v1273, %v1415
    %v1464 = vadd.f32 %v1274, %v1416
    %v1465 = vadd.f32 %v1275, %v1417
    %v1466 = vadd.f32 %v1276, %v1418
    %v1467 = vadd.f32 %v1277, %v1419
    %v1468 = vadd.f32 %v1278, %v1420
    %v1469 = vadd.f32 %v1279, %v1421
    %v1470 = vadd.f32 %v1280, %v1422
    %v1471 = vadd.f32 %v1281, %v1423
    %v1472 = vadd.f32 %v1282, %v1424
    %v1473 = vadd.f32 %v1283, %v1425
    %v1474 = vadd.f32 %v1284, %v1426
    %v1475 = vadd.f32 %v1285, %v1427
    %v1477 = vlaneseq
    %v1478 = vshrl.u32 %v1477, 7
    %v1479 = vsub.s32 0, %v1478
    %v1480 = vrot.slane %v162, %v1479
    %v1481 = vlaneseq
    %v1482 = vshrl.u32 %v1481, 7
    %v1483 = vsub.s32 1, %v1482
    %v1484 = vrot.slane %v162, %v1483
    %v1485 = vlaneseq
    %v1486 = vshrl.u32 %v1485, 7
    %v1487 = vsub.s32 2, %v1486
    %v1488 = vrot.slane %v162, %v1487
    %v1489 = vlaneseq
    %v1490 = vshrl.u32 %v1489, 7
    %v1491 = vsub.s32 3, %v1490
    %v1492 = vrot.slane %v162, %v1491
    %v1493 = vlaneseq
    %v1494 = vshrl.u32 %v1493, 7
    %v1495 = vsub.s32 4, %v1494
    %v1496 = vrot.slane %v162, %v1495
    %v1497 = vlaneseq
    %v1498 = vshrl.u32 %v1497, 7
    %v1499 = vsub.s32 5, %v1498
    %v1500 = vrot.slane %v162, %v1499
    %v1507 = vadd.f32 %v1428, %v1480
    %v1508 = vadd.f32 %v1429, %v1484
    %v1509 = vadd.f32 %v1430, %v1488
    %v1510 = vadd.f32 %v1431, %v1492
    %v1511 = vadd.f32 %v1432, %v1496
    %v1512 = vadd.f32 %v1433, %v1500
    %v1513 = vadd.f32 %v1434, %v1480
    %v1514 = vadd.f32 %v1435, %v1484
    %v1515 = vadd.f32 %v1436, %v1488
    %v1516 = vadd.f32 %v1437, %v1492
    %v1517 = vadd.f32 %v1438, %v1496
    %v1518 = vadd.f32 %v1439, %v1500
    %v1519 = vadd.f32 %v1440, %v1480
    %v1520 = vadd.f32 %v1441, %v1484
    %v1521 = vadd.f32 %v1442, %v1488
    %v1522 = vadd.f32 %v1443, %v1492
    %v1523 = vadd.f32 %v1444, %v1496
    %v1524 = vadd.f32 %v1445, %v1500
    %v1525 = vadd.f32 %v1446, %v1480
    %v1526 = vadd.f32 %v1447, %v1484
    %v1527 = vadd.f32 %v1448, %v1488
    %v1528 = vadd.f32 %v1449, %v1492
    %v1529 = vadd.f32 %v1450, %v1496
    %v1530 = vadd.f32 %v1451, %v1500
    %v1531 = vadd.f32 %v1452, %v1480
    %v1532 = vadd.f32 %v1453, %v1484
    %v1533 = vadd.f32 %v1454, %v1488
    %v1534 = vadd.f32 %v1455, %v1492
    %v1535 = vadd.f32 %v1456, %v1496
    %v1536 = vadd.f32 %v1457, %v1500
    %v1537 = vadd.f32 %v1458, %v1480
    %v1538 = vadd.f32 %v1459, %v1484
    %v1539 = vadd.f32 %v1460, %v1488
    %v1540 = vadd.f32 %v1461, %v1492
    %v1541 = vadd.f32 %v1462, %v1496
    %v1542 = vadd.f32 %v1463, %v1500
    %v1543 = vadd.f32 %v1464, %v1480
    %v1544 = vadd.f32 %v1465, %v1484
    %v1545 = vadd.f32 %v1466, %v1488
    %v1546 = vadd.f32 %v1467, %v1492
    %v1547 = vadd.f32 %v1468, %v1496
    %v1548 = vadd.f32 %v1469, %v1500
    %v1549 = vadd.f32 %v1470, %v1480
    %v1550 = vadd.f32 %v1471, %v1484
    %v1551 = vadd.f32 %v1472, %v1488
    %v1552 = vadd.f32 %v1473, %v1492
    %v1553 = vadd.f32 %v1474, %v1496
    %v1554 = vadd.f32 %v1475, %v1500
    %v1603 = vcombine.low %v1507, %v1508
    %v1604 = vcombine.low %v1509, %v1510
    %v1606 = vunpack.c.l.s4 1983009808
    %v1607 = vunpack.c.0.s8 %v1606
    %v1608 = vlaneseq
    %v1609 = vshrl.u32 %v1608, 7
    %v1610 = vsub.s32 %v1607, %v1609
    %v1611 = vrot.slane %v1603, %v1610
    %v1613 = vunpack.c.l.s4 1983009808
    %v1614 = vunpack.c.0.s8 %v1613
    %v1615 = vlaneseq
    %v1616 = vshrl.u32 %v1615, 7
    %v1617 = vsub.s32 %v1614, %v1616
    %v1618 = vrot.slane %v1604, %v1617
    %v1619 = vcombine.low %v1611, %v1618
    %v1620 = vcombine.low %v1511, %v1512
    %v1622 = vunpack.c.l.s4 1983009808
    %v1623 = vunpack.c.0.s8 %v1622
    %v1624 = vlaneseq
    %v1625 = vshrl.u32 %v1624, 7
    %v1626 = vsub.s32 %v1623, %v1625
    %v1627 = vrot.slane %v1620, %v1626
    %v1628 = vcombine.low %v1513, %v1514
    %v1629 = vcombine.low %v1515, %v1516
    %v1631 = vunpack.c.l.s4 1983009808
    %v1632 = vunpack.c.0.s8 %v1631
    %v1633 = vlaneseq
    %v1634 = vshrl.u32 %v1633, 7
    %v1635 = vsub.s32 %v1632, %v1634
    %v1636 = vrot.slane %v1628, %v1635
    %v1638 = vunpack.c.l.s4 1983009808
    %v1639 = vunpack.c.0.s8 %v1638
    %v1640 = vlaneseq
    %v1641 = vshrl.u32 %v1640, 7
    %v1642 = vsub.s32 %v1639, %v1641
    %v1643 = vrot.slane %v1629, %v1642
    %v1644 = vcombine.low %v1636, %v1643
    %v1645 = vcombine.low %v1517, %v1518
    %v1647 = vunpack.c.l.s4 1983009808
    %v1648 = vunpack.c.0.s8 %v1647
    %v1649 = vlaneseq
    %v1650 = vshrl.u32 %v1649, 7
    %v1651 = vsub.s32 %v1648, %v1650
    %v1652 = vrot.slane %v1645, %v1651
    %v1653 = vcombine.low %v1519, %v1520
    %v1654 = vcombine.low %v1521, %v1522
    %v1656 = vunpack.c.l.s4 1983009808
    %v1657 = vunpack.c.0.s8 %v1656
    %v1658 = vlaneseq
    %v1659 = vshrl.u32 %v1658, 7
    %v1660 = vsub.s32 %v1657, %v1659
    %v1661 = vrot.slane %v1653, %v1660
    %v1663 = vunpack.c.l.s4 1983009808
    %v1664 = vunpack.c.0.s8 %v1663
    %v1665 = vlaneseq
    %v1666 = vshrl.u32 %v1665, 7
    %v1667 = vsub.s32 %v1664, %v1666
    %v1668 = vrot.slane %v1654, %v1667
    %v1669 = vcombine.low %v1661, %v1668
    %v1670 = vcombine.low %v1523, %v1524
    %v1672 = vunpack.c.l.s4 1983009808
    %v1673 = vunpack.c.0.s8 %v1672
    %v1674 = vlaneseq
    %v1675 = vshrl.u32 %v1674, 7
    %v1676 = vsub.s32 %v1673, %v1675
    %v1677 = vrot.slane %v1670, %v1676
    %v1678 = vcombine.low %v1525, %v1526
    %v1679 = vcombine.low %v1527, %v1528
    %v1681 = vunpack.c.l.s4 1983009808
    %v1682 = vunpack.c.0.s8 %v1681
    %v1683 = vlaneseq
    %v1684 = vshrl.u32 %v1683, 7
    %v1685 = vsub.s32 %v1682, %v1684
    %v1686 = vrot.slane %v1678, %v1685
    %v1688 = vunpack.c.l.s4 1983009808
    %v1689 = vunpack.c.0.s8 %v1688
    %v1690 = vlaneseq
    %v1691 = vshrl.u32 %v1690, 7
    %v1692 = vsub.s32 %v1689, %v1691
    %v1693 = vrot.slane %v1679, %v1692
    %v1694 = vcombine.low %v1686, %v1693
    %v1695 = vcombine.low %v1529, %v1530
    %v1697 = vunpack.c.l.s4 1983009808
    %v1698 = vunpack.c.0.s8 %v1697
    %v1699 = vlaneseq
    %v1700 = vshrl.u32 %v1699, 7
    %v1701 = vsub.s32 %v1698, %v1700
    %v1702 = vrot.slane %v1695, %v1701
    %v1703 = vcombine.low %v1531, %v1532
    %v1704 = vcombine.low %v1533, %v1534
    %v1706 = vunpack.c.l.s4 1983009808
    %v1707 = vunpack.c.0.s8 %v1706
    %v1708 = vlaneseq
    %v1709 = vshrl.u32 %v1708, 7
    %v1710 = vsub.s32 %v1707, %v1709
    %v1711 = vrot.slane %v1703, %v1710
    %v1713 = vunpack.c.l.s4 1983009808
    %v1714 = vunpack.c.0.s8 %v1713
    %v1715 = vlaneseq
    %v1716 = vshrl.u32 %v1715, 7
    %v1717 = vsub.s32 %v1714, %v1716
    %v1718 = vrot.slane %v1704, %v1717
    %v1719 = vcombine.low %v1711, %v1718
    %v1720 = vcombine.low %v1535, %v1536
    %v1722 = vunpack.c.l.s4 1983009808
    %v1723 = vunpack.c.0.s8 %v1722
    %v1724 = vlaneseq
    %v1725 = vshrl.u32 %v1724, 7
    %v1726 = vsub.s32 %v1723, %v1725
    %v1727 = vrot.slane %v1720, %v1726
    %v1728 = vcombine.low %v1537, %v1538
    %v1729 = vcombine.low %v1539, %v1540
    %v1731 = vunpack.c.l.s4 1983009808
    %v1732 = vunpack.c.0.s8 %v1731
    %v1733 = vlaneseq
    %v1734 = vshrl.u32 %v1733, 7
    %v1735 = vsub.s32 %v1732, %v1734
    %v1736 = vrot.slane %v1728, %v1735
    %v1738 = vunpack.c.l.s4 1983009808
    %v1739 = vunpack.c.0.s8 %v1738
    %v1740 = vlaneseq
    %v1741 = vshrl.u32 %v1740, 7
    %v1742 = vsub.s32 %v1739, %v1741
    %v1743 = vrot.slane %v1729, %v1742
    %v1744 = vcombine.low %v1736, %v1743
    %v1745 = vcombine.low %v1541, %v1542
    %v1747 = vunpack.c.l.s4 1983009808
    %v1748 = vunpack.c.0.s8 %v1747
    %v1749 = vlaneseq
    %v1750 = vshrl.u32 %v1749, 7
    %v1751 = vsub.s32 %v1748, %v1750
    %v1752 = vrot.slane %v1745, %v1751
    %v1753 = vcombine.low %v1543, %v1544
    %v1754 = vcombine.low %v1545, %v1546
    %v1756 = vunpack.c.l.s4 1983009808
    %v1757 = vunpack.c.0.s8 %v1756
    %v1758 = vlaneseq
    %v1759 = vshrl.u32 %v1758, 7
    %v1760 = vsub.s32 %v1757, %v1759
    %v1761 = vrot.slane %v1753, %v1760
    %v1763 = vunpack.c.l.s4 1983009808
    %v1764 = vunpack.c.0.s8 %v1763
    %v1765 = vlaneseq
    %v1766 = vshrl.u32 %v1765, 7
    %v1767 = vsub.s32 %v1764, %v1766
    %v1768 = vrot.slane %v1754, %v1767
    %v1769 = vcombine.low %v1761, %v1768
    %v1770 = vcombine.low %v1547, %v1548
    %v1772 = vunpack.c.l.s4 1983009808
    %v1773 = vunpack.c.0.s8 %v1772
    %v1774 = vlaneseq
    %v1775 = vshrl.u32 %v1774, 7
    %v1776 = vsub.s32 %v1773, %v1775
    %v1777 = vrot.slane %v1770, %v1776
    %v1778 = vcombine.low %v1549, %v1550
    %v1779 = vcombine.low %v1551, %v1552
    %v1781 = vunpack.c.l.s4 1983009808
    %v1782 = vunpack.c.0.s8 %v1781
    %v1783 = vlaneseq
    %v1784 = vshrl.u32 %v1783, 7
    %v1785 = vsub.s32 %v1782, %v1784
    %v1786 = vrot.slane %v1778, %v1785
    %v1788 = vunpack.c.l.s4 1983009808
    %v1789 = vunpack.c.0.s8 %v1788
    %v1790 = vlaneseq
    %v1791 = vshrl.u32 %v1790, 7
    %v1792 = vsub.s32 %v1789, %v1791
    %v1793 = vrot.slane %v1779, %v1792
    %v1794 = vcombine.low %v1786, %v1793
    %v1795 = vcombine.low %v1553, %v1554
    %v1797 = vunpack.c.l.s4 1983009808
    %v1798 = vunpack.c.0.s8 %v1797
    %v1799 = vlaneseq
    %v1800 = vshrl.u32 %v1799, 7
    %v1801 = vsub.s32 %v1798, %v1800
    %v1802 = vrot.slane %v1795, %v1801
    %1819 = vst [vmem:[#allocation2] sm:$0xff] %v1619
    %1820 = vst [vmem:[#allocation2 + $0x8] sm:$0xf] %v1627
    %1821 = vst [vmem:[#allocation2 + $0xc] sm:$0xff] %v1644
    %1822 = vst [vmem:[#allocation2 + $0x14] sm:$0xf] %v1652
    %1823 = vst [vmem:[#allocation2 + $0x18] sm:$0xff] %v1669
    %1824 = vst [vmem:[#allocation2 + $0x20] sm:$0xf] %v1677
    %1825 = vst [vmem:[#allocation2 + $0x24] sm:$0xff] %v1694
    %1826 = vst [vmem:[#allocation2 + $0x2c] sm:$0xf] %v1702
    %1827 = vst [vmem:[#allocation2 + $0x30] sm:$0xff] %v1719
    %1828 = vst [vmem:[#allocation2 + $0x38] sm:$0xf] %v1727
    %1829 = vst [vmem:[#allocation2 + $0x3c] sm:$0xff] %v1744
    %1830 = vst [vmem:[#allocation2 + $0x44] sm:$0xf] %v1752
    %1831 = vst [vmem:[#allocation2 + $0x48] sm:$0xff] %v1769
    %1832 = vst [vmem:[#allocation2 + $0x50] sm:$0xf] %v1777
    %1833 = vst [vmem:[#allocation2 + $0x54] sm:$0xff] %v1794
    %1834 = vst [vmem:[#allocation2 + $0x5c] sm:$0xf] %v1802
    %v1835 = vld [vmem:[#allocation2] sm:$0xff]
    %v1836 = vld [vmem:[#allocation2 + $0x8] sm:$0xf]
    %v1837 = vadd.f32 %v1835, 0.0
    %v1838 = vxor.u32 %v1837, 2147483648
    %v1839 = vmul.f32 %v1838, 1.442695
    %v1840 = vpow.pop %v1839
    %v1841 = vadd.f32 %v1840, 1.0
    %v1842 = vrcp.pop %v1841
    %v1843 = vmul.f32 1.0, %v1842
    %v1845 = vrot.slane %v1835, 4
    %v1847 = vadd.f32 %v1845, 0.0
    %v1848 = vxor.u32 %v1847, 2147483648
    %v1849 = vmul.f32 %v1848, 1.442695
    %v1850 = vpow.pop %v1849
    %v1851 = vadd.f32 %v1850, 1.0
    %v1852 = vrcp.pop %v1851
    %v1853 = vmul.f32 1.0, %v1852
    %v1854 = vadd.f32 %v168, 0.0
    %v1855 = vadd.f32 %v172, 0.0
    %v1858 = vcombine.low %v1854, %v1855
    %v1860 = vunpack.c.l.s4 1983009808
    %v1861 = vunpack.c.0.s8 %v1860
    %v1862 = vlaneseq
    %v1863 = vshrl.u32 %v1862, 7
    %v1864 = vsub.s32 %v1861, %v1863
    %v1865 = vrot.slane %v1858, %v1864
    %v1867 = vmul.f32 %v1843, %v1865
    %v1868 = vadd.f32 %v1836, %v1867
    %v1869 = vtanh.pop %v1868
    %v1870 = vsub.f32 1.0, %v1853
    %v1871 = vmul.f32 %v1870, %v1869
    %v1872 = vmul.f32 %v1853, 0.0
    %v1873 = vadd.f32 %v1871, %v1872
    %v1876 = vunpack.c.l.s4 1983009808
    %v1877 = vunpack.c.0.s8 %v1876
    %v1878 = vlaneseq
    %v1879 = vshrl.u32 %v1878, 7
    %v1880 = vsub.s32 %v1877, %v1879
    %v1881 = vrot.slane %v1873, %v1880
    %v1882 = vcombine.high %v1881, %v1881
    %1885 = vmatprep.subr.mxu0 %v176
    %1886 = vmatpush1.msra.mxu0 %v175
    %1887 = vmatprep.subr.mxu0 %v190
    %1888 = vmatpush1.msra.mxu0 %v189
    %1889 = vmatprep.subr.mxu0 %v204
    %1890 = vmatpush1.msra.mxu0 %v203
    %1891 = vmatprep.subr.mxu0 %v218
    %1892 = vmatpush1.msra.mxu0 %v217
    %1893 = vmatprep.subr.mxu0 %v232
    %1894 = vmatpush1.msra.mxu0 %v231
    %1895 = vmatprep.subr.mxu0 %v246
    %1896 = vmatpush1.msra.mxu0 %v245
    %1897 = vmatprep.subr.mxu0 %v260
    %1898 = vmatpush1.msra.mxu0 %v259
    %1899 = vmatprep.subr.mxu0 %v274
    %1900 = vmatpush1.msra.mxu0 %v273
    %1901 = vmatprep.subr.mxu0 %v288
    %1902 = vmatpush1.msra.mxu0 %v287
    %1903 = vmatprep.subr.mxu0 %v302
    %1904 = vmatpush1.msra.mxu0 %v301
    %1905 = vmatprep.subr.mxu0 %v316
    %1906 = vmatpush1.msra.mxu0 %v315
    %1907 = vmatprep.subr.mxu0 %v330
    %1908 = vmatpush1.msra.mxu0 %v329
    %1909 = vmatprep.subr.mxu0 %v344
    %1910 = vmatpush1.msra.mxu0 %v343
    %1911 = vmatprep.subr.mxu0 %v358
    %1912 = vmatpush1.msra.mxu0 %v357
    %1913 = vmatprep.subr.mxu0 %v372
    %1914 = vmatpush1.msra.mxu0 %v371
    %1915 = vmatprep.subr.mxu0 %v386
    %1916 = vmatpush1.msra.mxu0 %v385
    %1917 = vmatprep.subr.mxu0 %v400
    %1918 = vmatpush1.msra.mxu0 %v399
    %1919 = vmatprep.subr.mxu0 %v414
    %1920 = vmatpush1.msra.mxu0 %v413
    %1921 = vmatprep.subr.mxu0 %v428
    %1922 = vmatpush1.msra.mxu0 %v427
    %1923 = vmatprep.subr.mxu0 %v442
    %1924 = vmatpush1.msra.mxu0 %v441
    %1925 = vmatprep.subr.mxu0 %v456
    %1926 = vmatpush1.msra.mxu0 %v455
    %1927 = vmatprep.subr.mxu0 %v470
    %1928 = vmatpush1.msra.mxu0 %v469
    %1929 = vmatprep.subr.mxu0 %v484
    %1930 = vmatpush1.msra.mxu0 %v483
    %1931 = vmatprep.subr.mxu0 %v498
    %1932 = vmatpush1.msra.mxu0 %v497
    %1933 = vmatprep.subr.mxu0 %v512
    %1934 = vmatpush1.msra.mxu0 %v511
    %1935 = vmatprep.subr.mxu0 %v526
    %1936 = vmatpush1.msra.mxu0 %v525
    %1937 = vmatprep.subr.mxu0 %v540
    %1938 = vmatpush1.msra.mxu0 %v539
    %1939 = vmatprep.subr.mxu0 %v554
    %1940 = vmatpush1.msra.mxu0 %v553
    %1941 = vmatprep.subr.mxu0 %v568
    %1942 = vmatpush1.msra.mxu0 %v567
    %1943 = vmatprep.subr.mxu0 %v582
    %1944 = vmatpush1.msra.mxu0 %v581
    %1945 = vmatprep.subr.mxu0 %v596
    %1946 = vmatpush1.msra.mxu0 %v595
    %1947 = vmatprep.subr.mxu0 %v610
    %1948 = vmatpush1.msra.mxu0 %v609
    %1949 = vmatprep.mubr.f32.mxu0 %v1882
    %1950 = vmatmul.mubr.f32.gmra.mrb[0].mxu0 %v1881
    %v1951 = vpop.f32.mrb[0].mxu0
    %v1952 = vadd.f32 0.0, %v1951
    %v1953 = vpop.f32.mrb[0].mxu0
    %v1954 = vadd.f32 0.0, %v1953
    %1955 = vdwg.mxu0
    %1956 = vmatprep.subr.mxu0 %v624
    %1957 = vmatpush1.msra.mxu0 %v623
    %1958 = vmatprep.subr.mxu0 %v638
    %1959 = vmatpush1.msra.mxu0 %v637
    %1960 = vmatprep.subr.mxu0 %v652
    %1961 = vmatpush1.msra.mxu0 %v651
    %1962 = vmatprep.subr.mxu0 %v666
    %1963 = vmatpush1.msra.mxu0 %v665
    %1964 = vmatprep.subr.mxu0 %v680
    %1965 = vmatpush1.msra.mxu0 %v679
    %1966 = vmatprep.subr.mxu0 %v694
    %1967 = vmatpush1.msra.mxu0 %v693
    %1968 = vmatprep.subr.mxu0 %v708
    %1969 = vmatpush1.msra.mxu0 %v707
    %1970 = vmatprep.subr.mxu0 %v722
    %1971 = vmatpush1.msra.mxu0 %v721
    %1972 = vmatprep.subr.mxu0 %v736
    %1973 = vmatpush1.msra.mxu0 %v735
    %1974 = vmatprep.subr.mxu0 %v750
    %1975 = vmatpush1.msra.mxu0 %v749
    %1976 = vmatprep.subr.mxu0 %v764
    %1977 = vmatpush1.msra.mxu0 %v763
    %1978 = vmatprep.subr.mxu0 %v778
    %1979 = vmatpush1.msra.mxu0 %v777
    %1980 = vmatprep.subr.mxu0 %v792
    %1981 = vmatpush1.msra.mxu0 %v791
    %1982 = vmatprep.subr.mxu0 %v806
    %1983 = vmatpush1.msra.mxu0 %v805
    %1984 = vmatprep.subr.mxu0 %v820
    %1985 = vmatpush1.msra.mxu0 %v819
    %1986 = vmatprep.subr.mxu0 %v834
    %1987 = vmatpush1.msra.mxu0 %v833
    %1988 = vmatprep.subr.mxu0 %v848
    %1989 = vmatpush1.msra.mxu0 %v847
    %1990 = vmatprep.subr.mxu0 %v862
    %1991 = vmatpush1.msra.mxu0 %v861
    %1992 = vmatprep.subr.mxu0 %v876
    %1993 = vmatpush1.msra.mxu0 %v875
    %1994 = vmatprep.subr.mxu0 %v890
    %1995 = vmatpush1.msra.mxu0 %v889
    %1996 = vmatprep.subr.mxu0 %v904
    %1997 = vmatpush1.msra.mxu0 %v903
    %1998 = vmatprep.subr.mxu0 %v918
    %1999 = vmatpush1.msra.mxu0 %v917
    %2000 = vmatprep.subr.mxu0 %v932
    %2001 = vmatpush1.msra.mxu0 %v931
    %2002 = vmatprep.subr.mxu0 %v946
    %2003 = vmatpush1.msra.mxu0 %v945
    %2004 = vmatprep.subr.mxu0 %v960
    %2005 = vmatpush1.msra.mxu0 %v959
    %2006 = vmatprep.subr.mxu0 %v974
    %2007 = vmatpush1.msra.mxu0 %v973
    %2008 = vmatprep.subr.mxu0 %v988
    %2009 = vmatpush1.msra.mxu0 %v987
    %2010 = vmatprep.subr.mxu0 %v1002
    %2011 = vmatpush1.msra.mxu0 %v1001
    %2012 = vmatprep.subr.mxu0 %v1016
    %2013 = vmatpush1.msra.mxu0 %v1015
    %2014 = vmatprep.subr.mxu0 %v1030
    %2015 = vmatpush1.msra.mxu0 %v1029
    %2016 = vmatprep.subr.mxu0 %v1044
    %2017 = vmatpush1.msra.mxu0 %v1043
    %2018 = vmatprep.subr.mxu0 %v1058
    %2019 = vmatpush1.msra.mxu0 %v1057
    %2020 = vmatprep.mubr.f32.mxu0 0.0
    %2021 = vmatmul.mubr.f32.gmra.mrb[0].mxu0 0.0
    %v2022 = vpop.f32.mrb[0].mxu0
    %v2023 = vadd.f32 %v1952, %v2022
    %v2024 = vpop.f32.mrb[0].mxu0
    %v2025 = vadd.f32 %v1954, %v2024
    %2026 = vdwg.mxu0
    %2027 = vmatprep.subr.mxu0 %v178
    %2028 = vmatpush1.msra.mxu0 %v177
    %2029 = vmatprep.subr.mxu0 %v192
    %2030 = vmatpush1.msra.mxu0 %v191
    %2031 = vmatprep.subr.mxu0 %v206
    %2032 = vmatpush1.msra.mxu0 %v205
    %2033 = vmatprep.subr.mxu0 %v220
    %2034 = vmatpush1.msra.mxu0 %v219
    %2035 = vmatprep.subr.mxu0 %v234
    %2036 = vmatpush1.msra.mxu0 %v233
    %2037 = vmatprep.subr.mxu0 %v248
    %2038 = vmatpush1.msra.mxu0 %v247
    %2039 = vmatprep.subr.mxu0 %v262
    %2040 = vmatpush1.msra.mxu0 %v261
    %2041 = vmatprep.subr.mxu0 %v276
    %2042 = vmatpush1.msra.mxu0 %v275
    %2043 = vmatprep.subr.mxu0 %v290
    %2044 = vmatpush1.msra.mxu0 %v289
    %2045 = vmatprep.subr.mxu0 %v304
    %2046 = vmatpush1.msra.mxu0 %v303
    %2047 = vmatprep.subr.mxu0 %v318
    %2048 = vmatpush1.msra.mxu0 %v317
    %2049 = vmatprep.subr.mxu0 %v332
    %2050 = vmatpush1.msra.mxu0 %v331
    %2051 = vmatprep.subr.mxu0 %v346
    %2052 = vmatpush1.msra.mxu0 %v345
    %2053 = vmatprep.subr.mxu0 %v360
    %2054 = vmatpush1.msra.mxu0 %v359
    %2055 = vmatprep.subr.mxu0 %v374
    %2056 = vmatpush1.msra.mxu0 %v373
    %2057 = vmatprep.subr.mxu0 %v388
    %2058 = vmatpush1.msra.mxu0 %v387
    %2059 = vmatprep.subr.mxu0 %v402
    %2060 = vmatpush1.msra.mxu0 %v401
    %2061 = vmatprep.subr.mxu0 %v416
    %2062 = vmatpush1.msra.mxu0 %v415
    %2063 = vmatprep.subr.mxu0 %v430
    %2064 = vmatpush1.msra.mxu0 %v429
    %2065 = vmatprep.subr.mxu0 %v444
    %2066 = vmatpush1.msra.mxu0 %v443
    %2067 = vmatprep.subr.mxu0 %v458
    %2068 = vmatpush1.msra.mxu0 %v457
    %2069 = vmatprep.subr.mxu0 %v472
    %2070 = vmatpush1.msra.mxu0 %v471
    %2071 = vmatprep.subr.mxu0 %v486
    %2072 = vmatpush1.msra.mxu0 %v485
    %2073 = vmatprep.subr.mxu0 %v500
    %2074 = vmatpush1.msra.mxu0 %v499
    %2075 = vmatprep.subr.mxu0 %v514
    %2076 = vmatpush1.msra.mxu0 %v513
    %2077 = vmatprep.subr.mxu0 %v528
    %2078 = vmatpush1.msra.mxu0 %v527
    %2079 = vmatprep.subr.mxu0 %v542
    %2080 = vmatpush1.msra.mxu0 %v541
    %2081 = vmatprep.subr.mxu0 %v556
    %2082 = vmatpush1.msra.mxu0 %v555
    %2083 = vmatprep.subr.mxu0 %v570
    %2084 = vmatpush1.msra.mxu0 %v569
    %2085 = vmatprep.subr.mxu0 %v584
    %2086 = vmatpush1.msra.mxu0 %v583
    %2087 = vmatprep.subr.mxu0 %v598
    %2088 = vmatpush1.msra.mxu0 %v597
    %2089 = vmatprep.subr.mxu0 %v612
    %2090 = vmatpush1.msra.mxu0 %v611
    %2091 = vmatprep.mubr.f32.mxu0 %v1882
    %2092 = vmatmul.mubr.f32.gmra.mrb[0].mxu0 %v1881
    %v2093 = vpop.f32.mrb[0].mxu0
    %v2094 = vadd.f32 0.0, %v2093
    %v2095 = vpop.f32.mrb[0].mxu0
    %v2096 = vadd.f32 0.0, %v2095
    %2097 = vdwg.mxu0
    %2098 = vmatprep.subr.mxu0 %v626
    %2099 = vmatpush1.msra.mxu0 %v625
    %2100 = vmatprep.subr.mxu0 %v640
    %2101 = vmatpush1.msra.mxu0 %v639
    %2102 = vmatprep.subr.mxu0 %v654
    %2103 = vmatpush1.msra.mxu0 %v653
    %2104 = vmatprep.subr.mxu0 %v668
    %2105 = vmatpush1.msra.mxu0 %v667
    %2106 = vmatprep.subr.mxu0 %v682
    %2107 = vmatpush1.msra.mxu0 %v681
    %2108 = vmatprep.subr.mxu0 %v696
    %2109 = vmatpush1.msra.mxu0 %v695
    %2110 = vmatprep.subr.mxu0 %v710
    %2111 = vmatpush1.msra.mxu0 %v709
    %2112 = vmatprep.subr.mxu0 %v724
    %2113 = vmatpush1.msra.mxu0 %v723
    %2114 = vmatprep.subr.mxu0 %v738
    %2115 = vmatpush1.msra.mxu0 %v737
    %2116 = vmatprep.subr.mxu0 %v752
    %2117 = vmatpush1.msra.mxu0 %v751
    %2118 = vmatprep.subr.mxu0 %v766
    %2119 = vmatpush1.msra.mxu0 %v765
    %2120 = vmatprep.subr.mxu0 %v780
    %2121 = vmatpush1.msra.mxu0 %v779
    %2122 = vmatprep.subr.mxu0 %v794
    %2123 = vmatpush1.msra.mxu0 %v793
    %2124 = vmatprep.subr.mxu0 %v808
    %2125 = vmatpush1.msra.mxu0 %v807
    %2126 = vmatprep.subr.mxu0 %v822
    %2127 = vmatpush1.msra.mxu0 %v821
    %2128 = vmatprep.subr.mxu0 %v836
    %2129 = vmatpush1.msra.mxu0 %v835
    %2130 = vmatprep.subr.mxu0 %v850
    %2131 = vmatpush1.msra.mxu0 %v849
    %2132 = vmatprep.subr.mxu0 %v864
    %2133 = vmatpush1.msra.mxu0 %v863
    %2134 = vmatprep.subr.mxu0 %v878
    %2135 = vmatpush1.msra.mxu0 %v877
    %2136 = vmatprep.subr.mxu0 %v892
    %2137 = vmatpush1.msra.mxu0 %v891
    %2138 = vmatprep.subr.mxu0 %v906
    %2139 = vmatpush1.msra.mxu0 %v905
    %2140 = vmatprep.subr.mxu0 %v920
    %2141 = vmatpush1.msra.mxu0 %v919
    %2142 = vmatprep.subr.mxu0 %v934
    %2143 = vmatpush1.msra.mxu0 %v933
    %2144 = vmatprep.subr.mxu0 %v948
    %2145 = vmatpush1.msra.mxu0 %v947
    %2146 = vmatprep.subr.mxu0 %v962
    %2147 = vmatpush1.msra.mxu0 %v961
    %2148 = vmatprep.subr.mxu0 %v976
    %2149 = vmatpush1.msra.mxu0 %v975
    %2150 = vmatprep.subr.mxu0 %v990
    %2151 = vmatpush1.msra.mxu0 %v989
    %2152 = vmatprep.subr.mxu0 %v1004
    %2153 = vmatpush1.msra.mxu0 %v1003
    %2154 = vmatprep.subr.mxu0 %v1018
    %2155 = vmatpush1.msra.mxu0 %v1017
    %2156 = vmatprep.subr.mxu0 %v1032
    %2157 = vmatpush1.msra.mxu0 %v1031
    %2158 = vmatprep.subr.mxu0 %v1046
    %2159 = vmatpush1.msra.mxu0 %v1045
    %2160 = vmatprep.subr.mxu0 %v1060
    %2161 = vmatpush1.msra.mxu0 %v1059
    %2162 = vmatprep.mubr.f32.mxu0 0.0
    %2163 = vmatmul.mubr.f32.gmra.mrb[0].mxu0 0.0
    %v2164 = vpop.f32.mrb[0].mxu0
    %v2165 = vadd.f32 %v2094, %v2164
    %v2166 = vpop.f32.mrb[0].mxu0
    %v2167 = vadd.f32 %v2096, %v2166
    %2168 = vdwg.mxu0
    %2169 = vmatprep.subr.mxu0 %v180
    %2170 = vmatpush1.msra.mxu0 %v179
    %2171 = vmatprep.subr.mxu0 %v194
    %2172 = vmatpush1.msra.mxu0 %v193
    %2173 = vmatprep.subr.mxu0 %v208
    %2174 = vmatpush1.msra.mxu0 %v207
    %2175 = vmatprep.subr.mxu0 %v222
    %2176 = vmatpush1.msra.mxu0 %v221
    %2177 = vmatprep.subr.mxu0 %v236
    %2178 = vmatpush1.msra.mxu0 %v235
    %2179 = vmatprep.subr.mxu0 %v250
    %2180 = vmatpush1.msra.mxu0 %v249
    %2181 = vmatprep.subr.mxu0 %v264
    %2182 = vmatpush1.msra.mxu0 %v263
    %2183 = vmatprep.subr.mxu0 %v278
    %2184 = vmatpush1.msra.mxu0 %v277
    %2185 = vmatprep.subr.mxu0 %v292
    %2186 = vmatpush1.msra.mxu0 %v291
    %2187 = vmatprep.subr.mxu0 %v306
    %2188 = vmatpush1.msra.mxu0 %v305
    %2189 = vmatprep.subr.mxu0 %v320
    %2190 = vmatpush1.msra.mxu0 %v319
    %2191 = vmatprep.subr.mxu0 %v334
    %2192 = vmatpush1.msra.mxu0 %v333
    %2193 = vmatprep.subr.mxu0 %v348
    %2194 = vmatpush1.msra.mxu0 %v347
    %2195 = vmatprep.subr.mxu0 %v362
    %2196 = vmatpush1.msra.mxu0 %v361
    %2197 = vmatprep.subr.mxu0 %v376
    %2198 = vmatpush1.msra.mxu0 %v375
    %2199 = vmatprep.subr.mxu0 %v390
    %2200 = vmatpush1.msra.mxu0 %v389
    %2201 = vmatprep.subr.mxu0 %v404
    %2202 = vmatpush1.msra.mxu0 %v403
    %2203 = vmatprep.subr.mxu0 %v418
    %2204 = vmatpush1.msra.mxu0 %v417
    %2205 = vmatprep.subr.mxu0 %v432
    %2206 = vmatpush1.msra.mxu0 %v431
    %2207 = vmatprep.subr.mxu0 %v446
    %2208 = vmatpush1.msra.mxu0 %v445
    %2209 = vmatprep.subr.mxu0 %v460
    %2210 = vmatpush1.msra.mxu0 %v459
    %2211 = vmatprep.subr.mxu0 %v474
    %2212 = vmatpush1.msra.mxu0 %v473
    %2213 = vmatprep.subr.mxu0 %v488
    %2214 = vmatpush1.msra.mxu0 %v487
    %2215 = vmatprep.subr.mxu0 %v502
    %2216 = vmatpush1.msra.mxu0 %v501
    %2217 = vmatprep.subr.mxu0 %v516
    %2218 = vmatpush1.msra.mxu0 %v515
    %2219 = vmatprep.subr.mxu0 %v530
    %2220 = vmatpush1.msra.mxu0 %v529
    %2221 = vmatprep.subr.mxu0 %v544
    %2222 = vmatpush1.msra.mxu0 %v543
    %2223 = vmatprep.subr.mxu0 %v558
    %2224 = vmatpush1.msra.mxu0 %v557
    %2225 = vmatprep.subr.mxu0 %v572
    %2226 = vmatpush1.msra.mxu0 %v571
    %2227 = vmatprep.subr.mxu0 %v586
    %2228 = vmatpush1.msra.mxu0 %v585
    %2229 = vmatprep.subr.mxu0 %v600
    %2230 = vmatpush1.msra.mxu0 %v599
    %2231 = vmatprep.subr.mxu0 %v614
    %2232 = vmatpush1.msra.mxu0 %v613
    %2233 = vmatprep.mubr.f32.mxu0 %v1882
    %2234 = vmatmul.mubr.f32.gmra.mrb[0].mxu0 %v1881
    %v2235 = vpop.f32.mrb[0].mxu0
    %v2236 = vadd.f32 0.0, %v2235
    %v2237 = vpop.f32.mrb[0].mxu0
    %v2238 = vadd.f32 0.0, %v2237
    %2239 = vdwg.mxu0
    %2240 = vmatprep.subr.mxu0 %v628
    %2241 = vmatpush1.msra.mxu0 %v627
    %2242 = vmatprep.subr.mxu0 %v642
    %2243 = vmatpush1.msra.mxu0 %v641
    %2244 = vmatprep.subr.mxu0 %v656
    %2245 = vmatpush1.msra.mxu0 %v655
    %2246 = vmatprep.subr.mxu0 %v670
    %2247 = vmatpush1.msra.mxu0 %v669
    %2248 = vmatprep.subr.mxu0 %v684
    %2249 = vmatpush1.msra.mxu0 %v683
    %2250 = vmatprep.subr.mxu0 %v698
    %2251 = vmatpush1.msra.mxu0 %v697
    %2252 = vmatprep.subr.mxu0 %v712
    %2253 = vmatpush1.msra.mxu0 %v711
    %2254 = vmatprep.subr.mxu0 %v726
    %2255 = vmatpush1.msra.mxu0 %v725
    %2256 = vmatprep.subr.mxu0 %v740
    %2257 = vmatpush1.msra.mxu0 %v739
    %2258 = vmatprep.subr.mxu0 %v754
    %2259 = vmatpush1.msra.mxu0 %v753
    %2260 = vmatprep.subr.mxu0 %v768
    %2261 = vmatpush1.msra.mxu0 %v767
    %2262 = vmatprep.subr.mxu0 %v782
    %2263 = vmatpush1.msra.mxu0 %v781
    %2264 = vmatprep.subr.mxu0 %v796
    %2265 = vmatpush1.msra.mxu0 %v795
    %2266 = vmatprep.subr.mxu0 %v810
    %2267 = vmatpush1.msra.mxu0 %v809
    %2268 = vmatprep.subr.mxu0 %v824
    %2269 = vmatpush1.msra.mxu0 %v823
    %2270 = vmatprep.subr.mxu0 %v838
    %2271 = vmatpush1.msra.mxu0 %v837
    %2272 = vmatprep.subr.mxu0 %v852
    %2273 = vmatpush1.msra.mxu0 %v851
    %2274 = vmatprep.subr.mxu0 %v866
    %2275 = vmatpush1.msra.mxu0 %v865
    %2276 = vmatprep.subr.mxu0 %v880
    %2277 = vmatpush1.msra.mxu0 %v879
    %2278 = vmatprep.subr.mxu0 %v894
    %2279 = vmatpush1.msra.mxu0 %v893
    %2280 = vmatprep.subr.mxu0 %v908
    %2281 = vmatpush1.msra.mxu0 %v907
    %2282 = vmatprep.subr.mxu0 %v922
    %2283 = vmatpush1.msra.mxu0 %v921
    %2284 = vmatprep.subr.mxu0 %v936
    %2285 = vmatpush1.msra.mxu0 %v935
    %2286 = vmatprep.subr.mxu0 %v950
    %2287 = vmatpush1.msra.mxu0 %v949
    %2288 = vmatprep.subr.mxu0 %v964
    %2289 = vmatpush1.msra.mxu0 %v963
    %2290 = vmatprep.subr.mxu0 %v978
    %2291 = vmatpush1.msra.mxu0 %v977
    %2292 = vmatprep.subr.mxu0 %v992
    %2293 = vmatpush1.msra.mxu0 %v991
    %2294 = vmatprep.subr.mxu0 %v1006
    %2295 = vmatpush1.msra.mxu0 %v1005
    %2296 = vmatprep.subr.mxu0 %v1020
    %2297 = vmatpush1.msra.mxu0 %v1019
    %2298 = vmatprep.subr.mxu0 %v1034
    %2299 = vmatpush1.msra.mxu0 %v1033
    %2300 = vmatprep.subr.mxu0 %v1048
    %2301 = vmatpush1.msra.mxu0 %v1047
    %2302 = vmatprep.subr.mxu0 %v1062
    %2303 = vmatpush1.msra.mxu0 %v1061
    %2304 = vmatprep.mubr.f32.mxu0 0.0
    %2305 = vmatmul.mubr.f32.gmra.mrb[0].mxu0 0.0
    %v2306 = vpop.f32.mrb[0].mxu0
    %v2307 = vadd.f32 %v2236, %v2306
    %v2308 = vpop.f32.mrb[0].mxu0
    %v2309 = vadd.f32 %v2238, %v2308
    %2310 = vdwg.mxu0
    %2311 = vmatprep.subr.mxu0 %v182
    %2312 = vmatpush1.msra.mxu0 %v181
    %2313 = vmatprep.subr.mxu0 %v196
    %2314 = vmatpush1.msra.mxu0 %v195
    %2315 = vmatprep.subr.mxu0 %v210
    %2316 = vmatpush1.msra.mxu0 %v209
    %2317 = vmatprep.subr.mxu0 %v224
    %2318 = vmatpush1.msra.mxu0 %v223
    %2319 = vmatprep.subr.mxu0 %v238
    %2320 = vmatpush1.msra.mxu0 %v237
    %2321 = vmatprep.subr.mxu0 %v252
    %2322 = vmatpush1.msra.mxu0 %v251
    %2323 = vmatprep.subr.mxu0 %v266
    %2324 = vmatpush1.msra.mxu0 %v265
    %2325 = vmatprep.subr.mxu0 %v280
    %2326 = vmatpush1.msra.mxu0 %v279
    %2327 = vmatprep.subr.mxu0 %v294
    %2328 = vmatpush1.msra.mxu0 %v293
    %2329 = vmatprep.subr.mxu0 %v308
    %2330 = vmatpush1.msra.mxu0 %v307
    %2331 = vmatprep.subr.mxu0 %v322
    %2332 = vmatpush1.msra.mxu0 %v321
    %2333 = vmatprep.subr.mxu0 %v336
    %2334 = vmatpush1.msra.mxu0 %v335
    %2335 = vmatprep.subr.mxu0 %v350
    %2336 = vmatpush1.msra.mxu0 %v349
    %2337 = vmatprep.subr.mxu0 %v364
    %2338 = vmatpush1.msra.mxu0 %v363
    %2339 = vmatprep.subr.mxu0 %v378
    %2340 = vmatpush1.msra.mxu0 %v377
    %2341 = vmatprep.subr.mxu0 %v392
    %2342 = vmatpush1.msra.mxu0 %v391
    %2343 = vmatprep.subr.mxu0 %v406
    %2344 = vmatpush1.msra.mxu0 %v405
    %2345 = vmatprep.subr.mxu0 %v420
    %2346 = vmatpush1.msra.mxu0 %v419
    %2347 = vmatprep.subr.mxu0 %v434
    %2348 = vmatpush1.msra.mxu0 %v433
    %2349 = vmatprep.subr.mxu0 %v448
    %2350 = vmatpush1.msra.mxu0 %v447
    %2351 = vmatprep.subr.mxu0 %v462
    %2352 = vmatpush1.msra.mxu0 %v461
    %2353 = vmatprep.subr.mxu0 %v476
    %2354 = vmatpush1.msra.mxu0 %v475
    %2355 = vmatprep.subr.mxu0 %v490
    %2356 = vmatpush1.msra.mxu0 %v489
    %2357 = vmatprep.subr.mxu0 %v504
    %2358 = vmatpush1.msra.mxu0 %v503
    %2359 = vmatprep.subr.mxu0 %v518
    %2360 = vmatpush1.msra.mxu0 %v517
    %2361 = vmatprep.subr.mxu0 %v532
    %2362 = vmatpush1.msra.mxu0 %v531
    %2363 = vmatprep.subr.mxu0 %v546
    %2364 = vmatpush1.msra.mxu0 %v545
    %2365 = vmatprep.subr.mxu0 %v560
    %2366 = vmatpush1.msra.mxu0 %v559
    %2367 = vmatprep.subr.mxu0 %v574
    %2368 = vmatpush1.msra.mxu0 %v573
    %2369 = vmatprep.subr.mxu0 %v588
    %2370 = vmatpush1.msra.mxu0 %v587
    %2371 = vmatprep.subr.mxu0 %v602
    %2372 = vmatpush1.msra.mxu0 %v601
    %2373 = vmatprep.subr.mxu0 %v616
    %2374 = vmatpush1.msra.mxu0 %v615
    %2375 = vmatprep.mubr.f32.mxu0 %v1882
    %2376 = vmatmul.mubr.f32.gmra.mrb[0].mxu0 %v1881
    %v2377 = vpop.f32.mrb[0].mxu0
    %v2378 = vadd.f32 0.0, %v2377
    %v2379 = vpop.f32.mrb[0].mxu0
    %v2380 = vadd.f32 0.0, %v2379
    %2381 = vdwg.mxu0
    %2382 = vmatprep.subr.mxu0 %v630
    %2383 = vmatpush1.msra.mxu0 %v629
    %2384 = vmatprep.subr.mxu0 %v644
    %2385 = vmatpush1.msra.mxu0 %v643
    %2386 = vmatprep.subr.mxu0 %v658
    %2387 = vmatpush1.msra.mxu0 %v657
    %2388 = vmatprep.subr.mxu0 %v672
    %2389 = vmatpush1.msra.mxu0 %v671
    %2390 = vmatprep.subr.mxu0 %v686
    %2391 = vmatpush1.msra.mxu0 %v685
    %2392 = vmatprep.subr.mxu0 %v700
    %2393 = vmatpush1.msra.mxu0 %v699
    %2394 = vmatprep.subr.mxu0 %v714
    %2395 = vmatpush1.msra.mxu0 %v713
    %2396 = vmatprep.subr.mxu0 %v728
    %2397 = vmatpush1.msra.mxu0 %v727
    %2398 = vmatprep.subr.mxu0 %v742
    %2399 = vmatpush1.msra.mxu0 %v741
    %2400 = vmatprep.subr.mxu0 %v756
    %2401 = vmatpush1.msra.mxu0 %v755
    %2402 = vmatprep.subr.mxu0 %v770
    %2403 = vmatpush1.msra.mxu0 %v769
    %2404 = vmatprep.subr.mxu0 %v784
    %2405 = vmatpush1.msra.mxu0 %v783
    %2406 = vmatprep.subr.mxu0 %v798
    %2407 = vmatpush1.msra.mxu0 %v797
    %2408 = vmatprep.subr.mxu0 %v812
    %2409 = vmatpush1.msra.mxu0 %v811
    %2410 = vmatprep.subr.mxu0 %v826
    %2411 = vmatpush1.msra.mxu0 %v825
    %2412 = vmatprep.subr.mxu0 %v840
    %2413 = vmatpush1.msra.mxu0 %v839
    %2414 = vmatprep.subr.mxu0 %v854
    %2415 = vmatpush1.msra.mxu0 %v853
    %2416 = vmatprep.subr.mxu0 %v868
    %2417 = vmatpush1.msra.mxu0 %v867
    %2418 = vmatprep.subr.mxu0 %v882
    %2419 = vmatpush1.msra.mxu0 %v881
    %2420 = vmatprep.subr.mxu0 %v896
    %2421 = vmatpush1.msra.mxu0 %v895
    %2422 = vmatprep.subr.mxu0 %v910
    %2423 = vmatpush1.msra.mxu0 %v909
    %2424 = vmatprep.subr.mxu0 %v924
    %2425 = vmatpush1.msra.mxu0 %v923
    %2426 = vmatprep.subr.mxu0 %v938
    %2427 = vmatpush1.msra.mxu0 %v937
    %2428 = vmatprep.subr.mxu0 %v952
    %2429 = vmatpush1.msra.mxu0 %v951
    %2430 = vmatprep.subr.mxu0 %v966
    %2431 = vmatpush1.msra.mxu0 %v965
    %2432 = vmatprep.subr.mxu0 %v980
    %2433 = vmatpush1.msra.mxu0 %v979
    %2434 = vmatprep.subr.mxu0 %v994
    %2435 = vmatpush1.msra.mxu0 %v993
    %2436 = vmatprep.subr.mxu0 %v1008
    %2437 = vmatpush1.msra.mxu0 %v1007
    %2438 = vmatprep.subr.mxu0 %v1022
    %2439 = vmatpush1.msra.mxu0 %v1021
    %2440 = vmatprep.subr.mxu0 %v1036
    %2441 = vmatpush1.msra.mxu0 %v1035
    %2442 = vmatprep.subr.mxu0 %v1050
    %2443 = vmatpush1.msra.mxu0 %v1049
    %2444 = vmatprep.subr.mxu0 %v1064
    %2445 = vmatpush1.msra.mxu0 %v1063
    %2446 = vmatprep.mubr.f32.mxu0 0.0
    %2447 = vmatmul.mubr.f32.gmra.mrb[0].mxu0 0.0
    %v2448 = vpop.f32.mrb[0].mxu0
    %v2449 = vadd.f32 %v2378, %v2448
    %v2450 = vpop.f32.mrb[0].mxu0
    %v2451 = vadd.f32 %v2380, %v2450
    %2452 = vdwg.mxu0
    %2453 = vmatprep.subr.mxu0 %v184
    %2454 = vmatpush1.msra.mxu0 %v183
    %2455 = vmatprep.subr.mxu0 %v198
    %2456 = vmatpush1.msra.mxu0 %v197
    %2457 = vmatprep.subr.mxu0 %v212
    %2458 = vmatpush1.msra.mxu0 %v211
    %2459 = vmatprep.subr.mxu0 %v226
    %2460 = vmatpush1.msra.mxu0 %v225
    %2461 = vmatprep.subr.mxu0 %v240
    %2462 = vmatpush1.msra.mxu0 %v239
    %2463 = vmatprep.subr.mxu0 %v254
    %2464 = vmatpush1.msra.mxu0 %v253
    %2465 = vmatprep.subr.mxu0 %v268
    %2466 = vmatpush1.msra.mxu0 %v267
    %2467 = vmatprep.subr.mxu0 %v282
    %2468 = vmatpush1.msra.mxu0 %v281
    %2469 = vmatprep.subr.mxu0 %v296
    %2470 = vmatpush1.msra.mxu0 %v295
    %2471 = vmatprep.subr.mxu0 %v310
    %2472 = vmatpush1.msra.mxu0 %v309
    %2473 = vmatprep.subr.mxu0 %v324
    %2474 = vmatpush1.msra.mxu0 %v323
    %2475 = vmatprep.subr.mxu0 %v338
    %2476 = vmatpush1.msra.mxu0 %v337
    %2477 = vmatprep.subr.mxu0 %v352
    %2478 = vmatpush1.msra.mxu0 %v351
    %2479 = vmatprep.subr.mxu0 %v366
    %2480 = vmatpush1.msra.mxu0 %v365
    %2481 = vmatprep.subr.mxu0 %v380
    %2482 = vmatpush1.msra.mxu0 %v379
    %2483 = vmatprep.subr.mxu0 %v394
    %2484 = vmatpush1.msra.mxu0 %v393
    %2485 = vmatprep.subr.mxu0 %v408
    %2486 = vmatpush1.msra.mxu0 %v407
    %2487 = vmatprep.subr.mxu0 %v422
    %2488 = vmatpush1.msra.mxu0 %v421
    %2489 = vmatprep.subr.mxu0 %v436
    %2490 = vmatpush1.msra.mxu0 %v435
    %2491 = vmatprep.subr.mxu0 %v450
    %2492 = vmatpush1.msra.mxu0 %v449
    %2493 = vmatprep.subr.mxu0 %v464
    %2494 = vmatpush1.msra.mxu0 %v463
    %2495 = vmatprep.subr.mxu0 %v478
    %2496 = vmatpush1.msra.mxu0 %v477
    %2497 = vmatprep.subr.mxu0 %v492
    %2498 = vmatpush1.msra.mxu0 %v491
    %2499 = vmatprep.subr.mxu0 %v506
    %2500 = vmatpush1.msra.mxu0 %v505
    %2501 = vmatprep.subr.mxu0 %v520
    %2502 = vmatpush1.msra.mxu0 %v519
    %2503 = vmatprep.subr.mxu0 %v534
    %2504 = vmatpush1.msra.mxu0 %v533
    %2505 = vmatprep.subr.mxu0 %v548
    %2506 = vmatpush1.msra.mxu0 %v547
    %2507 = vmatprep.subr.mxu0 %v562
    %2508 = vmatpush1.msra.mxu0 %v561
    %2509 = vmatprep.subr.mxu0 %v576
    %2510 = vmatpush1.msra.mxu0 %v575
    %2511 = vmatprep.subr.mxu0 %v590
    %2512 = vmatpush1.msra.mxu0 %v589
    %2513 = vmatprep.subr.mxu0 %v604
    %2514 = vmatpush1.msra.mxu0 %v603
    %2515 = vmatprep.subr.mxu0 %v618
    %2516 = vmatpush1.msra.mxu0 %v617
    %2517 = vmatprep.mubr.f32.mxu0 %v1882
    %2518 = vmatmul.mubr.f32.gmra.mrb[0].mxu0 %v1881
    %v2519 = vpop.f32.mrb[0].mxu0
    %v2520 = vadd.f32 0.0, %v2519
    %v2521 = vpop.f32.mrb[0].mxu0
    %v2522 = vadd.f32 0.0, %v2521
    %2523 = vdwg.mxu0
    %2524 = vmatprep.subr.mxu0 %v632
    %2525 = vmatpush1.msra.mxu0 %v631
    %2526 = vmatprep.subr.mxu0 %v646
    %2527 = vmatpush1.msra.mxu0 %v645
    %2528 = vmatprep.subr.mxu0 %v660
    %2529 = vmatpush1.msra.mxu0 %v659
    %2530 = vmatprep.subr.mxu0 %v674
    %2531 = vmatpush1.msra.mxu0 %v673
    %2532 = vmatprep.subr.mxu0 %v688
    %2533 = vmatpush1.msra.mxu0 %v687
    %2534 = vmatprep.subr.mxu0 %v702
    %2535 = vmatpush1.msra.mxu0 %v701
    %2536 = vmatprep.subr.mxu0 %v716
    %2537 = vmatpush1.msra.mxu0 %v715
    %2538 = vmatprep.subr.mxu0 %v730
    %2539 = vmatpush1.msra.mxu0 %v729
    %2540 = vmatprep.subr.mxu0 %v744
    %2541 = vmatpush1.msra.mxu0 %v743
    %2542 = vmatprep.subr.mxu0 %v758
    %2543 = vmatpush1.msra.mxu0 %v757
    %2544 = vmatprep.subr.mxu0 %v772
    %2545 = vmatpush1.msra.mxu0 %v771
    %2546 = vmatprep.subr.mxu0 %v786
    %2547 = vmatpush1.msra.mxu0 %v785
    %2548 = vmatprep.subr.mxu0 %v800
    %2549 = vmatpush1.msra.mxu0 %v799
    %2550 = vmatprep.subr.mxu0 %v814
    %2551 = vmatpush1.msra.mxu0 %v813
    %2552 = vmatprep.subr.mxu0 %v828
    %2553 = vmatpush1.msra.mxu0 %v827
    %2554 = vmatprep.subr.mxu0 %v842
    %2555 = vmatpush1.msra.mxu0 %v841
    %2556 = vmatprep.subr.mxu0 %v856
    %2557 = vmatpush1.msra.mxu0 %v855
    %2558 = vmatprep.subr.mxu0 %v870
    %2559 = vmatpush1.msra.mxu0 %v869
    %2560 = vmatprep.subr.mxu0 %v884
    %2561 = vmatpush1.msra.mxu0 %v883
    %2562 = vmatprep.subr.mxu0 %v898
    %2563 = vmatpush1.msra.mxu0 %v897
    %2564 = vmatprep.subr.mxu0 %v912
    %2565 = vmatpush1.msra.mxu0 %v911
    %2566 = vmatprep.subr.mxu0 %v926
    %2567 = vmatpush1.msra.mxu0 %v925
    %2568 = vmatprep.subr.mxu0 %v940
    %2569 = vmatpush1.msra.mxu0 %v939
    %2570 = vmatprep.subr.mxu0 %v954
    %2571 = vmatpush1.msra.mxu0 %v953
    %2572 = vmatprep.subr.mxu0 %v968
    %2573 = vmatpush1.msra.mxu0 %v967
    %2574 = vmatprep.subr.mxu0 %v982
    %2575 = vmatpush1.msra.mxu0 %v981
    %2576 = vmatprep.subr.mxu0 %v996
    %2577 = vmatpush1.msra.mxu0 %v995
    %2578 = vmatprep.subr.mxu0 %v1010
    %2579 = vmatpush1.msra.mxu0 %v1009
    %2580 = vmatprep.subr.mxu0 %v1024
    %2581 = vmatpush1.msra.mxu0 %v1023
    %2582 = vmatprep.subr.mxu0 %v1038
    %2583 = vmatpush1.msra.mxu0 %v1037
    %2584 = vmatprep.subr.mxu0 %v1052
    %2585 = vmatpush1.msra.mxu0 %v1051
    %2586 = vmatprep.subr.mxu0 %v1066
    %2587 = vmatpush1.msra.mxu0 %v1065
    %2588 = vmatprep.mubr.f32.mxu0 0.0
    %2589 = vmatmul.mubr.f32.gmra.mrb[0].mxu0 0.0
    %v2590 = vpop.f32.mrb[0].mxu0
    %v2591 = vadd.f32 %v2520, %v2590
    %v2592 = vpop.f32.mrb[0].mxu0
    %v2593 = vadd.f32 %v2522, %v2592
    %2594 = vdwg.mxu0
    %2595 = vmatprep.subr.mxu0 %v186
    %2596 = vmatpush1.msra.mxu0 %v185
    %2597 = vmatprep.subr.mxu0 %v200
    %2598 = vmatpush1.msra.mxu0 %v199
    %2599 = vmatprep.subr.mxu0 %v214
    %2600 = vmatpush1.msra.mxu0 %v213
    %2601 = vmatprep.subr.mxu0 %v228
    %2602 = vmatpush1.msra.mxu0 %v227
    %2603 = vmatprep.subr.mxu0 %v242
    %2604 = vmatpush1.msra.mxu0 %v241
    %2605 = vmatprep.subr.mxu0 %v256
    %2606 = vmatpush1.msra.mxu0 %v255
    %2607 = vmatprep.subr.mxu0 %v270
    %2608 = vmatpush1.msra.mxu0 %v269
    %2609 = vmatprep.subr.mxu0 %v284
    %2610 = vmatpush1.msra.mxu0 %v283
    %2611 = vmatprep.subr.mxu0 %v298
    %2612 = vmatpush1.msra.mxu0 %v297
    %2613 = vmatprep.subr.mxu0 %v312
    %2614 = vmatpush1.msra.mxu0 %v311
    %2615 = vmatprep.subr.mxu0 %v326
    %2616 = vmatpush1.msra.mxu0 %v325
    %2617 = vmatprep.subr.mxu0 %v340
    %2618 = vmatpush1.msra.mxu0 %v339
    %2619 = vmatprep.subr.mxu0 %v354
    %2620 = vmatpush1.msra.mxu0 %v353
    %2621 = vmatprep.subr.mxu0 %v368
    %2622 = vmatpush1.msra.mxu0 %v367
    %2623 = vmatprep.subr.mxu0 %v382
    %2624 = vmatpush1.msra.mxu0 %v381
    %2625 = vmatprep.subr.mxu0 %v396
    %2626 = vmatpush1.msra.mxu0 %v395
    %2627 = vmatprep.subr.mxu0 %v410
    %2628 = vmatpush1.msra.mxu0 %v409
    %2629 = vmatprep.subr.mxu0 %v424
    %2630 = vmatpush1.msra.mxu0 %v423
    %2631 = vmatprep.subr.mxu0 %v438
    %2632 = vmatpush1.msra.mxu0 %v437
    %2633 = vmatprep.subr.mxu0 %v452
    %2634 = vmatpush1.msra.mxu0 %v451
    %2635 = vmatprep.subr.mxu0 %v466
    %2636 = vmatpush1.msra.mxu0 %v465
    %2637 = vmatprep.subr.mxu0 %v480
    %2638 = vmatpush1.msra.mxu0 %v479
    %2639 = vmatprep.subr.mxu0 %v494
    %2640 = vmatpush1.msra.mxu0 %v493
    %2641 = vmatprep.subr.mxu0 %v508
    %2642 = vmatpush1.msra.mxu0 %v507
    %2643 = vmatprep.subr.mxu0 %v522
    %2644 = vmatpush1.msra.mxu0 %v521
    %2645 = vmatprep.subr.mxu0 %v536
    %2646 = vmatpush1.msra.mxu0 %v535
    %2647 = vmatprep.subr.mxu0 %v550
    %2648 = vmatpush1.msra.mxu0 %v549
    %2649 = vmatprep.subr.mxu0 %v564
    %2650 = vmatpush1.msra.mxu0 %v563
    %2651 = vmatprep.subr.mxu0 %v578
    %2652 = vmatpush1.msra.mxu0 %v577
    %2653 = vmatprep.subr.mxu0 %v592
    %2654 = vmatpush1.msra.mxu0 %v591
    %2655 = vmatprep.subr.mxu0 %v606
    %2656 = vmatpush1.msra.mxu0 %v605
    %2657 = vmatprep.subr.mxu0 %v620
    %2658 = vmatpush1.msra.mxu0 %v619
    %2659 = vmatprep.mubr.f32.mxu0 %v1882
    %2660 = vmatmul.mubr.f32.gmra.mrb[0].mxu0 %v1881
    %v2661 = vpop.f32.mrb[0].mxu0
    %v2662 = vadd.f32 0.0, %v2661
    %v2663 = vpop.f32.mrb[0].mxu0
    %v2664 = vadd.f32 0.0, %v2663
    %2665 = vdwg.mxu0
    %2666 = vmatprep.subr.mxu0 %v634
    %2667 = vmatpush1.msra.mxu0 %v633
    %2668 = vmatprep.subr.mxu0 %v648
    %2669 = vmatpush1.msra.mxu0 %v647
    %2670 = vmatprep.subr.mxu0 %v662
    %2671 = vmatpush1.msra.mxu0 %v661
    %2672 = vmatprep.subr.mxu0 %v676
    %2673 = vmatpush1.msra.mxu0 %v675
    %2674 = vmatprep.subr.mxu0 %v690
    %2675 = vmatpush1.msra.mxu0 %v689
    %2676 = vmatprep.subr.mxu0 %v704
    %2677 = vmatpush1.msra.mxu0 %v703
    %2678 = vmatprep.subr.mxu0 %v718
    %2679 = vmatpush1.msra.mxu0 %v717
    %2680 = vmatprep.subr.mxu0 %v732
    %2681 = vmatpush1.msra.mxu0 %v731
    %2682 = vmatprep.subr.mxu0 %v746
    %2683 = vmatpush1.msra.mxu0 %v745
    %2684 = vmatprep.subr.mxu0 %v760
    %2685 = vmatpush1.msra.mxu0 %v759
    %2686 = vmatprep.subr.mxu0 %v774
    %2687 = vmatpush1.msra.mxu0 %v773
    %2688 = vmatprep.subr.mxu0 %v788
    %2689 = vmatpush1.msra.mxu0 %v787
    %2690 = vmatprep.subr.mxu0 %v802
    %2691 = vmatpush1.msra.mxu0 %v801
    %2692 = vmatprep.subr.mxu0 %v816
    %2693 = vmatpush1.msra.mxu0 %v815
    %2694 = vmatprep.subr.mxu0 %v830
    %2695 = vmatpush1.msra.mxu0 %v829
    %2696 = vmatprep.subr.mxu0 %v844
    %2697 = vmatpush1.msra.mxu0 %v843
    %2698 = vmatprep.subr.mxu0 %v858
    %2699 = vmatpush1.msra.mxu0 %v857
    %2700 = vmatprep.subr.mxu0 %v872
    %2701 = vmatpush1.msra.mxu0 %v871
    %2702 = vmatprep.subr.mxu0 %v886
    %2703 = vmatpush1.msra.mxu0 %v885
    %2704 = vmatprep.subr.mxu0 %v900
    %2705 = vmatpush1.msra.mxu0 %v899
    %2706 = vmatprep.subr.mxu0 %v914
    %2707 = vmatpush1.msra.mxu0 %v913
    %2708 = vmatprep.subr.mxu0 %v928
    %2709 = vmatpush1.msra.mxu0 %v927
    %2710 = vmatprep.subr.mxu0 %v942
    %2711 = vmatpush1.msra.mxu0 %v941
    %2712 = vmatprep.subr.mxu0 %v956
    %2713 = vmatpush1.msra.mxu0 %v955
    %2714 = vmatprep.subr.mxu0 %v970
    %2715 = vmatpush1.msra.mxu0 %v969
    %2716 = vmatprep.subr.mxu0 %v984
    %2717 = vmatpush1.msra.mxu0 %v983
    %2718 = vmatprep.subr.mxu0 %v998
    %2719 = vmatpush1.msra.mxu0 %v997
    %2720 = vmatprep.subr.mxu0 %v1012
    %2721 = vmatpush1.msra.mxu0 %v1011
    %2722 = vmatprep.subr.mxu0 %v1026
    %2723 = vmatpush1.msra.mxu0 %v1025
    %2724 = vmatprep.subr.mxu0 %v1040
    %2725 = vmatpush1.msra.mxu0 %v1039
    %2726 = vmatprep.subr.mxu0 %v1054
    %2727 = vmatpush1.msra.mxu0 %v1053
    %2728 = vmatprep.subr.mxu0 %v1068
    %2729 = vmatpush1.msra.mxu0 %v1067
    %2730 = vmatprep.mubr.f32.mxu0 0.0
    %2731 = vmatmul.mubr.f32.gmra.mrb[0].mxu0 0.0
    %v2732 = vpop.f32.mrb[0].mxu0
    %v2733 = vadd.f32 %v2662, %v2732
    %v2734 = vpop.f32.mrb[0].mxu0
    %v2735 = vadd.f32 %v2664, %v2734
    %2736 = vdwg.mxu0
    %2737 = vmatprep.subr.mxu0 %v188
    %2738 = vmatpush1.msra.mxu0 %v187
    %2739 = vmatprep.subr.mxu0 %v202
    %2740 = vmatpush1.msra.mxu0 %v201
    %2741 = vmatprep.subr.mxu0 %v216
    %2742 = vmatpush1.msra.mxu0 %v215
    %2743 = vmatprep.subr.mxu0 %v230
    %2744 = vmatpush1.msra.mxu0 %v229
    %2745 = vmatprep.subr.mxu0 %v244
    %2746 = vmatpush1.msra.mxu0 %v243
    %2747 = vmatprep.subr.mxu0 %v258
    %2748 = vmatpush1.msra.mxu0 %v257
    %2749 = vmatprep.subr.mxu0 %v272
    %2750 = vmatpush1.msra.mxu0 %v271
    %2751 = vmatprep.subr.mxu0 %v286
    %2752 = vmatpush1.msra.mxu0 %v285
    %2753 = vmatprep.subr.mxu0 %v300
    %2754 = vmatpush1.msra.mxu0 %v299
    %2755 = vmatprep.subr.mxu0 %v314
    %2756 = vmatpush1.msra.mxu0 %v313
    %2757 = vmatprep.subr.mxu0 %v328
    %2758 = vmatpush1.msra.mxu0 %v327
    %2759 = vmatprep.subr.mxu0 %v342
    %2760 = vmatpush1.msra.mxu0 %v341
    %2761 = vmatprep.subr.mxu0 %v356
    %2762 = vmatpush1.msra.mxu0 %v355
    %2763 = vmatprep.subr.mxu0 %v370
    %2764 = vmatpush1.msra.mxu0 %v369
    %2765 = vmatprep.subr.mxu0 %v384
    %2766 = vmatpush1.msra.mxu0 %v383
    %2767 = vmatprep.subr.mxu0 %v398
    %2768 = vmatpush1.msra.mxu0 %v397
    %2769 = vmatprep.subr.mxu0 %v412
    %2770 = vmatpush1.msra.mxu0 %v411
    %2771 = vmatprep.subr.mxu0 %v426
    %2772 = vmatpush1.msra.mxu0 %v425
    %2773 = vmatprep.subr.mxu0 %v440
    %2774 = vmatpush1.msra.mxu0 %v439
    %2775 = vmatprep.subr.mxu0 %v454
    %2776 = vmatpush1.msra.mxu0 %v453
    %2777 = vmatprep.subr.mxu0 %v468
    %2778 = vmatpush1.msra.mxu0 %v467
    %2779 = vmatprep.subr.mxu0 %v482
    %2780 = vmatpush1.msra.mxu0 %v481
    %2781 = vmatprep.subr.mxu0 %v496
    %2782 = vmatpush1.msra.mxu0 %v495
    %2783 = vmatprep.subr.mxu0 %v510
    %2784 = vmatpush1.msra.mxu0 %v509
    %2785 = vmatprep.subr.mxu0 %v524
    %2786 = vmatpush1.msra.mxu0 %v523
    %2787 = vmatprep.subr.mxu0 %v538
    %2788 = vmatpush1.msra.mxu0 %v537
    %2789 = vmatprep.subr.mxu0 %v552
    %2790 = vmatpush1.msra.mxu0 %v551
    %2791 = vmatprep.subr.mxu0 %v566
    %2792 = vmatpush1.msra.mxu0 %v565
    %2793 = vmatprep.subr.mxu0 %v580
    %2794 = vmatpush1.msra.mxu0 %v579
    %2795 = vmatprep.subr.mxu0 %v594
    %2796 = vmatpush1.msra.mxu0 %v593
    %2797 = vmatprep.subr.mxu0 %v608
    %2798 = vmatpush1.msra.mxu0 %v607
    %2799 = vmatprep.subr.mxu0 %v622
    %2800 = vmatpush1.msra.mxu0 %v621
    %2801 = vmatprep.mubr.f32.mxu0 %v1882
    %2802 = vmatmul.mubr.f32.gmra.mrb[0].mxu0 %v1881
    %v2803 = vpop.f32.mrb[0].mxu0
    %v2804 = vadd.f32 0.0, %v2803
    %v2805 = vpop.f32.mrb[0].mxu0
    %v2806 = vadd.f32 0.0, %v2805
    %2807 = vdwg.mxu0
    %2808 = vmatprep.subr.mxu0 %v636
    %2809 = vmatpush1.msra.mxu0 %v635
    %2810 = vmatprep.subr.mxu0 %v650
    %2811 = vmatpush1.msra.mxu0 %v649
    %2812 = vmatprep.subr.mxu0 %v664
    %2813 = vmatpush1.msra.mxu0 %v663
    %2814 = vmatprep.subr.mxu0 %v678
    %2815 = vmatpush1.msra.mxu0 %v677
    %2816 = vmatprep.subr.mxu0 %v692
    %2817 = vmatpush1.msra.mxu0 %v691
    %2818 = vmatprep.subr.mxu0 %v706
    %2819 = vmatpush1.msra.mxu0 %v705
    %2820 = vmatprep.subr.mxu0 %v720
    %2821 = vmatpush1.msra.mxu0 %v719
    %2822 = vmatprep.subr.mxu0 %v734
    %2823 = vmatpush1.msra.mxu0 %v733
    %2824 = vmatprep.subr.mxu0 %v748
    %2825 = vmatpush1.msra.mxu0 %v747
    %2826 = vmatprep.subr.mxu0 %v762
    %2827 = vmatpush1.msra.mxu0 %v761
    %2828 = vmatprep.subr.mxu0 %v776
    %2829 = vmatpush1.msra.mxu0 %v775
    %2830 = vmatprep.subr.mxu0 %v790
    %2831 = vmatpush1.msra.mxu0 %v789
    %2832 = vmatprep.subr.mxu0 %v804
    %2833 = vmatpush1.msra.mxu0 %v803
    %2834 = vmatprep.subr.mxu0 %v818
    %2835 = vmatpush1.msra.mxu0 %v817
    %2836 = vmatprep.subr.mxu0 %v832
    %2837 = vmatpush1.msra.mxu0 %v831
    %2838 = vmatprep.subr.mxu0 %v846
    %2839 = vmatpush1.msra.mxu0 %v845
    %2840 = vmatprep.subr.mxu0 %v860
    %2841 = vmatpush1.msra.mxu0 %v859
    %2842 = vmatprep.subr.mxu0 %v874
    %2843 = vmatpush1.msra.mxu0 %v873
    %2844 = vmatprep.subr.mxu0 %v888
    %2845 = vmatpush1.msra.mxu0 %v887
    %2846 = vmatprep.subr.mxu0 %v902
    %2847 = vmatpush1.msra.mxu0 %v901
    %2848 = vmatprep.subr.mxu0 %v916
    %2849 = vmatpush1.msra.mxu0 %v915
    %2850 = vmatprep.subr.mxu0 %v930
    %2851 = vmatpush1.msra.mxu0 %v929
    %2852 = vmatprep.subr.mxu0 %v944
    %2853 = vmatpush1.msra.mxu0 %v943
    %2854 = vmatprep.subr.mxu0 %v958
    %2855 = vmatpush1.msra.mxu0 %v957
    %2856 = vmatprep.subr.mxu0 %v972
    %2857 = vmatpush1.msra.mxu0 %v971
    %2858 = vmatprep.subr.mxu0 %v986
    %2859 = vmatpush1.msra.mxu0 %v985
    %2860 = vmatprep.subr.mxu0 %v1000
    %2861 = vmatpush1.msra.mxu0 %v999
    %2862 = vmatprep.subr.mxu0 %v1014
    %2863 = vmatpush1.msra.mxu0 %v1013
    %2864 = vmatprep.subr.mxu0 %v1028
    %2865 = vmatpush1.msra.mxu0 %v1027
    %2866 = vmatprep.subr.mxu0 %v1042
    %2867 = vmatpush1.msra.mxu0 %v1041
    %2868 = vmatprep.subr.mxu0 %v1056
    %2869 = vmatpush1.msra.mxu0 %v1055
    %2870 = vmatprep.subr.mxu0 %v1070
    %2871 = vmatpush1.msra.mxu0 %v1069
    %2872 = vmatprep.mubr.f32.mxu0 0.0
    %2873 = vmatmul.mubr.f32.gmra.mrb[0].mxu0 0.0
    %v2874 = vpop.f32.mrb[0].mxu0
    %v2875 = vadd.f32 %v2804, %v2874
    %v2876 = vpop.f32.mrb[0].mxu0
    %v2877 = vadd.f32 %v2806, %v2876
    %2878 = vdwg.mxu0
    %v2879 = vadd.f32 %v2449, %v1076
    %v2880 = vadd.f32 %v2451, %v1080
    %v2881 = vadd.f32 %v2591, %v1084
    %v2882 = vadd.f32 %v2593, %v1088
    %v2883 = vadd.f32 %v2733, %v1092
    %v2884 = vadd.f32 %v2735, %v1096
    %v2885 = vadd.f32 %v2875, %v1100
    %v2886 = vadd.f32 %v2877, %v1104
    %v2887 = vxor.u32 %v2879, 2147483648
    %v2888 = vxor.u32 %v2880, 2147483648
    %v2889 = vmul.f32 %v2887, 1.442695
    %v2890 = vpow.pop %v2889
    %v2891 = vmul.f32 %v2888, 1.442695
    %v2892 = vpow.pop %v2891
    %v2893 = vadd.f32 %v2890, 1.0
    %v2894 = vadd.f32 %v2892, 1.0
    %v2895 = vrcp.pop %v2893
    %v2896 = vmul.f32 1.0, %v2895
    %v2897 = vrcp.pop %v2894
    %v2898 = vmul.f32 1.0, %v2897
    %v2899 = vxor.u32 %v2881, 2147483648
    %v2900 = vxor.u32 %v2882, 2147483648
    %v2901 = vmul.f32 %v2899, 1.442695
    %v2902 = vpow.pop %v2901
    %v2903 = vmul.f32 %v2900, 1.442695
    %v2904 = vpow.pop %v2903
    %v2905 = vadd.f32 %v2902, 1.0
    %v2906 = vadd.f32 %v2904, 1.0
    %v2907 = vrcp.pop %v2905
    %v2908 = vmul.f32 1.0, %v2907
    %v2909 = vrcp.pop %v2906
    %v2910 = vmul.f32 1.0, %v2909
    %v2911 = vadd.f32 %v2885, %v1118
    %v2912 = vadd.f32 %v2886, %v1122
    %v2913 = vmul.f32 %v2896, %v2911
    %v2914 = vmul.f32 %v2898, %v2912
    %v2915 = vadd.f32 %v2883, %v2913
    %v2916 = vadd.f32 %v2884, %v2914
    %v2917 = vtanh.pop %v2915
    %v2918 = vtanh.pop %v2916
    %v2919 = vsub.f32 1.0, %v2908
    %v2920 = vsub.f32 1.0, %v2910
    %v2921 = vmul.f32 %v2919, %v2917
    %v2922 = vmul.f32 %v2920, %v2918
    %v2923 = vmul.f32 %v2908, 0.0
    %v2924 = vmul.f32 %v2910, 0.0
    %v2925 = vadd.f32 %v2921, %v2923
    %v2926 = vadd.f32 %v2922, %v2924
    %s2927 = scalar_lea.vmem [#allocation2], 12
    %v2928 = vld [vmem:[%s2927] sm:$0xff]
    %v2929 = vld [vmem:[%s2927 + $0x8] sm:$0xf]
    %v2932 = vcombine.low %v2023, %v2025
    %v2934 = vunpack.c.l.s4 1983009808
    %v2935 = vunpack.c.0.s8 %v2934
    %v2936 = vlaneseq
    %v2937 = vshrl.u32 %v2936, 7
    %v2938 = vsub.s32 %v2935, %v2937
    %v2939 = vrot.slane %v2932, %v2938
    %v2941 = vadd.f32 %v2928, %v2939
    %v2942 = vxor.u32 %v2941, 2147483648
    %v2943 = vmul.f32 %v2942, 1.442695
    %v2944 = vpow.pop %v2943
    %v2945 = vadd.f32 %v2944, 1.0
    %v2946 = vrcp.pop %v2945
    %v2947 = vmul.f32 1.0, %v2946
    %v2949 = vrot.slane %v2928, 4
    %v2953 = vcombine.low %v2165, %v2167
    %v2955 = vunpack.c.l.s4 1983009808
    %v2956 = vunpack.c.0.s8 %v2955
    %v2957 = vlaneseq
    %v2958 = vshrl.u32 %v2957, 7
    %v2959 = vsub.s32 %v2956, %v2958
    %v2960 = vrot.slane %v2953, %v2959
    %v2962 = vadd.f32 %v2949, %v2960
    %v2963 = vxor.u32 %v2962, 2147483648
    %v2964 = vmul.f32 %v2963, 1.442695
    %v2965 = vpow.pop %v2964
    %v2966 = vadd.f32 %v2965, 1.0
    %v2967 = vrcp.pop %v2966
    %v2968 = vmul.f32 1.0, %v2967
    %v2969 = vadd.f32 %v2307, %v168
    %v2970 = vadd.f32 %v2309, %v172
    %v2973 = vcombine.low %v2969, %v2970
    %v2975 = vunpack.c.l.s4 1983009808
    %v2976 = vunpack.c.0.s8 %v2975
    %v2977 = vlaneseq
    %v2978 = vshrl.u32 %v2977, 7
    %v2979 = vsub.s32 %v2976, %v2978
    %v2980 = vrot.slane %v2973, %v2979
    %v2982 = vmul.f32 %v2947, %v2980
    %v2983 = vadd.f32 %v2929, %v2982
    %v2984 = vtanh.pop %v2983
    %v2985 = vsub.f32 1.0, %v2968
    %v2986 = vmul.f32 %v2985, %v2984
    %v2987 = vmul.f32 %v2968, %v1873
    %v2988 = vadd.f32 %v2986, %v2987
    %v2991 = vunpack.c.l.s4 1983009808
    %v2992 = vunpack.c.0.s8 %v2991
    %v2993 = vlaneseq
    %v2994 = vshrl.u32 %v2993, 7
    %v2995 = vsub.s32 %v2992, %v2994
    %v2996 = vrot.slane %v2988, %v2995
    %v2997 = vcombine.high %v2996, %v2996
    %3000 = vmatprep.subr.mxu0 %v176
    %3001 = vmatpush1.msra.mxu0 %v175
    %3002 = vmatprep.subr.mxu0 %v190
    %3003 = vmatpush1.msra.mxu0 %v189
    %3004 = vmatprep.subr.mxu0 %v204
    %3005 = vmatpush1.msra.mxu0 %v203
    %3006 = vmatprep.subr.mxu0 %v218
    %3007 = vmatpush1.msra.mxu0 %v217
    %3008 = vmatprep.subr.mxu0 %v232
    %3009 = vmatpush1.msra.mxu0 %v231
    %3010 = vmatprep.subr.mxu0 %v246
    %3011 = vmatpush1.msra.mxu0 %v245
    %3012 = vmatprep.subr.mxu0 %v260
    %3013 = vmatpush1.msra.mxu0 %v259
    %3014 = vmatprep.subr.mxu0 %v274
    %3015 = vmatpush1.msra.mxu0 %v273
    %3016 = vmatprep.subr.mxu0 %v288
    %3017 = vmatpush1.msra.mxu0 %v287
    %3018 = vmatprep.subr.mxu0 %v302
    %3019 = vmatpush1.msra.mxu0 %v301
    %3020 = vmatprep.subr.mxu0 %v316
    %3021 = vmatpush1.msra.mxu0 %v315
    %3022 = vmatprep.subr.mxu0 %v330
    %3023 = vmatpush1.msra.mxu0 %v329
    %3024 = vmatprep.subr.mxu0 %v344
    %3025 = vmatpush1.msra.mxu0 %v343
    %3026 = vmatprep.subr.mxu0 %v358
    %3027 = vmatpush1.msra.mxu0 %v357
    %3028 = vmatprep.subr.mxu0 %v372
    %3029 = vmatpush1.msra.mxu0 %v371
    %3030 = vmatprep.subr.mxu0 %v386
    %3031 = vmatpush1.msra.mxu0 %v385
    %3032 = vmatprep.subr.mxu0 %v400
    %3033 = vmatpush1.msra.mxu0 %v399
    %3034 = vmatprep.subr.mxu0 %v414
    %3035 = vmatpush1.msra.mxu0 %v413
    %3036 = vmatprep.subr.mxu0 %v428
    %3037 = vmatpush1.msra.mxu0 %v427
    %3038 = vmatprep.subr.mxu0 %v442
    %3039 = vmatpush1.msra.mxu0 %v441
    %3040 = vmatprep.subr.mxu0 %v456
    %3041 = vmatpush1.msra.mxu0 %v455
    %3042 = vmatprep.subr.mxu0 %v470
    %3043 = vmatpush1.msra.mxu0 %v469
    %3044 = vmatprep.subr.mxu0 %v484
    %3045 = vmatpush1.msra.mxu0 %v483
    %3046 = vmatprep.subr.mxu0 %v498
    %3047 = vmatpush1.msra.mxu0 %v497
    %3048 = vmatprep.subr.mxu0 %v512
    %3049 = vmatpush1.msra.mxu0 %v511
    %3050 = vmatprep.subr.mxu0 %v526
    %3051 = vmatpush1.msra.mxu0 %v525
    %3052 = vmatprep.subr.mxu0 %v540
    %3053 = vmatpush1.msra.mxu0 %v539
    %3054 = vmatprep.subr.mxu0 %v554
    %3055 = vmatpush1.msra.mxu0 %v553
    %3056 = vmatprep.subr.mxu0 %v568
    %3057 = vmatpush1.msra.mxu0 %v567
    %3058 = vmatprep.subr.mxu0 %v582
    %3059 = vmatpush1.msra.mxu0 %v581
    %3060 = vmatprep.subr.mxu0 %v596
    %3061 = vmatpush1.msra.mxu0 %v595
    %3062 = vmatprep.subr.mxu0 %v610
    %3063 = vmatpush1.msra.mxu0 %v609
    %3064 = vmatprep.mubr.f32.mxu0 %v2997
    %3065 = vmatmul.mubr.f32.gmra.mrb[0].mxu0 %v2996
    %v3066 = vpop.f32.mrb[0].mxu0
    %v3067 = vadd.f32 0.0, %v3066
    %v3068 = vpop.f32.mrb[0].mxu0
    %v3069 = vadd.f32 0.0, %v3068
    %3070 = vdwg.mxu0
    %3071 = vmatprep.subr.mxu0 %v624
    %3072 = vmatpush1.msra.mxu0 %v623
    %3073 = vmatprep.subr.mxu0 %v638
    %3074 = vmatpush1.msra.mxu0 %v637
    %3075 = vmatprep.subr.mxu0 %v652
    %3076 = vmatpush1.msra.mxu0 %v651
    %3077 = vmatprep.subr.mxu0 %v666
    %3078 = vmatpush1.msra.mxu0 %v665
    %3079 = vmatprep.subr.mxu0 %v680
    %3080 = vmatpush1.msra.mxu0 %v679
    %3081 = vmatprep.subr.mxu0 %v694
    %3082 = vmatpush1.msra.mxu0 %v693
    %3083 = vmatprep.subr.mxu0 %v708
    %3084 = vmatpush1.msra.mxu0 %v707
    %3085 = vmatprep.subr.mxu0 %v722
    %3086 = vmatpush1.msra.mxu0 %v721
    %3087 = vmatprep.subr.mxu0 %v736
    %3088 = vmatpush1.msra.mxu0 %v735
    %3089 = vmatprep.subr.mxu0 %v750
    %3090 = vmatpush1.msra.mxu0 %v749
    %3091 = vmatprep.subr.mxu0 %v764
    %3092 = vmatpush1.msra.mxu0 %v763
    %3093 = vmatprep.subr.mxu0 %v778
    %3094 = vmatpush1.msra.mxu0 %v777
    %3095 = vmatprep.subr.mxu0 %v792
    %3096 = vmatpush1.msra.mxu0 %v791
    %3097 = vmatprep.subr.mxu0 %v806
    %3098 = vmatpush1.msra.mxu0 %v805
    %3099 = vmatprep.subr.mxu0 %v820
    %3100 = vmatpush1.msra.mxu0 %v819
    %3101 = vmatprep.subr.mxu0 %v834
    %3102 = vmatpush1.msra.mxu0 %v833
    %3103 = vmatprep.subr.mxu0 %v848
    %3104 = vmatpush1.msra.mxu0 %v847
    %3105 = vmatprep.subr.mxu0 %v862
    %3106 = vmatpush1.msra.mxu0 %v861
    %3107 = vmatprep.subr.mxu0 %v876
    %3108 = vmatpush1.msra.mxu0 %v875
    %3109 = vmatprep.subr.mxu0 %v890
    %3110 = vmatpush1.msra.mxu0 %v889
    %3111 = vmatprep.subr.mxu0 %v904
    %3112 = vmatpush1.msra.mxu0 %v903
    %3113 = vmatprep.subr.mxu0 %v918
    %3114 = vmatpush1.msra.mxu0 %v917
    %3115 = vmatprep.subr.mxu0 %v932
    %3116 = vmatpush1.msra.mxu0 %v931
    %3117 = vmatprep.subr.mxu0 %v946
    %3118 = vmatpush1.msra.mxu0 %v945
    %3119 = vmatprep.subr.mxu0 %v960
    %3120 = vmatpush1.msra.mxu0 %v959
    %3121 = vmatprep.subr.mxu0 %v974
    %3122 = vmatpush1.msra.mxu0 %v973
    %3123 = vmatprep.subr.mxu0 %v988
    %3124 = vmatpush1.msra.mxu0 %v987
    %3125 = vmatprep.subr.mxu0 %v1002
    %3126 = vmatpush1.msra.mxu0 %v1001
    %3127 = vmatprep.subr.mxu0 %v1016
    %3128 = vmatpush1.msra.mxu0 %v1015
    %3129 = vmatprep.subr.mxu0 %v1030
    %3130 = vmatpush1.msra.mxu0 %v1029
    %3131 = vmatprep.subr.mxu0 %v1044
    %3132 = vmatpush1.msra.mxu0 %v1043
    %3133 = vmatprep.subr.mxu0 %v1058
    %3134 = vmatpush1.msra.mxu0 %v1057
    %3135 = vmatprep.mubr.f32.mxu0 %v2926
    %3136 = vmatmul.mubr.f32.gmra.mrb[0].mxu0 %v2925
    %v3137 = vpop.f32.mrb[0].mxu0
    %v3138 = vadd.f32 %v3067, %v3137
    %v3139 = vpop.f32.mrb[0].mxu0
    %v3140 = vadd.f32 %v3069, %v3139
    %3141 = vdwg.mxu0
    %3142 = vmatprep.subr.mxu0 %v178
    %3143 = vmatpush1.msra.mxu0 %v177
    %3144 = vmatprep.subr.mxu0 %v192
    %3145 = vmatpush1.msra.mxu0 %v191
    %3146 = vmatprep.subr.mxu0 %v206
    %3147 = vmatpush1.msra.mxu0 %v205
    %3148 = vmatprep.subr.mxu0 %v220
    %3149 = vmatpush1.msra.mxu0 %v219
    %3150 = vmatprep.subr.mxu0 %v234
    %3151 = vmatpush1.msra.mxu0 %v233
    %3152 = vmatprep.subr.mxu0 %v248
    %3153 = vmatpush1.msra.mxu0 %v247
    %3154 = vmatprep.subr.mxu0 %v262
    %3155 = vmatpush1.msra.mxu0 %v261
    %3156 = vmatprep.subr.mxu0 %v276
    %3157 = vmatpush1.msra.mxu0 %v275
    %3158 = vmatprep.subr.mxu0 %v290
    %3159 = vmatpush1.msra.mxu0 %v289
    %3160 = vmatprep.subr.mxu0 %v304
    %3161 = vmatpush1.msra.mxu0 %v303
    %3162 = vmatprep.subr.mxu0 %v318
    %3163 = vmatpush1.msra.mxu0 %v317
    %3164 = vmatprep.subr.mxu0 %v332
    %3165 = vmatpush1.msra.mxu0 %v331
    %3166 = vmatprep.subr.mxu0 %v346
    %3167 = vmatpush1.msra.mxu0 %v345
    %3168 = vmatprep.subr.mxu0 %v360
    %3169 = vmatpush1.msra.mxu0 %v359
    %3170 = vmatprep.subr.mxu0 %v374
    %3171 = vmatpush1.msra.mxu0 %v373
    %3172 = vmatprep.subr.mxu0 %v388
    %3173 = vmatpush1.msra.mxu0 %v387
    %3174 = vmatprep.subr.mxu0 %v402
    %3175 = vmatpush1.msra.mxu0 %v401
    %3176 = vmatprep.subr.mxu0 %v416
    %3177 = vmatpush1.msra.mxu0 %v415
    %3178 = vmatprep.subr.mxu0 %v430
    %3179 = vmatpush1.msra.mxu0 %v429
    %3180 = vmatprep.subr.mxu0 %v444
    %3181 = vmatpush1.msra.mxu0 %v443
    %3182 = vmatprep.subr.mxu0 %v458
    %3183 = vmatpush1.msra.mxu0 %v457
    %3184 = vmatprep.subr.mxu0 %v472
    %3185 = vmatpush1.msra.mxu0 %v471
    %3186 = vmatprep.subr.mxu0 %v486
    %3187 = vmatpush1.msra.mxu0 %v485
    %3188 = vmatprep.subr.mxu0 %v500
    %3189 = vmatpush1.msra.mxu0 %v499
    %3190 = vmatprep.subr.mxu0 %v514
    %3191 = vmatpush1.msra.mxu0 %v513
    %3192 = vmatprep.subr.mxu0 %v528
    %3193 = vmatpush1.msra.mxu0 %v527
    %3194 = vmatprep.subr.mxu0 %v542
    %3195 = vmatpush1.msra.mxu0 %v541
    %3196 = vmatprep.subr.mxu0 %v556
    %3197 = vmatpush1.msra.mxu0 %v555
    %3198 = vmatprep.subr.mxu0 %v570
    %3199 = vmatpush1.msra.mxu0 %v569
    %3200 = vmatprep.subr.mxu0 %v584
    %3201 = vmatpush1.msra.mxu0 %v583
    %3202 = vmatprep.subr.mxu0 %v598
    %3203 = vmatpush1.msra.mxu0 %v597
    %3204 = vmatprep.subr.mxu0 %v612
    %3205 = vmatpush1.msra.mxu0 %v611
    %3206 = vmatprep.mubr.f32.mxu0 %v2997
    %3207 = vmatmul.mubr.f32.gmra.mrb[0].mxu0 %v2996
    %v3208 = vpop.f32.mrb[0].mxu0
    %v3209 = vadd.f32 0.0, %v3208
    %v3210 = vpop.f32.mrb[0].mxu0
    %v3211 = vadd.f32 0.0, %v3210
    %3212 = vdwg.mxu0
    %3213 = vmatprep.subr.mxu0 %v626
    %3214 = vmatpush1.msra.mxu0 %v625
    %3215 = vmatprep.subr.mxu0 %v640
    %3216 = vmatpush1.msra.mxu0 %v639
    %3217 = vmatprep.subr.mxu0 %v654
    %3218 = vmatpush1.msra.mxu0 %v653
    %3219 = vmatprep.subr.mxu0 %v668
    %3220 = vmatpush1.msra.mxu0 %v667
    %3221 = vmatprep.subr.mxu0 %v682
    %3222 = vmatpush1.msra.mxu0 %v681
    %3223 = vmatprep.subr.mxu0 %v696
    %3224 = vmatpush1.msra.mxu0 %v695
    %3225 = vmatprep.subr.mxu0 %v710
    %3226 = vmatpush1.msra.mxu0 %v709
    %3227 = vmatprep.subr.mxu0 %v724
    %3228 = vmatpush1.msra.mxu0 %v723
    %3229 = vmatprep.subr.mxu0 %v738
    %3230 = vmatpush1.msra.mxu0 %v737
    %3231 = vmatprep.subr.mxu0 %v752
    %3232 = vmatpush1.msra.mxu0 %v751
    %3233 = vmatprep.subr.mxu0 %v766
    %3234 = vmatpush1.msra.mxu0 %v765
    %3235 = vmatprep.subr.mxu0 %v780
    %3236 = vmatpush1.msra.mxu0 %v779
    %3237 = vmatprep.subr.mxu0 %v794
    %3238 = vmatpush1.msra.mxu0 %v793
    %3239 = vmatprep.subr.mxu0 %v808
    %3240 = vmatpush1.msra.mxu0 %v807
    %3241 = vmatprep.subr.mxu0 %v822
    %3242 = vmatpush1.msra.mxu0 %v821
    %3243 = vmatprep.subr.mxu0 %v836
    %3244 = vmatpush1.msra.mxu0 %v835
    %3245 = vmatprep.subr.mxu0 %v850
    %3246 = vmatpush1.msra.mxu0 %v849
    %3247 = vmatprep.subr.mxu0 %v864
    %3248 = vmatpush1.msra.mxu0 %v863
    %3249 = vmatprep.subr.mxu0 %v878
    %3250 = vmatpush1.msra.mxu0 %v877
    %3251 = vmatprep.subr.mxu0 %v892
    %3252 = vmatpush1.msra.mxu0 %v891
    %3253 = vmatprep.subr.mxu0 %v906
    %3254 = vmatpush1.msra.mxu0 %v905
    %3255 = vmatprep.subr.mxu0 %v920
    %3256 = vmatpush1.msra.mxu0 %v919
    %3257 = vmatprep.subr.mxu0 %v934
    %3258 = vmatpush1.msra.mxu0 %v933
    %3259 = vmatprep.subr.mxu0 %v948
    %3260 = vmatpush1.msra.mxu0 %v947
    %3261 = vmatprep.subr.mxu0 %v962
    %3262 = vmatpush1.msra.mxu0 %v961
    %3263 = vmatprep.subr.mxu0 %v976
    %3264 = vmatpush1.msra.mxu0 %v975
    %3265 = vmatprep.subr.mxu0 %v990
    %3266 = vmatpush1.msra.mxu0 %v989
    %3267 = vmatprep.subr.mxu0 %v1004
    %3268 = vmatpush1.msra.mxu0 %v1003
    %3269 = vmatprep.subr.mxu0 %v1018
    %3270 = vmatpush1.msra.mxu0 %v1017
    %3271 = vmatprep.subr.mxu0 %v1032
    %3272 = vmatpush1.msra.mxu0 %v1031
    %3273 = vmatprep.subr.mxu0 %v1046
    %3274 = vmatpush1.msra.mxu0 %v1045
    %3275 = vmatprep.subr.mxu0 %v1060
    %3276 = vmatpush1.msra.mxu0 %v1059
    %3277 = vmatprep.mubr.f32.mxu0 %v2926
    %3278 = vmatmul.mubr.f32.gmra.mrb[0].mxu0 %v2925
    %v3279 = vpop.f32.mrb[0].mxu0
    %v3280 = vadd.f32 %v3209, %v3279
    %v3281 = vpop.f32.mrb[0].mxu0
    %v3282 = vadd.f32 %v3211, %v3281
    %3283 = vdwg.mxu0
    %3284 = vmatprep.subr.mxu0 %v180
    %3285 = vmatpush1.msra.mxu0 %v179
    %3286 = vmatprep.subr.mxu0 %v194
    %3287 = vmatpush1.msra.mxu0 %v193
    %3288 = vmatprep.subr.mxu0 %v208
    %3289 = vmatpush1.msra.mxu0 %v207
    %3290 = vmatprep.subr.mxu0 %v222
    %3291 = vmatpush1.msra.mxu0 %v221
    %3292 = vmatprep.subr.mxu0 %v236
    %3293 = vmatpush1.msra.mxu0 %v235
    %3294 = vmatprep.subr.mxu0 %v250
    %3295 = vmatpush1.msra.mxu0 %v249
    %3296 = vmatprep.subr.mxu0 %v264
    %3297 = vmatpush1.msra.mxu0 %v263
    %3298 = vmatprep.subr.mxu0 %v278
    %3299 = vmatpush1.msra.mxu0 %v277
    %3300 = vmatprep.subr.mxu0 %v292
    %3301 = vmatpush1.msra.mxu0 %v291
    %3302 = vmatprep.subr.mxu0 %v306
    %3303 = vmatpush1.msra.mxu0 %v305
    %3304 = vmatprep.subr.mxu0 %v320
    %3305 = vmatpush1.msra.mxu0 %v319
    %3306 = vmatprep.subr.mxu0 %v334
    %3307 = vmatpush1.msra.mxu0 %v333
    %3308 = vmatprep.subr.mxu0 %v348
    %3309 = vmatpush1.msra.mxu0 %v347
    %3310 = vmatprep.subr.mxu0 %v362
    %3311 = vmatpush1.msra.mxu0 %v361
    %3312 = vmatprep.subr.mxu0 %v376
    %3313 = vmatpush1.msra.mxu0 %v375
    %3314 = vmatprep.subr.mxu0 %v390
    %3315 = vmatpush1.msra.mxu0 %v389
    %3316 = vmatprep.subr.mxu0 %v404
    %3317 = vmatpush1.msra.mxu0 %v403
    %3318 = vmatprep.subr.mxu0 %v418
    %3319 = vmatpush1.msra.mxu0 %v417
    %3320 = vmatprep.subr.mxu0 %v432
    %3321 = vmatpush1.msra.mxu0 %v431
    %3322 = vmatprep.subr.mxu0 %v446
    %3323 = vmatpush1.msra.mxu0 %v445
    %3324 = vmatprep.subr.mxu0 %v460
    %3325 = vmatpush1.msra.mxu0 %v459
    %3326 = vmatprep.subr.mxu0 %v474
    %3327 = vmatpush1.msra.mxu0 %v473
    %3328 = vmatprep.subr.mxu0 %v488
    %3329 = vmatpush1.msra.mxu0 %v487
    %3330 = vmatprep.subr.mxu0 %v502
    %3331 = vmatpush1.msra.mxu0 %v501
    %3332 = vmatprep.subr.mxu0 %v516
    %3333 = vmatpush1.msra.mxu0 %v515
    %3334 = vmatprep.subr.mxu0 %v530
    %3335 = vmatpush1.msra.mxu0 %v529
    %3336 = vmatprep.subr.mxu0 %v544
    %3337 = vmatpush1.msra.mxu0 %v543
    %3338 = vmatprep.subr.mxu0 %v558
    %3339 = vmatpush1.msra.mxu0 %v557
    %3340 = vmatprep.subr.mxu0 %v572
    %3341 = vmatpush1.msra.mxu0 %v571
    %3342 = vmatprep.subr.mxu0 %v586
    %3343 = vmatpush1.msra.mxu0 %v585
    %3344 = vmatprep.subr.mxu0 %v600
    %3345 = vmatpush1.msra.mxu0 %v599
    %3346 = vmatprep.subr.mxu0 %v614
    %3347 = vmatpush1.msra.mxu0 %v613
    %3348 = vmatprep.mubr.f32.mxu0 %v2997
    %3349 = vmatmul.mubr.f32.gmra.mrb[0].mxu0 %v2996
    %v3350 = vpop.f32.mrb[0].mxu0
    %v3351 = vadd.f32 0.0, %v3350
    %v3352 = vpop.f32.mrb[0].mxu0
    %v3353 = vadd.f32 0.0, %v3352
    %3354 = vdwg.mxu0
    %3355 = vmatprep.subr.mxu0 %v628
    %3356 = vmatpush1.msra.mxu0 %v627
    %3357 = vmatprep.subr.mxu0 %v642
    %3358 = vmatpush1.msra.mxu0 %v641
    %3359 = vmatprep.subr.mxu0 %v656
    %3360 = vmatpush1.msra.mxu0 %v655
    %3361 = vmatprep.subr.mxu0 %v670
    %3362 = vmatpush1.msra.mxu0 %v669
    %3363 = vmatprep.subr.mxu0 %v684
    %3364 = vmatpush1.msra.mxu0 %v683
    %3365 = vmatprep.subr.mxu0 %v698
    %3366 = vmatpush1.msra.mxu0 %v697
    %3367 = vmatprep.subr.mxu0 %v712
    %3368 = vmatpush1.msra.mxu0 %v711
    %3369 = vmatprep.subr.mxu0 %v726
    %3370 = vmatpush1.msra.mxu0 %v725
    %3371 = vmatprep.subr.mxu0 %v740
    %3372 = vmatpush1.msra.mxu0 %v739
    %3373 = vmatprep.subr.mxu0 %v754
    %3374 = vmatpush1.msra.mxu0 %v753
    %3375 = vmatprep.subr.mxu0 %v768
    %3376 = vmatpush1.msra.mxu0 %v767
    %3377 = vmatprep.subr.mxu0 %v782
    %3378 = vmatpush1.msra.mxu0 %v781
    %3379 = vmatprep.subr.mxu0 %v796
    %3380 = vmatpush1.msra.mxu0 %v795
    %3381 = vmatprep.subr.mxu0 %v810
    %3382 = vmatpush1.msra.mxu0 %v809
    %3383 = vmatprep.subr.mxu0 %v824
    %3384 = vmatpush1.msra.mxu0 %v823
    %3385 = vmatprep.subr.mxu0 %v838
    %3386 = vmatpush1.msra.mxu0 %v837
    %3387 = vmatprep.subr.mxu0 %v852
    %3388 = vmatpush1.msra.mxu0 %v851
    %3389 = vmatprep.subr.mxu0 %v866
    %3390 = vmatpush1.msra.mxu0 %v865
    %3391 = vmatprep.subr.mxu0 %v880
    %3392 = vmatpush1.msra.mxu0 %v879
    %3393 = vmatprep.subr.mxu0 %v894
    %3394 = vmatpush1.msra.mxu0 %v893
    %3395 = vmatprep.subr.mxu0 %v908
    %3396 = vmatpush1.msra.mxu0 %v907
    %3397 = vmatprep.subr.mxu0 %v922
    %3398 = vmatpush1.msra.mxu0 %v921
    %3399 = vmatprep.subr.mxu0 %v936
    %3400 = vmatpush1.msra.mxu0 %v935
    %3401 = vmatprep.subr.mxu0 %v950
    %3402 = vmatpush1.msra.mxu0 %v949
    %3403 = vmatprep.subr.mxu0 %v964
    %3404 = vmatpush1.msra.mxu0 %v963
    %3405 = vmatprep.subr.mxu0 %v978
    %3406 = vmatpush1.msra.mxu0 %v977
    %3407 = vmatprep.subr.mxu0 %v992
    %3408 = vmatpush1.msra.mxu0 %v991
    %3409 = vmatprep.subr.mxu0 %v1006
    %3410 = vmatpush1.msra.mxu0 %v1005
    %3411 = vmatprep.subr.mxu0 %v1020
    %3412 = vmatpush1.msra.mxu0 %v1019
    %3413 = vmatprep.subr.mxu0 %v1034
    %3414 = vmatpush1.msra.mxu0 %v1033
    %3415 = vmatprep.subr.mxu0 %v1048
    %3416 = vmatpush1.msra.mxu0 %v1047
    %3417 = vmatprep.subr.mxu0 %v1062
    %3418 = vmatpush1.msra.mxu0 %v1061
    %3419 = vmatprep.mubr.f32.mxu0 %v2926
    %3420 = vmatmul.mubr.f32.gmra.mrb[0].mxu0 %v2925
    %v3421 = vpop.f32.mrb[0].mxu0
    %v3422 = vadd.f32 %v3351, %v3421
    %v3423 = vpop.f32.mrb[0].mxu0
    %v3424 = vadd.f32 %v3353, %v3423
    %3425 = vdwg.mxu0
    %3426 = vmatprep.subr.mxu0 %v182
    %3427 = vmatpush1.msra.mxu0 %v181
    %3428 = vmatprep.subr.mxu0 %v196
    %3429 = vmatpush1.msra.mxu0 %v195
    %3430 = vmatprep.subr.mxu0 %v210
    %3431 = vmatpush1.msra.mxu0 %v209
    %3432 = vmatprep.subr.mxu0 %v224
    %3433 = vmatpush1.msra.mxu0 %v223
    %3434 = vmatprep.subr.mxu0 %v238
    %3435 = vmatpush1.msra.mxu0 %v237
    %3436 = vmatprep.subr.mxu0 %v252
    %3437 = vmatpush1.msra.mxu0 %v251
    %3438 = vmatprep.subr.mxu0 %v266
    %3439 = vmatpush1.msra.mxu0 %v265
    %3440 = vmatprep.subr.mxu0 %v280
    %3441 = vmatpush1.msra.mxu0 %v279
    %3442 = vmatprep.subr.mxu0 %v294
    %3443 = vmatpush1.msra.mxu0 %v293
    %3444 = vmatprep.subr.mxu0 %v308
    %3445 = vmatpush1.msra.mxu0 %v307
    %3446 = vmatprep.subr.mxu0 %v322
    %3447 = vmatpush1.msra.mxu0 %v321
    %3448 = vmatprep.subr.mxu0 %v336
    %3449 = vmatpush1.msra.mxu0 %v335
    %3450 = vmatprep.subr.mxu0 %v350
    %3451 = vmatpush1.msra.mxu0 %v349
    %3452 = vmatprep.subr.mxu0 %v364
    %3453 = vmatpush1.msra.mxu0 %v363
    %3454 = vmatprep.subr.mxu0 %v378
    %3455 = vmatpush1.msra.mxu0 %v377
    %3456 = vmatprep.subr.mxu0 %v392
    %3457 = vmatpush1.msra.mxu0 %v391
    %3458 = vmatprep.subr.mxu0 %v406
    %3459 = vmatpush1.msra.mxu0 %v405
    %3460 = vmatprep.subr.mxu0 %v420
    %3461 = vmatpush1.msra.mxu0 %v419
    %3462 = vmatprep.subr.mxu0 %v434
    %3463 = vmatpush1.msra.mxu0 %v433
    %3464 = vmatprep.subr.mxu0 %v448
    %3465 = vmatpush1.msra.mxu0 %v447
    %3466 = vmatprep.subr.mxu0 %v462
    %3467 = vmatpush1.msra.mxu0 %v461
    %3468 = vmatprep.subr.mxu0 %v476
    %3469 = vmatpush1.msra.mxu0 %v475
    %3470 = vmatprep.subr.mxu0 %v490
    %3471 = vmatpush1.msra.mxu0 %v489
    %3472 = vmatprep.subr.mxu0 %v504
    %3473 = vmatpush1.msra.mxu0 %v503
    %3474 = vmatprep.subr.mxu0 %v518
    %3475 = vmatpush1.msra.mxu0 %v517
    %3476 = vmatprep.subr.mxu0 %v532
    %3477 = vmatpush1.msra.mxu0 %v531
    %3478 = vmatprep.subr.mxu0 %v546
    %3479 = vmatpush1.msra.mxu0 %v545
    %3480 = vmatprep.subr.mxu0 %v560
    %3481 = vmatpush1.msra.mxu0 %v559
    %3482 = vmatprep.subr.mxu0 %v574
    %3483 = vmatpush1.msra.mxu0 %v573
    %3484 = vmatprep.subr.mxu0 %v588
    %3485 = vmatpush1.msra.mxu0 %v587
    %3486 = vmatprep.subr.mxu0 %v602
    %3487 = vmatpush1.msra.mxu0 %v601
    %3488 = vmatprep.subr.mxu0 %v616
    %3489 = vmatpush1.msra.mxu0 %v615
    %3490 = vmatprep.mubr.f32.mxu0 %v2997
    %3491 = vmatmul.mubr.f32.gmra.mrb[0].mxu0 %v2996
    %v3492 = vpop.f32.mrb[0].mxu0
    %v3493 = vadd.f32 0.0, %v3492
    %v3494 = vpop.f32.mrb[0].mxu0
    %v3495 = vadd.f32 0.0, %v3494
    %3496 = vdwg.mxu0
    %3497 = vmatprep.subr.mxu0 %v630
    %3498 = vmatpush1.msra.mxu0 %v629
    %3499 = vmatprep.subr.mxu0 %v644
    %3500 = vmatpush1.msra.mxu0 %v643
    %3501 = vmatprep.subr.mxu0 %v658
    %3502 = vmatpush1.msra.mxu0 %v657
    %3503 = vmatprep.subr.mxu0 %v672
    %3504 = vmatpush1.msra.mxu0 %v671
    %3505 = vmatprep.subr.mxu0 %v686
    %3506 = vmatpush1.msra.mxu0 %v685
    %3507 = vmatprep.subr.mxu0 %v700
    %3508 = vmatpush1.msra.mxu0 %v699
    %3509 = vmatprep.subr.mxu0 %v714
    %3510 = vmatpush1.msra.mxu0 %v713
    %3511 = vmatprep.subr.mxu0 %v728
    %3512 = vmatpush1.msra.mxu0 %v727
    %3513 = vmatprep.subr.mxu0 %v742
    %3514 = vmatpush1.msra.mxu0 %v741
    %3515 = vmatprep.subr.mxu0 %v756
    %3516 = vmatpush1.msra.mxu0 %v755
    %3517 = vmatprep.subr.mxu0 %v770
    %3518 = vmatpush1.msra.mxu0 %v769
    %3519 = vmatprep.subr.mxu0 %v784
    %3520 = vmatpush1.msra.mxu0 %v783
    %3521 = vmatprep.subr.mxu0 %v798
    %3522 = vmatpush1.msra.mxu0 %v797
    %3523 = vmatprep.subr.mxu0 %v812
    %3524 = vmatpush1.msra.mxu0 %v811
    %3525 = vmatprep.subr.mxu0 %v826
    %3526 = vmatpush1.msra.mxu0 %v825
    %3527 = vmatprep.subr.mxu0 %v840
    %3528 = vmatpush1.msra.mxu0 %v839
    %3529 = vmatprep.subr.mxu0 %v854
    %3530 = vmatpush1.msra.mxu0 %v853
    %3531 = vmatprep.subr.mxu0 %v868
    %3532 = vmatpush1.msra.mxu0 %v867
    %3533 = vmatprep.subr.mxu0 %v882
    %3534 = vmatpush1.msra.mxu0 %v881
    %3535 = vmatprep.subr.mxu0 %v896
    %3536 = vmatpush1.msra.mxu0 %v895
    %3537 = vmatprep.subr.mxu0 %v910
    %3538 = vmatpush1.msra.mxu0 %v909
    %3539 = vmatprep.subr.mxu0 %v924
    %3540 = vmatpush1.msra.mxu0 %v923
    %3541 = vmatprep.subr.mxu0 %v938
    %3542 = vmatpush1.msra.mxu0 %v937
    %3543 = vmatprep.subr.mxu0 %v952
    %3544 = vmatpush1.msra.mxu0 %v951
    %3545 = vmatprep.subr.mxu0 %v966
    %3546 = vmatpush1.msra.mxu0 %v965
    %3547 = vmatprep.subr.mxu0 %v980
    %3548 = vmatpush1.msra.mxu0 %v979
    %3549 = vmatprep.subr.mxu0 %v994
    %3550 = vmatpush1.msra.mxu0 %v993
    %3551 = vmatprep.subr.mxu0 %v1008
    %3552 = vmatpush1.msra.mxu0 %v1007
    %3553 = vmatprep.subr.mxu0 %v1022
    %3554 = vmatpush1.msra.mxu0 %v1021
    %3555 = vmatprep.subr.mxu0 %v1036
    %3556 = vmatpush1.msra.mxu0 %v1035
    %3557 = vmatprep.subr.mxu0 %v1050
    %3558 = vmatpush1.msra.mxu0 %v1049
    %3559 = vmatprep.subr.mxu0 %v1064
    %3560 = vmatpush1.msra.mxu0 %v1063
    %3561 = vmatprep.mubr.f32.mxu0 %v2926
    %3562 = vmatmul.mubr.f32.gmra.mrb[0].mxu0 %v2925
    %v3563 = vpop.f32.mrb[0].mxu0
    %v3564 = vadd.f32 %v3493, %v3563
    %v3565 = vpop.f32.mrb[0].mxu0
    %v3566 = vadd.f32 %v3495, %v3565
    %3567 = vdwg.mxu0
    %3568 = vmatprep.subr.mxu0 %v184
    %3569 = vmatpush1.msra.mxu0 %v183
    %3570 = vmatprep.subr.mxu0 %v198
    %3571 = vmatpush1.msra.mxu0 %v197
    %3572 = vmatprep.subr.mxu0 %v212
    %3573 = vmatpush1.msra.mxu0 %v211
    %3574 = vmatprep.subr.mxu0 %v226
    %3575 = vmatpush1.msra.mxu0 %v225
    %3576 = vmatprep.subr.mxu0 %v240
    %3577 = vmatpush1.msra.mxu0 %v239
    %3578 = vmatprep.subr.mxu0 %v254
    %3579 = vmatpush1.msra.mxu0 %v253
    %3580 = vmatprep.subr.mxu0 %v268
    %3581 = vmatpush1.msra.mxu0 %v267
    %3582 = vmatprep.subr.mxu0 %v282
    %3583 = vmatpush1.msra.mxu0 %v281
    %3584 = vmatprep.subr.mxu0 %v296
    %3585 = vmatpush1.msra.mxu0 %v295
    %3586 = vmatprep.subr.mxu0 %v310
    %3587 = vmatpush1.msra.mxu0 %v309
    %3588 = vmatprep.subr.mxu0 %v324
    %3589 = vmatpush1.msra.mxu0 %v323
    %3590 = vmatprep.subr.mxu0 %v338
    %3591 = vmatpush1.msra.mxu0 %v337
    %3592 = vmatprep.subr.mxu0 %v352
    %3593 = vmatpush1.msra.mxu0 %v351
    %3594 = vmatprep.subr.mxu0 %v366
    %3595 = vmatpush1.msra.mxu0 %v365
    %3596 = vmatprep.subr.mxu0 %v380
    %3597 = vmatpush1.msra.mxu0 %v379
    %3598 = vmatprep.subr.mxu0 %v394
    %3599 = vmatpush1.msra.mxu0 %v393
    %3600 = vmatprep.subr.mxu0 %v408
    %3601 = vmatpush1.msra.mxu0 %v407
    %3602 = vmatprep.subr.mxu0 %v422
    %3603 = vmatpush1.msra.mxu0 %v421
    %3604 = vmatprep.subr.mxu0 %v436
    %3605 = vmatpush1.msra.mxu0 %v435
    %3606 = vmatprep.subr.mxu0 %v450
    %3607 = vmatpush1.msra.mxu0 %v449
    %3608 = vmatprep.subr.mxu0 %v464
    %3609 = vmatpush1.msra.mxu0 %v463
    %3610 = vmatprep.subr.mxu0 %v478
    %3611 = vmatpush1.msra.mxu0 %v477
    %3612 = vmatprep.subr.mxu0 %v492
    %3613 = vmatpush1.msra.mxu0 %v491
    %3614 = vmatprep.subr.mxu0 %v506
    %3615 = vmatpush1.msra.mxu0 %v505
    %3616 = vmatprep.subr.mxu0 %v520
    %3617 = vmatpush1.msra.mxu0 %v519
    %3618 = vmatprep.subr.mxu0 %v534
    %3619 = vmatpush1.msra.mxu0 %v533
    %3620 = vmatprep.subr.mxu0 %v548
    %3621 = vmatpush1.msra.mxu0 %v547
    %3622 = vmatprep.subr.mxu0 %v562
    %3623 = vmatpush1.msra.mxu0 %v561
    %3624 = vmatprep.subr.mxu0 %v576
    %3625 = vmatpush1.msra.mxu0 %v575
    %3626 = vmatprep.subr.mxu0 %v590
    %3627 = vmatpush1.msra.mxu0 %v589
    %3628 = vmatprep.subr.mxu0 %v604
    %3629 = vmatpush1.msra.mxu0 %v603
    %3630 = vmatprep.subr.mxu0 %v618
    %3631 = vmatpush1.msra.mxu0 %v617
    %3632 = vmatprep.mubr.f32.mxu0 %v2997
    %3633 = vmatmul.mubr.f32.gmra.mrb[0].mxu0 %v2996
    %v3634 = vpop.f32.mrb[0].mxu0
    %v3635 = vadd.f32 0.0, %v3634
    %v3636 = vpop.f32.mrb[0].mxu0
    %v3637 = vadd.f32 0.0, %v3636
    %3638 = vdwg.mxu0
    %3639 = vmatprep.subr.mxu0 %v632
    %3640 = vmatpush1.msra.mxu0 %v631
    %3641 = vmatprep.subr.mxu0 %v646
    %3642 = vmatpush1.msra.mxu0 %v645
    %3643 = vmatprep.subr.mxu0 %v660
    %3644 = vmatpush1.msra.mxu0 %v659
    %3645 = vmatprep.subr.mxu0 %v674
    %3646 = vmatpush1.msra.mxu0 %v673
    %3647 = vmatprep.subr.mxu0 %v688
    %3648 = vmatpush1.msra.mxu0 %v687
    %3649 = vmatprep.subr.mxu0 %v702
    %3650 = vmatpush1.msra.mxu0 %v701
    %3651 = vmatprep.subr.mxu0 %v716
    %3652 = vmatpush1.msra.mxu0 %v715
    %3653 = vmatprep.subr.mxu0 %v730
    %3654 = vmatpush1.msra.mxu0 %v729
    %3655 = vmatprep.subr.mxu0 %v744
    %3656 = vmatpush1.msra.mxu0 %v743
    %3657 = vmatprep.subr.mxu0 %v758
    %3658 = vmatpush1.msra.mxu0 %v757
    %3659 = vmatprep.subr.mxu0 %v772
    %3660 = vmatpush1.msra.mxu0 %v771
    %3661 = vmatprep.subr.mxu0 %v786
    %3662 = vmatpush1.msra.mxu0 %v785
    %3663 = vmatprep.subr.mxu0 %v800
    %3664 = vmatpush1.msra.mxu0 %v799
    %3665 = vmatprep.subr.mxu0 %v814
    %3666 = vmatpush1.msra.mxu0 %v813
    %3667 = vmatprep.subr.mxu0 %v828
    %3668 = vmatpush1.msra.mxu0 %v827
    %3669 = vmatprep.subr.mxu0 %v842
    %3670 = vmatpush1.msra.mxu0 %v841
    %3671 = vmatprep.subr.mxu0 %v856
    %3672 = vmatpush1.msra.mxu0 %v855
    %3673 = vmatprep.subr.mxu0 %v870
    %3674 = vmatpush1.msra.mxu0 %v869
    %3675 = vmatprep.subr.mxu0 %v884
    %3676 = vmatpush1.msra.mxu0 %v883
    %3677 = vmatprep.subr.mxu0 %v898
    %3678 = vmatpush1.msra.mxu0 %v897
    %3679 = vmatprep.subr.mxu0 %v912
    %3680 = vmatpush1.msra.mxu0 %v911
    %3681 = vmatprep.subr.mxu0 %v926
    %3682 = vmatpush1.msra.mxu0 %v925
    %3683 = vmatprep.subr.mxu0 %v940
    %3684 = vmatpush1.msra.mxu0 %v939
    %3685 = vmatprep.subr.mxu0 %v954
    %3686 = vmatpush1.msra.mxu0 %v953
    %3687 = vmatprep.subr.mxu0 %v968
    %3688 = vmatpush1.msra.mxu0 %v967
    %3689 = vmatprep.subr.mxu0 %v982
    %3690 = vmatpush1.msra.mxu0 %v981
    %3691 = vmatprep.subr.mxu0 %v996
    %3692 = vmatpush1.msra.mxu0 %v995
    %3693 = vmatprep.subr.mxu0 %v1010
    %3694 = vmatpush1.msra.mxu0 %v1009
    %3695 = vmatprep.subr.mxu0 %v1024
    %3696 = vmatpush1.msra.mxu0 %v1023
    %3697 = vmatprep.subr.mxu0 %v1038
    %3698 = vmatpush1.msra.mxu0 %v1037
    %3699 = vmatprep.subr.mxu0 %v1052
    %3700 = vmatpush1.msra.mxu0 %v1051
    %3701 = vmatprep.subr.mxu0 %v1066
    %3702 = vmatpush1.msra.mxu0 %v1065
    %3703 = vmatprep.mubr.f32.mxu0 %v2926
    %3704 = vmatmul.mubr.f32.gmra.mrb[0].mxu0 %v2925
    %v3705 = vpop.f32.mrb[0].mxu0
    %v3706 = vadd.f32 %v3635, %v3705
    %v3707 = vpop.f32.mrb[0].mxu0
    %v3708 = vadd.f32 %v3637, %v3707
    %3709 = vdwg.mxu0
    %3710 = vmatprep.subr.mxu0 %v186
    %3711 = vmatpush1.msra.mxu0 %v185
    %3712 = vmatprep.subr.mxu0 %v200
    %3713 = vmatpush1.msra.mxu0 %v199
    %3714 = vmatprep.subr.mxu0 %v214
    %3715 = vmatpush1.msra.mxu0 %v213
    %3716 = vmatprep.subr.mxu0 %v228
    %3717 = vmatpush1.msra.mxu0 %v227
    %3718 = vmatprep.subr.mxu0 %v242
    %3719 = vmatpush1.msra.mxu0 %v241
    %3720 = vmatprep.subr.mxu0 %v256
    %3721 = vmatpush1.msra.mxu0 %v255
    %3722 = vmatprep.subr.mxu0 %v270
    %3723 = vmatpush1.msra.mxu0 %v269
    %3724 = vmatprep.subr.mxu0 %v284
    %3725 = vmatpush1.msra.mxu0 %v283
    %3726 = vmatprep.subr.mxu0 %v298
    %3727 = vmatpush1.msra.mxu0 %v297
    %3728 = vmatprep.subr.mxu0 %v312
    %3729 = vmatpush1.msra.mxu0 %v311
    %3730 = vmatprep.subr.mxu0 %v326
    %3731 = vmatpush1.msra.mxu0 %v325
    %3732 = vmatprep.subr.mxu0 %v340
    %3733 = vmatpush1.msra.mxu0 %v339
    %3734 = vmatprep.subr.mxu0 %v354
    %3735 = vmatpush1.msra.mxu0 %v353
    %3736 = vmatprep.subr.mxu0 %v368
    %3737 = vmatpush1.msra.mxu0 %v367
    %3738 = vmatprep.subr.mxu0 %v382
    %3739 = vmatpush1.msra.mxu0 %v381
    %3740 = vmatprep.subr.mxu0 %v396
    %3741 = vmatpush1.msra.mxu0 %v395
    %3742 = vmatprep.subr.mxu0 %v410
    %3743 = vmatpush1.msra.mxu0 %v409
    %3744 = vmatprep.subr.mxu0 %v424
    %3745 = vmatpush1.msra.mxu0 %v423
    %3746 = vmatprep.subr.mxu0 %v438
    %3747 = vmatpush1.msra.mxu0 %v437
    %3748 = vmatprep.subr.mxu0 %v452
    %3749 = vmatpush1.msra.mxu0 %v451
    %3750 = vmatprep.subr.mxu0 %v466
    %3751 = vmatpush1.msra.mxu0 %v465
    %3752 = vmatprep.subr.mxu0 %v480
    %3753 = vmatpush1.msra.mxu0 %v479
    %3754 = vmatprep.subr.mxu0 %v494
    %3755 = vmatpush1.msra.mxu0 %v493
    %3756 = vmatprep.subr.mxu0 %v508
    %3757 = vmatpush1.msra.mxu0 %v507
    %3758 = vmatprep.subr.mxu0 %v522
    %3759 = vmatpush1.msra.mxu0 %v521
    %3760 = vmatprep.subr.mxu0 %v536
    %3761 = vmatpush1.msra.mxu0 %v535
    %3762 = vmatprep.subr.mxu0 %v550
    %3763 = vmatpush1.msra.mxu0 %v549
    %3764 = vmatprep.subr.mxu0 %v564
    %3765 = vmatpush1.msra.mxu0 %v563
    %3766 = vmatprep.subr.mxu0 %v578
    %3767 = vmatpush1.msra.mxu0 %v577
    %3768 = vmatprep.subr.mxu0 %v592
    %3769 = vmatpush1.msra.mxu0 %v591
    %3770 = vmatprep.subr.mxu0 %v606
    %3771 = vmatpush1.msra.mxu0 %v605
    %3772 = vmatprep.subr.mxu0 %v620
    %3773 = vmatpush1.msra.mxu0 %v619
    %3774 = vmatprep.mubr.f32.mxu0 %v2997
    %3775 = vmatmul.mubr.f32.gmra.mrb[0].mxu0 %v2996
    %v3776 = vpop.f32.mrb[0].mxu0
    %v3777 = vadd.f32 0.0, %v3776
    %v3778 = vpop.f32.mrb[0].mxu0
    %v3779 = vadd.f32 0.0, %v3778
    %3780 = vdwg.mxu0
    %3781 = vmatprep.subr.mxu0 %v634
    %3782 = vmatpush1.msra.mxu0 %v633
    %3783 = vmatprep.subr.mxu0 %v648
    %3784 = vmatpush1.msra.mxu0 %v647
    %3785 = vmatprep.subr.mxu0 %v662
    %3786 = vmatpush1.msra.mxu0 %v661
    %3787 = vmatprep.subr.mxu0 %v676
    %3788 = vmatpush1.msra.mxu0 %v675
    %3789 = vmatprep.subr.mxu0 %v690
    %3790 = vmatpush1.msra.mxu0 %v689
    %3791 = vmatprep.subr.mxu0 %v704
    %3792 = vmatpush1.msra.mxu0 %v703
    %3793 = vmatprep.subr.mxu0 %v718
    %3794 = vmatpush1.msra.mxu0 %v717
    %3795 = vmatprep.subr.mxu0 %v732
    %3796 = vmatpush1.msra.mxu0 %v731
    %3797 = vmatprep.subr.mxu0 %v746
    %3798 = vmatpush1.msra.mxu0 %v745
    %3799 = vmatprep.subr.mxu0 %v760
    %3800 = vmatpush1.msra.mxu0 %v759
    %3801 = vmatprep.subr.mxu0 %v774
    %3802 = vmatpush1.msra.mxu0 %v773
    %3803 = vmatprep.subr.mxu0 %v788
    %3804 = vmatpush1.msra.mxu0 %v787
    %3805 = vmatprep.subr.mxu0 %v802
    %3806 = vmatpush1.msra.mxu0 %v801
    %3807 = vmatprep.subr.mxu0 %v816
    %3808 = vmatpush1.msra.mxu0 %v815
    %3809 = vmatprep.subr.mxu0 %v830
    %3810 = vmatpush1.msra.mxu0 %v829
    %3811 = vmatprep.subr.mxu0 %v844
    %3812 = vmatpush1.msra.mxu0 %v843
    %3813 = vmatprep.subr.mxu0 %v858
    %3814 = vmatpush1.msra.mxu0 %v857
    %3815 = vmatprep.subr.mxu0 %v872
    %3816 = vmatpush1.msra.mxu0 %v871
    %3817 = vmatprep.subr.mxu0 %v886
    %3818 = vmatpush1.msra.mxu0 %v885
    %3819 = vmatprep.subr.mxu0 %v900
    %3820 = vmatpush1.msra.mxu0 %v899
    %3821 = vmatprep.subr.mxu0 %v914
    %3822 = vmatpush1.msra.mxu0 %v913
    %3823 = vmatprep.subr.mxu0 %v928
    %3824 = vmatpush1.msra.mxu0 %v927
    %3825 = vmatprep.subr.mxu0 %v942
    %3826 = vmatpush1.msra.mxu0 %v941
    %3827 = vmatprep.subr.mxu0 %v956
    %3828 = vmatpush1.msra.mxu0 %v955
    %3829 = vmatprep.subr.mxu0 %v970
    %3830 = vmatpush1.msra.mxu0 %v969
    %3831 = vmatprep.subr.mxu0 %v984
    %3832 = vmatpush1.msra.mxu0 %v983
    %3833 = vmatprep.subr.mxu0 %v998
    %3834 = vmatpush1.msra.mxu0 %v997
    %3835 = vmatprep.subr.mxu0 %v1012
    %3836 = vmatpush1.msra.mxu0 %v1011
    %3837 = vmatprep.subr.mxu0 %v1026
    %3838 = vmatpush1.msra.mxu0 %v1025
    %3839 = vmatprep.subr.mxu0 %v1040
    %3840 = vmatpush1.msra.mxu0 %v1039
    %3841 = vmatprep.subr.mxu0 %v1054
    %3842 = vmatpush1.msra.mxu0 %v1053
    %3843 = vmatprep.subr.mxu0 %v1068
    %3844 = vmatpush1.msra.mxu0 %v1067
    %3845 = vmatprep.mubr.f32.mxu0 %v2926
    %3846 = vmatmul.mubr.f32.gmra.mrb[0].mxu0 %v2925
    %v3847 = vpop.f32.mrb[0].mxu0
    %v3848 = vadd.f32 %v3777, %v3847
    %v3849 = vpop.f32.mrb[0].mxu0
    %v3850 = vadd.f32 %v3779, %v3849
    %3851 = vdwg.mxu0
    %3852 = vmatprep.subr.mxu0 %v188
    %3853 = vmatpush1.msra.mxu0 %v187
    %3854 = vmatprep.subr.mxu0 %v202
    %3855 = vmatpush1.msra.mxu0 %v201
    %3856 = vmatprep.subr.mxu0 %v216
    %3857 = vmatpush1.msra.mxu0 %v215
    %3858 = vmatprep.subr.mxu0 %v230
    %3859 = vmatpush1.msra.mxu0 %v229
    %3860 = vmatprep.subr.mxu0 %v244
    %3861 = vmatpush1.msra.mxu0 %v243
    %3862 = vmatprep.subr.mxu0 %v258
    %3863 = vmatpush1.msra.mxu0 %v257
    %3864 = vmatprep.subr.mxu0 %v272
    %3865 = vmatpush1.msra.mxu0 %v271
    %3866 = vmatprep.subr.mxu0 %v286
    %3867 = vmatpush1.msra.mxu0 %v285
    %3868 = vmatprep.subr.mxu0 %v300
    %3869 = vmatpush1.msra.mxu0 %v299
    %3870 = vmatprep.subr.mxu0 %v314
    %3871 = vmatpush1.msra.mxu0 %v313
    %3872 = vmatprep.subr.mxu0 %v328
    %3873 = vmatpush1.msra.mxu0 %v327
    %3874 = vmatprep.subr.mxu0 %v342
    %3875 = vmatpush1.msra.mxu0 %v341
    %3876 = vmatprep.subr.mxu0 %v356
    %3877 = vmatpush1.msra.mxu0 %v355
    %3878 = vmatprep.subr.mxu0 %v370
    %3879 = vmatpush1.msra.mxu0 %v369
    %3880 = vmatprep.subr.mxu0 %v384
    %3881 = vmatpush1.msra.mxu0 %v383
    %3882 = vmatprep.subr.mxu0 %v398
    %3883 = vmatpush1.msra.mxu0 %v397
    %3884 = vmatprep.subr.mxu0 %v412
    %3885 = vmatpush1.msra.mxu0 %v411
    %3886 = vmatprep.subr.mxu0 %v426
    %3887 = vmatpush1.msra.mxu0 %v425
    %3888 = vmatprep.subr.mxu0 %v440
    %3889 = vmatpush1.msra.mxu0 %v439
    %3890 = vmatprep.subr.mxu0 %v454
    %3891 = vmatpush1.msra.mxu0 %v453
    %3892 = vmatprep.subr.mxu0 %v468
    %3893 = vmatpush1.msra.mxu0 %v467
    %3894 = vmatprep.subr.mxu0 %v482
    %3895 = vmatpush1.msra.mxu0 %v481
    %3896 = vmatprep.subr.mxu0 %v496
    %3897 = vmatpush1.msra.mxu0 %v495
    %3898 = vmatprep.subr.mxu0 %v510
    %3899 = vmatpush1.msra.mxu0 %v509
    %3900 = vmatprep.subr.mxu0 %v524
    %3901 = vmatpush1.msra.mxu0 %v523
    %3902 = vmatprep.subr.mxu0 %v538
    %3903 = vmatpush1.msra.mxu0 %v537
    %3904 = vmatprep.subr.mxu0 %v552
    %3905 = vmatpush1.msra.mxu0 %v551
    %3906 = vmatprep.subr.mxu0 %v566
    %3907 = vmatpush1.msra.mxu0 %v565
    %3908 = vmatprep.subr.mxu0 %v580
    %3909 = vmatpush1.msra.mxu0 %v579
    %3910 = vmatprep.subr.mxu0 %v594
    %3911 = vmatpush1.msra.mxu0 %v593
    %3912 = vmatprep.subr.mxu0 %v608
    %3913 = vmatpush1.msra.mxu0 %v607
    %3914 = vmatprep.subr.mxu0 %v622
    %3915 = vmatpush1.msra.mxu0 %v621
    %3916 = vmatprep.mubr.f32.mxu0 %v2997
    %3917 = vmatmul.mubr.f32.gmra.mrb[0].mxu0 %v2996
    %v3918 = vpop.f32.mrb[0].mxu0
    %v3919 = vadd.f32 0.0, %v3918
    %v3920 = vpop.f32.mrb[0].mxu0
    %v3921 = vadd.f32 0.0, %v3920
    %3922 = vdwg.mxu0
    %3923 = vmatprep.subr.mxu0 %v636
    %3924 = vmatpush1.msra.mxu0 %v635
    %3925 = vmatprep.subr.mxu0 %v650
    %3926 = vmatpush1.msra.mxu0 %v649
    %3927 = vmatprep.subr.mxu0 %v664
    %3928 = vmatpush1.msra.mxu0 %v663
    %3929 = vmatprep.subr.mxu0 %v678
    %3930 = vmatpush1.msra.mxu0 %v677
    %3931 = vmatprep.subr.mxu0 %v692
    %3932 = vmatpush1.msra.mxu0 %v691
    %3933 = vmatprep.subr.mxu0 %v706
    %3934 = vmatpush1.msra.mxu0 %v705
    %3935 = vmatprep.subr.mxu0 %v720
    %3936 = vmatpush1.msra.mxu0 %v719
    %3937 = vmatprep.subr.mxu0 %v734
    %3938 = vmatpush1.msra.mxu0 %v733
    %3939 = vmatprep.subr.mxu0 %v748
    %3940 = vmatpush1.msra.mxu0 %v747
    %3941 = vmatprep.subr.mxu0 %v762
    %3942 = vmatpush1.msra.mxu0 %v761
    %3943 = vmatprep.subr.mxu0 %v776
    %3944 = vmatpush1.msra.mxu0 %v775
    %3945 = vmatprep.subr.mxu0 %v790
    %3946 = vmatpush1.msra.mxu0 %v789
    %3947 = vmatprep.subr.mxu0 %v804
    %3948 = vmatpush1.msra.mxu0 %v803
    %3949 = vmatprep.subr.mxu0 %v818
    %3950 = vmatpush1.msra.mxu0 %v817
    %3951 = vmatprep.subr.mxu0 %v832
    %3952 = vmatpush1.msra.mxu0 %v831
    %3953 = vmatprep.subr.mxu0 %v846
    %3954 = vmatpush1.msra.mxu0 %v845
    %3955 = vmatprep.subr.mxu0 %v860
    %3956 = vmatpush1.msra.mxu0 %v859
    %3957 = vmatprep.subr.mxu0 %v874
    %3958 = vmatpush1.msra.mxu0 %v873
    %3959 = vmatprep.subr.mxu0 %v888
    %3960 = vmatpush1.msra.mxu0 %v887
    %3961 = vmatprep.subr.mxu0 %v902
    %3962 = vmatpush1.msra.mxu0 %v901
    %3963 = vmatprep.subr.mxu0 %v916
    %3964 = vmatpush1.msra.mxu0 %v915
    %3965 = vmatprep.subr.mxu0 %v930
    %3966 = vmatpush1.msra.mxu0 %v929
    %3967 = vmatprep.subr.mxu0 %v944
    %3968 = vmatpush1.msra.mxu0 %v943
    %3969 = vmatprep.subr.mxu0 %v958
    %3970 = vmatpush1.msra.mxu0 %v957
    %3971 = vmatprep.subr.mxu0 %v972
    %3972 = vmatpush1.msra.mxu0 %v971
    %3973 = vmatprep.subr.mxu0 %v986
    %3974 = vmatpush1.msra.mxu0 %v985
    %3975 = vmatprep.subr.mxu0 %v1000
    %3976 = vmatpush1.msra.mxu0 %v999
    %3977 = vmatprep.subr.mxu0 %v1014
    %3978 = vmatpush1.msra.mxu0 %v1013
    %3979 = vmatprep.subr.mxu0 %v1028
    %3980 = vmatpush1.msra.mxu0 %v1027
    %3981 = vmatprep.subr.mxu0 %v1042
    %3982 = vmatpush1.msra.mxu0 %v1041
    %3983 = vmatprep.subr.mxu0 %v1056
    %3984 = vmatpush1.msra.mxu0 %v1055
    %3985 = vmatprep.subr.mxu0 %v1070
    %3986 = vmatpush1.msra.mxu0 %v1069
    %3987 = vmatprep.mubr.f32.mxu0 %v2926
    %3988 = vmatmul.mubr.f32.gmra.mrb[0].mxu0 %v2925
    %v3989 = vpop.f32.mrb[0].mxu0
    %v3990 = vadd.f32 %v3919, %v3989
    %v3991 = vpop.f32.mrb[0].mxu0
    %v3992 = vadd.f32 %v3921, %v3991
    %3993 = vdwg.mxu0
    %v3994 = vadd.f32 %v3564, %v1076
    %v3995 = vadd.f32 %v3566, %v1080
    %v3996 = vadd.f32 %v3706, %v1084
    %v3997 = vadd.f32 %v3708, %v1088
    %v3998 = vadd.f32 %v3848, %v1092
    %v3999 = vadd.f32 %v3850, %v1096
    %v4000 = vadd.f32 %v3990, %v1100
    %v4001 = vadd.f32 %v3992, %v1104
    %v4002 = vxor.u32 %v3994, 2147483648
    %v4003 = vxor.u32 %v3995, 2147483648
    %v4004 = vmul.f32 %v4002, 1.442695
    %v4005 = vpow.pop %v4004
    %v4006 = vmul.f32 %v4003, 1.442695
    %v4007 = vpow.pop %v4006
    %v4008 = vadd.f32 %v4005, 1.0
    %v4009 = vadd.f32 %v4007, 1.0
    %v4010 = vrcp.pop %v4008
    %v4011 = vmul.f32 1.0, %v4010
    %v4012 = vrcp.pop %v4009
    %v4013 = vmul.f32 1.0, %v4012
    %v4014 = vxor.u32 %v3996, 2147483648
    %v4015 = vxor.u32 %v3997, 2147483648
    %v4016 = vmul.f32 %v4014, 1.442695
    %v4017 = vpow.pop %v4016
    %v4018 = vmul.f32 %v4015, 1.442695
    %v4019 = vpow.pop %v4018
    %v4020 = vadd.f32 %v4017, 1.0
    %v4021 = vadd.f32 %v4019, 1.0
    %v4022 = vrcp.pop %v4020
    %v4023 = vmul.f32 1.0, %v4022
    %v4024 = vrcp.pop %v4021
    %v4025 = vmul.f32 1.0, %v4024
    %v4026 = vadd.f32 %v4000, %v1118
    %v4027 = vadd.f32 %v4001, %v1122
    %v4028 = vmul.f32 %v4011, %v4026
    %v4029 = vmul.f32 %v4013, %v4027
    %v4030 = vadd.f32 %v3998, %v4028
    %v4031 = vadd.f32 %v3999, %v4029
    %v4032 = vtanh.pop %v4030
    %v4033 = vtanh.pop %v4031
    %v4034 = vsub.f32 1.0, %v4023
    %v4035 = vsub.f32 1.0, %v4025
    %v4036 = vmul.f32 %v4034, %v4032
    %v4037 = vmul.f32 %v4035, %v4033
    %v4038 = vmul.f32 %v4023, %v2925
    %v4039 = vmul.f32 %v4025, %v2926
    %v4040 = vadd.f32 %v4036, %v4038
    %v4041 = vadd.f32 %v4037, %v4039
    %s4042 = scalar_lea.vmem [#allocation2], 24
    %v4043 = vld [vmem:[%s4042] sm:$0xff]
    %v4044 = vld [vmem:[%s4042 + $0x8] sm:$0xf]
    %v4047 = vcombine.low %v3138, %v3140
    %v4049 = vunpack.c.l.s4 1983009808
    %v4050 = vunpack.c.0.s8 %v4049
    %v4051 = vlaneseq
    %v4052 = vshrl.u32 %v4051, 7
    %v4053 = vsub.s32 %v4050, %v4052
    %v4054 = vrot.slane %v4047, %v4053
    %v4056 = vadd.f32 %v4043, %v4054
    %v4057 = vxor.u32 %v4056, 2147483648
    %v4058 = vmul.f32 %v4057, 1.442695
    %v4059 = vpow.pop %v4058
    %v4060 = vadd.f32 %v4059, 1.0
    %v4061 = vrcp.pop %v4060
    %v4062 = vmul.f32 1.0, %v4061
    %v4064 = vrot.slane %v4043, 4
    %v4068 = vcombine.low %v3280, %v3282
    %v4070 = vunpack.c.l.s4 1983009808
    %v4071 = vunpack.c.0.s8 %v4070
    %v4072 = vlaneseq
    %v4073 = vshrl.u32 %v4072, 7
    %v4074 = vsub.s32 %v4071, %v4073
    %v4075 = vrot.slane %v4068, %v4074
    %v4077 = vadd.f32 %v4064, %v4075
    %v4078 = vxor.u32 %v4077, 2147483648
    %v4079 = vmul.f32 %v4078, 1.442695
    %v4080 = vpow.pop %v4079
    %v4081 = vadd.f32 %v4080, 1.0
    %v4082 = vrcp.pop %v4081
    %v4083 = vmul.f32 1.0, %v4082
    %v4084 = vadd.f32 %v3422, %v168
    %v4085 = vadd.f32 %v3424, %v172
    %v4088 = vcombine.low %v4084, %v4085
    %v4090 = vunpack.c.l.s4 1983009808
    %v4091 = vunpack.c.0.s8 %v4090
    %v4092 = vlaneseq
    %v4093 = vshrl.u32 %v4092, 7
    %v4094 = vsub.s32 %v4091, %v4093
    %v4095 = vrot.slane %v4088, %v4094
    %v4097 = vmul.f32 %v4062, %v4095
    %v4098 = vadd.f32 %v4044, %v4097
    %v4099 = vtanh.pop %v4098
    %v4100 = vsub.f32 1.0, %v4083
    %v4101 = vmul.f32 %v4100, %v4099
    %v4102 = vmul.f32 %v4083, %v2988
    %v4103 = vadd.f32 %v4101, %v4102
    %v4106 = vunpack.c.l.s4 1983009808
    %v4107 = vunpack.c.0.s8 %v4106
    %v4108 = vlaneseq
    %v4109 = vshrl.u32 %v4108, 7
    %v4110 = vsub.s32 %v4107, %v4109
    %v4111 = vrot.slane %v4103, %v4110
    %v4112 = vcombine.high %v4111, %v4111
    %4115 = vmatprep.subr.mxu0 %v176
    %4116 = vmatpush1.msra.mxu0 %v175
    %4117 = vmatprep.subr.mxu0 %v190
    %4118 = vmatpush1.msra.mxu0 %v189
    %4119 = vmatprep.subr.mxu0 %v204
    %4120 = vmatpush1.msra.mxu0 %v203
    %4121 = vmatprep.subr.mxu0 %v218
    %4122 = vmatpush1.msra.mxu0 %v217
    %4123 = vmatprep.subr.mxu0 %v232
    %4124 = vmatpush1.msra.mxu0 %v231
    %4125 = vmatprep.subr.mxu0 %v246
    %4126 = vmatpush1.msra.mxu0 %v245
    %4127 = vmatprep.subr.mxu0 %v260
    %4128 = vmatpush1.msra.mxu0 %v259
    %4129 = vmatprep.subr.mxu0 %v274
    %4130 = vmatpush1.msra.mxu0 %v273
    %4131 = vmatprep.subr.mxu0 %v288
    %4132 = vmatpush1.msra.mxu0 %v287
    %4133 = vmatprep.subr.mxu0 %v302
    %4134 = vmatpush1.msra.mxu0 %v301
    %4135 = vmatprep.subr.mxu0 %v316
    %4136 = vmatpush1.msra.mxu0 %v315
    %4137 = vmatprep.subr.mxu0 %v330
    %4138 = vmatpush1.msra.mxu0 %v329
    %4139 = vmatprep.subr.mxu0 %v344
    %4140 = vmatpush1.msra.mxu0 %v343
    %4141 = vmatprep.subr.mxu0 %v358
    %4142 = vmatpush1.msra.mxu0 %v357
    %4143 = vmatprep.subr.mxu0 %v372
    %4144 = vmatpush1.msra.mxu0 %v371
    %4145 = vmatprep.subr.mxu0 %v386
    %4146 = vmatpush1.msra.mxu0 %v385
    %4147 = vmatprep.subr.mxu0 %v400
    %4148 = vmatpush1.msra.mxu0 %v399
    %4149 = vmatprep.subr.mxu0 %v414
    %4150 = vmatpush1.msra.mxu0 %v413
    %4151 = vmatprep.subr.mxu0 %v428
    %4152 = vmatpush1.msra.mxu0 %v427
    %4153 = vmatprep.subr.mxu0 %v442
    %4154 = vmatpush1.msra.mxu0 %v441
    %4155 = vmatprep.subr.mxu0 %v456
    %4156 = vmatpush1.msra.mxu0 %v455
    %4157 = vmatprep.subr.mxu0 %v470
    %4158 = vmatpush1.msra.mxu0 %v469
    %4159 = vmatprep.subr.mxu0 %v484
    %4160 = vmatpush1.msra.mxu0 %v483
    %4161 = vmatprep.subr.mxu0 %v498
    %4162 = vmatpush1.msra.mxu0 %v497
    %4163 = vmatprep.subr.mxu0 %v512
    %4164 = vmatpush1.msra.mxu0 %v511
    %4165 = vmatprep.subr.mxu0 %v526
    %4166 = vmatpush1.msra.mxu0 %v525
    %4167 = vmatprep.subr.mxu0 %v540
    %4168 = vmatpush1.msra.mxu0 %v539
    %4169 = vmatprep.subr.mxu0 %v554
    %4170 = vmatpush1.msra.mxu0 %v553
    %4171 = vmatprep.subr.mxu0 %v568
    %4172 = vmatpush1.msra.mxu0 %v567
    %4173 = vmatprep.subr.mxu0 %v582
    %4174 = vmatpush1.msra.mxu0 %v581
    %4175 = vmatprep.subr.mxu0 %v596
    %4176 = vmatpush1.msra.mxu0 %v595
    %4177 = vmatprep.subr.mxu0 %v610
    %4178 = vmatpush1.msra.mxu0 %v609
    %4179 = vmatprep.mubr.f32.mxu0 %v4112
    %4180 = vmatmul.mubr.f32.gmra.mrb[0].mxu0 %v4111
    %v4181 = vpop.f32.mrb[0].mxu0
    %v4182 = vadd.f32 0.0, %v4181
    %v4183 = vpop.f32.mrb[0].mxu0
    %v4184 = vadd.f32 0.0, %v4183
    %4185 = vdwg.mxu0
    %4186 = vmatprep.subr.mxu0 %v624
    %4187 = vmatpush1.msra.mxu0 %v623
    %4188 = vmatprep.subr.mxu0 %v638
    %4189 = vmatpush1.msra.mxu0 %v637
    %4190 = vmatprep.subr.mxu0 %v652
    %4191 = vmatpush1.msra.mxu0 %v651
    %4192 = vmatprep.subr.mxu0 %v666
    %4193 = vmatpush1.msra.mxu0 %v665
    %4194 = vmatprep.subr.mxu0 %v680
    %4195 = vmatpush1.msra.mxu0 %v679
    %4196 = vmatprep.subr.mxu0 %v694
    %4197 = vmatpush1.msra.mxu0 %v693
    %4198 = vmatprep.subr.mxu0 %v708
    %4199 = vmatpush1.msra.mxu0 %v707
    %4200 = vmatprep.subr.mxu0 %v722
    %4201 = vmatpush1.msra.mxu0 %v721
    %4202 = vmatprep.subr.mxu0 %v736
    %4203 = vmatpush1.msra.mxu0 %v735
    %4204 = vmatprep.subr.mxu0 %v750
    %4205 = vmatpush1.msra.mxu0 %v749
    %4206 = vmatprep.subr.mxu0 %v764
    %4207 = vmatpush1.msra.mxu0 %v763
    %4208 = vmatprep.subr.mxu0 %v778
    %4209 = vmatpush1.msra.mxu0 %v777
    %4210 = vmatprep.subr.mxu0 %v792
    %4211 = vmatpush1.msra.mxu0 %v791
    %4212 = vmatprep.subr.mxu0 %v806
    %4213 = vmatpush1.msra.mxu0 %v805
    %4214 = vmatprep.subr.mxu0 %v820
    %4215 = vmatpush1.msra.mxu0 %v819
    %4216 = vmatprep.subr.mxu0 %v834
    %4217 = vmatpush1.msra.mxu0 %v833
    %4218 = vmatprep.subr.mxu0 %v848
    %4219 = vmatpush1.msra.mxu0 %v847
    %4220 = vmatprep.subr.mxu0 %v862
    %4221 = vmatpush1.msra.mxu0 %v861
    %4222 = vmatprep.subr.mxu0 %v876
    %4223 = vmatpush1.msra.mxu0 %v875
    %4224 = vmatprep.subr.mxu0 %v890
    %4225 = vmatpush1.msra.mxu0 %v889
    %4226 = vmatprep.subr.mxu0 %v904
    %4227 = vmatpush1.msra.mxu0 %v903
    %4228 = vmatprep.subr.mxu0 %v918
    %4229 = vmatpush1.msra.mxu0 %v917
    %4230 = vmatprep.subr.mxu0 %v932
    %4231 = vmatpush1.msra.mxu0 %v931
    %4232 = vmatprep.subr.mxu0 %v946
    %4233 = vmatpush1.msra.mxu0 %v945
    %4234 = vmatprep.subr.mxu0 %v960
    %4235 = vmatpush1.msra.mxu0 %v959
    %4236 = vmatprep.subr.mxu0 %v974
    %4237 = vmatpush1.msra.mxu0 %v973
    %4238 = vmatprep.subr.mxu0 %v988
    %4239 = vmatpush1.msra.mxu0 %v987
    %4240 = vmatprep.subr.mxu0 %v1002
    %4241 = vmatpush1.msra.mxu0 %v1001
    %4242 = vmatprep.subr.mxu0 %v1016
    %4243 = vmatpush1.msra.mxu0 %v1015
    %4244 = vmatprep.subr.mxu0 %v1030
    %4245 = vmatpush1.msra.mxu0 %v1029
    %4246 = vmatprep.subr.mxu0 %v1044
    %4247 = vmatpush1.msra.mxu0 %v1043
    %4248 = vmatprep.subr.mxu0 %v1058
    %4249 = vmatpush1.msra.mxu0 %v1057
    %4250 = vmatprep.mubr.f32.mxu0 %v4041
    %4251 = vmatmul.mubr.f32.gmra.mrb[0].mxu0 %v4040
    %v4252 = vpop.f32.mrb[0].mxu0
    %v4253 = vadd.f32 %v4182, %v4252
    %v4254 = vpop.f32.mrb[0].mxu0
    %v4255 = vadd.f32 %v4184, %v4254
    %4256 = vdwg.mxu0
    %4257 = vmatprep.subr.mxu0 %v178
    %4258 = vmatpush1.msra.mxu0 %v177
    %4259 = vmatprep.subr.mxu0 %v192
    %4260 = vmatpush1.msra.mxu0 %v191
    %4261 = vmatprep.subr.mxu0 %v206
    %4262 = vmatpush1.msra.mxu0 %v205
    %4263 = vmatprep.subr.mxu0 %v220
    %4264 = vmatpush1.msra.mxu0 %v219
    %4265 = vmatprep.subr.mxu0 %v234
    %4266 = vmatpush1.msra.mxu0 %v233
    %4267 = vmatprep.subr.mxu0 %v248
    %4268 = vmatpush1.msra.mxu0 %v247
    %4269 = vmatprep.subr.mxu0 %v262
    %4270 = vmatpush1.msra.mxu0 %v261
    %4271 = vmatprep.subr.mxu0 %v276
    %4272 = vmatpush1.msra.mxu0 %v275
    %4273 = vmatprep.subr.mxu0 %v290
    %4274 = vmatpush1.msra.mxu0 %v289
    %4275 = vmatprep.subr.mxu0 %v304
    %4276 = vmatpush1.msra.mxu0 %v303
    %4277 = vmatprep.subr.mxu0 %v318
    %4278 = vmatpush1.msra.mxu0 %v317
    %4279 = vmatprep.subr.mxu0 %v332
    %4280 = vmatpush1.msra.mxu0 %v331
    %4281 = vmatprep.subr.mxu0 %v346
    %4282 = vmatpush1.msra.mxu0 %v345
    %4283 = vmatprep.subr.mxu0 %v360
    %4284 = vmatpush1.msra.mxu0 %v359
    %4285 = vmatprep.subr.mxu0 %v374
    %4286 = vmatpush1.msra.mxu0 %v373
    %4287 = vmatprep.subr.mxu0 %v388
    %4288 = vmatpush1.msra.mxu0 %v387
    %4289 = vmatprep.subr.mxu0 %v402
    %4290 = vmatpush1.msra.mxu0 %v401
    %4291 = vmatprep.subr.mxu0 %v416
    %4292 = vmatpush1.msra.mxu0 %v415
    %4293 = vmatprep.subr.mxu0 %v430
    %4294 = vmatpush1.msra.mxu0 %v429
    %4295 = vmatprep.subr.mxu0 %v444
    %4296 = vmatpush1.msra.mxu0 %v443
    %4297 = vmatprep.subr.mxu0 %v458
    %4298 = vmatpush1.msra.mxu0 %v457
    %4299 = vmatprep.subr.mxu0 %v472
    %4300 = vmatpush1.msra.mxu0 %v471
    %4301 = vmatprep.subr.mxu0 %v486
    %4302 = vmatpush1.msra.mxu0 %v485
    %4303 = vmatprep.subr.mxu0 %v500
    %4304 = vmatpush1.msra.mxu0 %v499
    %4305 = vmatprep.subr.mxu0 %v514
    %4306 = vmatpush1.msra.mxu0 %v513
    %4307 = vmatprep.subr.mxu0 %v528
    %4308 = vmatpush1.msra.mxu0 %v527
    %4309 = vmatprep.subr.mxu0 %v542
    %4310 = vmatpush1.msra.mxu0 %v541
    %4311 = vmatprep.subr.mxu0 %v556
    %4312 = vmatpush1.msra.mxu0 %v555
    %4313 = vmatprep.subr.mxu0 %v570
    %4314 = vmatpush1.msra.mxu0 %v569
    %4315 = vmatprep.subr.mxu0 %v584
    %4316 = vmatpush1.msra.mxu0 %v583
    %4317 = vmatprep.subr.mxu0 %v598
    %4318 = vmatpush1.msra.mxu0 %v597
    %4319 = vmatprep.subr.mxu0 %v612
    %4320 = vmatpush1.msra.mxu0 %v611
    %4321 = vmatprep.mubr.f32.mxu0 %v4112
    %4322 = vmatmul.mubr.f32.gmra.mrb[0].mxu0 %v4111
    %v4323 = vpop.f32.mrb[0].mxu0
    %v4324 = vadd.f32 0.0, %v4323
    %v4325 = vpop.f32.mrb[0].mxu0
    %v4326 = vadd.f32 0.0, %v4325
    %4327 = vdwg.mxu0
    %4328 = vmatprep.subr.mxu0 %v626
    %4329 = vmatpush1.msra.mxu0 %v625
    %4330 = vmatprep.subr.mxu0 %v640
    %4331 = vmatpush1.msra.mxu0 %v639
    %4332 = vmatprep.subr.mxu0 %v654
    %4333 = vmatpush1.msra.mxu0 %v653
    %4334 = vmatprep.subr.mxu0 %v668
    %4335 = vmatpush1.msra.mxu0 %v667
    %4336 = vmatprep.subr.mxu0 %v682
    %4337 = vmatpush1.msra.mxu0 %v681
    %4338 = vmatprep.subr.mxu0 %v696
    %4339 = vmatpush1.msra.mxu0 %v695
    %4340 = vmatprep.subr.mxu0 %v710
    %4341 = vmatpush1.msra.mxu0 %v709
    %4342 = vmatprep.subr.mxu0 %v724
    %4343 = vmatpush1.msra.mxu0 %v723
    %4344 = vmatprep.subr.mxu0 %v738
    %4345 = vmatpush1.msra.mxu0 %v737
    %4346 = vmatprep.subr.mxu0 %v752
    %4347 = vmatpush1.msra.mxu0 %v751
    %4348 = vmatprep.subr.mxu0 %v766
    %4349 = vmatpush1.msra.mxu0 %v765
    %4350 = vmatprep.subr.mxu0 %v780
    %4351 = vmatpush1.msra.mxu0 %v779
    %4352 = vmatprep.subr.mxu0 %v794
    %4353 = vmatpush1.msra.mxu0 %v793
    %4354 = vmatprep.subr.mxu0 %v808
    %4355 = vmatpush1.msra.mxu0 %v807
    %4356 = vmatprep.subr.mxu0 %v822
    %4357 = vmatpush1.msra.mxu0 %v821
    %4358 = vmatprep.subr.mxu0 %v836
    %4359 = vmatpush1.msra.mxu0 %v835
    %4360 = vmatprep.subr.mxu0 %v850
    %4361 = vmatpush1.msra.mxu0 %v849
    %4362 = vmatprep.subr.mxu0 %v864
    %4363 = vmatpush1.msra.mxu0 %v863
    %4364 = vmatprep.subr.mxu0 %v878
    %4365 = vmatpush1.msra.mxu0 %v877
    %4366 = vmatprep.subr.mxu0 %v892
    %4367 = vmatpush1.msra.mxu0 %v891
    %4368 = vmatprep.subr.mxu0 %v906
    %4369 = vmatpush1.msra.mxu0 %v905
    %4370 = vmatprep.subr.mxu0 %v920
    %4371 = vmatpush1.msra.mxu0 %v919
    %4372 = vmatprep.subr.mxu0 %v934
    %4373 = vmatpush1.msra.mxu0 %v933
    %4374 = vmatprep.subr.mxu0 %v948
    %4375 = vmatpush1.msra.mxu0 %v947
    %4376 = vmatprep.subr.mxu0 %v962
    %4377 = vmatpush1.msra.mxu0 %v961
    %4378 = vmatprep.subr.mxu0 %v976
    %4379 = vmatpush1.msra.mxu0 %v975
    %4380 = vmatprep.subr.mxu0 %v990
    %4381 = vmatpush1.msra.mxu0 %v989
    %4382 = vmatprep.subr.mxu0 %v1004
    %4383 = vmatpush1.msra.mxu0 %v1003
    %4384 = vmatprep.subr.mxu0 %v1018
    %4385 = vmatpush1.msra.mxu0 %v1017
    %4386 = vmatprep.subr.mxu0 %v1032
    %4387 = vmatpush1.msra.mxu0 %v1031
    %4388 = vmatprep.subr.mxu0 %v1046
    %4389 = vmatpush1.msra.mxu0 %v1045
    %4390 = vmatprep.subr.mxu0 %v1060
    %4391 = vmatpush1.msra.mxu0 %v1059
    %4392 = vmatprep.mubr.f32.mxu0 %v4041
    %4393 = vmatmul.mubr.f32.gmra.mrb[0].mxu0 %v4040
    %v4394 = vpop.f32.mrb[0].mxu0
    %v4395 = vadd.f32 %v4324, %v4394
    %v4396 = vpop.f32.mrb[0].mxu0
    %v4397 = vadd.f32 %v4326, %v4396
    %4398 = vdwg.mxu0
    %4399 = vmatprep.subr.mxu0 %v180
    %4400 = vmatpush1.msra.mxu0 %v179
    %4401 = vmatprep.subr.mxu0 %v194
    %4402 = vmatpush1.msra.mxu0 %v193
    %4403 = vmatprep.subr.mxu0 %v208
    %4404 = vmatpush1.msra.mxu0 %v207
    %4405 = vmatprep.subr.mxu0 %v222
    %4406 = vmatpush1.msra.mxu0 %v221
    %4407 = vmatprep.subr.mxu0 %v236
    %4408 = vmatpush1.msra.mxu0 %v235
    %4409 = vmatprep.subr.mxu0 %v250
    %4410 = vmatpush1.msra.mxu0 %v249
    %4411 = vmatprep.subr.mxu0 %v264
    %4412 = vmatpush1.msra.mxu0 %v263
    %4413 = vmatprep.subr.mxu0 %v278
    %4414 = vmatpush1.msra.mxu0 %v277
    %4415 = vmatprep.subr.mxu0 %v292
    %4416 = vmatpush1.msra.mxu0 %v291
    %4417 = vmatprep.subr.mxu0 %v306
    %4418 = vmatpush1.msra.mxu0 %v305
    %4419 = vmatprep.subr.mxu0 %v320
    %4420 = vmatpush1.msra.mxu0 %v319
    %4421 = vmatprep.subr.mxu0 %v334
    %4422 = vmatpush1.msra.mxu0 %v333
    %4423 = vmatprep.subr.mxu0 %v348
    %4424 = vmatpush1.msra.mxu0 %v347
    %4425 = vmatprep.subr.mxu0 %v362
    %4426 = vmatpush1.msra.mxu0 %v361
    %4427 = vmatprep.subr.mxu0 %v376
    %4428 = vmatpush1.msra.mxu0 %v375
    %4429 = vmatprep.subr.mxu0 %v390
    %4430 = vmatpush1.msra.mxu0 %v389
    %4431 = vmatprep.subr.mxu0 %v404
    %4432 = vmatpush1.msra.mxu0 %v403
    %4433 = vmatprep.subr.mxu0 %v418
    %4434 = vmatpush1.msra.mxu0 %v417
    %4435 = vmatprep.subr.mxu0 %v432
    %4436 = vmatpush1.msra.mxu0 %v431
    %4437 = vmatprep.subr.mxu0 %v446
    %4438 = vmatpush1.msra.mxu0 %v445
    %4439 = vmatprep.subr.mxu0 %v460
    %4440 = vmatpush1.msra.mxu0 %v459
    %4441 = vmatprep.subr.mxu0 %v474
    %4442 = vmatpush1.msra.mxu0 %v473
    %4443 = vmatprep.subr.mxu0 %v488
    %4444 = vmatpush1.msra.mxu0 %v487
    %4445 = vmatprep.subr.mxu0 %v502
    %4446 = vmatpush1.msra.mxu0 %v501
    %4447 = vmatprep.subr.mxu0 %v516
    %4448 = vmatpush1.msra.mxu0 %v515
    %4449 = vmatprep.subr.mxu0 %v530
    %4450 = vmatpush1.msra.mxu0 %v529
    %4451 = vmatprep.subr.mxu0 %v544
    %4452 = vmatpush1.msra.mxu0 %v543
    %4453 = vmatprep.subr.mxu0 %v558
    %4454 = vmatpush1.msra.mxu0 %v557
    %4455 = vmatprep.subr.mxu0 %v572
    %4456 = vmatpush1.msra.mxu0 %v571
    %4457 = vmatprep.subr.mxu0 %v586
    %4458 = vmatpush1.msra.mxu0 %v585
    %4459 = vmatprep.subr.mxu0 %v600
    %4460 = vmatpush1.msra.mxu0 %v599
    %4461 = vmatprep.subr.mxu0 %v614
    %4462 = vmatpush1.msra.mxu0 %v613
    %4463 = vmatprep.mubr.f32.mxu0 %v4112
    %4464 = vmatmul.mubr.f32.gmra.mrb[0].mxu0 %v4111
    %v4465 = vpop.f32.mrb[0].mxu0
    %v4466 = vadd.f32 0.0, %v4465
    %v4467 = vpop.f32.mrb[0].mxu0
    %v4468 = vadd.f32 0.0, %v4467
    %4469 = vdwg.mxu0
    %4470 = vmatprep.subr.mxu0 %v628
    %4471 = vmatpush1.msra.mxu0 %v627
    %4472 = vmatprep.subr.mxu0 %v642
    %4473 = vmatpush1.msra.mxu0 %v641
    %4474 = vmatprep.subr.mxu0 %v656
    %4475 = vmatpush1.msra.mxu0 %v655
    %4476 = vmatprep.subr.mxu0 %v670
    %4477 = vmatpush1.msra.mxu0 %v669
    %4478 = vmatprep.subr.mxu0 %v684
    %4479 = vmatpush1.msra.mxu0 %v683
    %4480 = vmatprep.subr.mxu0 %v698
    %4481 = vmatpush1.msra.mxu0 %v697
    %4482 = vmatprep.subr.mxu0 %v712
    %4483 = vmatpush1.msra.mxu0 %v711
    %4484 = vmatprep.subr.mxu0 %v726
    %4485 = vmatpush1.msra.mxu0 %v725
    %4486 = vmatprep.subr.mxu0 %v740
    %4487 = vmatpush1.msra.mxu0 %v739
    %4488 = vmatprep.subr.mxu0 %v754
    %4489 = vmatpush1.msra.mxu0 %v753
    %4490 = vmatprep.subr.mxu0 %v768
    %4491 = vmatpush1.msra.mxu0 %v767
    %4492 = vmatprep.subr.mxu0 %v782
    %4493 = vmatpush1.msra.mxu0 %v781
    %4494 = vmatprep.subr.mxu0 %v796
    %4495 = vmatpush1.msra.mxu0 %v795
    %4496 = vmatprep.subr.mxu0 %v810
    %4497 = vmatpush1.msra.mxu0 %v809
    %4498 = vmatprep.subr.mxu0 %v824
    %4499 = vmatpush1.msra.mxu0 %v823
    %4500 = vmatprep.subr.mxu0 %v838
    %4501 = vmatpush1.msra.mxu0 %v837
    %4502 = vmatprep.subr.mxu0 %v852
    %4503 = vmatpush1.msra.mxu0 %v851
    %4504 = vmatprep.subr.mxu0 %v866
    %4505 = vmatpush1.msra.mxu0 %v865
    %4506 = vmatprep.subr.mxu0 %v880
    %4507 = vmatpush1.msra.mxu0 %v879
    %4508 = vmatprep.subr.mxu0 %v894
    %4509 = vmatpush1.msra.mxu0 %v893
    %4510 = vmatprep.subr.mxu0 %v908
    %4511 = vmatpush1.msra.mxu0 %v907
    %4512 = vmatprep.subr.mxu0 %v922
    %4513 = vmatpush1.msra.mxu0 %v921
    %4514 = vmatprep.subr.mxu0 %v936
    %4515 = vmatpush1.msra.mxu0 %v935
    %4516 = vmatprep.subr.mxu0 %v950
    %4517 = vmatpush1.msra.mxu0 %v949
    %4518 = vmatprep.subr.mxu0 %v964
    %4519 = vmatpush1.msra.mxu0 %v963
    %4520 = vmatprep.subr.mxu0 %v978
    %4521 = vmatpush1.msra.mxu0 %v977
    %4522 = vmatprep.subr.mxu0 %v992
    %4523 = vmatpush1.msra.mxu0 %v991
    %4524 = vmatprep.subr.mxu0 %v1006
    %4525 = vmatpush1.msra.mxu0 %v1005
    %4526 = vmatprep.subr.mxu0 %v1020
    %4527 = vmatpush1.msra.mxu0 %v1019
    %4528 = vmatprep.subr.mxu0 %v1034
    %4529 = vmatpush1.msra.mxu0 %v1033
    %4530 = vmatprep.subr.mxu0 %v1048
    %4531 = vmatpush1.msra.mxu0 %v1047
    %4532 = vmatprep.subr.mxu0 %v1062
    %4533 = vmatpush1.msra.mxu0 %v1061
    %4534 = vmatprep.mubr.f32.mxu0 %v4041
    %4535 = vmatmul.mubr.f32.gmra.mrb[0].mxu0 %v4040
    %v4536 = vpop.f32.mrb[0].mxu0
    %v4537 = vadd.f32 %v4466, %v4536
    %v4538 = vpop.f32.mrb[0].mxu0
    %v4539 = vadd.f32 %v4468, %v4538
    %4540 = vdwg.mxu0
    %4541 = vmatprep.subr.mxu0 %v182
    %4542 = vmatpush1.msra.mxu0 %v181
    %4543 = vmatprep.subr.mxu0 %v196
    %4544 = vmatpush1.msra.mxu0 %v195
    %4545 = vmatprep.subr.mxu0 %v210
    %4546 = vmatpush1.msra.mxu0 %v209
    %4547 = vmatprep.subr.mxu0 %v224
    %4548 = vmatpush1.msra.mxu0 %v223
    %4549 = vmatprep.subr.mxu0 %v238
    %4550 = vmatpush1.msra.mxu0 %v237
    %4551 = vmatprep.subr.mxu0 %v252
    %4552 = vmatpush1.msra.mxu0 %v251
    %4553 = vmatprep.subr.mxu0 %v266
    %4554 = vmatpush1.msra.mxu0 %v265
    %4555 = vmatprep.subr.mxu0 %v280
    %4556 = vmatpush1.msra.mxu0 %v279
    %4557 = vmatprep.subr.mxu0 %v294
    %4558 = vmatpush1.msra.mxu0 %v293
    %4559 = vmatprep.subr.mxu0 %v308
    %4560 = vmatpush1.msra.mxu0 %v307
    %4561 = vmatprep.subr.mxu0 %v322
    %4562 = vmatpush1.msra.mxu0 %v321
    %4563 = vmatprep.subr.mxu0 %v336
    %4564 = vmatpush1.msra.mxu0 %v335
    %4565 = vmatprep.subr.mxu0 %v350
    %4566 = vmatpush1.msra.mxu0 %v349
    %4567 = vmatprep.subr.mxu0 %v364
    %4568 = vmatpush1.msra.mxu0 %v363
    %4569 = vmatprep.subr.mxu0 %v378
    %4570 = vmatpush1.msra.mxu0 %v377
    %4571 = vmatprep.subr.mxu0 %v392
    %4572 = vmatpush1.msra.mxu0 %v391
    %4573 = vmatprep.subr.mxu0 %v406
    %4574 = vmatpush1.msra.mxu0 %v405
    %4575 = vmatprep.subr.mxu0 %v420
    %4576 = vmatpush1.msra.mxu0 %v419
    %4577 = vmatprep.subr.mxu0 %v434
    %4578 = vmatpush1.msra.mxu0 %v433
    %4579 = vmatprep.subr.mxu0 %v448
    %4580 = vmatpush1.msra.mxu0 %v447
    %4581 = vmatprep.subr.mxu0 %v462
    %4582 = vmatpush1.msra.mxu0 %v461
    %4583 = vmatprep.subr.mxu0 %v476
    %4584 = vmatpush1.msra.mxu0 %v475
    %4585 = vmatprep.subr.mxu0 %v490
    %4586 = vmatpush1.msra.mxu0 %v489
    %4587 = vmatprep.subr.mxu0 %v504
    %4588 = vmatpush1.msra.mxu0 %v503
    %4589 = vmatprep.subr.mxu0 %v518
    %4590 = vmatpush1.msra.mxu0 %v517
    %4591 = vmatprep.subr.mxu0 %v532
    %4592 = vmatpush1.msra.mxu0 %v531
    %4593 = vmatprep.subr.mxu0 %v546
    %4594 = vmatpush1.msra.mxu0 %v545
    %4595 = vmatprep.subr.mxu0 %v560
    %4596 = vmatpush1.msra.mxu0 %v559
    %4597 = vmatprep.subr.mxu0 %v574
    %4598 = vmatpush1.msra.mxu0 %v573
    %4599 = vmatprep.subr.mxu0 %v588
    %4600 = vmatpush1.msra.mxu0 %v587
    %4601 = vmatprep.subr.mxu0 %v602
    %4602 = vmatpush1.msra.mxu0 %v601
    %4603 = vmatprep.subr.mxu0 %v616
    %4604 = vmatpush1.msra.mxu0 %v615
    %4605 = vmatprep.mubr.f32.mxu0 %v4112
    %4606 = vmatmul.mubr.f32.gmra.mrb[0].mxu0 %v4111
    %v4607 = vpop.f32.mrb[0].mxu0
    %v4608 = vadd.f32 0.0, %v4607
    %v4609 = vpop.f32.mrb[0].mxu0
    %v4610 = vadd.f32 0.0, %v4609
    %4611 = vdwg.mxu0
    %4612 = vmatprep.subr.mxu0 %v630
    %4613 = vmatpush1.msra.mxu0 %v629
    %4614 = vmatprep.subr.mxu0 %v644
    %4615 = vmatpush1.msra.mxu0 %v643
    %4616 = vmatprep.subr.mxu0 %v658
    %4617 = vmatpush1.msra.mxu0 %v657
    %4618 = vmatprep.subr.mxu0 %v672
    %4619 = vmatpush1.msra.mxu0 %v671
    %4620 = vmatprep.subr.mxu0 %v686
    %4621 = vmatpush1.msra.mxu0 %v685
    %4622 = vmatprep.subr.mxu0 %v700
    %4623 = vmatpush1.msra.mxu0 %v699
    %4624 = vmatprep.subr.mxu0 %v714
    %4625 = vmatpush1.msra.mxu0 %v713
    %4626 = vmatprep.subr.mxu0 %v728
    %4627 = vmatpush1.msra.mxu0 %v727
    %4628 = vmatprep.subr.mxu0 %v742
    %4629 = vmatpush1.msra.mxu0 %v741
    %4630 = vmatprep.subr.mxu0 %v756
    %4631 = vmatpush1.msra.mxu0 %v755
    %4632 = vmatprep.subr.mxu0 %v770
    %4633 = vmatpush1.msra.mxu0 %v769
    %4634 = vmatprep.subr.mxu0 %v784
    %4635 = vmatpush1.msra.mxu0 %v783
    %4636 = vmatprep.subr.mxu0 %v798
    %4637 = vmatpush1.msra.mxu0 %v797
    %4638 = vmatprep.subr.mxu0 %v812
    %4639 = vmatpush1.msra.mxu0 %v811
    %4640 = vmatprep.subr.mxu0 %v826
    %4641 = vmatpush1.msra.mxu0 %v825
    %4642 = vmatprep.subr.mxu0 %v840
    %4643 = vmatpush1.msra.mxu0 %v839
    %4644 = vmatprep.subr.mxu0 %v854
    %4645 = vmatpush1.msra.mxu0 %v853
    %4646 = vmatprep.subr.mxu0 %v868
    %4647 = vmatpush1.msra.mxu0 %v867
    %4648 = vmatprep.subr.mxu0 %v882
    %4649 = vmatpush1.msra.mxu0 %v881
    %4650 = vmatprep.subr.mxu0 %v896
    %4651 = vmatpush1.msra.mxu0 %v895
    %4652 = vmatprep.subr.mxu0 %v910
    %4653 = vmatpush1.msra.mxu0 %v909
    %4654 = vmatprep.subr.mxu0 %v924
    %4655 = vmatpush1.msra.mxu0 %v923
    %4656 = vmatprep.subr.mxu0 %v938
    %4657 = vmatpush1.msra.mxu0 %v937
    %4658 = vmatprep.subr.mxu0 %v952
    %4659 = vmatpush1.msra.mxu0 %v951
    %4660 = vmatprep.subr.mxu0 %v966
    %4661 = vmatpush1.msra.mxu0 %v965
    %4662 = vmatprep.subr.mxu0 %v980
    %4663 = vmatpush1.msra.mxu0 %v979
    %4664 = vmatprep.subr.mxu0 %v994
    %4665 = vmatpush1.msra.mxu0 %v993
    %4666 = vmatprep.subr.mxu0 %v1008
    %4667 = vmatpush1.msra.mxu0 %v1007
    %4668 = vmatprep.subr.mxu0 %v1022
    %4669 = vmatpush1.msra.mxu0 %v1021
    %4670 = vmatprep.subr.mxu0 %v1036
    %4671 = vmatpush1.msra.mxu0 %v1035
    %4672 = vmatprep.subr.mxu0 %v1050
    %4673 = vmatpush1.msra.mxu0 %v1049
    %4674 = vmatprep.subr.mxu0 %v1064
    %4675 = vmatpush1.msra.mxu0 %v1063
    %4676 = vmatprep.mubr.f32.mxu0 %v4041
    %4677 = vmatmul.mubr.f32.gmra.mrb[0].mxu0 %v4040
    %v4678 = vpop.f32.mrb[0].mxu0
    %v4679 = vadd.f32 %v4608, %v4678
    %v4680 = vpop.f32.mrb[0].mxu0
    %v4681 = vadd.f32 %v4610, %v4680
    %4682 = vdwg.mxu0
    %4683 = vmatprep.subr.mxu0 %v184
    %4684 = vmatpush1.msra.mxu0 %v183
    %4685 = vmatprep.subr.mxu0 %v198
    %4686 = vmatpush1.msra.mxu0 %v197
    %4687 = vmatprep.subr.mxu0 %v212
    %4688 = vmatpush1.msra.mxu0 %v211
    %4689 = vmatprep.subr.mxu0 %v226
    %4690 = vmatpush1.msra.mxu0 %v225
    %4691 = vmatprep.subr.mxu0 %v240
    %4692 = vmatpush1.msra.mxu0 %v239
    %4693 = vmatprep.subr.mxu0 %v254
    %4694 = vmatpush1.msra.mxu0 %v253
    %4695 = vmatprep.subr.mxu0 %v268
    %4696 = vmatpush1.msra.mxu0 %v267
    %4697 = vmatprep.subr.mxu0 %v282
    %4698 = vmatpush1.msra.mxu0 %v281
    %4699 = vmatprep.subr.mxu0 %v296
    %4700 = vmatpush1.msra.mxu0 %v295
    %4701 = vmatprep.subr.mxu0 %v310
    %4702 = vmatpush1.msra.mxu0 %v309
    %4703 = vmatprep.subr.mxu0 %v324
    %4704 = vmatpush1.msra.mxu0 %v323
    %4705 = vmatprep.subr.mxu0 %v338
    %4706 = vmatpush1.msra.mxu0 %v337
    %4707 = vmatprep.subr.mxu0 %v352
    %4708 = vmatpush1.msra.mxu0 %v351
    %4709 = vmatprep.subr.mxu0 %v366
    %4710 = vmatpush1.msra.mxu0 %v365
    %4711 = vmatprep.subr.mxu0 %v380
    %4712 = vmatpush1.msra.mxu0 %v379
    %4713 = vmatprep.subr.mxu0 %v394
    %4714 = vmatpush1.msra.mxu0 %v393
    %4715 = vmatprep.subr.mxu0 %v408
    %4716 = vmatpush1.msra.mxu0 %v407
    %4717 = vmatprep.subr.mxu0 %v422
    %4718 = vmatpush1.msra.mxu0 %v421
    %4719 = vmatprep.subr.mxu0 %v436
    %4720 = vmatpush1.msra.mxu0 %v435
    %4721 = vmatprep.subr.mxu0 %v450
    %4722 = vmatpush1.msra.mxu0 %v449
    %4723 = vmatprep.subr.mxu0 %v464
    %4724 = vmatpush1.msra.mxu0 %v463
    %4725 = vmatprep.subr.mxu0 %v478
    %4726 = vmatpush1.msra.mxu0 %v477
    %4727 = vmatprep.subr.mxu0 %v492
    %4728 = vmatpush1.msra.mxu0 %v491
    %4729 = vmatprep.subr.mxu0 %v506
    %4730 = vmatpush1.msra.mxu0 %v505
    %4731 = vmatprep.subr.mxu0 %v520
    %4732 = vmatpush1.msra.mxu0 %v519
    %4733 = vmatprep.subr.mxu0 %v534
    %4734 = vmatpush1.msra.mxu0 %v533
    %4735 = vmatprep.subr.mxu0 %v548
    %4736 = vmatpush1.msra.mxu0 %v547
    %4737 = vmatprep.subr.mxu0 %v562
    %4738 = vmatpush1.msra.mxu0 %v561
    %4739 = vmatprep.subr.mxu0 %v576
    %4740 = vmatpush1.msra.mxu0 %v575
    %4741 = vmatprep.subr.mxu0 %v590
    %4742 = vmatpush1.msra.mxu0 %v589
    %4743 = vmatprep.subr.mxu0 %v604
    %4744 = vmatpush1.msra.mxu0 %v603
    %4745 = vmatprep.subr.mxu0 %v618
    %4746 = vmatpush1.msra.mxu0 %v617
    %4747 = vmatprep.mubr.f32.mxu0 %v4112
    %4748 = vmatmul.mubr.f32.gmra.mrb[0].mxu0 %v4111
    %v4749 = vpop.f32.mrb[0].mxu0
    %v4750 = vadd.f32 0.0, %v4749
    %v4751 = vpop.f32.mrb[0].mxu0
    %v4752 = vadd.f32 0.0, %v4751
    %4753 = vdwg.mxu0
    %4754 = vmatprep.subr.mxu0 %v632
    %4755 = vmatpush1.msra.mxu0 %v631
    %4756 = vmatprep.subr.mxu0 %v646
    %4757 = vmatpush1.msra.mxu0 %v645
    %4758 = vmatprep.subr.mxu0 %v660
    %4759 = vmatpush1.msra.mxu0 %v659
    %4760 = vmatprep.subr.mxu0 %v674
    %4761 = vmatpush1.msra.mxu0 %v673
    %4762 = vmatprep.subr.mxu0 %v688
    %4763 = vmatpush1.msra.mxu0 %v687
    %4764 = vmatprep.subr.mxu0 %v702
    %4765 = vmatpush1.msra.mxu0 %v701
    %4766 = vmatprep.subr.mxu0 %v716
    %4767 = vmatpush1.msra.mxu0 %v715
    %4768 = vmatprep.subr.mxu0 %v730
    %4769 = vmatpush1.msra.mxu0 %v729
    %4770 = vmatprep.subr.mxu0 %v744
    %4771 = vmatpush1.msra.mxu0 %v743
    %4772 = vmatprep.subr.mxu0 %v758
    %4773 = vmatpush1.msra.mxu0 %v757
    %4774 = vmatprep.subr.mxu0 %v772
    %4775 = vmatpush1.msra.mxu0 %v771
    %4776 = vmatprep.subr.mxu0 %v786
    %4777 = vmatpush1.msra.mxu0 %v785
    %4778 = vmatprep.subr.mxu0 %v800
    %4779 = vmatpush1.msra.mxu0 %v799
    %4780 = vmatprep.subr.mxu0 %v814
    %4781 = vmatpush1.msra.mxu0 %v813
    %4782 = vmatprep.subr.mxu0 %v828
    %4783 = vmatpush1.msra.mxu0 %v827
    %4784 = vmatprep.subr.mxu0 %v842
    %4785 = vmatpush1.msra.mxu0 %v841
    %4786 = vmatprep.subr.mxu0 %v856
    %4787 = vmatpush1.msra.mxu0 %v855
    %4788 = vmatprep.subr.mxu0 %v870
    %4789 = vmatpush1.msra.mxu0 %v869
    %4790 = vmatprep.subr.mxu0 %v884
    %4791 = vmatpush1.msra.mxu0 %v883
    %4792 = vmatprep.subr.mxu0 %v898
    %4793 = vmatpush1.msra.mxu0 %v897
    %4794 = vmatprep.subr.mxu0 %v912
    %4795 = vmatpush1.msra.mxu0 %v911
    %4796 = vmatprep.subr.mxu0 %v926
    %4797 = vmatpush1.msra.mxu0 %v925
    %4798 = vmatprep.subr.mxu0 %v940
    %4799 = vmatpush1.msra.mxu0 %v939
    %4800 = vmatprep.subr.mxu0 %v954
    %4801 = vmatpush1.msra.mxu0 %v953
    %4802 = vmatprep.subr.mxu0 %v968
    %4803 = vmatpush1.msra.mxu0 %v967
    %4804 = vmatprep.subr.mxu0 %v982
    %4805 = vmatpush1.msra.mxu0 %v981
    %4806 = vmatprep.subr.mxu0 %v996
    %4807 = vmatpush1.msra.mxu0 %v995
    %4808 = vmatprep.subr.mxu0 %v1010
    %4809 = vmatpush1.msra.mxu0 %v1009
    %4810 = vmatprep.subr.mxu0 %v1024
    %4811 = vmatpush1.msra.mxu0 %v1023
    %4812 = vmatprep.subr.mxu0 %v1038
    %4813 = vmatpush1.msra.mxu0 %v1037
    %4814 = vmatprep.subr.mxu0 %v1052
    %4815 = vmatpush1.msra.mxu0 %v1051
    %4816 = vmatprep.subr.mxu0 %v1066
    %4817 = vmatpush1.msra.mxu0 %v1065
    %4818 = vmatprep.mubr.f32.mxu0 %v4041
    %4819 = vmatmul.mubr.f32.gmra.mrb[0].mxu0 %v4040
    %v4820 = vpop.f32.mrb[0].mxu0
    %v4821 = vadd.f32 %v4750, %v4820
    %v4822 = vpop.f32.mrb[0].mxu0
    %v4823 = vadd.f32 %v4752, %v4822
    %4824 = vdwg.mxu0
    %4825 = vmatprep.subr.mxu0 %v186
    %4826 = vmatpush1.msra.mxu0 %v185
    %4827 = vmatprep.subr.mxu0 %v200
    %4828 = vmatpush1.msra.mxu0 %v199
    %4829 = vmatprep.subr.mxu0 %v214
    %4830 = vmatpush1.msra.mxu0 %v213
    %4831 = vmatprep.subr.mxu0 %v228
    %4832 = vmatpush1.msra.mxu0 %v227
    %4833 = vmatprep.subr.mxu0 %v242
    %4834 = vmatpush1.msra.mxu0 %v241
    %4835 = vmatprep.subr.mxu0 %v256
    %4836 = vmatpush1.msra.mxu0 %v255
    %4837 = vmatprep.subr.mxu0 %v270
    %4838 = vmatpush1.msra.mxu0 %v269
    %4839 = vmatprep.subr.mxu0 %v284
    %4840 = vmatpush1.msra.mxu0 %v283
    %4841 = vmatprep.subr.mxu0 %v298
    %4842 = vmatpush1.msra.mxu0 %v297
    %4843 = vmatprep.subr.mxu0 %v312
    %4844 = vmatpush1.msra.mxu0 %v311
    %4845 = vmatprep.subr.mxu0 %v326
    %4846 = vmatpush1.msra.mxu0 %v325
    %4847 = vmatprep.subr.mxu0 %v340
    %4848 = vmatpush1.msra.mxu0 %v339
    %4849 = vmatprep.subr.mxu0 %v354
    %4850 = vmatpush1.msra.mxu0 %v353
    %4851 = vmatprep.subr.mxu0 %v368
    %4852 = vmatpush1.msra.mxu0 %v367
    %4853 = vmatprep.subr.mxu0 %v382
    %4854 = vmatpush1.msra.mxu0 %v381
    %4855 = vmatprep.subr.mxu0 %v396
    %4856 = vmatpush1.msra.mxu0 %v395
    %4857 = vmatprep.subr.mxu0 %v410
    %4858 = vmatpush1.msra.mxu0 %v409
    %4859 = vmatprep.subr.mxu0 %v424
    %4860 = vmatpush1.msra.mxu0 %v423
    %4861 = vmatprep.subr.mxu0 %v438
    %4862 = vmatpush1.msra.mxu0 %v437
    %4863 = vmatprep.subr.mxu0 %v452
    %4864 = vmatpush1.msra.mxu0 %v451
    %4865 = vmatprep.subr.mxu0 %v466
    %4866 = vmatpush1.msra.mxu0 %v465
    %4867 = vmatprep.subr.mxu0 %v480
    %4868 = vmatpush1.msra.mxu0 %v479
    %4869 = vmatprep.subr.mxu0 %v494
    %4870 = vmatpush1.msra.mxu0 %v493
    %4871 = vmatprep.subr.mxu0 %v508
    %4872 = vmatpush1.msra.mxu0 %v507
    %4873 = vmatprep.subr.mxu0 %v522
    %4874 = vmatpush1.msra.mxu0 %v521
    %4875 = vmatprep.subr.mxu0 %v536
    %4876 = vmatpush1.msra.mxu0 %v535
    %4877 = vmatprep.subr.mxu0 %v550
    %4878 = vmatpush1.msra.mxu0 %v549
    %4879 = vmatprep.subr.mxu0 %v564
    %4880 = vmatpush1.msra.mxu0 %v563
    %4881 = vmatprep.subr.mxu0 %v578
    %4882 = vmatpush1.msra.mxu0 %v577
    %4883 = vmatprep.subr.mxu0 %v592
    %4884 = vmatpush1.msra.mxu0 %v591
    %4885 = vmatprep.subr.mxu0 %v606
    %4886 = vmatpush1.msra.mxu0 %v605
    %4887 = vmatprep.subr.mxu0 %v620
    %4888 = vmatpush1.msra.mxu0 %v619
    %4889 = vmatprep.mubr.f32.mxu0 %v4112
    %4890 = vmatmul.mubr.f32.gmra.mrb[0].mxu0 %v4111
    %v4891 = vpop.f32.mrb[0].mxu0
    %v4892 = vadd.f32 0.0, %v4891
    %v4893 = vpop.f32.mrb[0].mxu0
    %v4894 = vadd.f32 0.0, %v4893
    %4895 = vdwg.mxu0
    %4896 = vmatprep.subr.mxu0 %v634
    %4897 = vmatpush1.msra.mxu0 %v633
    %4898 = vmatprep.subr.mxu0 %v648
    %4899 = vmatpush1.msra.mxu0 %v647
    %4900 = vmatprep.subr.mxu0 %v662
    %4901 = vmatpush1.msra.mxu0 %v661
    %4902 = vmatprep.subr.mxu0 %v676
    %4903 = vmatpush1.msra.mxu0 %v675
    %4904 = vmatprep.subr.mxu0 %v690
    %4905 = vmatpush1.msra.mxu0 %v689
    %4906 = vmatprep.subr.mxu0 %v704
    %4907 = vmatpush1.msra.mxu0 %v703
    %4908 = vmatprep.subr.mxu0 %v718
    %4909 = vmatpush1.msra.mxu0 %v717
    %4910 = vmatprep.subr.mxu0 %v732
    %4911 = vmatpush1.msra.mxu0 %v731
    %4912 = vmatprep.subr.mxu0 %v746
    %4913 = vmatpush1.msra.mxu0 %v745
    %4914 = vmatprep.subr.mxu0 %v760
    %4915 = vmatpush1.msra.mxu0 %v759
    %4916 = vmatprep.subr.mxu0 %v774
    %4917 = vmatpush1.msra.mxu0 %v773
    %4918 = vmatprep.subr.mxu0 %v788
    %4919 = vmatpush1.msra.mxu0 %v787
    %4920 = vmatprep.subr.mxu0 %v802
    %4921 = vmatpush1.msra.mxu0 %v801
    %4922 = vmatprep.subr.mxu0 %v816
    %4923 = vmatpush1.msra.mxu0 %v815
    %4924 = vmatprep.subr.mxu0 %v830
    %4925 = vmatpush1.msra.mxu0 %v829
    %4926 = vmatprep.subr.mxu0 %v844
    %4927 = vmatpush1.msra.mxu0 %v843
    %4928 = vmatprep.subr.mxu0 %v858
    %4929 = vmatpush1.msra.mxu0 %v857
    %4930 = vmatprep.subr.mxu0 %v872
    %4931 = vmatpush1.msra.mxu0 %v871
    %4932 = vmatprep.subr.mxu0 %v886
    %4933 = vmatpush1.msra.mxu0 %v885
    %4934 = vmatprep.subr.mxu0 %v900
    %4935 = vmatpush1.msra.mxu0 %v899
    %4936 = vmatprep.subr.mxu0 %v914
    %4937 = vmatpush1.msra.mxu0 %v913
    %4938 = vmatprep.subr.mxu0 %v928
    %4939 = vmatpush1.msra.mxu0 %v927
    %4940 = vmatprep.subr.mxu0 %v942
    %4941 = vmatpush1.msra.mxu0 %v941
    %4942 = vmatprep.subr.mxu0 %v956
    %4943 = vmatpush1.msra.mxu0 %v955
    %4944 = vmatprep.subr.mxu0 %v970
    %4945 = vmatpush1.msra.mxu0 %v969
    %4946 = vmatprep.subr.mxu0 %v984
    %4947 = vmatpush1.msra.mxu0 %v983
    %4948 = vmatprep.subr.mxu0 %v998
    %4949 = vmatpush1.msra.mxu0 %v997
    %4950 = vmatprep.subr.mxu0 %v1012
    %4951 = vmatpush1.msra.mxu0 %v1011
    %4952 = vmatprep.subr.mxu0 %v1026
    %4953 = vmatpush1.msra.mxu0 %v1025
    %4954 = vmatprep.subr.mxu0 %v1040
    %4955 = vmatpush1.msra.mxu0 %v1039
    %4956 = vmatprep.subr.mxu0 %v1054
    %4957 = vmatpush1.msra.mxu0 %v1053
    %4958 = vmatprep.subr.mxu0 %v1068
    %4959 = vmatpush1.msra.mxu0 %v1067
    %4960 = vmatprep.mubr.f32.mxu0 %v4041
    %4961 = vmatmul.mubr.f32.gmra.mrb[0].mxu0 %v4040
    %v4962 = vpop.f32.mrb[0].mxu0
    %v4963 = vadd.f32 %v4892, %v4962
    %v4964 = vpop.f32.mrb[0].mxu0
    %v4965 = vadd.f32 %v4894, %v4964
    %4966 = vdwg.mxu0
    %4967 = vmatprep.subr.mxu0 %v188
    %4968 = vmatpush1.msra.mxu0 %v187
    %4969 = vmatprep.subr.mxu0 %v202
    %4970 = vmatpush1.msra.mxu0 %v201
    %4971 = vmatprep.subr.mxu0 %v216
    %4972 = vmatpush1.msra.mxu0 %v215
    %4973 = vmatprep.subr.mxu0 %v230
    %4974 = vmatpush1.msra.mxu0 %v229
    %4975 = vmatprep.subr.mxu0 %v244
    %4976 = vmatpush1.msra.mxu0 %v243
    %4977 = vmatprep.subr.mxu0 %v258
    %4978 = vmatpush1.msra.mxu0 %v257
    %4979 = vmatprep.subr.mxu0 %v272
    %4980 = vmatpush1.msra.mxu0 %v271
    %4981 = vmatprep.subr.mxu0 %v286
    %4982 = vmatpush1.msra.mxu0 %v285
    %4983 = vmatprep.subr.mxu0 %v300
    %4984 = vmatpush1.msra.mxu0 %v299
    %4985 = vmatprep.subr.mxu0 %v314
    %4986 = vmatpush1.msra.mxu0 %v313
    %4987 = vmatprep.subr.mxu0 %v328
    %4988 = vmatpush1.msra.mxu0 %v327
    %4989 = vmatprep.subr.mxu0 %v342
    %4990 = vmatpush1.msra.mxu0 %v341
    %4991 = vmatprep.subr.mxu0 %v356
    %4992 = vmatpush1.msra.mxu0 %v355
    %4993 = vmatprep.subr.mxu0 %v370
    %4994 = vmatpush1.msra.mxu0 %v369
    %4995 = vmatprep.subr.mxu0 %v384
    %4996 = vmatpush1.msra.mxu0 %v383
    %4997 = vmatprep.subr.mxu0 %v398
    %4998 = vmatpush1.msra.mxu0 %v397
    %4999 = vmatprep.subr.mxu0 %v412
    %5000 = vmatpush1.msra.mxu0 %v411
    %5001 = vmatprep.subr.mxu0 %v426
    %5002 = vmatpush1.msra.mxu0 %v425
    %5003 = vmatprep.subr.mxu0 %v440
    %5004 = vmatpush1.msra.mxu0 %v439
    %5005 = vmatprep.subr.mxu0 %v454
    %5006 = vmatpush1.msra.mxu0 %v453
    %5007 = vmatprep.subr.mxu0 %v468
    %5008 = vmatpush1.msra.mxu0 %v467
    %5009 = vmatprep.subr.mxu0 %v482
    %5010 = vmatpush1.msra.mxu0 %v481
    %5011 = vmatprep.subr.mxu0 %v496
    %5012 = vmatpush1.msra.mxu0 %v495
    %5013 = vmatprep.subr.mxu0 %v510
    %5014 = vmatpush1.msra.mxu0 %v509
    %5015 = vmatprep.subr.mxu0 %v524
    %5016 = vmatpush1.msra.mxu0 %v523
    %5017 = vmatprep.subr.mxu0 %v538
    %5018 = vmatpush1.msra.mxu0 %v537
    %5019 = vmatprep.subr.mxu0 %v552
    %5020 = vmatpush1.msra.mxu0 %v551
    %5021 = vmatprep.subr.mxu0 %v566
    %5022 = vmatpush1.msra.mxu0 %v565
    %5023 = vmatprep.subr.mxu0 %v580
    %5024 = vmatpush1.msra.mxu0 %v579
    %5025 = vmatprep.subr.mxu0 %v594
    %5026 = vmatpush1.msra.mxu0 %v593
    %5027 = vmatprep.subr.mxu0 %v608
    %5028 = vmatpush1.msra.mxu0 %v607
    %5029 = vmatprep.subr.mxu0 %v622
    %5030 = vmatpush1.msra.mxu0 %v621
    %5031 = vmatprep.mubr.f32.mxu0 %v4112
    %5032 = vmatmul.mubr.f32.gmra.mrb[0].mxu0 %v4111
    %v5033 = vpop.f32.mrb[0].mxu0
    %v5034 = vadd.f32 0.0, %v5033
    %v5035 = vpop.f32.mrb[0].mxu0
    %v5036 = vadd.f32 0.0, %v5035
    %5037 = vdwg.mxu0
    %5038 = vmatprep.subr.mxu0 %v636
    %5039 = vmatpush1.msra.mxu0 %v635
    %5040 = vmatprep.subr.mxu0 %v650
    %5041 = vmatpush1.msra.mxu0 %v649
    %5042 = vmatprep.subr.mxu0 %v664
    %5043 = vmatpush1.msra.mxu0 %v663
    %5044 = vmatprep.subr.mxu0 %v678
    %5045 = vmatpush1.msra.mxu0 %v677
    %5046 = vmatprep.subr.mxu0 %v692
    %5047 = vmatpush1.msra.mxu0 %v691
    %5048 = vmatprep.subr.mxu0 %v706
    %5049 = vmatpush1.msra.mxu0 %v705
    %5050 = vmatprep.subr.mxu0 %v720
    %5051 = vmatpush1.msra.mxu0 %v719
    %5052 = vmatprep.subr.mxu0 %v734
    %5053 = vmatpush1.msra.mxu0 %v733
    %5054 = vmatprep.subr.mxu0 %v748
    %5055 = vmatpush1.msra.mxu0 %v747
    %5056 = vmatprep.subr.mxu0 %v762
    %5057 = vmatpush1.msra.mxu0 %v761
    %5058 = vmatprep.subr.mxu0 %v776
    %5059 = vmatpush1.msra.mxu0 %v775
    %5060 = vmatprep.subr.mxu0 %v790
    %5061 = vmatpush1.msra.mxu0 %v789
    %5062 = vmatprep.subr.mxu0 %v804
    %5063 = vmatpush1.msra.mxu0 %v803
    %5064 = vmatprep.subr.mxu0 %v818
    %5065 = vmatpush1.msra.mxu0 %v817
    %5066 = vmatprep.subr.mxu0 %v832
    %5067 = vmatpush1.msra.mxu0 %v831
    %5068 = vmatprep.subr.mxu0 %v846
    %5069 = vmatpush1.msra.mxu0 %v845
    %5070 = vmatprep.subr.mxu0 %v860
    %5071 = vmatpush1.msra.mxu0 %v859
    %5072 = vmatprep.subr.mxu0 %v874
    %5073 = vmatpush1.msra.mxu0 %v873
    %5074 = vmatprep.subr.mxu0 %v888
    %5075 = vmatpush1.msra.mxu0 %v887
    %5076 = vmatprep.subr.mxu0 %v902
    %5077 = vmatpush1.msra.mxu0 %v901
    %5078 = vmatprep.subr.mxu0 %v916
    %5079 = vmatpush1.msra.mxu0 %v915
    %5080 = vmatprep.subr.mxu0 %v930
    %5081 = vmatpush1.msra.mxu0 %v929
    %5082 = vmatprep.subr.mxu0 %v944
    %5083 = vmatpush1.msra.mxu0 %v943
    %5084 = vmatprep.subr.mxu0 %v958
    %5085 = vmatpush1.msra.mxu0 %v957
    %5086 = vmatprep.subr.mxu0 %v972
    %5087 = vmatpush1.msra.mxu0 %v971
    %5088 = vmatprep.subr.mxu0 %v986
    %5089 = vmatpush1.msra.mxu0 %v985
    %5090 = vmatprep.subr.mxu0 %v1000
    %5091 = vmatpush1.msra.mxu0 %v999
    %5092 = vmatprep.subr.mxu0 %v1014
    %5093 = vmatpush1.msra.mxu0 %v1013
    %5094 = vmatprep.subr.mxu0 %v1028
    %5095 = vmatpush1.msra.mxu0 %v1027
    %5096 = vmatprep.subr.mxu0 %v1042
    %5097 = vmatpush1.msra.mxu0 %v1041
    %5098 = vmatprep.subr.mxu0 %v1056
    %5099 = vmatpush1.msra.mxu0 %v1055
    %5100 = vmatprep.subr.mxu0 %v1070
    %5101 = vmatpush1.msra.mxu0 %v1069
    %5102 = vmatprep.mubr.f32.mxu0 %v4041
    %5103 = vmatmul.mubr.f32.gmra.mrb[0].mxu0 %v4040
    %v5104 = vpop.f32.mrb[0].mxu0
    %v5105 = vadd.f32 %v5034, %v5104
    %v5106 = vpop.f32.mrb[0].mxu0
    %v5107 = vadd.f32 %v5036, %v5106
    %5108 = vdwg.mxu0
    %v5109 = vadd.f32 %v4679, %v1076
    %v5110 = vadd.f32 %v4681, %v1080
    %v5111 = vadd.f32 %v4821, %v1084
    %v5112 = vadd.f32 %v4823, %v1088
    %v5113 = vadd.f32 %v4963, %v1092
    %v5114 = vadd.f32 %v4965, %v1096
    %v5115 = vadd.f32 %v5105, %v1100
    %v5116 = vadd.f32 %v5107, %v1104
    %v5117 = vxor.u32 %v5109, 2147483648
    %v5118 = vxor.u32 %v5110, 2147483648
    %v5119 = vmul.f32 %v5117, 1.442695
    %v5120 = vpow.pop %v5119
    %v5121 = vmul.f32 %v5118, 1.442695
    %v5122 = vpow.pop %v5121
    %v5123 = vadd.f32 %v5120, 1.0
    %v5124 = vadd.f32 %v5122, 1.0
    %v5125 = vrcp.pop %v5123
    %v5126 = vmul.f32 1.0, %v5125
    %v5127 = vrcp.pop %v5124
    %v5128 = vmul.f32 1.0, %v5127
    %v5129 = vxor.u32 %v5111, 2147483648
    %v5130 = vxor.u32 %v5112, 2147483648
    %v5131 = vmul.f32 %v5129, 1.442695
    %v5132 = vpow.pop %v5131
    %v5133 = vmul.f32 %v5130, 1.442695
    %v5134 = vpow.pop %v5133
    %v5135 = vadd.f32 %v5132, 1.0
    %v5136 = vadd.f32 %v5134, 1.0
    %v5137 = vrcp.pop %v5135
    %v5138 = vmul.f32 1.0, %v5137
    %v5139 = vrcp.pop %v5136
    %v5140 = vmul.f32 1.0, %v5139
    %v5141 = vadd.f32 %v5115, %v1118
    %v5142 = vadd.f32 %v5116, %v1122
    %v5143 = vmul.f32 %v5126, %v5141
    %v5144 = vmul.f32 %v5128, %v5142
    %v5145 = vadd.f32 %v5113, %v5143
    %v5146 = vadd.f32 %v5114, %v5144
    %v5147 = vtanh.pop %v5145
    %v5148 = vtanh.pop %v5146
    %v5149 = vsub.f32 1.0, %v5138
    %v5150 = vsub.f32 1.0, %v5140
    %v5151 = vmul.f32 %v5149, %v5147
    %v5152 = vmul.f32 %v5150, %v5148
    %v5153 = vmul.f32 %v5138, %v4040
    %v5154 = vmul.f32 %v5140, %v4041
    %v5155 = vadd.f32 %v5151, %v5153
    %v5156 = vadd.f32 %v5152, %v5154
    %s5157 = scalar_lea.vmem [#allocation2], 36
    %v5158 = vld [vmem:[%s5157] sm:$0xff]
    %v5159 = vld [vmem:[%s5157 + $0x8] sm:$0xf]
    %v5162 = vcombine.low %v4253, %v4255
    %v5164 = vunpack.c.l.s4 1983009808
    %v5165 = vunpack.c.0.s8 %v5164
    %v5166 = vlaneseq
    %v5167 = vshrl.u32 %v5166, 7
    %v5168 = vsub.s32 %v5165, %v5167
    %v5169 = vrot.slane %v5162, %v5168
    %v5171 = vadd.f32 %v5158, %v5169
    %v5172 = vxor.u32 %v5171, 2147483648
    %v5173 = vmul.f32 %v5172, 1.442695
    %v5174 = vpow.pop %v5173
    %v5175 = vadd.f32 %v5174, 1.0
    %v5176 = vrcp.pop %v5175
    %v5177 = vmul.f32 1.0, %v5176
    %v5179 = vrot.slane %v5158, 4
    %v5183 = vcombine.low %v4395, %v4397
    %v5185 = vunpack.c.l.s4 1983009808
    %v5186 = vunpack.c.0.s8 %v5185
    %v5187 = vlaneseq
    %v5188 = vshrl.u32 %v5187, 7
    %v5189 = vsub.s32 %v5186, %v5188
    %v5190 = vrot.slane %v5183, %v5189
    %v5192 = vadd.f32 %v5179, %v5190
    %v5193 = vxor.u32 %v5192, 2147483648
    %v5194 = vmul.f32 %v5193, 1.442695
    %v5195 = vpow.pop %v5194
    %v5196 = vadd.f32 %v5195, 1.0
    %v5197 = vrcp.pop %v5196
    %v5198 = vmul.f32 1.0, %v5197
    %v5199 = vadd.f32 %v4537, %v168
    %v5200 = vadd.f32 %v4539, %v172
    %v5203 = vcombine.low %v5199, %v5200
    %v5205 = vunpack.c.l.s4 1983009808
    %v5206 = vunpack.c.0.s8 %v5205
    %v5207 = vlaneseq
    %v5208 = vshrl.u32 %v5207, 7
    %v5209 = vsub.s32 %v5206, %v5208
    %v5210 = vrot.slane %v5203, %v5209
    %v5212 = vmul.f32 %v5177, %v5210
    %v5213 = vadd.f32 %v5159, %v5212
    %v5214 = vtanh.pop %v5213
    %v5215 = vsub.f32 1.0, %v5198
    %v5216 = vmul.f32 %v5215, %v5214
    %v5217 = vmul.f32 %v5198, %v4103
    %v5218 = vadd.f32 %v5216, %v5217
    %v5221 = vunpack.c.l.s4 1983009808
    %v5222 = vunpack.c.0.s8 %v5221
    %v5223 = vlaneseq
    %v5224 = vshrl.u32 %v5223, 7
    %v5225 = vsub.s32 %v5222, %v5224
    %v5226 = vrot.slane %v5218, %v5225
    %v5227 = vcombine.high %v5226, %v5226
    %5230 = vmatprep.subr.mxu0 %v176
    %5231 = vmatpush1.msra.mxu0 %v175
    %5232 = vmatprep.subr.mxu0 %v190
    %5233 = vmatpush1.msra.mxu0 %v189
    %5234 = vmatprep.subr.mxu0 %v204
    %5235 = vmatpush1.msra.mxu0 %v203
    %5236 = vmatprep.subr.mxu0 %v218
    %5237 = vmatpush1.msra.mxu0 %v217
    %5238 = vmatprep.subr.mxu0 %v232
    %5239 = vmatpush1.msra.mxu0 %v231
    %5240 = vmatprep.subr.mxu0 %v246
    %5241 = vmatpush1.msra.mxu0 %v245
    %5242 = vmatprep.subr.mxu0 %v260
    %5243 = vmatpush1.msra.mxu0 %v259
    %5244 = vmatprep.subr.mxu0 %v274
    %5245 = vmatpush1.msra.mxu0 %v273
    %5246 = vmatprep.subr.mxu0 %v288
    %5247 = vmatpush1.msra.mxu0 %v287
    %5248 = vmatprep.subr.mxu0 %v302
    %5249 = vmatpush1.msra.mxu0 %v301
    %5250 = vmatprep.subr.mxu0 %v316
    %5251 = vmatpush1.msra.mxu0 %v315
    %5252 = vmatprep.subr.mxu0 %v330
    %5253 = vmatpush1.msra.mxu0 %v329
    %5254 = vmatprep.subr.mxu0 %v344
    %5255 = vmatpush1.msra.mxu0 %v343
    %5256 = vmatprep.subr.mxu0 %v358
    %5257 = vmatpush1.msra.mxu0 %v357
    %5258 = vmatprep.subr.mxu0 %v372
    %5259 = vmatpush1.msra.mxu0 %v371
    %5260 = vmatprep.subr.mxu0 %v386
    %5261 = vmatpush1.msra.mxu0 %v385
    %5262 = vmatprep.subr.mxu0 %v400
    %5263 = vmatpush1.msra.mxu0 %v399
    %5264 = vmatprep.subr.mxu0 %v414
    %5265 = vmatpush1.msra.mxu0 %v413
    %5266 = vmatprep.subr.mxu0 %v428
    %5267 = vmatpush1.msra.mxu0 %v427
    %5268 = vmatprep.subr.mxu0 %v442
    %5269 = vmatpush1.msra.mxu0 %v441
    %5270 = vmatprep.subr.mxu0 %v456
    %5271 = vmatpush1.msra.mxu0 %v455
    %5272 = vmatprep.subr.mxu0 %v470
    %5273 = vmatpush1.msra.mxu0 %v469
    %5274 = vmatprep.subr.mxu0 %v484
    %5275 = vmatpush1.msra.mxu0 %v483
    %5276 = vmatprep.subr.mxu0 %v498
    %5277 = vmatpush1.msra.mxu0 %v497
    %5278 = vmatprep.subr.mxu0 %v512
    %5279 = vmatpush1.msra.mxu0 %v511
    %5280 = vmatprep.subr.mxu0 %v526
    %5281 = vmatpush1.msra.mxu0 %v525
    %5282 = vmatprep.subr.mxu0 %v540
    %5283 = vmatpush1.msra.mxu0 %v539
    %5284 = vmatprep.subr.mxu0 %v554
    %5285 = vmatpush1.msra.mxu0 %v553
    %5286 = vmatprep.subr.mxu0 %v568
    %5287 = vmatpush1.msra.mxu0 %v567
    %5288 = vmatprep.subr.mxu0 %v582
    %5289 = vmatpush1.msra.mxu0 %v581
    %5290 = vmatprep.subr.mxu0 %v596
    %5291 = vmatpush1.msra.mxu0 %v595
    %5292 = vmatprep.subr.mxu0 %v610
    %5293 = vmatpush1.msra.mxu0 %v609
    %5294 = vmatprep.mubr.f32.mxu0 %v5227
    %5295 = vmatmul.mubr.f32.gmra.mrb[0].mxu0 %v5226
    %v5296 = vpop.f32.mrb[0].mxu0
    %v5297 = vadd.f32 0.0, %v5296
    %v5298 = vpop.f32.mrb[0].mxu0
    %v5299 = vadd.f32 0.0, %v5298
    %5300 = vdwg.mxu0
    %5301 = vmatprep.subr.mxu0 %v624
    %5302 = vmatpush1.msra.mxu0 %v623
    %5303 = vmatprep.subr.mxu0 %v638
    %5304 = vmatpush1.msra.mxu0 %v637
    %5305 = vmatprep.subr.mxu0 %v652
    %5306 = vmatpush1.msra.mxu0 %v651
    %5307 = vmatprep.subr.mxu0 %v666
    %5308 = vmatpush1.msra.mxu0 %v665
    %5309 = vmatprep.subr.mxu0 %v680
    %5310 = vmatpush1.msra.mxu0 %v679
    %5311 = vmatprep.subr.mxu0 %v694
    %5312 = vmatpush1.msra.mxu0 %v693
    %5313 = vmatprep.subr.mxu0 %v708
    %5314 = vmatpush1.msra.mxu0 %v707
    %5315 = vmatprep.subr.mxu0 %v722
    %5316 = vmatpush1.msra.mxu0 %v721
    %5317 = vmatprep.subr.mxu0 %v736
    %5318 = vmatpush1.msra.mxu0 %v735
    %5319 = vmatprep.subr.mxu0 %v750
    %5320 = vmatpush1.msra.mxu0 %v749
    %5321 = vmatprep.subr.mxu0 %v764
    %5322 = vmatpush1.msra.mxu0 %v763
    %5323 = vmatprep.subr.mxu0 %v778
    %5324 = vmatpush1.msra.mxu0 %v777
    %5325 = vmatprep.subr.mxu0 %v792
    %5326 = vmatpush1.msra.mxu0 %v791
    %5327 = vmatprep.subr.mxu0 %v806
    %5328 = vmatpush1.msra.mxu0 %v805
    %5329 = vmatprep.subr.mxu0 %v820
    %5330 = vmatpush1.msra.mxu0 %v819
    %5331 = vmatprep.subr.mxu0 %v834
    %5332 = vmatpush1.msra.mxu0 %v833
    %5333 = vmatprep.subr.mxu0 %v848
    %5334 = vmatpush1.msra.mxu0 %v847
    %5335 = vmatprep.subr.mxu0 %v862
    %5336 = vmatpush1.msra.mxu0 %v861
    %5337 = vmatprep.subr.mxu0 %v876
    %5338 = vmatpush1.msra.mxu0 %v875
    %5339 = vmatprep.subr.mxu0 %v890
    %5340 = vmatpush1.msra.mxu0 %v889
    %5341 = vmatprep.subr.mxu0 %v904
    %5342 = vmatpush1.msra.mxu0 %v903
    %5343 = vmatprep.subr.mxu0 %v918
    %5344 = vmatpush1.msra.mxu0 %v917
    %5345 = vmatprep.subr.mxu0 %v932
    %5346 = vmatpush1.msra.mxu0 %v931
    %5347 = vmatprep.subr.mxu0 %v946
    %5348 = vmatpush1.msra.mxu0 %v945
    %5349 = vmatprep.subr.mxu0 %v960
    %5350 = vmatpush1.msra.mxu0 %v959
    %5351 = vmatprep.subr.mxu0 %v974
    %5352 = vmatpush1.msra.mxu0 %v973
    %5353 = vmatprep.subr.mxu0 %v988
    %5354 = vmatpush1.msra.mxu0 %v987
    %5355 = vmatprep.subr.mxu0 %v1002
    %5356 = vmatpush1.msra.mxu0 %v1001
    %5357 = vmatprep.subr.mxu0 %v1016
    %5358 = vmatpush1.msra.mxu0 %v1015
    %5359 = vmatprep.subr.mxu0 %v1030
    %5360 = vmatpush1.msra.mxu0 %v1029
    %5361 = vmatprep.subr.mxu0 %v1044
    %5362 = vmatpush1.msra.mxu0 %v1043
    %5363 = vmatprep.subr.mxu0 %v1058
    %5364 = vmatpush1.msra.mxu0 %v1057
    %5365 = vmatprep.mubr.f32.mxu0 %v5156
    %5366 = vmatmul.mubr.f32.gmra.mrb[0].mxu0 %v5155
    %v5367 = vpop.f32.mrb[0].mxu0
    %v5368 = vadd.f32 %v5297, %v5367
    %v5369 = vpop.f32.mrb[0].mxu0
    %v5370 = vadd.f32 %v5299, %v5369
    %5371 = vdwg.mxu0
    %5372 = vmatprep.subr.mxu0 %v178
    %5373 = vmatpush1.msra.mxu0 %v177
    %5374 = vmatprep.subr.mxu0 %v192
    %5375 = vmatpush1.msra.mxu0 %v191
    %5376 = vmatprep.subr.mxu0 %v206
    %5377 = vmatpush1.msra.mxu0 %v205
    %5378 = vmatprep.subr.mxu0 %v220
    %5379 = vmatpush1.msra.mxu0 %v219
    %5380 = vmatprep.subr.mxu0 %v234
    %5381 = vmatpush1.msra.mxu0 %v233
    %5382 = vmatprep.subr.mxu0 %v248
    %5383 = vmatpush1.msra.mxu0 %v247
    %5384 = vmatprep.subr.mxu0 %v262
    %5385 = vmatpush1.msra.mxu0 %v261
    %5386 = vmatprep.subr.mxu0 %v276
    %5387 = vmatpush1.msra.mxu0 %v275
    %5388 = vmatprep.subr.mxu0 %v290
    %5389 = vmatpush1.msra.mxu0 %v289
    %5390 = vmatprep.subr.mxu0 %v304
    %5391 = vmatpush1.msra.mxu0 %v303
    %5392 = vmatprep.subr.mxu0 %v318
    %5393 = vmatpush1.msra.mxu0 %v317
    %5394 = vmatprep.subr.mxu0 %v332
    %5395 = vmatpush1.msra.mxu0 %v331
    %5396 = vmatprep.subr.mxu0 %v346
    %5397 = vmatpush1.msra.mxu0 %v345
    %5398 = vmatprep.subr.mxu0 %v360
    %5399 = vmatpush1.msra.mxu0 %v359
    %5400 = vmatprep.subr.mxu0 %v374
    %5401 = vmatpush1.msra.mxu0 %v373
    %5402 = vmatprep.subr.mxu0 %v388
    %5403 = vmatpush1.msra.mxu0 %v387
    %5404 = vmatprep.subr.mxu0 %v402
    %5405 = vmatpush1.msra.mxu0 %v401
    %5406 = vmatprep.subr.mxu0 %v416
    %5407 = vmatpush1.msra.mxu0 %v415
    %5408 = vmatprep.subr.mxu0 %v430
    %5409 = vmatpush1.msra.mxu0 %v429
    %5410 = vmatprep.subr.mxu0 %v444
    %5411 = vmatpush1.msra.mxu0 %v443
    %5412 = vmatprep.subr.mxu0 %v458
    %5413 = vmatpush1.msra.mxu0 %v457
    %5414 = vmatprep.subr.mxu0 %v472
    %5415 = vmatpush1.msra.mxu0 %v471
    %5416 = vmatprep.subr.mxu0 %v486
    %5417 = vmatpush1.msra.mxu0 %v485
    %5418 = vmatprep.subr.mxu0 %v500
    %5419 = vmatpush1.msra.mxu0 %v499
    %5420 = vmatprep.subr.mxu0 %v514
    %5421 = vmatpush1.msra.mxu0 %v513
    %5422 = vmatprep.subr.mxu0 %v528
    %5423 = vmatpush1.msra.mxu0 %v527
    %5424 = vmatprep.subr.mxu0 %v542
    %5425 = vmatpush1.msra.mxu0 %v541
    %5426 = vmatprep.subr.mxu0 %v556
    %5427 = vmatpush1.msra.mxu0 %v555
    %5428 = vmatprep.subr.mxu0 %v570
    %5429 = vmatpush1.msra.mxu0 %v569
    %5430 = vmatprep.subr.mxu0 %v584
    %5431 = vmatpush1.msra.mxu0 %v583
    %5432 = vmatprep.subr.mxu0 %v598
    %5433 = vmatpush1.msra.mxu0 %v597
    %5434 = vmatprep.subr.mxu0 %v612
    %5435 = vmatpush1.msra.mxu0 %v611
    %5436 = vmatprep.mubr.f32.mxu0 %v5227
    %5437 = vmatmul.mubr.f32.gmra.mrb[0].mxu0 %v5226
    %v5438 = vpop.f32.mrb[0].mxu0
    %v5439 = vadd.f32 0.0, %v5438
    %v5440 = vpop.f32.mrb[0].mxu0
    %v5441 = vadd.f32 0.0, %v5440
    %5442 = vdwg.mxu0
    %5443 = vmatprep.subr.mxu0 %v626
    %5444 = vmatpush1.msra.mxu0 %v625
    %5445 = vmatprep.subr.mxu0 %v640
    %5446 = vmatpush1.msra.mxu0 %v639
    %5447 = vmatprep.subr.mxu0 %v654
    %5448 = vmatpush1.msra.mxu0 %v653
    %5449 = vmatprep.subr.mxu0 %v668
    %5450 = vmatpush1.msra.mxu0 %v667
    %5451 = vmatprep.subr.mxu0 %v682
    %5452 = vmatpush1.msra.mxu0 %v681
    %5453 = vmatprep.subr.mxu0 %v696
    %5454 = vmatpush1.msra.mxu0 %v695
    %5455 = vmatprep.subr.mxu0 %v710
    %5456 = vmatpush1.msra.mxu0 %v709
    %5457 = vmatprep.subr.mxu0 %v724
    %5458 = vmatpush1.msra.mxu0 %v723
    %5459 = vmatprep.subr.mxu0 %v738
    %5460 = vmatpush1.msra.mxu0 %v737
    %5461 = vmatprep.subr.mxu0 %v752
    %5462 = vmatpush1.msra.mxu0 %v751
    %5463 = vmatprep.subr.mxu0 %v766
    %5464 = vmatpush1.msra.mxu0 %v765
    %5465 = vmatprep.subr.mxu0 %v780
    %5466 = vmatpush1.msra.mxu0 %v779
    %5467 = vmatprep.subr.mxu0 %v794
    %5468 = vmatpush1.msra.mxu0 %v793
    %5469 = vmatprep.subr.mxu0 %v808
    %5470 = vmatpush1.msra.mxu0 %v807
    %5471 = vmatprep.subr.mxu0 %v822
    %5472 = vmatpush1.msra.mxu0 %v821
    %5473 = vmatprep.subr.mxu0 %v836
    %5474 = vmatpush1.msra.mxu0 %v835
    %5475 = vmatprep.subr.mxu0 %v850
    %5476 = vmatpush1.msra.mxu0 %v849
    %5477 = vmatprep.subr.mxu0 %v864
    %5478 = vmatpush1.msra.mxu0 %v863
    %5479 = vmatprep.subr.mxu0 %v878
    %5480 = vmatpush1.msra.mxu0 %v877
    %5481 = vmatprep.subr.mxu0 %v892
    %5482 = vmatpush1.msra.mxu0 %v891
    %5483 = vmatprep.subr.mxu0 %v906
    %5484 = vmatpush1.msra.mxu0 %v905
    %5485 = vmatprep.subr.mxu0 %v920
    %5486 = vmatpush1.msra.mxu0 %v919
    %5487 = vmatprep.subr.mxu0 %v934
    %5488 = vmatpush1.msra.mxu0 %v933
    %5489 = vmatprep.subr.mxu0 %v948
    %5490 = vmatpush1.msra.mxu0 %v947
    %5491 = vmatprep.subr.mxu0 %v962
    %5492 = vmatpush1.msra.mxu0 %v961
    %5493 = vmatprep.subr.mxu0 %v976
    %5494 = vmatpush1.msra.mxu0 %v975
    %5495 = vmatprep.subr.mxu0 %v990
    %5496 = vmatpush1.msra.mxu0 %v989
    %5497 = vmatprep.subr.mxu0 %v1004
    %5498 = vmatpush1.msra.mxu0 %v1003
    %5499 = vmatprep.subr.mxu0 %v1018
    %5500 = vmatpush1.msra.mxu0 %v1017
    %5501 = vmatprep.subr.mxu0 %v1032
    %5502 = vmatpush1.msra.mxu0 %v1031
    %5503 = vmatprep.subr.mxu0 %v1046
    %5504 = vmatpush1.msra.mxu0 %v1045
    %5505 = vmatprep.subr.mxu0 %v1060
    %5506 = vmatpush1.msra.mxu0 %v1059
    %5507 = vmatprep.mubr.f32.mxu0 %v5156
    %5508 = vmatmul.mubr.f32.gmra.mrb[0].mxu0 %v5155
    %v5509 = vpop.f32.mrb[0].mxu0
    %v5510 = vadd.f32 %v5439, %v5509
    %v5511 = vpop.f32.mrb[0].mxu0
    %v5512 = vadd.f32 %v5441, %v5511
    %5513 = vdwg.mxu0
    %5514 = vmatprep.subr.mxu0 %v180
    %5515 = vmatpush1.msra.mxu0 %v179
    %5516 = vmatprep.subr.mxu0 %v194
    %5517 = vmatpush1.msra.mxu0 %v193
    %5518 = vmatprep.subr.mxu0 %v208
    %5519 = vmatpush1.msra.mxu0 %v207
    %5520 = vmatprep.subr.mxu0 %v222
    %5521 = vmatpush1.msra.mxu0 %v221
    %5522 = vmatprep.subr.mxu0 %v236
    %5523 = vmatpush1.msra.mxu0 %v235
    %5524 = vmatprep.subr.mxu0 %v250
    %5525 = vmatpush1.msra.mxu0 %v249
    %5526 = vmatprep.subr.mxu0 %v264
    %5527 = vmatpush1.msra.mxu0 %v263
    %5528 = vmatprep.subr.mxu0 %v278
    %5529 = vmatpush1.msra.mxu0 %v277
    %5530 = vmatprep.subr.mxu0 %v292
    %5531 = vmatpush1.msra.mxu0 %v291
    %5532 = vmatprep.subr.mxu0 %v306
    %5533 = vmatpush1.msra.mxu0 %v305
    %5534 = vmatprep.subr.mxu0 %v320
    %5535 = vmatpush1.msra.mxu0 %v319
    %5536 = vmatprep.subr.mxu0 %v334
    %5537 = vmatpush1.msra.mxu0 %v333
    %5538 = vmatprep.subr.mxu0 %v348
    %5539 = vmatpush1.msra.mxu0 %v347
    %5540 = vmatprep.subr.mxu0 %v362
    %5541 = vmatpush1.msra.mxu0 %v361
    %5542 = vmatprep.subr.mxu0 %v376
    %5543 = vmatpush1.msra.mxu0 %v375
    %5544 = vmatprep.subr.mxu0 %v390
    %5545 = vmatpush1.msra.mxu0 %v389
    %5546 = vmatprep.subr.mxu0 %v404
    %5547 = vmatpush1.msra.mxu0 %v403
    %5548 = vmatprep.subr.mxu0 %v418
    %5549 = vmatpush1.msra.mxu0 %v417
    %5550 = vmatprep.subr.mxu0 %v432
    %5551 = vmatpush1.msra.mxu0 %v431
    %5552 = vmatprep.subr.mxu0 %v446
    %5553 = vmatpush1.msra.mxu0 %v445
    %5554 = vmatprep.subr.mxu0 %v460
    %5555 = vmatpush1.msra.mxu0 %v459
    %5556 = vmatprep.subr.mxu0 %v474
    %5557 = vmatpush1.msra.mxu0 %v473
    %5558 = vmatprep.subr.mxu0 %v488
    %5559 = vmatpush1.msra.mxu0 %v487
    %5560 = vmatprep.subr.mxu0 %v502
    %5561 = vmatpush1.msra.mxu0 %v501
    %5562 = vmatprep.subr.mxu0 %v516
    %5563 = vmatpush1.msra.mxu0 %v515
    %5564 = vmatprep.subr.mxu0 %v530
    %5565 = vmatpush1.msra.mxu0 %v529
    %5566 = vmatprep.subr.mxu0 %v544
    %5567 = vmatpush1.msra.mxu0 %v543
    %5568 = vmatprep.subr.mxu0 %v558
    %5569 = vmatpush1.msra.mxu0 %v557
    %5570 = vmatprep.subr.mxu0 %v572
    %5571 = vmatpush1.msra.mxu0 %v571
    %5572 = vmatprep.subr.mxu0 %v586
    %5573 = vmatpush1.msra.mxu0 %v585
    %5574 = vmatprep.subr.mxu0 %v600
    %5575 = vmatpush1.msra.mxu0 %v599
    %5576 = vmatprep.subr.mxu0 %v614
    %5577 = vmatpush1.msra.mxu0 %v613
    %5578 = vmatprep.mubr.f32.mxu0 %v5227
    %5579 = vmatmul.mubr.f32.gmra.mrb[0].mxu0 %v5226
    %v5580 = vpop.f32.mrb[0].mxu0
    %v5581 = vadd.f32 0.0, %v5580
    %v5582 = vpop.f32.mrb[0].mxu0
    %v5583 = vadd.f32 0.0, %v5582
    %5584 = vdwg.mxu0
    %5585 = vmatprep.subr.mxu0 %v628
    %5586 = vmatpush1.msra.mxu0 %v627
    %5587 = vmatprep.subr.mxu0 %v642
    %5588 = vmatpush1.msra.mxu0 %v641
    %5589 = vmatprep.subr.mxu0 %v656
    %5590 = vmatpush1.msra.mxu0 %v655
    %5591 = vmatprep.subr.mxu0 %v670
    %5592 = vmatpush1.msra.mxu0 %v669
    %5593 = vmatprep.subr.mxu0 %v684
    %5594 = vmatpush1.msra.mxu0 %v683
    %5595 = vmatprep.subr.mxu0 %v698
    %5596 = vmatpush1.msra.mxu0 %v697
    %5597 = vmatprep.subr.mxu0 %v712
    %5598 = vmatpush1.msra.mxu0 %v711
    %5599 = vmatprep.subr.mxu0 %v726
    %5600 = vmatpush1.msra.mxu0 %v725
    %5601 = vmatprep.subr.mxu0 %v740
    %5602 = vmatpush1.msra.mxu0 %v739
    %5603 = vmatprep.subr.mxu0 %v754
    %5604 = vmatpush1.msra.mxu0 %v753
    %5605 = vmatprep.subr.mxu0 %v768
    %5606 = vmatpush1.msra.mxu0 %v767
    %5607 = vmatprep.subr.mxu0 %v782
    %5608 = vmatpush1.msra.mxu0 %v781
    %5609 = vmatprep.subr.mxu0 %v796
    %5610 = vmatpush1.msra.mxu0 %v795
    %5611 = vmatprep.subr.mxu0 %v810
    %5612 = vmatpush1.msra.mxu0 %v809
    %5613 = vmatprep.subr.mxu0 %v824
    %5614 = vmatpush1.msra.mxu0 %v823
    %5615 = vmatprep.subr.mxu0 %v838
    %5616 = vmatpush1.msra.mxu0 %v837
    %5617 = vmatprep.subr.mxu0 %v852
    %5618 = vmatpush1.msra.mxu0 %v851
    %5619 = vmatprep.subr.mxu0 %v866
    %5620 = vmatpush1.msra.mxu0 %v865
    %5621 = vmatprep.subr.mxu0 %v880
    %5622 = vmatpush1.msra.mxu0 %v879
    %5623 = vmatprep.subr.mxu0 %v894
    %5624 = vmatpush1.msra.mxu0 %v893
    %5625 = vmatprep.subr.mxu0 %v908
    %5626 = vmatpush1.msra.mxu0 %v907
    %5627 = vmatprep.subr.mxu0 %v922
    %5628 = vmatpush1.msra.mxu0 %v921
    %5629 = vmatprep.subr.mxu0 %v936
    %5630 = vmatpush1.msra.mxu0 %v935
    %5631 = vmatprep.subr.mxu0 %v950
    %5632 = vmatpush1.msra.mxu0 %v949
    %5633 = vmatprep.subr.mxu0 %v964
    %5634 = vmatpush1.msra.mxu0 %v963
    %5635 = vmatprep.subr.mxu0 %v978
    %5636 = vmatpush1.msra.mxu0 %v977
    %5637 = vmatprep.subr.mxu0 %v992
    %5638 = vmatpush1.msra.mxu0 %v991
    %5639 = vmatprep.subr.mxu0 %v1006
    %5640 = vmatpush1.msra.mxu0 %v1005
    %5641 = vmatprep.subr.mxu0 %v1020
    %5642 = vmatpush1.msra.mxu0 %v1019
    %5643 = vmatprep.subr.mxu0 %v1034
    %5644 = vmatpush1.msra.mxu0 %v1033
    %5645 = vmatprep.subr.mxu0 %v1048
    %5646 = vmatpush1.msra.mxu0 %v1047
    %5647 = vmatprep.subr.mxu0 %v1062
    %5648 = vmatpush1.msra.mxu0 %v1061
    %5649 = vmatprep.mubr.f32.mxu0 %v5156
    %5650 = vmatmul.mubr.f32.gmra.mrb[0].mxu0 %v5155
    %v5651 = vpop.f32.mrb[0].mxu0
    %v5652 = vadd.f32 %v5581, %v5651
    %v5653 = vpop.f32.mrb[0].mxu0
    %v5654 = vadd.f32 %v5583, %v5653
    %5655 = vdwg.mxu0
    %5656 = vmatprep.subr.mxu0 %v182
    %5657 = vmatpush1.msra.mxu0 %v181
    %5658 = vmatprep.subr.mxu0 %v196
    %5659 = vmatpush1.msra.mxu0 %v195
    %5660 = vmatprep.subr.mxu0 %v210
    %5661 = vmatpush1.msra.mxu0 %v209
    %5662 = vmatprep.subr.mxu0 %v224
    %5663 = vmatpush1.msra.mxu0 %v223
    %5664 = vmatprep.subr.mxu0 %v238
    %5665 = vmatpush1.msra.mxu0 %v237
    %5666 = vmatprep.subr.mxu0 %v252
    %5667 = vmatpush1.msra.mxu0 %v251
    %5668 = vmatprep.subr.mxu0 %v266
    %5669 = vmatpush1.msra.mxu0 %v265
    %5670 = vmatprep.subr.mxu0 %v280
    %5671 = vmatpush1.msra.mxu0 %v279
    %5672 = vmatprep.subr.mxu0 %v294
    %5673 = vmatpush1.msra.mxu0 %v293
    %5674 = vmatprep.subr.mxu0 %v308
    %5675 = vmatpush1.msra.mxu0 %v307
    %5676 = vmatprep.subr.mxu0 %v322
    %5677 = vmatpush1.msra.mxu0 %v321
    %5678 = vmatprep.subr.mxu0 %v336
    %5679 = vmatpush1.msra.mxu0 %v335
    %5680 = vmatprep.subr.mxu0 %v350
    %5681 = vmatpush1.msra.mxu0 %v349
    %5682 = vmatprep.subr.mxu0 %v364
    %5683 = vmatpush1.msra.mxu0 %v363
    %5684 = vmatprep.subr.mxu0 %v378
    %5685 = vmatpush1.msra.mxu0 %v377
    %5686 = vmatprep.subr.mxu0 %v392
    %5687 = vmatpush1.msra.mxu0 %v391
    %5688 = vmatprep.subr.mxu0 %v406
    %5689 = vmatpush1.msra.mxu0 %v405
    %5690 = vmatprep.subr.mxu0 %v420
    %5691 = vmatpush1.msra.mxu0 %v419
    %5692 = vmatprep.subr.mxu0 %v434
    %5693 = vmatpush1.msra.mxu0 %v433
    %5694 = vmatprep.subr.mxu0 %v448
    %5695 = vmatpush1.msra.mxu0 %v447
    %5696 = vmatprep.subr.mxu0 %v462
    %5697 = vmatpush1.msra.mxu0 %v461
    %5698 = vmatprep.subr.mxu0 %v476
    %5699 = vmatpush1.msra.mxu0 %v475
    %5700 = vmatprep.subr.mxu0 %v490
    %5701 = vmatpush1.msra.mxu0 %v489
    %5702 = vmatprep.subr.mxu0 %v504
    %5703 = vmatpush1.msra.mxu0 %v503
    %5704 = vmatprep.subr.mxu0 %v518
    %5705 = vmatpush1.msra.mxu0 %v517
    %5706 = vmatprep.subr.mxu0 %v532
    %5707 = vmatpush1.msra.mxu0 %v531
    %5708 = vmatprep.subr.mxu0 %v546
    %5709 = vmatpush1.msra.mxu0 %v545
    %5710 = vmatprep.subr.mxu0 %v560
    %5711 = vmatpush1.msra.mxu0 %v559
    %5712 = vmatprep.subr.mxu0 %v574
    %5713 = vmatpush1.msra.mxu0 %v573
    %5714 = vmatprep.subr.mxu0 %v588
    %5715 = vmatpush1.msra.mxu0 %v587
    %5716 = vmatprep.subr.mxu0 %v602
    %5717 = vmatpush1.msra.mxu0 %v601
    %5718 = vmatprep.subr.mxu0 %v616
    %5719 = vmatpush1.msra.mxu0 %v615
    %5720 = vmatprep.mubr.f32.mxu0 %v5227
    %5721 = vmatmul.mubr.f32.gmra.mrb[0].mxu0 %v5226
    %v5722 = vpop.f32.mrb[0].mxu0
    %v5723 = vadd.f32 0.0, %v5722
    %v5724 = vpop.f32.mrb[0].mxu0
    %v5725 = vadd.f32 0.0, %v5724
    %5726 = vdwg.mxu0
    %5727 = vmatprep.subr.mxu0 %v630
    %5728 = vmatpush1.msra.mxu0 %v629
    %5729 = vmatprep.subr.mxu0 %v644
    %5730 = vmatpush1.msra.mxu0 %v643
    %5731 = vmatprep.subr.mxu0 %v658
    %5732 = vmatpush1.msra.mxu0 %v657
    %5733 = vmatprep.subr.mxu0 %v672
    %5734 = vmatpush1.msra.mxu0 %v671
    %5735 = vmatprep.subr.mxu0 %v686
    %5736 = vmatpush1.msra.mxu0 %v685
    %5737 = vmatprep.subr.mxu0 %v700
    %5738 = vmatpush1.msra.mxu0 %v699
    %5739 = vmatprep.subr.mxu0 %v714
    %5740 = vmatpush1.msra.mxu0 %v713
    %5741 = vmatprep.subr.mxu0 %v728
    %5742 = vmatpush1.msra.mxu0 %v727
    %5743 = vmatprep.subr.mxu0 %v742
    %5744 = vmatpush1.msra.mxu0 %v741
    %5745 = vmatprep.subr.mxu0 %v756
    %5746 = vmatpush1.msra.mxu0 %v755
    %5747 = vmatprep.subr.mxu0 %v770
    %5748 = vmatpush1.msra.mxu0 %v769
    %5749 = vmatprep.subr.mxu0 %v784
    %5750 = vmatpush1.msra.mxu0 %v783
    %5751 = vmatprep.subr.mxu0 %v798
    %5752 = vmatpush1.msra.mxu0 %v797
    %5753 = vmatprep.subr.mxu0 %v812
    %5754 = vmatpush1.msra.mxu0 %v811
    %5755 = vmatprep.subr.mxu0 %v826
    %5756 = vmatpush1.msra.mxu0 %v825
    %5757 = vmatprep.subr.mxu0 %v840
    %5758 = vmatpush1.msra.mxu0 %v839
    %5759 = vmatprep.subr.mxu0 %v854
    %5760 = vmatpush1.msra.mxu0 %v853
    %5761 = vmatprep.subr.mxu0 %v868
    %5762 = vmatpush1.msra.mxu0 %v867
    %5763 = vmatprep.subr.mxu0 %v882
    %5764 = vmatpush1.msra.mxu0 %v881
    %5765 = vmatprep.subr.mxu0 %v896
    %5766 = vmatpush1.msra.mxu0 %v895
    %5767 = vmatprep.subr.mxu0 %v910
    %5768 = vmatpush1.msra.mxu0 %v909
    %5769 = vmatprep.subr.mxu0 %v924
    %5770 = vmatpush1.msra.mxu0 %v923
    %5771 = vmatprep.subr.mxu0 %v938
    %5772 = vmatpush1.msra.mxu0 %v937
    %5773 = vmatprep.subr.mxu0 %v952
    %5774 = vmatpush1.msra.mxu0 %v951
    %5775 = vmatprep.subr.mxu0 %v966
    %5776 = vmatpush1.msra.mxu0 %v965
    %5777 = vmatprep.subr.mxu0 %v980
    %5778 = vmatpush1.msra.mxu0 %v979
    %5779 = vmatprep.subr.mxu0 %v994
    %5780 = vmatpush1.msra.mxu0 %v993
    %5781 = vmatprep.subr.mxu0 %v1008
    %5782 = vmatpush1.msra.mxu0 %v1007
    %5783 = vmatprep.subr.mxu0 %v1022
    %5784 = vmatpush1.msra.mxu0 %v1021
    %5785 = vmatprep.subr.mxu0 %v1036
    %5786 = vmatpush1.msra.mxu0 %v1035
    %5787 = vmatprep.subr.mxu0 %v1050
    %5788 = vmatpush1.msra.mxu0 %v1049
    %5789 = vmatprep.subr.mxu0 %v1064
    %5790 = vmatpush1.msra.mxu0 %v1063
    %5791 = vmatprep.mubr.f32.mxu0 %v5156
    %5792 = vmatmul.mubr.f32.gmra.mrb[0].mxu0 %v5155
    %v5793 = vpop.f32.mrb[0].mxu0
    %v5794 = vadd.f32 %v5723, %v5793
    %v5795 = vpop.f32.mrb[0].mxu0
    %v5796 = vadd.f32 %v5725, %v5795
    %5797 = vdwg.mxu0
    %5798 = vmatprep.subr.mxu0 %v184
    %5799 = vmatpush1.msra.mxu0 %v183
    %5800 = vmatprep.subr.mxu0 %v198
    %5801 = vmatpush1.msra.mxu0 %v197
    %5802 = vmatprep.subr.mxu0 %v212
    %5803 = vmatpush1.msra.mxu0 %v211
    %5804 = vmatprep.subr.mxu0 %v226
    %5805 = vmatpush1.msra.mxu0 %v225
    %5806 = vmatprep.subr.mxu0 %v240
    %5807 = vmatpush1.msra.mxu0 %v239
    %5808 = vmatprep.subr.mxu0 %v254
    %5809 = vmatpush1.msra.mxu0 %v253
    %5810 = vmatprep.subr.mxu0 %v268
    %5811 = vmatpush1.msra.mxu0 %v267
    %5812 = vmatprep.subr.mxu0 %v282
    %5813 = vmatpush1.msra.mxu0 %v281
    %5814 = vmatprep.subr.mxu0 %v296
    %5815 = vmatpush1.msra.mxu0 %v295
    %5816 = vmatprep.subr.mxu0 %v310
    %5817 = vmatpush1.msra.mxu0 %v309
    %5818 = vmatprep.subr.mxu0 %v324
    %5819 = vmatpush1.msra.mxu0 %v323
    %5820 = vmatprep.subr.mxu0 %v338
    %5821 = vmatpush1.msra.mxu0 %v337
    %5822 = vmatprep.subr.mxu0 %v352
    %5823 = vmatpush1.msra.mxu0 %v351
    %5824 = vmatprep.subr.mxu0 %v366
    %5825 = vmatpush1.msra.mxu0 %v365
    %5826 = vmatprep.subr.mxu0 %v380
    %5827 = vmatpush1.msra.mxu0 %v379
    %5828 = vmatprep.subr.mxu0 %v394
    %5829 = vmatpush1.msra.mxu0 %v393
    %5830 = vmatprep.subr.mxu0 %v408
    %5831 = vmatpush1.msra.mxu0 %v407
    %5832 = vmatprep.subr.mxu0 %v422
    %5833 = vmatpush1.msra.mxu0 %v421
    %5834 = vmatprep.subr.mxu0 %v436
    %5835 = vmatpush1.msra.mxu0 %v435
    %5836 = vmatprep.subr.mxu0 %v450
    %5837 = vmatpush1.msra.mxu0 %v449
    %5838 = vmatprep.subr.mxu0 %v464
    %5839 = vmatpush1.msra.mxu0 %v463
    %5840 = vmatprep.subr.mxu0 %v478
    %5841 = vmatpush1.msra.mxu0 %v477
    %5842 = vmatprep.subr.mxu0 %v492
    %5843 = vmatpush1.msra.mxu0 %v491
    %5844 = vmatprep.subr.mxu0 %v506
    %5845 = vmatpush1.msra.mxu0 %v505
    %5846 = vmatprep.subr.mxu0 %v520
    %5847 = vmatpush1.msra.mxu0 %v519
    %5848 = vmatprep.subr.mxu0 %v534
    %5849 = vmatpush1.msra.mxu0 %v533
    %5850 = vmatprep.subr.mxu0 %v548
    %5851 = vmatpush1.msra.mxu0 %v547
    %5852 = vmatprep.subr.mxu0 %v562
    %5853 = vmatpush1.msra.mxu0 %v561
    %5854 = vmatprep.subr.mxu0 %v576
    %5855 = vmatpush1.msra.mxu0 %v575
    %5856 = vmatprep.subr.mxu0 %v590
    %5857 = vmatpush1.msra.mxu0 %v589
    %5858 = vmatprep.subr.mxu0 %v604
    %5859 = vmatpush1.msra.mxu0 %v603
    %5860 = vmatprep.subr.mxu0 %v618
    %5861 = vmatpush1.msra.mxu0 %v617
    %5862 = vmatprep.mubr.f32.mxu0 %v5227
    %5863 = vmatmul.mubr.f32.gmra.mrb[0].mxu0 %v5226
    %v5864 = vpop.f32.mrb[0].mxu0
    %v5865 = vadd.f32 0.0, %v5864
    %v5866 = vpop.f32.mrb[0].mxu0
    %v5867 = vadd.f32 0.0, %v5866
    %5868 = vdwg.mxu0
    %5869 = vmatprep.subr.mxu0 %v632
    %5870 = vmatpush1.msra.mxu0 %v631
    %5871 = vmatprep.subr.mxu0 %v646
    %5872 = vmatpush1.msra.mxu0 %v645
    %5873 = vmatprep.subr.mxu0 %v660
    %5874 = vmatpush1.msra.mxu0 %v659
    %5875 = vmatprep.subr.mxu0 %v674
    %5876 = vmatpush1.msra.mxu0 %v673
    %5877 = vmatprep.subr.mxu0 %v688
    %5878 = vmatpush1.msra.mxu0 %v687
    %5879 = vmatprep.subr.mxu0 %v702
    %5880 = vmatpush1.msra.mxu0 %v701
    %5881 = vmatprep.subr.mxu0 %v716
    %5882 = vmatpush1.msra.mxu0 %v715
    %5883 = vmatprep.subr.mxu0 %v730
    %5884 = vmatpush1.msra.mxu0 %v729
    %5885 = vmatprep.subr.mxu0 %v744
    %5886 = vmatpush1.msra.mxu0 %v743
    %5887 = vmatprep.subr.mxu0 %v758
    %5888 = vmatpush1.msra.mxu0 %v757
    %5889 = vmatprep.subr.mxu0 %v772
    %5890 = vmatpush1.msra.mxu0 %v771
    %5891 = vmatprep.subr.mxu0 %v786
    %5892 = vmatpush1.msra.mxu0 %v785
    %5893 = vmatprep.subr.mxu0 %v800
    %5894 = vmatpush1.msra.mxu0 %v799
    %5895 = vmatprep.subr.mxu0 %v814
    %5896 = vmatpush1.msra.mxu0 %v813
    %5897 = vmatprep.subr.mxu0 %v828
    %5898 = vmatpush1.msra.mxu0 %v827
    %5899 = vmatprep.subr.mxu0 %v842
    %5900 = vmatpush1.msra.mxu0 %v841
    %5901 = vmatprep.subr.mxu0 %v856
    %5902 = vmatpush1.msra.mxu0 %v855
    %5903 = vmatprep.subr.mxu0 %v870
    %5904 = vmatpush1.msra.mxu0 %v869
    %5905 = vmatprep.subr.mxu0 %v884
    %5906 = vmatpush1.msra.mxu0 %v883
    %5907 = vmatprep.subr.mxu0 %v898
    %5908 = vmatpush1.msra.mxu0 %v897
    %5909 = vmatprep.subr.mxu0 %v912
    %5910 = vmatpush1.msra.mxu0 %v911
    %5911 = vmatprep.subr.mxu0 %v926
    %5912 = vmatpush1.msra.mxu0 %v925
    %5913 = vmatprep.subr.mxu0 %v940
    %5914 = vmatpush1.msra.mxu0 %v939
    %5915 = vmatprep.subr.mxu0 %v954
    %5916 = vmatpush1.msra.mxu0 %v953
    %5917 = vmatprep.subr.mxu0 %v968
    %5918 = vmatpush1.msra.mxu0 %v967
    %5919 = vmatprep.subr.mxu0 %v982
    %5920 = vmatpush1.msra.mxu0 %v981
    %5921 = vmatprep.subr.mxu0 %v996
    %5922 = vmatpush1.msra.mxu0 %v995
    %5923 = vmatprep.subr.mxu0 %v1010
    %5924 = vmatpush1.msra.mxu0 %v1009
    %5925 = vmatprep.subr.mxu0 %v1024
    %5926 = vmatpush1.msra.mxu0 %v1023
    %5927 = vmatprep.subr.mxu0 %v1038
    %5928 = vmatpush1.msra.mxu0 %v1037
    %5929 = vmatprep.subr.mxu0 %v1052
    %5930 = vmatpush1.msra.mxu0 %v1051
    %5931 = vmatprep.subr.mxu0 %v1066
    %5932 = vmatpush1.msra.mxu0 %v1065
    %5933 = vmatprep.mubr.f32.mxu0 %v5156
    %5934 = vmatmul.mubr.f32.gmra.mrb[0].mxu0 %v5155
    %v5935 = vpop.f32.mrb[0].mxu0
    %v5936 = vadd.f32 %v5865, %v5935
    %v5937 = vpop.f32.mrb[0].mxu0
    %v5938 = vadd.f32 %v5867, %v5937
    %5939 = vdwg.mxu0
    %5940 = vmatprep.subr.mxu0 %v186
    %5941 = vmatpush1.msra.mxu0 %v185
    %5942 = vmatprep.subr.mxu0 %v200
    %5943 = vmatpush1.msra.mxu0 %v199
    %5944 = vmatprep.subr.mxu0 %v214
    %5945 = vmatpush1.msra.mxu0 %v213
    %5946 = vmatprep.subr.mxu0 %v228
    %5947 = vmatpush1.msra.mxu0 %v227
    %5948 = vmatprep.subr.mxu0 %v242
    %5949 = vmatpush1.msra.mxu0 %v241
    %5950 = vmatprep.subr.mxu0 %v256
    %5951 = vmatpush1.msra.mxu0 %v255
    %5952 = vmatprep.subr.mxu0 %v270
    %5953 = vmatpush1.msra.mxu0 %v269
    %5954 = vmatprep.subr.mxu0 %v284
    %5955 = vmatpush1.msra.mxu0 %v283
    %5956 = vmatprep.subr.mxu0 %v298
    %5957 = vmatpush1.msra.mxu0 %v297
    %5958 = vmatprep.subr.mxu0 %v312
    %5959 = vmatpush1.msra.mxu0 %v311
    %5960 = vmatprep.subr.mxu0 %v326
    %5961 = vmatpush1.msra.mxu0 %v325
    %5962 = vmatprep.subr.mxu0 %v340
    %5963 = vmatpush1.msra.mxu0 %v339
    %5964 = vmatprep.subr.mxu0 %v354
    %5965 = vmatpush1.msra.mxu0 %v353
    %5966 = vmatprep.subr.mxu0 %v368
    %5967 = vmatpush1.msra.mxu0 %v367
    %5968 = vmatprep.subr.mxu0 %v382
    %5969 = vmatpush1.msra.mxu0 %v381
    %5970 = vmatprep.subr.mxu0 %v396
    %5971 = vmatpush1.msra.mxu0 %v395
    %5972 = vmatprep.subr.mxu0 %v410
    %5973 = vmatpush1.msra.mxu0 %v409
    %5974 = vmatprep.subr.mxu0 %v424
    %5975 = vmatpush1.msra.mxu0 %v423
    %5976 = vmatprep.subr.mxu0 %v438
    %5977 = vmatpush1.msra.mxu0 %v437
    %5978 = vmatprep.subr.mxu0 %v452
    %5979 = vmatpush1.msra.mxu0 %v451
    %5980 = vmatprep.subr.mxu0 %v466
    %5981 = vmatpush1.msra.mxu0 %v465
    %5982 = vmatprep.subr.mxu0 %v480
    %5983 = vmatpush1.msra.mxu0 %v479
    %5984 = vmatprep.subr.mxu0 %v494
    %5985 = vmatpush1.msra.mxu0 %v493
    %5986 = vmatprep.subr.mxu0 %v508
    %5987 = vmatpush1.msra.mxu0 %v507
    %5988 = vmatprep.subr.mxu0 %v522
    %5989 = vmatpush1.msra.mxu0 %v521
    %5990 = vmatprep.subr.mxu0 %v536
    %5991 = vmatpush1.msra.mxu0 %v535
    %5992 = vmatprep.subr.mxu0 %v550
    %5993 = vmatpush1.msra.mxu0 %v549
    %5994 = vmatprep.subr.mxu0 %v564
    %5995 = vmatpush1.msra.mxu0 %v563
    %5996 = vmatprep.subr.mxu0 %v578
    %5997 = vmatpush1.msra.mxu0 %v577
    %5998 = vmatprep.subr.mxu0 %v592
    %5999 = vmatpush1.msra.mxu0 %v591
    %6000 = vmatprep.subr.mxu0 %v606
    %6001 = vmatpush1.msra.mxu0 %v605
    %6002 = vmatprep.subr.mxu0 %v620
    %6003 = vmatpush1.msra.mxu0 %v619
    %6004 = vmatprep.mubr.f32.mxu0 %v5227
    %6005 = vmatmul.mubr.f32.gmra.mrb[0].mxu0 %v5226
    %v6006 = vpop.f32.mrb[0].mxu0
    %v6007 = vadd.f32 0.0, %v6006
    %v6008 = vpop.f32.mrb[0].mxu0
    %v6009 = vadd.f32 0.0, %v6008
    %6010 = vdwg.mxu0
    %6011 = vmatprep.subr.mxu0 %v634
    %6012 = vmatpush1.msra.mxu0 %v633
    %6013 = vmatprep.subr.mxu0 %v648
    %6014 = vmatpush1.msra.mxu0 %v647
    %6015 = vmatprep.subr.mxu0 %v662
    %6016 = vmatpush1.msra.mxu0 %v661
    %6017 = vmatprep.subr.mxu0 %v676
    %6018 = vmatpush1.msra.mxu0 %v675
    %6019 = vmatprep.subr.mxu0 %v690
    %6020 = vmatpush1.msra.mxu0 %v689
    %6021 = vmatprep.subr.mxu0 %v704
    %6022 = vmatpush1.msra.mxu0 %v703
    %6023 = vmatprep.subr.mxu0 %v718
    %6024 = vmatpush1.msra.mxu0 %v717
    %6025 = vmatprep.subr.mxu0 %v732
    %6026 = vmatpush1.msra.mxu0 %v731
    %6027 = vmatprep.subr.mxu0 %v746
    %6028 = vmatpush1.msra.mxu0 %v745
    %6029 = vmatprep.subr.mxu0 %v760
    %6030 = vmatpush1.msra.mxu0 %v759
    %6031 = vmatprep.subr.mxu0 %v774
    %6032 = vmatpush1.msra.mxu0 %v773
    %6033 = vmatprep.subr.mxu0 %v788
    %6034 = vmatpush1.msra.mxu0 %v787
    %6035 = vmatprep.subr.mxu0 %v802
    %6036 = vmatpush1.msra.mxu0 %v801
    %6037 = vmatprep.subr.mxu0 %v816
    %6038 = vmatpush1.msra.mxu0 %v815
    %6039 = vmatprep.subr.mxu0 %v830
    %6040 = vmatpush1.msra.mxu0 %v829
    %6041 = vmatprep.subr.mxu0 %v844
    %6042 = vmatpush1.msra.mxu0 %v843
    %6043 = vmatprep.subr.mxu0 %v858
    %6044 = vmatpush1.msra.mxu0 %v857
    %6045 = vmatprep.subr.mxu0 %v872
    %6046 = vmatpush1.msra.mxu0 %v871
    %6047 = vmatprep.subr.mxu0 %v886
    %6048 = vmatpush1.msra.mxu0 %v885
    %6049 = vmatprep.subr.mxu0 %v900
    %6050 = vmatpush1.msra.mxu0 %v899
    %6051 = vmatprep.subr.mxu0 %v914
    %6052 = vmatpush1.msra.mxu0 %v913
    %6053 = vmatprep.subr.mxu0 %v928
    %6054 = vmatpush1.msra.mxu0 %v927
    %6055 = vmatprep.subr.mxu0 %v942
    %6056 = vmatpush1.msra.mxu0 %v941
    %6057 = vmatprep.subr.mxu0 %v956
    %6058 = vmatpush1.msra.mxu0 %v955
    %6059 = vmatprep.subr.mxu0 %v970
    %6060 = vmatpush1.msra.mxu0 %v969
    %6061 = vmatprep.subr.mxu0 %v984
    %6062 = vmatpush1.msra.mxu0 %v983
    %6063 = vmatprep.subr.mxu0 %v998
    %6064 = vmatpush1.msra.mxu0 %v997
    %6065 = vmatprep.subr.mxu0 %v1012
    %6066 = vmatpush1.msra.mxu0 %v1011
    %6067 = vmatprep.subr.mxu0 %v1026
    %6068 = vmatpush1.msra.mxu0 %v1025
    %6069 = vmatprep.subr.mxu0 %v1040
    %6070 = vmatpush1.msra.mxu0 %v1039
    %6071 = vmatprep.subr.mxu0 %v1054
    %6072 = vmatpush1.msra.mxu0 %v1053
    %6073 = vmatprep.subr.mxu0 %v1068
    %6074 = vmatpush1.msra.mxu0 %v1067
    %6075 = vmatprep.mubr.f32.mxu0 %v5156
    %6076 = vmatmul.mubr.f32.gmra.mrb[0].mxu0 %v5155
    %v6077 = vpop.f32.mrb[0].mxu0
    %v6078 = vadd.f32 %v6007, %v6077
    %v6079 = vpop.f32.mrb[0].mxu0
    %v6080 = vadd.f32 %v6009, %v6079
    %6081 = vdwg.mxu0
    %6082 = vmatprep.subr.mxu0 %v188
    %6083 = vmatpush1.msra.mxu0 %v187
    %6084 = vmatprep.subr.mxu0 %v202
    %6085 = vmatpush1.msra.mxu0 %v201
    %6086 = vmatprep.subr.mxu0 %v216
    %6087 = vmatpush1.msra.mxu0 %v215
    %6088 = vmatprep.subr.mxu0 %v230
    %6089 = vmatpush1.msra.mxu0 %v229
    %6090 = vmatprep.subr.mxu0 %v244
    %6091 = vmatpush1.msra.mxu0 %v243
    %6092 = vmatprep.subr.mxu0 %v258
    %6093 = vmatpush1.msra.mxu0 %v257
    %6094 = vmatprep.subr.mxu0 %v272
    %6095 = vmatpush1.msra.mxu0 %v271
    %6096 = vmatprep.subr.mxu0 %v286
    %6097 = vmatpush1.msra.mxu0 %v285
    %6098 = vmatprep.subr.mxu0 %v300
    %6099 = vmatpush1.msra.mxu0 %v299
    %6100 = vmatprep.subr.mxu0 %v314
    %6101 = vmatpush1.msra.mxu0 %v313
    %6102 = vmatprep.subr.mxu0 %v328
    %6103 = vmatpush1.msra.mxu0 %v327
    %6104 = vmatprep.subr.mxu0 %v342
    %6105 = vmatpush1.msra.mxu0 %v341
    %6106 = vmatprep.subr.mxu0 %v356
    %6107 = vmatpush1.msra.mxu0 %v355
    %6108 = vmatprep.subr.mxu0 %v370
    %6109 = vmatpush1.msra.mxu0 %v369
    %6110 = vmatprep.subr.mxu0 %v384
    %6111 = vmatpush1.msra.mxu0 %v383
    %6112 = vmatprep.subr.mxu0 %v398
    %6113 = vmatpush1.msra.mxu0 %v397
    %6114 = vmatprep.subr.mxu0 %v412
    %6115 = vmatpush1.msra.mxu0 %v411
    %6116 = vmatprep.subr.mxu0 %v426
    %6117 = vmatpush1.msra.mxu0 %v425
    %6118 = vmatprep.subr.mxu0 %v440
    %6119 = vmatpush1.msra.mxu0 %v439
    %6120 = vmatprep.subr.mxu0 %v454
    %6121 = vmatpush1.msra.mxu0 %v453
    %6122 = vmatprep.subr.mxu0 %v468
    %6123 = vmatpush1.msra.mxu0 %v467
    %6124 = vmatprep.subr.mxu0 %v482
    %6125 = vmatpush1.msra.mxu0 %v481
    %6126 = vmatprep.subr.mxu0 %v496
    %6127 = vmatpush1.msra.mxu0 %v495
    %6128 = vmatprep.subr.mxu0 %v510
    %6129 = vmatpush1.msra.mxu0 %v509
    %6130 = vmatprep.subr.mxu0 %v524
    %6131 = vmatpush1.msra.mxu0 %v523
    %6132 = vmatprep.subr.mxu0 %v538
    %6133 = vmatpush1.msra.mxu0 %v537
    %6134 = vmatprep.subr.mxu0 %v552
    %6135 = vmatpush1.msra.mxu0 %v551
    %6136 = vmatprep.subr.mxu0 %v566
    %6137 = vmatpush1.msra.mxu0 %v565
    %6138 = vmatprep.subr.mxu0 %v580
    %6139 = vmatpush1.msra.mxu0 %v579
    %6140 = vmatprep.subr.mxu0 %v594
    %6141 = vmatpush1.msra.mxu0 %v593
    %6142 = vmatprep.subr.mxu0 %v608
    %6143 = vmatpush1.msra.mxu0 %v607
    %6144 = vmatprep.subr.mxu0 %v622
    %6145 = vmatpush1.msra.mxu0 %v621
    %6146 = vmatprep.mubr.f32.mxu0 %v5227
    %6147 = vmatmul.mubr.f32.gmra.mrb[0].mxu0 %v5226
    %v6148 = vpop.f32.mrb[0].mxu0
    %v6149 = vadd.f32 0.0, %v6148
    %v6150 = vpop.f32.mrb[0].mxu0
    %v6151 = vadd.f32 0.0, %v6150
    %6152 = vdwg.mxu0
    %6153 = vmatprep.subr.mxu0 %v636
    %6154 = vmatpush1.msra.mxu0 %v635
    %6155 = vmatprep.subr.mxu0 %v650
    %6156 = vmatpush1.msra.mxu0 %v649
    %6157 = vmatprep.subr.mxu0 %v664
    %6158 = vmatpush1.msra.mxu0 %v663
    %6159 = vmatprep.subr.mxu0 %v678
    %6160 = vmatpush1.msra.mxu0 %v677
    %6161 = vmatprep.subr.mxu0 %v692
    %6162 = vmatpush1.msra.mxu0 %v691
    %6163 = vmatprep.subr.mxu0 %v706
    %6164 = vmatpush1.msra.mxu0 %v705
    %6165 = vmatprep.subr.mxu0 %v720
    %6166 = vmatpush1.msra.mxu0 %v719
    %6167 = vmatprep.subr.mxu0 %v734
    %6168 = vmatpush1.msra.mxu0 %v733
    %6169 = vmatprep.subr.mxu0 %v748
    %6170 = vmatpush1.msra.mxu0 %v747
    %6171 = vmatprep.subr.mxu0 %v762
    %6172 = vmatpush1.msra.mxu0 %v761
    %6173 = vmatprep.subr.mxu0 %v776
    %6174 = vmatpush1.msra.mxu0 %v775
    %6175 = vmatprep.subr.mxu0 %v790
    %6176 = vmatpush1.msra.mxu0 %v789
    %6177 = vmatprep.subr.mxu0 %v804
    %6178 = vmatpush1.msra.mxu0 %v803
    %6179 = vmatprep.subr.mxu0 %v818
    %6180 = vmatpush1.msra.mxu0 %v817
    %6181 = vmatprep.subr.mxu0 %v832
    %6182 = vmatpush1.msra.mxu0 %v831
    %6183 = vmatprep.subr.mxu0 %v846
    %6184 = vmatpush1.msra.mxu0 %v845
    %6185 = vmatprep.subr.mxu0 %v860
    %6186 = vmatpush1.msra.mxu0 %v859
    %6187 = vmatprep.subr.mxu0 %v874
    %6188 = vmatpush1.msra.mxu0 %v873
    %6189 = vmatprep.subr.mxu0 %v888
    %6190 = vmatpush1.msra.mxu0 %v887
    %6191 = vmatprep.subr.mxu0 %v902
    %6192 = vmatpush1.msra.mxu0 %v901
    %6193 = vmatprep.subr.mxu0 %v916
    %6194 = vmatpush1.msra.mxu0 %v915
    %6195 = vmatprep.subr.mxu0 %v930
    %6196 = vmatpush1.msra.mxu0 %v929
    %6197 = vmatprep.subr.mxu0 %v944
    %6198 = vmatpush1.msra.mxu0 %v943
    %6199 = vmatprep.subr.mxu0 %v958
    %6200 = vmatpush1.msra.mxu0 %v957
    %6201 = vmatprep.subr.mxu0 %v972
    %6202 = vmatpush1.msra.mxu0 %v971
    %6203 = vmatprep.subr.mxu0 %v986
    %6204 = vmatpush1.msra.mxu0 %v985
    %6205 = vmatprep.subr.mxu0 %v1000
    %6206 = vmatpush1.msra.mxu0 %v999
    %6207 = vmatprep.subr.mxu0 %v1014
    %6208 = vmatpush1.msra.mxu0 %v1013
    %6209 = vmatprep.subr.mxu0 %v1028
    %6210 = vmatpush1.msra.mxu0 %v1027
    %6211 = vmatprep.subr.mxu0 %v1042
    %6212 = vmatpush1.msra.mxu0 %v1041
    %6213 = vmatprep.subr.mxu0 %v1056
    %6214 = vmatpush1.msra.mxu0 %v1055
    %6215 = vmatprep.subr.mxu0 %v1070
    %6216 = vmatpush1.msra.mxu0 %v1069
    %6217 = vmatprep.mubr.f32.mxu0 %v5156
    %6218 = vmatmul.mubr.f32.gmra.mrb[0].mxu0 %v5155
    %v6219 = vpop.f32.mrb[0].mxu0
    %v6220 = vadd.f32 %v6149, %v6219
    %v6221 = vpop.f32.mrb[0].mxu0
    %v6222 = vadd.f32 %v6151, %v6221
    %6223 = vdwg.mxu0
    %v6224 = vadd.f32 %v5794, %v1076
    %v6225 = vadd.f32 %v5796, %v1080
    %v6226 = vadd.f32 %v5936, %v1084
    %v6227 = vadd.f32 %v5938, %v1088
    %v6228 = vadd.f32 %v6078, %v1092
    %v6229 = vadd.f32 %v6080, %v1096
    %v6230 = vadd.f32 %v6220, %v1100
    %v6231 = vadd.f32 %v6222, %v1104
    %v6232 = vxor.u32 %v6224, 2147483648
    %v6233 = vxor.u32 %v6225, 2147483648
    %v6234 = vmul.f32 %v6232, 1.442695
    %v6235 = vpow.pop %v6234
    %v6236 = vmul.f32 %v6233, 1.442695
    %v6237 = vpow.pop %v6236
    %v6238 = vadd.f32 %v6235, 1.0
    %v6239 = vadd.f32 %v6237, 1.0
    %v6240 = vrcp.pop %v6238
    %v6241 = vmul.f32 1.0, %v6240
    %v6242 = vrcp.pop %v6239
    %v6243 = vmul.f32 1.0, %v6242
    %v6244 = vxor.u32 %v6226, 2147483648
    %v6245 = vxor.u32 %v6227, 2147483648
    %v6246 = vmul.f32 %v6244, 1.442695
    %v6247 = vpow.pop %v6246
    %v6248 = vmul.f32 %v6245, 1.442695
    %v6249 = vpow.pop %v6248
    %v6250 = vadd.f32 %v6247, 1.0
    %v6251 = vadd.f32 %v6249, 1.0
    %v6252 = vrcp.pop %v6250
    %v6253 = vmul.f32 1.0, %v6252
    %v6254 = vrcp.pop %v6251
    %v6255 = vmul.f32 1.0, %v6254
    %v6256 = vadd.f32 %v6230, %v1118
    %v6257 = vadd.f32 %v6231, %v1122
    %v6258 = vmul.f32 %v6241, %v6256
    %v6259 = vmul.f32 %v6243, %v6257
    %v6260 = vadd.f32 %v6228, %v6258
    %v6261 = vadd.f32 %v6229, %v6259
    %v6262 = vtanh.pop %v6260
    %v6263 = vtanh.pop %v6261
    %v6264 = vsub.f32 1.0, %v6253
    %v6265 = vsub.f32 1.0, %v6255
    %v6266 = vmul.f32 %v6264, %v6262
    %v6267 = vmul.f32 %v6265, %v6263
    %v6268 = vmul.f32 %v6253, %v5155
    %v6269 = vmul.f32 %v6255, %v5156
    %v6270 = vadd.f32 %v6266, %v6268
    %v6271 = vadd.f32 %v6267, %v6269
    %s6272 = scalar_lea.vmem [#allocation2], 48
    %v6273 = vld [vmem:[%s6272] sm:$0xff]
    %v6274 = vld [vmem:[%s6272 + $0x8] sm:$0xf]
    %v6277 = vcombine.low %v5368, %v5370
    %v6279 = vunpack.c.l.s4 1983009808
    %v6280 = vunpack.c.0.s8 %v6279
    %v6281 = vlaneseq
    %v6282 = vshrl.u32 %v6281, 7
    %v6283 = vsub.s32 %v6280, %v6282
    %v6284 = vrot.slane %v6277, %v6283
    %v6286 = vadd.f32 %v6273, %v6284
    %v6287 = vxor.u32 %v6286, 2147483648
    %v6288 = vmul.f32 %v6287, 1.442695
    %v6289 = vpow.pop %v6288
    %v6290 = vadd.f32 %v6289, 1.0
    %v6291 = vrcp.pop %v6290
    %v6292 = vmul.f32 1.0, %v6291
    %v6294 = vrot.slane %v6273, 4
    %v6298 = vcombine.low %v5510, %v5512
    %v6300 = vunpack.c.l.s4 1983009808
    %v6301 = vunpack.c.0.s8 %v6300
    %v6302 = vlaneseq
    %v6303 = vshrl.u32 %v6302, 7
    %v6304 = vsub.s32 %v6301, %v6303
    %v6305 = vrot.slane %v6298, %v6304
    %v6307 = vadd.f32 %v6294, %v6305
    %v6308 = vxor.u32 %v6307, 2147483648
    %v6309 = vmul.f32 %v6308, 1.442695
    %v6310 = vpow.pop %v6309
    %v6311 = vadd.f32 %v6310, 1.0
    %v6312 = vrcp.pop %v6311
    %v6313 = vmul.f32 1.0, %v6312
    %v6314 = vadd.f32 %v5652, %v168
    %v6315 = vadd.f32 %v5654, %v172
    %v6318 = vcombine.low %v6314, %v6315
    %v6320 = vunpack.c.l.s4 1983009808
    %v6321 = vunpack.c.0.s8 %v6320
    %v6322 = vlaneseq
    %v6323 = vshrl.u32 %v6322, 7
    %v6324 = vsub.s32 %v6321, %v6323
    %v6325 = vrot.slane %v6318, %v6324
    %v6327 = vmul.f32 %v6292, %v6325
    %v6328 = vadd.f32 %v6274, %v6327
    %v6329 = vtanh.pop %v6328
    %v6330 = vsub.f32 1.0, %v6313
    %v6331 = vmul.f32 %v6330, %v6329
    %v6332 = vmul.f32 %v6313, %v5218
    %v6333 = vadd.f32 %v6331, %v6332
    %v6336 = vunpack.c.l.s4 1983009808
    %v6337 = vunpack.c.0.s8 %v6336
    %v6338 = vlaneseq
    %v6339 = vshrl.u32 %v6338, 7
    %v6340 = vsub.s32 %v6337, %v6339
    %v6341 = vrot.slane %v6333, %v6340
    %v6342 = vcombine.high %v6341, %v6341
    %6345 = vmatprep.subr.mxu0 %v176
    %6346 = vmatpush1.msra.mxu0 %v175
    %6347 = vmatprep.subr.mxu0 %v190
    %6348 = vmatpush1.msra.mxu0 %v189
    %6349 = vmatprep.subr.mxu0 %v204
    %6350 = vmatpush1.msra.mxu0 %v203
    %6351 = vmatprep.subr.mxu0 %v218
    %6352 = vmatpush1.msra.mxu0 %v217
    %6353 = vmatprep.subr.mxu0 %v232
    %6354 = vmatpush1.msra.mxu0 %v231
    %6355 = vmatprep.subr.mxu0 %v246
    %6356 = vmatpush1.msra.mxu0 %v245
    %6357 = vmatprep.subr.mxu0 %v260
    %6358 = vmatpush1.msra.mxu0 %v259
    %6359 = vmatprep.subr.mxu0 %v274
    %6360 = vmatpush1.msra.mxu0 %v273
    %6361 = vmatprep.subr.mxu0 %v288
    %6362 = vmatpush1.msra.mxu0 %v287
    %6363 = vmatprep.subr.mxu0 %v302
    %6364 = vmatpush1.msra.mxu0 %v301
    %6365 = vmatprep.subr.mxu0 %v316
    %6366 = vmatpush1.msra.mxu0 %v315
    %6367 = vmatprep.subr.mxu0 %v330
    %6368 = vmatpush1.msra.mxu0 %v329
    %6369 = vmatprep.subr.mxu0 %v344
    %6370 = vmatpush1.msra.mxu0 %v343
    %6371 = vmatprep.subr.mxu0 %v358
    %6372 = vmatpush1.msra.mxu0 %v357
    %6373 = vmatprep.subr.mxu0 %v372
    %6374 = vmatpush1.msra.mxu0 %v371
    %6375 = vmatprep.subr.mxu0 %v386
    %6376 = vmatpush1.msra.mxu0 %v385
    %6377 = vmatprep.subr.mxu0 %v400
    %6378 = vmatpush1.msra.mxu0 %v399
    %6379 = vmatprep.subr.mxu0 %v414
    %6380 = vmatpush1.msra.mxu0 %v413
    %6381 = vmatprep.subr.mxu0 %v428
    %6382 = vmatpush1.msra.mxu0 %v427
    %6383 = vmatprep.subr.mxu0 %v442
    %6384 = vmatpush1.msra.mxu0 %v441
    %6385 = vmatprep.subr.mxu0 %v456
    %6386 = vmatpush1.msra.mxu0 %v455
    %6387 = vmatprep.subr.mxu0 %v470
    %6388 = vmatpush1.msra.mxu0 %v469
    %6389 = vmatprep.subr.mxu0 %v484
    %6390 = vmatpush1.msra.mxu0 %v483
    %6391 = vmatprep.subr.mxu0 %v498
    %6392 = vmatpush1.msra.mxu0 %v497
    %6393 = vmatprep.subr.mxu0 %v512
    %6394 = vmatpush1.msra.mxu0 %v511
    %6395 = vmatprep.subr.mxu0 %v526
    %6396 = vmatpush1.msra.mxu0 %v525
    %6397 = vmatprep.subr.mxu0 %v540
    %6398 = vmatpush1.msra.mxu0 %v539
    %6399 = vmatprep.subr.mxu0 %v554
    %6400 = vmatpush1.msra.mxu0 %v553
    %6401 = vmatprep.subr.mxu0 %v568
    %6402 = vmatpush1.msra.mxu0 %v567
    %6403 = vmatprep.subr.mxu0 %v582
    %6404 = vmatpush1.msra.mxu0 %v581
    %6405 = vmatprep.subr.mxu0 %v596
    %6406 = vmatpush1.msra.mxu0 %v595
    %6407 = vmatprep.subr.mxu0 %v610
    %6408 = vmatpush1.msra.mxu0 %v609
    %6409 = vmatprep.mubr.f32.mxu0 %v6342
    %6410 = vmatmul.mubr.f32.gmra.mrb[0].mxu0 %v6341
    %v6411 = vpop.f32.mrb[0].mxu0
    %v6412 = vadd.f32 0.0, %v6411
    %v6413 = vpop.f32.mrb[0].mxu0
    %v6414 = vadd.f32 0.0, %v6413
    %6415 = vdwg.mxu0
    %6416 = vmatprep.subr.mxu0 %v624
    %6417 = vmatpush1.msra.mxu0 %v623
    %6418 = vmatprep.subr.mxu0 %v638
    %6419 = vmatpush1.msra.mxu0 %v637
    %6420 = vmatprep.subr.mxu0 %v652
    %6421 = vmatpush1.msra.mxu0 %v651
    %6422 = vmatprep.subr.mxu0 %v666
    %6423 = vmatpush1.msra.mxu0 %v665
    %6424 = vmatprep.subr.mxu0 %v680
    %6425 = vmatpush1.msra.mxu0 %v679
    %6426 = vmatprep.subr.mxu0 %v694
    %6427 = vmatpush1.msra.mxu0 %v693
    %6428 = vmatprep.subr.mxu0 %v708
    %6429 = vmatpush1.msra.mxu0 %v707
    %6430 = vmatprep.subr.mxu0 %v722
    %6431 = vmatpush1.msra.mxu0 %v721
    %6432 = vmatprep.subr.mxu0 %v736
    %6433 = vmatpush1.msra.mxu0 %v735
    %6434 = vmatprep.subr.mxu0 %v750
    %6435 = vmatpush1.msra.mxu0 %v749
    %6436 = vmatprep.subr.mxu0 %v764
    %6437 = vmatpush1.msra.mxu0 %v763
    %6438 = vmatprep.subr.mxu0 %v778
    %6439 = vmatpush1.msra.mxu0 %v777
    %6440 = vmatprep.subr.mxu0 %v792
    %6441 = vmatpush1.msra.mxu0 %v791
    %6442 = vmatprep.subr.mxu0 %v806
    %6443 = vmatpush1.msra.mxu0 %v805
    %6444 = vmatprep.subr.mxu0 %v820
    %6445 = vmatpush1.msra.mxu0 %v819
    %6446 = vmatprep.subr.mxu0 %v834
    %6447 = vmatpush1.msra.mxu0 %v833
    %6448 = vmatprep.subr.mxu0 %v848
    %6449 = vmatpush1.msra.mxu0 %v847
    %6450 = vmatprep.subr.mxu0 %v862
    %6451 = vmatpush1.msra.mxu0 %v861
    %6452 = vmatprep.subr.mxu0 %v876
    %6453 = vmatpush1.msra.mxu0 %v875
    %6454 = vmatprep.subr.mxu0 %v890
    %6455 = vmatpush1.msra.mxu0 %v889
    %6456 = vmatprep.subr.mxu0 %v904
    %6457 = vmatpush1.msra.mxu0 %v903
    %6458 = vmatprep.subr.mxu0 %v918
    %6459 = vmatpush1.msra.mxu0 %v917
    %6460 = vmatprep.subr.mxu0 %v932
    %6461 = vmatpush1.msra.mxu0 %v931
    %6462 = vmatprep.subr.mxu0 %v946
    %6463 = vmatpush1.msra.mxu0 %v945
    %6464 = vmatprep.subr.mxu0 %v960
    %6465 = vmatpush1.msra.mxu0 %v959
    %6466 = vmatprep.subr.mxu0 %v974
    %6467 = vmatpush1.msra.mxu0 %v973
    %6468 = vmatprep.subr.mxu0 %v988
    %6469 = vmatpush1.msra.mxu0 %v987
    %6470 = vmatprep.subr.mxu0 %v1002
    %6471 = vmatpush1.msra.mxu0 %v1001
    %6472 = vmatprep.subr.mxu0 %v1016
    %6473 = vmatpush1.msra.mxu0 %v1015
    %6474 = vmatprep.subr.mxu0 %v1030
    %6475 = vmatpush1.msra.mxu0 %v1029
    %6476 = vmatprep.subr.mxu0 %v1044
    %6477 = vmatpush1.msra.mxu0 %v1043
    %6478 = vmatprep.subr.mxu0 %v1058
    %6479 = vmatpush1.msra.mxu0 %v1057
    %6480 = vmatprep.mubr.f32.mxu0 %v6271
    %6481 = vmatmul.mubr.f32.gmra.mrb[0].mxu0 %v6270
    %v6482 = vpop.f32.mrb[0].mxu0
    %v6483 = vadd.f32 %v6412, %v6482
    %v6484 = vpop.f32.mrb[0].mxu0
    %v6485 = vadd.f32 %v6414, %v6484
    %6486 = vdwg.mxu0
    %6487 = vmatprep.subr.mxu0 %v178
    %6488 = vmatpush1.msra.mxu0 %v177
    %6489 = vmatprep.subr.mxu0 %v192
    %6490 = vmatpush1.msra.mxu0 %v191
    %6491 = vmatprep.subr.mxu0 %v206
    %6492 = vmatpush1.msra.mxu0 %v205
    %6493 = vmatprep.subr.mxu0 %v220
    %6494 = vmatpush1.msra.mxu0 %v219
    %6495 = vmatprep.subr.mxu0 %v234
    %6496 = vmatpush1.msra.mxu0 %v233
    %6497 = vmatprep.subr.mxu0 %v248
    %6498 = vmatpush1.msra.mxu0 %v247
    %6499 = vmatprep.subr.mxu0 %v262
    %6500 = vmatpush1.msra.mxu0 %v261
    %6501 = vmatprep.subr.mxu0 %v276
    %6502 = vmatpush1.msra.mxu0 %v275
    %6503 = vmatprep.subr.mxu0 %v290
    %6504 = vmatpush1.msra.mxu0 %v289
    %6505 = vmatprep.subr.mxu0 %v304
    %6506 = vmatpush1.msra.mxu0 %v303
    %6507 = vmatprep.subr.mxu0 %v318
    %6508 = vmatpush1.msra.mxu0 %v317
    %6509 = vmatprep.subr.mxu0 %v332
    %6510 = vmatpush1.msra.mxu0 %v331
    %6511 = vmatprep.subr.mxu0 %v346
    %6512 = vmatpush1.msra.mxu0 %v345
    %6513 = vmatprep.subr.mxu0 %v360
    %6514 = vmatpush1.msra.mxu0 %v359
    %6515 = vmatprep.subr.mxu0 %v374
    %6516 = vmatpush1.msra.mxu0 %v373
    %6517 = vmatprep.subr.mxu0 %v388
    %6518 = vmatpush1.msra.mxu0 %v387
    %6519 = vmatprep.subr.mxu0 %v402
    %6520 = vmatpush1.msra.mxu0 %v401
    %6521 = vmatprep.subr.mxu0 %v416
    %6522 = vmatpush1.msra.mxu0 %v415
    %6523 = vmatprep.subr.mxu0 %v430
    %6524 = vmatpush1.msra.mxu0 %v429
    %6525 = vmatprep.subr.mxu0 %v444
    %6526 = vmatpush1.msra.mxu0 %v443
    %6527 = vmatprep.subr.mxu0 %v458
    %6528 = vmatpush1.msra.mxu0 %v457
    %6529 = vmatprep.subr.mxu0 %v472
    %6530 = vmatpush1.msra.mxu0 %v471
    %6531 = vmatprep.subr.mxu0 %v486
    %6532 = vmatpush1.msra.mxu0 %v485
    %6533 = vmatprep.subr.mxu0 %v500
    %6534 = vmatpush1.msra.mxu0 %v499
    %6535 = vmatprep.subr.mxu0 %v514
    %6536 = vmatpush1.msra.mxu0 %v513
    %6537 = vmatprep.subr.mxu0 %v528
    %6538 = vmatpush1.msra.mxu0 %v527
    %6539 = vmatprep.subr.mxu0 %v542
    %6540 = vmatpush1.msra.mxu0 %v541
    %6541 = vmatprep.subr.mxu0 %v556
    %6542 = vmatpush1.msra.mxu0 %v555
    %6543 = vmatprep.subr.mxu0 %v570
    %6544 = vmatpush1.msra.mxu0 %v569
    %6545 = vmatprep.subr.mxu0 %v584
    %6546 = vmatpush1.msra.mxu0 %v583
    %6547 = vmatprep.subr.mxu0 %v598
    %6548 = vmatpush1.msra.mxu0 %v597
    %6549 = vmatprep.subr.mxu0 %v612
    %6550 = vmatpush1.msra.mxu0 %v611
    %6551 = vmatprep.mubr.f32.mxu0 %v6342
    %6552 = vmatmul.mubr.f32.gmra.mrb[0].mxu0 %v6341
    %v6553 = vpop.f32.mrb[0].mxu0
    %v6554 = vadd.f32 0.0, %v6553
    %v6555 = vpop.f32.mrb[0].mxu0
    %v6556 = vadd.f32 0.0, %v6555
    %6557 = vdwg.mxu0
    %6558 = vmatprep.subr.mxu0 %v626
    %6559 = vmatpush1.msra.mxu0 %v625
    %6560 = vmatprep.subr.mxu0 %v640
    %6561 = vmatpush1.msra.mxu0 %v639
    %6562 = vmatprep.subr.mxu0 %v654
    %6563 = vmatpush1.msra.mxu0 %v653
    %6564 = vmatprep.subr.mxu0 %v668
    %6565 = vmatpush1.msra.mxu0 %v667
    %6566 = vmatprep.subr.mxu0 %v682
    %6567 = vmatpush1.msra.mxu0 %v681
    %6568 = vmatprep.subr.mxu0 %v696
    %6569 = vmatpush1.msra.mxu0 %v695
    %6570 = vmatprep.subr.mxu0 %v710
    %6571 = vmatpush1.msra.mxu0 %v709
    %6572 = vmatprep.subr.mxu0 %v724
    %6573 = vmatpush1.msra.mxu0 %v723
    %6574 = vmatprep.subr.mxu0 %v738
    %6575 = vmatpush1.msra.mxu0 %v737
    %6576 = vmatprep.subr.mxu0 %v752
    %6577 = vmatpush1.msra.mxu0 %v751
    %6578 = vmatprep.subr.mxu0 %v766
    %6579 = vmatpush1.msra.mxu0 %v765
    %6580 = vmatprep.subr.mxu0 %v780
    %6581 = vmatpush1.msra.mxu0 %v779
    %6582 = vmatprep.subr.mxu0 %v794
    %6583 = vmatpush1.msra.mxu0 %v793
    %6584 = vmatprep.subr.mxu0 %v808
    %6585 = vmatpush1.msra.mxu0 %v807
    %6586 = vmatprep.subr.mxu0 %v822
    %6587 = vmatpush1.msra.mxu0 %v821
    %6588 = vmatprep.subr.mxu0 %v836
    %6589 = vmatpush1.msra.mxu0 %v835
    %6590 = vmatprep.subr.mxu0 %v850
    %6591 = vmatpush1.msra.mxu0 %v849
    %6592 = vmatprep.subr.mxu0 %v864
    %6593 = vmatpush1.msra.mxu0 %v863
    %6594 = vmatprep.subr.mxu0 %v878
    %6595 = vmatpush1.msra.mxu0 %v877
    %6596 = vmatprep.subr.mxu0 %v892
    %6597 = vmatpush1.msra.mxu0 %v891
    %6598 = vmatprep.subr.mxu0 %v906
    %6599 = vmatpush1.msra.mxu0 %v905
    %6600 = vmatprep.subr.mxu0 %v920
    %6601 = vmatpush1.msra.mxu0 %v919
    %6602 = vmatprep.subr.mxu0 %v934
    %6603 = vmatpush1.msra.mxu0 %v933
    %6604 = vmatprep.subr.mxu0 %v948
    %6605 = vmatpush1.msra.mxu0 %v947
    %6606 = vmatprep.subr.mxu0 %v962
    %6607 = vmatpush1.msra.mxu0 %v961
    %6608 = vmatprep.subr.mxu0 %v976
    %6609 = vmatpush1.msra.mxu0 %v975
    %6610 = vmatprep.subr.mxu0 %v990
    %6611 = vmatpush1.msra.mxu0 %v989
    %6612 = vmatprep.subr.mxu0 %v1004
    %6613 = vmatpush1.msra.mxu0 %v1003
    %6614 = vmatprep.subr.mxu0 %v1018
    %6615 = vmatpush1.msra.mxu0 %v1017
    %6616 = vmatprep.subr.mxu0 %v1032
    %6617 = vmatpush1.msra.mxu0 %v1031
    %6618 = vmatprep.subr.mxu0 %v1046
    %6619 = vmatpush1.msra.mxu0 %v1045
    %6620 = vmatprep.subr.mxu0 %v1060
    %6621 = vmatpush1.msra.mxu0 %v1059
    %6622 = vmatprep.mubr.f32.mxu0 %v6271
    %6623 = vmatmul.mubr.f32.gmra.mrb[0].mxu0 %v6270
    %v6624 = vpop.f32.mrb[0].mxu0
    %v6625 = vadd.f32 %v6554, %v6624
    %v6626 = vpop.f32.mrb[0].mxu0
    %v6627 = vadd.f32 %v6556, %v6626
    %6628 = vdwg.mxu0
    %6629 = vmatprep.subr.mxu0 %v180
    %6630 = vmatpush1.msra.mxu0 %v179
    %6631 = vmatprep.subr.mxu0 %v194
    %6632 = vmatpush1.msra.mxu0 %v193
    %6633 = vmatprep.subr.mxu0 %v208
    %6634 = vmatpush1.msra.mxu0 %v207
    %6635 = vmatprep.subr.mxu0 %v222
    %6636 = vmatpush1.msra.mxu0 %v221
    %6637 = vmatprep.subr.mxu0 %v236
    %6638 = vmatpush1.msra.mxu0 %v235
    %6639 = vmatprep.subr.mxu0 %v250
    %6640 = vmatpush1.msra.mxu0 %v249
    %6641 = vmatprep.subr.mxu0 %v264
    %6642 = vmatpush1.msra.mxu0 %v263
    %6643 = vmatprep.subr.mxu0 %v278
    %6644 = vmatpush1.msra.mxu0 %v277
    %6645 = vmatprep.subr.mxu0 %v292
    %6646 = vmatpush1.msra.mxu0 %v291
    %6647 = vmatprep.subr.mxu0 %v306
    %6648 = vmatpush1.msra.mxu0 %v305
    %6649 = vmatprep.subr.mxu0 %v320
    %6650 = vmatpush1.msra.mxu0 %v319
    %6651 = vmatprep.subr.mxu0 %v334
    %6652 = vmatpush1.msra.mxu0 %v333
    %6653 = vmatprep.subr.mxu0 %v348
    %6654 = vmatpush1.msra.mxu0 %v347
    %6655 = vmatprep.subr.mxu0 %v362
    %6656 = vmatpush1.msra.mxu0 %v361
    %6657 = vmatprep.subr.mxu0 %v376
    %6658 = vmatpush1.msra.mxu0 %v375
    %6659 = vmatprep.subr.mxu0 %v390
    %6660 = vmatpush1.msra.mxu0 %v389
    %6661 = vmatprep.subr.mxu0 %v404
    %6662 = vmatpush1.msra.mxu0 %v403
    %6663 = vmatprep.subr.mxu0 %v418
    %6664 = vmatpush1.msra.mxu0 %v417
    %6665 = vmatprep.subr.mxu0 %v432
    %6666 = vmatpush1.msra.mxu0 %v431
    %6667 = vmatprep.subr.mxu0 %v446
    %6668 = vmatpush1.msra.mxu0 %v445
    %6669 = vmatprep.subr.mxu0 %v460
    %6670 = vmatpush1.msra.mxu0 %v459
    %6671 = vmatprep.subr.mxu0 %v474
    %6672 = vmatpush1.msra.mxu0 %v473
    %6673 = vmatprep.subr.mxu0 %v488
    %6674 = vmatpush1.msra.mxu0 %v487
    %6675 = vmatprep.subr.mxu0 %v502
    %6676 = vmatpush1.msra.mxu0 %v501
    %6677 = vmatprep.subr.mxu0 %v516
    %6678 = vmatpush1.msra.mxu0 %v515
    %6679 = vmatprep.subr.mxu0 %v530
    %6680 = vmatpush1.msra.mxu0 %v529
    %6681 = vmatprep.subr.mxu0 %v544
    %6682 = vmatpush1.msra.mxu0 %v543
    %6683 = vmatprep.subr.mxu0 %v558
    %6684 = vmatpush1.msra.mxu0 %v557
    %6685 = vmatprep.subr.mxu0 %v572
    %6686 = vmatpush1.msra.mxu0 %v571
    %6687 = vmatprep.subr.mxu0 %v586
    %6688 = vmatpush1.msra.mxu0 %v585
    %6689 = vmatprep.subr.mxu0 %v600
    %6690 = vmatpush1.msra.mxu0 %v599
    %6691 = vmatprep.subr.mxu0 %v614
    %6692 = vmatpush1.msra.mxu0 %v613
    %6693 = vmatprep.mubr.f32.mxu0 %v6342
    %6694 = vmatmul.mubr.f32.gmra.mrb[0].mxu0 %v6341
    %v6695 = vpop.f32.mrb[0].mxu0
    %v6696 = vadd.f32 0.0, %v6695
    %v6697 = vpop.f32.mrb[0].mxu0
    %v6698 = vadd.f32 0.0, %v6697
    %6699 = vdwg.mxu0
    %6700 = vmatprep.subr.mxu0 %v628
    %6701 = vmatpush1.msra.mxu0 %v627
    %6702 = vmatprep.subr.mxu0 %v642
    %6703 = vmatpush1.msra.mxu0 %v641
    %6704 = vmatprep.subr.mxu0 %v656
    %6705 = vmatpush1.msra.mxu0 %v655
    %6706 = vmatprep.subr.mxu0 %v670
    %6707 = vmatpush1.msra.mxu0 %v669
    %6708 = vmatprep.subr.mxu0 %v684
    %6709 = vmatpush1.msra.mxu0 %v683
    %6710 = vmatprep.subr.mxu0 %v698
    %6711 = vmatpush1.msra.mxu0 %v697
    %6712 = vmatprep.subr.mxu0 %v712
    %6713 = vmatpush1.msra.mxu0 %v711
    %6714 = vmatprep.subr.mxu0 %v726
    %6715 = vmatpush1.msra.mxu0 %v725
    %6716 = vmatprep.subr.mxu0 %v740
    %6717 = vmatpush1.msra.mxu0 %v739
    %6718 = vmatprep.subr.mxu0 %v754
    %6719 = vmatpush1.msra.mxu0 %v753
    %6720 = vmatprep.subr.mxu0 %v768
    %6721 = vmatpush1.msra.mxu0 %v767
    %6722 = vmatprep.subr.mxu0 %v782
    %6723 = vmatpush1.msra.mxu0 %v781
    %6724 = vmatprep.subr.mxu0 %v796
    %6725 = vmatpush1.msra.mxu0 %v795
    %6726 = vmatprep.subr.mxu0 %v810
    %6727 = vmatpush1.msra.mxu0 %v809
    %6728 = vmatprep.subr.mxu0 %v824
    %6729 = vmatpush1.msra.mxu0 %v823
    %6730 = vmatprep.subr.mxu0 %v838
    %6731 = vmatpush1.msra.mxu0 %v837
    %6732 = vmatprep.subr.mxu0 %v852
    %6733 = vmatpush1.msra.mxu0 %v851
    %6734 = vmatprep.subr.mxu0 %v866
    %6735 = vmatpush1.msra.mxu0 %v865
    %6736 = vmatprep.subr.mxu0 %v880
    %6737 = vmatpush1.msra.mxu0 %v879
    %6738 = vmatprep.subr.mxu0 %v894
    %6739 = vmatpush1.msra.mxu0 %v893
    %6740 = vmatprep.subr.mxu0 %v908
    %6741 = vmatpush1.msra.mxu0 %v907
    %6742 = vmatprep.subr.mxu0 %v922
    %6743 = vmatpush1.msra.mxu0 %v921
    %6744 = vmatprep.subr.mxu0 %v936
    %6745 = vmatpush1.msra.mxu0 %v935
    %6746 = vmatprep.subr.mxu0 %v950
    %6747 = vmatpush1.msra.mxu0 %v949
    %6748 = vmatprep.subr.mxu0 %v964
    %6749 = vmatpush1.msra.mxu0 %v963
    %6750 = vmatprep.subr.mxu0 %v978
    %6751 = vmatpush1.msra.mxu0 %v977
    %6752 = vmatprep.subr.mxu0 %v992
    %6753 = vmatpush1.msra.mxu0 %v991
    %6754 = vmatprep.subr.mxu0 %v1006
    %6755 = vmatpush1.msra.mxu0 %v1005
    %6756 = vmatprep.subr.mxu0 %v1020
    %6757 = vmatpush1.msra.mxu0 %v1019
    %6758 = vmatprep.subr.mxu0 %v1034
    %6759 = vmatpush1.msra.mxu0 %v1033
    %6760 = vmatprep.subr.mxu0 %v1048
    %6761 = vmatpush1.msra.mxu0 %v1047
    %6762 = vmatprep.subr.mxu0 %v1062
    %6763 = vmatpush1.msra.mxu0 %v1061
    %6764 = vmatprep.mubr.f32.mxu0 %v6271
    %6765 = vmatmul.mubr.f32.gmra.mrb[0].mxu0 %v6270
    %v6766 = vpop.f32.mrb[0].mxu0
    %v6767 = vadd.f32 %v6696, %v6766
    %v6768 = vpop.f32.mrb[0].mxu0
    %v6769 = vadd.f32 %v6698, %v6768
    %6770 = vdwg.mxu0
    %6771 = vmatprep.subr.mxu0 %v182
    %6772 = vmatpush1.msra.mxu0 %v181
    %6773 = vmatprep.subr.mxu0 %v196
    %6774 = vmatpush1.msra.mxu0 %v195
    %6775 = vmatprep.subr.mxu0 %v210
    %6776 = vmatpush1.msra.mxu0 %v209
    %6777 = vmatprep.subr.mxu0 %v224
    %6778 = vmatpush1.msra.mxu0 %v223
    %6779 = vmatprep.subr.mxu0 %v238
    %6780 = vmatpush1.msra.mxu0 %v237
    %6781 = vmatprep.subr.mxu0 %v252
    %6782 = vmatpush1.msra.mxu0 %v251
    %6783 = vmatprep.subr.mxu0 %v266
    %6784 = vmatpush1.msra.mxu0 %v265
    %6785 = vmatprep.subr.mxu0 %v280
    %6786 = vmatpush1.msra.mxu0 %v279
    %6787 = vmatprep.subr.mxu0 %v294
    %6788 = vmatpush1.msra.mxu0 %v293
    %6789 = vmatprep.subr.mxu0 %v308
    %6790 = vmatpush1.msra.mxu0 %v307
    %6791 = vmatprep.subr.mxu0 %v322
    %6792 = vmatpush1.msra.mxu0 %v321
    %6793 = vmatprep.subr.mxu0 %v336
    %6794 = vmatpush1.msra.mxu0 %v335
    %6795 = vmatprep.subr.mxu0 %v350
    %6796 = vmatpush1.msra.mxu0 %v349
    %6797 = vmatprep.subr.mxu0 %v364
    %6798 = vmatpush1.msra.mxu0 %v363
    %6799 = vmatprep.subr.mxu0 %v378
    %6800 = vmatpush1.msra.mxu0 %v377
    %6801 = vmatprep.subr.mxu0 %v392
    %6802 = vmatpush1.msra.mxu0 %v391
    %6803 = vmatprep.subr.mxu0 %v406
    %6804 = vmatpush1.msra.mxu0 %v405
    %6805 = vmatprep.subr.mxu0 %v420
    %6806 = vmatpush1.msra.mxu0 %v419
    %6807 = vmatprep.subr.mxu0 %v434
    %6808 = vmatpush1.msra.mxu0 %v433
    %6809 = vmatprep.subr.mxu0 %v448
    %6810 = vmatpush1.msra.mxu0 %v447
    %6811 = vmatprep.subr.mxu0 %v462
    %6812 = vmatpush1.msra.mxu0 %v461
    %6813 = vmatprep.subr.mxu0 %v476
    %6814 = vmatpush1.msra.mxu0 %v475
    %6815 = vmatprep.subr.mxu0 %v490
    %6816 = vmatpush1.msra.mxu0 %v489
    %6817 = vmatprep.subr.mxu0 %v504
    %6818 = vmatpush1.msra.mxu0 %v503
    %6819 = vmatprep.subr.mxu0 %v518
    %6820 = vmatpush1.msra.mxu0 %v517
    %6821 = vmatprep.subr.mxu0 %v532
    %6822 = vmatpush1.msra.mxu0 %v531
    %6823 = vmatprep.subr.mxu0 %v546
    %6824 = vmatpush1.msra.mxu0 %v545
    %6825 = vmatprep.subr.mxu0 %v560
    %6826 = vmatpush1.msra.mxu0 %v559
    %6827 = vmatprep.subr.mxu0 %v574
    %6828 = vmatpush1.msra.mxu0 %v573
    %6829 = vmatprep.subr.mxu0 %v588
    %6830 = vmatpush1.msra.mxu0 %v587
    %6831 = vmatprep.subr.mxu0 %v602
    %6832 = vmatpush1.msra.mxu0 %v601
    %6833 = vmatprep.subr.mxu0 %v616
    %6834 = vmatpush1.msra.mxu0 %v615
    %6835 = vmatprep.mubr.f32.mxu0 %v6342
    %6836 = vmatmul.mubr.f32.gmra.mrb[0].mxu0 %v6341
    %v6837 = vpop.f32.mrb[0].mxu0
    %v6838 = vadd.f32 0.0, %v6837
    %v6839 = vpop.f32.mrb[0].mxu0
    %v6840 = vadd.f32 0.0, %v6839
    %6841 = vdwg.mxu0
    %6842 = vmatprep.subr.mxu0 %v630
    %6843 = vmatpush1.msra.mxu0 %v629
    %6844 = vmatprep.subr.mxu0 %v644
    %6845 = vmatpush1.msra.mxu0 %v643
    %6846 = vmatprep.subr.mxu0 %v658
    %6847 = vmatpush1.msra.mxu0 %v657
    %6848 = vmatprep.subr.mxu0 %v672
    %6849 = vmatpush1.msra.mxu0 %v671
    %6850 = vmatprep.subr.mxu0 %v686
    %6851 = vmatpush1.msra.mxu0 %v685
    %6852 = vmatprep.subr.mxu0 %v700
    %6853 = vmatpush1.msra.mxu0 %v699
    %6854 = vmatprep.subr.mxu0 %v714
    %6855 = vmatpush1.msra.mxu0 %v713
    %6856 = vmatprep.subr.mxu0 %v728
    %6857 = vmatpush1.msra.mxu0 %v727
    %6858 = vmatprep.subr.mxu0 %v742
    %6859 = vmatpush1.msra.mxu0 %v741
    %6860 = vmatprep.subr.mxu0 %v756
    %6861 = vmatpush1.msra.mxu0 %v755
    %6862 = vmatprep.subr.mxu0 %v770
    %6863 = vmatpush1.msra.mxu0 %v769
    %6864 = vmatprep.subr.mxu0 %v784
    %6865 = vmatpush1.msra.mxu0 %v783
    %6866 = vmatprep.subr.mxu0 %v798
    %6867 = vmatpush1.msra.mxu0 %v797
    %6868 = vmatprep.subr.mxu0 %v812
    %6869 = vmatpush1.msra.mxu0 %v811
    %6870 = vmatprep.subr.mxu0 %v826
    %6871 = vmatpush1.msra.mxu0 %v825
    %6872 = vmatprep.subr.mxu0 %v840
    %6873 = vmatpush1.msra.mxu0 %v839
    %6874 = vmatprep.subr.mxu0 %v854
    %6875 = vmatpush1.msra.mxu0 %v853
    %6876 = vmatprep.subr.mxu0 %v868
    %6877 = vmatpush1.msra.mxu0 %v867
    %6878 = vmatprep.subr.mxu0 %v882
    %6879 = vmatpush1.msra.mxu0 %v881
    %6880 = vmatprep.subr.mxu0 %v896
    %6881 = vmatpush1.msra.mxu0 %v895
    %6882 = vmatprep.subr.mxu0 %v910
    %6883 = vmatpush1.msra.mxu0 %v909
    %6884 = vmatprep.subr.mxu0 %v924
    %6885 = vmatpush1.msra.mxu0 %v923
    %6886 = vmatprep.subr.mxu0 %v938
    %6887 = vmatpush1.msra.mxu0 %v937
    %6888 = vmatprep.subr.mxu0 %v952
    %6889 = vmatpush1.msra.mxu0 %v951
    %6890 = vmatprep.subr.mxu0 %v966
    %6891 = vmatpush1.msra.mxu0 %v965
    %6892 = vmatprep.subr.mxu0 %v980
    %6893 = vmatpush1.msra.mxu0 %v979
    %6894 = vmatprep.subr.mxu0 %v994
    %6895 = vmatpush1.msra.mxu0 %v993
    %6896 = vmatprep.subr.mxu0 %v1008
    %6897 = vmatpush1.msra.mxu0 %v1007
    %6898 = vmatprep.subr.mxu0 %v1022
    %6899 = vmatpush1.msra.mxu0 %v1021
    %6900 = vmatprep.subr.mxu0 %v1036
    %6901 = vmatpush1.msra.mxu0 %v1035
    %6902 = vmatprep.subr.mxu0 %v1050
    %6903 = vmatpush1.msra.mxu0 %v1049
    %6904 = vmatprep.subr.mxu0 %v1064
    %6905 = vmatpush1.msra.mxu0 %v1063
    %6906 = vmatprep.mubr.f32.mxu0 %v6271
    %6907 = vmatmul.mubr.f32.gmra.mrb[0].mxu0 %v6270
    %v6908 = vpop.f32.mrb[0].mxu0
    %v6909 = vadd.f32 %v6838, %v6908
    %v6910 = vpop.f32.mrb[0].mxu0
    %v6911 = vadd.f32 %v6840, %v6910
    %6912 = vdwg.mxu0
    %6913 = vmatprep.subr.mxu0 %v184
    %6914 = vmatpush1.msra.mxu0 %v183
    %6915 = vmatprep.subr.mxu0 %v198
    %6916 = vmatpush1.msra.mxu0 %v197
    %6917 = vmatprep.subr.mxu0 %v212
    %6918 = vmatpush1.msra.mxu0 %v211
    %6919 = vmatprep.subr.mxu0 %v226
    %6920 = vmatpush1.msra.mxu0 %v225
    %6921 = vmatprep.subr.mxu0 %v240
    %6922 = vmatpush1.msra.mxu0 %v239
    %6923 = vmatprep.subr.mxu0 %v254
    %6924 = vmatpush1.msra.mxu0 %v253
    %6925 = vmatprep.subr.mxu0 %v268
    %6926 = vmatpush1.msra.mxu0 %v267
    %6927 = vmatprep.subr.mxu0 %v282
    %6928 = vmatpush1.msra.mxu0 %v281
    %6929 = vmatprep.subr.mxu0 %v296
    %6930 = vmatpush1.msra.mxu0 %v295
    %6931 = vmatprep.subr.mxu0 %v310
    %6932 = vmatpush1.msra.mxu0 %v309
    %6933 = vmatprep.subr.mxu0 %v324
    %6934 = vmatpush1.msra.mxu0 %v323
    %6935 = vmatprep.subr.mxu0 %v338
    %6936 = vmatpush1.msra.mxu0 %v337
    %6937 = vmatprep.subr.mxu0 %v352
    %6938 = vmatpush1.msra.mxu0 %v351
    %6939 = vmatprep.subr.mxu0 %v366
    %6940 = vmatpush1.msra.mxu0 %v365
    %6941 = vmatprep.subr.mxu0 %v380
    %6942 = vmatpush1.msra.mxu0 %v379
    %6943 = vmatprep.subr.mxu0 %v394
    %6944 = vmatpush1.msra.mxu0 %v393
    %6945 = vmatprep.subr.mxu0 %v408
    %6946 = vmatpush1.msra.mxu0 %v407
    %6947 = vmatprep.subr.mxu0 %v422
    %6948 = vmatpush1.msra.mxu0 %v421
    %6949 = vmatprep.subr.mxu0 %v436
    %6950 = vmatpush1.msra.mxu0 %v435
    %6951 = vmatprep.subr.mxu0 %v450
    %6952 = vmatpush1.msra.mxu0 %v449
    %6953 = vmatprep.subr.mxu0 %v464
    %6954 = vmatpush1.msra.mxu0 %v463
    %6955 = vmatprep.subr.mxu0 %v478
    %6956 = vmatpush1.msra.mxu0 %v477
    %6957 = vmatprep.subr.mxu0 %v492
    %6958 = vmatpush1.msra.mxu0 %v491
    %6959 = vmatprep.subr.mxu0 %v506
    %6960 = vmatpush1.msra.mxu0 %v505
    %6961 = vmatprep.subr.mxu0 %v520
    %6962 = vmatpush1.msra.mxu0 %v519
    %6963 = vmatprep.subr.mxu0 %v534
    %6964 = vmatpush1.msra.mxu0 %v533
    %6965 = vmatprep.subr.mxu0 %v548
    %6966 = vmatpush1.msra.mxu0 %v547
    %6967 = vmatprep.subr.mxu0 %v562
    %6968 = vmatpush1.msra.mxu0 %v561
    %6969 = vmatprep.subr.mxu0 %v576
    %6970 = vmatpush1.msra.mxu0 %v575
    %6971 = vmatprep.subr.mxu0 %v590
    %6972 = vmatpush1.msra.mxu0 %v589
    %6973 = vmatprep.subr.mxu0 %v604
    %6974 = vmatpush1.msra.mxu0 %v603
    %6975 = vmatprep.subr.mxu0 %v618
    %6976 = vmatpush1.msra.mxu0 %v617
    %6977 = vmatprep.mubr.f32.mxu0 %v6342
    %6978 = vmatmul.mubr.f32.gmra.mrb[0].mxu0 %v6341
    %v6979 = vpop.f32.mrb[0].mxu0
    %v6980 = vadd.f32 0.0, %v6979
    %v6981 = vpop.f32.mrb[0].mxu0
    %v6982 = vadd.f32 0.0, %v6981
    %6983 = vdwg.mxu0
    %6984 = vmatprep.subr.mxu0 %v632
    %6985 = vmatpush1.msra.mxu0 %v631
    %6986 = vmatprep.subr.mxu0 %v646
    %6987 = vmatpush1.msra.mxu0 %v645
    %6988 = vmatprep.subr.mxu0 %v660
    %6989 = vmatpush1.msra.mxu0 %v659
    %6990 = vmatprep.subr.mxu0 %v674
    %6991 = vmatpush1.msra.mxu0 %v673
    %6992 = vmatprep.subr.mxu0 %v688
    %6993 = vmatpush1.msra.mxu0 %v687
    %6994 = vmatprep.subr.mxu0 %v702
    %6995 = vmatpush1.msra.mxu0 %v701
    %6996 = vmatprep.subr.mxu0 %v716
    %6997 = vmatpush1.msra.mxu0 %v715
    %6998 = vmatprep.subr.mxu0 %v730
    %6999 = vmatpush1.msra.mxu0 %v729
    %7000 = vmatprep.subr.mxu0 %v744
    %7001 = vmatpush1.msra.mxu0 %v743
    %7002 = vmatprep.subr.mxu0 %v758
    %7003 = vmatpush1.msra.mxu0 %v757
    %7004 = vmatprep.subr.mxu0 %v772
    %7005 = vmatpush1.msra.mxu0 %v771
    %7006 = vmatprep.subr.mxu0 %v786
    %7007 = vmatpush1.msra.mxu0 %v785
    %7008 = vmatprep.subr.mxu0 %v800
    %7009 = vmatpush1.msra.mxu0 %v799
    %7010 = vmatprep.subr.mxu0 %v814
    %7011 = vmatpush1.msra.mxu0 %v813
    %7012 = vmatprep.subr.mxu0 %v828
    %7013 = vmatpush1.msra.mxu0 %v827
    %7014 = vmatprep.subr.mxu0 %v842
    %7015 = vmatpush1.msra.mxu0 %v841
    %7016 = vmatprep.subr.mxu0 %v856
    %7017 = vmatpush1.msra.mxu0 %v855
    %7018 = vmatprep.subr.mxu0 %v870
    %7019 = vmatpush1.msra.mxu0 %v869
    %7020 = vmatprep.subr.mxu0 %v884
    %7021 = vmatpush1.msra.mxu0 %v883
    %7022 = vmatprep.subr.mxu0 %v898
    %7023 = vmatpush1.msra.mxu0 %v897
    %7024 = vmatprep.subr.mxu0 %v912
    %7025 = vmatpush1.msra.mxu0 %v911
    %7026 = vmatprep.subr.mxu0 %v926
    %7027 = vmatpush1.msra.mxu0 %v925
    %7028 = vmatprep.subr.mxu0 %v940
    %7029 = vmatpush1.msra.mxu0 %v939
    %7030 = vmatprep.subr.mxu0 %v954
    %7031 = vmatpush1.msra.mxu0 %v953
    %7032 = vmatprep.subr.mxu0 %v968
    %7033 = vmatpush1.msra.mxu0 %v967
    %7034 = vmatprep.subr.mxu0 %v982
    %7035 = vmatpush1.msra.mxu0 %v981
    %7036 = vmatprep.subr.mxu0 %v996
    %7037 = vmatpush1.msra.mxu0 %v995
    %7038 = vmatprep.subr.mxu0 %v1010
    %7039 = vmatpush1.msra.mxu0 %v1009
    %7040 = vmatprep.subr.mxu0 %v1024
    %7041 = vmatpush1.msra.mxu0 %v1023
    %7042 = vmatprep.subr.mxu0 %v1038
    %7043 = vmatpush1.msra.mxu0 %v1037
    %7044 = vmatprep.subr.mxu0 %v1052
    %7045 = vmatpush1.msra.mxu0 %v1051
    %7046 = vmatprep.subr.mxu0 %v1066
    %7047 = vmatpush1.msra.mxu0 %v1065
    %7048 = vmatprep.mubr.f32.mxu0 %v6271
    %7049 = vmatmul.mubr.f32.gmra.mrb[0].mxu0 %v6270
    %v7050 = vpop.f32.mrb[0].mxu0
    %v7051 = vadd.f32 %v6980, %v7050
    %v7052 = vpop.f32.mrb[0].mxu0
    %v7053 = vadd.f32 %v6982, %v7052
    %7054 = vdwg.mxu0
    %7055 = vmatprep.subr.mxu0 %v186
    %7056 = vmatpush1.msra.mxu0 %v185
    %7057 = vmatprep.subr.mxu0 %v200
    %7058 = vmatpush1.msra.mxu0 %v199
    %7059 = vmatprep.subr.mxu0 %v214
    %7060 = vmatpush1.msra.mxu0 %v213
    %7061 = vmatprep.subr.mxu0 %v228
    %7062 = vmatpush1.msra.mxu0 %v227
    %7063 = vmatprep.subr.mxu0 %v242
    %7064 = vmatpush1.msra.mxu0 %v241
    %7065 = vmatprep.subr.mxu0 %v256
    %7066 = vmatpush1.msra.mxu0 %v255
    %7067 = vmatprep.subr.mxu0 %v270
    %7068 = vmatpush1.msra.mxu0 %v269
    %7069 = vmatprep.subr.mxu0 %v284
    %7070 = vmatpush1.msra.mxu0 %v283
    %7071 = vmatprep.subr.mxu0 %v298
    %7072 = vmatpush1.msra.mxu0 %v297
    %7073 = vmatprep.subr.mxu0 %v312
    %7074 = vmatpush1.msra.mxu0 %v311
    %7075 = vmatprep.subr.mxu0 %v326
    %7076 = vmatpush1.msra.mxu0 %v325
    %7077 = vmatprep.subr.mxu0 %v340
    %7078 = vmatpush1.msra.mxu0 %v339
    %7079 = vmatprep.subr.mxu0 %v354
    %7080 = vmatpush1.msra.mxu0 %v353
    %7081 = vmatprep.subr.mxu0 %v368
    %7082 = vmatpush1.msra.mxu0 %v367
    %7083 = vmatprep.subr.mxu0 %v382
    %7084 = vmatpush1.msra.mxu0 %v381
    %7085 = vmatprep.subr.mxu0 %v396
    %7086 = vmatpush1.msra.mxu0 %v395
    %7087 = vmatprep.subr.mxu0 %v410
    %7088 = vmatpush1.msra.mxu0 %v409
    %7089 = vmatprep.subr.mxu0 %v424
    %7090 = vmatpush1.msra.mxu0 %v423
    %7091 = vmatprep.subr.mxu0 %v438
    %7092 = vmatpush1.msra.mxu0 %v437
    %7093 = vmatprep.subr.mxu0 %v452
    %7094 = vmatpush1.msra.mxu0 %v451
    %7095 = vmatprep.subr.mxu0 %v466
    %7096 = vmatpush1.msra.mxu0 %v465
    %7097 = vmatprep.subr.mxu0 %v480
    %7098 = vmatpush1.msra.mxu0 %v479
    %7099 = vmatprep.subr.mxu0 %v494
    %7100 = vmatpush1.msra.mxu0 %v493
    %7101 = vmatprep.subr.mxu0 %v508
    %7102 = vmatpush1.msra.mxu0 %v507
    %7103 = vmatprep.subr.mxu0 %v522
    %7104 = vmatpush1.msra.mxu0 %v521
    %7105 = vmatprep.subr.mxu0 %v536
    %7106 = vmatpush1.msra.mxu0 %v535
    %7107 = vmatprep.subr.mxu0 %v550
    %7108 = vmatpush1.msra.mxu0 %v549
    %7109 = vmatprep.subr.mxu0 %v564
    %7110 = vmatpush1.msra.mxu0 %v563
    %7111 = vmatprep.subr.mxu0 %v578
    %7112 = vmatpush1.msra.mxu0 %v577
    %7113 = vmatprep.subr.mxu0 %v592
    %7114 = vmatpush1.msra.mxu0 %v591
    %7115 = vmatprep.subr.mxu0 %v606
    %7116 = vmatpush1.msra.mxu0 %v605
    %7117 = vmatprep.subr.mxu0 %v620
    %7118 = vmatpush1.msra.mxu0 %v619
    %7119 = vmatprep.mubr.f32.mxu0 %v6342
    %7120 = vmatmul.mubr.f32.gmra.mrb[0].mxu0 %v6341
    %v7121 = vpop.f32.mrb[0].mxu0
    %v7122 = vadd.f32 0.0, %v7121
    %v7123 = vpop.f32.mrb[0].mxu0
    %v7124 = vadd.f32 0.0, %v7123
    %7125 = vdwg.mxu0
    %7126 = vmatprep.subr.mxu0 %v634
    %7127 = vmatpush1.msra.mxu0 %v633
    %7128 = vmatprep.subr.mxu0 %v648
    %7129 = vmatpush1.msra.mxu0 %v647
    %7130 = vmatprep.subr.mxu0 %v662
    %7131 = vmatpush1.msra.mxu0 %v661
    %7132 = vmatprep.subr.mxu0 %v676
    %7133 = vmatpush1.msra.mxu0 %v675
    %7134 = vmatprep.subr.mxu0 %v690
    %7135 = vmatpush1.msra.mxu0 %v689
    %7136 = vmatprep.subr.mxu0 %v704
    %7137 = vmatpush1.msra.mxu0 %v703
    %7138 = vmatprep.subr.mxu0 %v718
    %7139 = vmatpush1.msra.mxu0 %v717
    %7140 = vmatprep.subr.mxu0 %v732
    %7141 = vmatpush1.msra.mxu0 %v731
    %7142 = vmatprep.subr.mxu0 %v746
    %7143 = vmatpush1.msra.mxu0 %v745
    %7144 = vmatprep.subr.mxu0 %v760
    %7145 = vmatpush1.msra.mxu0 %v759
    %7146 = vmatprep.subr.mxu0 %v774
    %7147 = vmatpush1.msra.mxu0 %v773
    %7148 = vmatprep.subr.mxu0 %v788
    %7149 = vmatpush1.msra.mxu0 %v787
    %7150 = vmatprep.subr.mxu0 %v802
    %7151 = vmatpush1.msra.mxu0 %v801
    %7152 = vmatprep.subr.mxu0 %v816
    %7153 = vmatpush1.msra.mxu0 %v815
    %7154 = vmatprep.subr.mxu0 %v830
    %7155 = vmatpush1.msra.mxu0 %v829
    %7156 = vmatprep.subr.mxu0 %v844
    %7157 = vmatpush1.msra.mxu0 %v843
    %7158 = vmatprep.subr.mxu0 %v858
    %7159 = vmatpush1.msra.mxu0 %v857
    %7160 = vmatprep.subr.mxu0 %v872
    %7161 = vmatpush1.msra.mxu0 %v871
    %7162 = vmatprep.subr.mxu0 %v886
    %7163 = vmatpush1.msra.mxu0 %v885
    %7164 = vmatprep.subr.mxu0 %v900
    %7165 = vmatpush1.msra.mxu0 %v899
    %7166 = vmatprep.subr.mxu0 %v914
    %7167 = vmatpush1.msra.mxu0 %v913
    %7168 = vmatprep.subr.mxu0 %v928
    %7169 = vmatpush1.msra.mxu0 %v927
    %7170 = vmatprep.subr.mxu0 %v942
    %7171 = vmatpush1.msra.mxu0 %v941
    %7172 = vmatprep.subr.mxu0 %v956
    %7173 = vmatpush1.msra.mxu0 %v955
    %7174 = vmatprep.subr.mxu0 %v970
    %7175 = vmatpush1.msra.mxu0 %v969
    %7176 = vmatprep.subr.mxu0 %v984
    %7177 = vmatpush1.msra.mxu0 %v983
    %7178 = vmatprep.subr.mxu0 %v998
    %7179 = vmatpush1.msra.mxu0 %v997
    %7180 = vmatprep.subr.mxu0 %v1012
    %7181 = vmatpush1.msra.mxu0 %v1011
    %7182 = vmatprep.subr.mxu0 %v1026
    %7183 = vmatpush1.msra.mxu0 %v1025
    %7184 = vmatprep.subr.mxu0 %v1040
    %7185 = vmatpush1.msra.mxu0 %v1039
    %7186 = vmatprep.subr.mxu0 %v1054
    %7187 = vmatpush1.msra.mxu0 %v1053
    %7188 = vmatprep.subr.mxu0 %v1068
    %7189 = vmatpush1.msra.mxu0 %v1067
    %7190 = vmatprep.mubr.f32.mxu0 %v6271
    %7191 = vmatmul.mubr.f32.gmra.mrb[0].mxu0 %v6270
    %v7192 = vpop.f32.mrb[0].mxu0
    %v7193 = vadd.f32 %v7122, %v7192
    %v7194 = vpop.f32.mrb[0].mxu0
    %v7195 = vadd.f32 %v7124, %v7194
    %7196 = vdwg.mxu0
    %7197 = vmatprep.subr.mxu0 %v188
    %7198 = vmatpush1.msra.mxu0 %v187
    %7199 = vmatprep.subr.mxu0 %v202
    %7200 = vmatpush1.msra.mxu0 %v201
    %7201 = vmatprep.subr.mxu0 %v216
    %7202 = vmatpush1.msra.mxu0 %v215
    %7203 = vmatprep.subr.mxu0 %v230
    %7204 = vmatpush1.msra.mxu0 %v229
    %7205 = vmatprep.subr.mxu0 %v244
    %7206 = vmatpush1.msra.mxu0 %v243
    %7207 = vmatprep.subr.mxu0 %v258
    %7208 = vmatpush1.msra.mxu0 %v257
    %7209 = vmatprep.subr.mxu0 %v272
    %7210 = vmatpush1.msra.mxu0 %v271
    %7211 = vmatprep.subr.mxu0 %v286
    %7212 = vmatpush1.msra.mxu0 %v285
    %7213 = vmatprep.subr.mxu0 %v300
    %7214 = vmatpush1.msra.mxu0 %v299
    %7215 = vmatprep.subr.mxu0 %v314
    %7216 = vmatpush1.msra.mxu0 %v313
    %7217 = vmatprep.subr.mxu0 %v328
    %7218 = vmatpush1.msra.mxu0 %v327
    %7219 = vmatprep.subr.mxu0 %v342
    %7220 = vmatpush1.msra.mxu0 %v341
    %7221 = vmatprep.subr.mxu0 %v356
    %7222 = vmatpush1.msra.mxu0 %v355
    %7223 = vmatprep.subr.mxu0 %v370
    %7224 = vmatpush1.msra.mxu0 %v369
    %7225 = vmatprep.subr.mxu0 %v384
    %7226 = vmatpush1.msra.mxu0 %v383
    %7227 = vmatprep.subr.mxu0 %v398
    %7228 = vmatpush1.msra.mxu0 %v397
    %7229 = vmatprep.subr.mxu0 %v412
    %7230 = vmatpush1.msra.mxu0 %v411
    %7231 = vmatprep.subr.mxu0 %v426
    %7232 = vmatpush1.msra.mxu0 %v425
    %7233 = vmatprep.subr.mxu0 %v440
    %7234 = vmatpush1.msra.mxu0 %v439
    %7235 = vmatprep.subr.mxu0 %v454
    %7236 = vmatpush1.msra.mxu0 %v453
    %7237 = vmatprep.subr.mxu0 %v468
    %7238 = vmatpush1.msra.mxu0 %v467
    %7239 = vmatprep.subr.mxu0 %v482
    %7240 = vmatpush1.msra.mxu0 %v481
    %7241 = vmatprep.subr.mxu0 %v496
    %7242 = vmatpush1.msra.mxu0 %v495
    %7243 = vmatprep.subr.mxu0 %v510
    %7244 = vmatpush1.msra.mxu0 %v509
    %7245 = vmatprep.subr.mxu0 %v524
    %7246 = vmatpush1.msra.mxu0 %v523
    %7247 = vmatprep.subr.mxu0 %v538
    %7248 = vmatpush1.msra.mxu0 %v537
    %7249 = vmatprep.subr.mxu0 %v552
    %7250 = vmatpush1.msra.mxu0 %v551
    %7251 = vmatprep.subr.mxu0 %v566
    %7252 = vmatpush1.msra.mxu0 %v565
    %7253 = vmatprep.subr.mxu0 %v580
    %7254 = vmatpush1.msra.mxu0 %v579
    %7255 = vmatprep.subr.mxu0 %v594
    %7256 = vmatpush1.msra.mxu0 %v593
    %7257 = vmatprep.subr.mxu0 %v608
    %7258 = vmatpush1.msra.mxu0 %v607
    %7259 = vmatprep.subr.mxu0 %v622
    %7260 = vmatpush1.msra.mxu0 %v621
    %7261 = vmatprep.mubr.f32.mxu0 %v6342
    %7262 = vmatmul.mubr.f32.gmra.mrb[0].mxu0 %v6341
    %v7263 = vpop.f32.mrb[0].mxu0
    %v7264 = vadd.f32 0.0, %v7263
    %v7265 = vpop.f32.mrb[0].mxu0
    %v7266 = vadd.f32 0.0, %v7265
    %7267 = vdwg.mxu0
    %7268 = vmatprep.subr.mxu0 %v636
    %7269 = vmatpush1.msra.mxu0 %v635
    %7270 = vmatprep.subr.mxu0 %v650
    %7271 = vmatpush1.msra.mxu0 %v649
    %7272 = vmatprep.subr.mxu0 %v664
    %7273 = vmatpush1.msra.mxu0 %v663
    %7274 = vmatprep.subr.mxu0 %v678
    %7275 = vmatpush1.msra.mxu0 %v677
    %7276 = vmatprep.subr.mxu0 %v692
    %7277 = vmatpush1.msra.mxu0 %v691
    %7278 = vmatprep.subr.mxu0 %v706
    %7279 = vmatpush1.msra.mxu0 %v705
    %7280 = vmatprep.subr.mxu0 %v720
    %7281 = vmatpush1.msra.mxu0 %v719
    %7282 = vmatprep.subr.mxu0 %v734
    %7283 = vmatpush1.msra.mxu0 %v733
    %7284 = vmatprep.subr.mxu0 %v748
    %7285 = vmatpush1.msra.mxu0 %v747
    %7286 = vmatprep.subr.mxu0 %v762
    %7287 = vmatpush1.msra.mxu0 %v761
    %7288 = vmatprep.subr.mxu0 %v776
    %7289 = vmatpush1.msra.mxu0 %v775
    %7290 = vmatprep.subr.mxu0 %v790
    %7291 = vmatpush1.msra.mxu0 %v789
    %7292 = vmatprep.subr.mxu0 %v804
    %7293 = vmatpush1.msra.mxu0 %v803
    %7294 = vmatprep.subr.mxu0 %v818
    %7295 = vmatpush1.msra.mxu0 %v817
    %7296 = vmatprep.subr.mxu0 %v832
    %7297 = vmatpush1.msra.mxu0 %v831
    %7298 = vmatprep.subr.mxu0 %v846
    %7299 = vmatpush1.msra.mxu0 %v845
    %7300 = vmatprep.subr.mxu0 %v860
    %7301 = vmatpush1.msra.mxu0 %v859
    %7302 = vmatprep.subr.mxu0 %v874
    %7303 = vmatpush1.msra.mxu0 %v873
    %7304 = vmatprep.subr.mxu0 %v888
    %7305 = vmatpush1.msra.mxu0 %v887
    %7306 = vmatprep.subr.mxu0 %v902
    %7307 = vmatpush1.msra.mxu0 %v901
    %7308 = vmatprep.subr.mxu0 %v916
    %7309 = vmatpush1.msra.mxu0 %v915
    %7310 = vmatprep.subr.mxu0 %v930
    %7311 = vmatpush1.msra.mxu0 %v929
    %7312 = vmatprep.subr.mxu0 %v944
    %7313 = vmatpush1.msra.mxu0 %v943
    %7314 = vmatprep.subr.mxu0 %v958
    %7315 = vmatpush1.msra.mxu0 %v957
    %7316 = vmatprep.subr.mxu0 %v972
    %7317 = vmatpush1.msra.mxu0 %v971
    %7318 = vmatprep.subr.mxu0 %v986
    %7319 = vmatpush1.msra.mxu0 %v985
    %7320 = vmatprep.subr.mxu0 %v1000
    %7321 = vmatpush1.msra.mxu0 %v999
    %7322 = vmatprep.subr.mxu0 %v1014
    %7323 = vmatpush1.msra.mxu0 %v1013
    %7324 = vmatprep.subr.mxu0 %v1028
    %7325 = vmatpush1.msra.mxu0 %v1027
    %7326 = vmatprep.subr.mxu0 %v1042
    %7327 = vmatpush1.msra.mxu0 %v1041
    %7328 = vmatprep.subr.mxu0 %v1056
    %7329 = vmatpush1.msra.mxu0 %v1055
    %7330 = vmatprep.subr.mxu0 %v1070
    %7331 = vmatpush1.msra.mxu0 %v1069
    %7332 = vmatprep.mubr.f32.mxu0 %v6271
    %7333 = vmatmul.mubr.f32.gmra.mrb[0].mxu0 %v6270
    %v7334 = vpop.f32.mrb[0].mxu0
    %v7335 = vadd.f32 %v7264, %v7334
    %v7336 = vpop.f32.mrb[0].mxu0
    %v7337 = vadd.f32 %v7266, %v7336
    %7338 = vdwg.mxu0
    %v7339 = vadd.f32 %v6909, %v1076
    %v7340 = vadd.f32 %v6911, %v1080
    %v7341 = vadd.f32 %v7051, %v1084
    %v7342 = vadd.f32 %v7053, %v1088
    %v7343 = vadd.f32 %v7193, %v1092
    %v7344 = vadd.f32 %v7195, %v1096
    %v7345 = vadd.f32 %v7335, %v1100
    %v7346 = vadd.f32 %v7337, %v1104
    %v7347 = vxor.u32 %v7339, 2147483648
    %v7348 = vxor.u32 %v7340, 2147483648
    %v7349 = vmul.f32 %v7347, 1.442695
    %v7350 = vpow.pop %v7349
    %v7351 = vmul.f32 %v7348, 1.442695
    %v7352 = vpow.pop %v7351
    %v7353 = vadd.f32 %v7350, 1.0
    %v7354 = vadd.f32 %v7352, 1.0
    %v7355 = vrcp.pop %v7353
    %v7356 = vmul.f32 1.0, %v7355
    %v7357 = vrcp.pop %v7354
    %v7358 = vmul.f32 1.0, %v7357
    %v7359 = vxor.u32 %v7341, 2147483648
    %v7360 = vxor.u32 %v7342, 2147483648
    %v7361 = vmul.f32 %v7359, 1.442695
    %v7362 = vpow.pop %v7361
    %v7363 = vmul.f32 %v7360, 1.442695
    %v7364 = vpow.pop %v7363
    %v7365 = vadd.f32 %v7362, 1.0
    %v7366 = vadd.f32 %v7364, 1.0
    %v7367 = vrcp.pop %v7365
    %v7368 = vmul.f32 1.0, %v7367
    %v7369 = vrcp.pop %v7366
    %v7370 = vmul.f32 1.0, %v7369
    %v7371 = vadd.f32 %v7345, %v1118
    %v7372 = vadd.f32 %v7346, %v1122
    %v7373 = vmul.f32 %v7356, %v7371
    %v7374 = vmul.f32 %v7358, %v7372
    %v7375 = vadd.f32 %v7343, %v7373
    %v7376 = vadd.f32 %v7344, %v7374
    %v7377 = vtanh.pop %v7375
    %v7378 = vtanh.pop %v7376
    %v7379 = vsub.f32 1.0, %v7368
    %v7380 = vsub.f32 1.0, %v7370
    %v7381 = vmul.f32 %v7379, %v7377
    %v7382 = vmul.f32 %v7380, %v7378
    %v7383 = vmul.f32 %v7368, %v6270
    %v7384 = vmul.f32 %v7370, %v6271
    %v7385 = vadd.f32 %v7381, %v7383
    %v7386 = vadd.f32 %v7382, %v7384
    %s7387 = scalar_lea.vmem [#allocation2], 60
    %v7388 = vld [vmem:[%s7387] sm:$0xff]
    %v7389 = vld [vmem:[%s7387 + $0x8] sm:$0xf]
    %v7392 = vcombine.low %v6483, %v6485
    %v7394 = vunpack.c.l.s4 1983009808
    %v7395 = vunpack.c.0.s8 %v7394
    %v7396 = vlaneseq
    %v7397 = vshrl.u32 %v7396, 7
    %v7398 = vsub.s32 %v7395, %v7397
    %v7399 = vrot.slane %v7392, %v7398
    %v7401 = vadd.f32 %v7388, %v7399
    %v7402 = vxor.u32 %v7401, 2147483648
    %v7403 = vmul.f32 %v7402, 1.442695
    %v7404 = vpow.pop %v7403
    %v7405 = vadd.f32 %v7404, 1.0
    %v7406 = vrcp.pop %v7405
    %v7407 = vmul.f32 1.0, %v7406
    %v7409 = vrot.slane %v7388, 4
    %v7413 = vcombine.low %v6625, %v6627
    %v7415 = vunpack.c.l.s4 1983009808
    %v7416 = vunpack.c.0.s8 %v7415
    %v7417 = vlaneseq
    %v7418 = vshrl.u32 %v7417, 7
    %v7419 = vsub.s32 %v7416, %v7418
    %v7420 = vrot.slane %v7413, %v7419
    %v7422 = vadd.f32 %v7409, %v7420
    %v7423 = vxor.u32 %v7422, 2147483648
    %v7424 = vmul.f32 %v7423, 1.442695
    %v7425 = vpow.pop %v7424
    %v7426 = vadd.f32 %v7425, 1.0
    %v7427 = vrcp.pop %v7426
    %v7428 = vmul.f32 1.0, %v7427
    %v7429 = vadd.f32 %v6767, %v168
    %v7430 = vadd.f32 %v6769, %v172
    %v7433 = vcombine.low %v7429, %v7430
    %v7435 = vunpack.c.l.s4 1983009808
    %v7436 = vunpack.c.0.s8 %v7435
    %v7437 = vlaneseq
    %v7438 = vshrl.u32 %v7437, 7
    %v7439 = vsub.s32 %v7436, %v7438
    %v7440 = vrot.slane %v7433, %v7439
    %v7442 = vmul.f32 %v7407, %v7440
    %v7443 = vadd.f32 %v7389, %v7442
    %v7444 = vtanh.pop %v7443
    %v7445 = vsub.f32 1.0, %v7428
    %v7446 = vmul.f32 %v7445, %v7444
    %v7447 = vmul.f32 %v7428, %v6333
    %v7448 = vadd.f32 %v7446, %v7447
    %v7451 = vunpack.c.l.s4 1983009808
    %v7452 = vunpack.c.0.s8 %v7451
    %v7453 = vlaneseq
    %v7454 = vshrl.u32 %v7453, 7
    %v7455 = vsub.s32 %v7452, %v7454
    %v7456 = vrot.slane %v7448, %v7455
    %v7457 = vcombine.high %v7456, %v7456
    %7460 = vmatprep.subr.mxu0 %v176
    %7461 = vmatpush1.msra.mxu0 %v175
    %7462 = vmatprep.subr.mxu0 %v190
    %7463 = vmatpush1.msra.mxu0 %v189
    %7464 = vmatprep.subr.mxu0 %v204
    %7465 = vmatpush1.msra.mxu0 %v203
    %7466 = vmatprep.subr.mxu0 %v218
    %7467 = vmatpush1.msra.mxu0 %v217
    %7468 = vmatprep.subr.mxu0 %v232
    %7469 = vmatpush1.msra.mxu0 %v231
    %7470 = vmatprep.subr.mxu0 %v246
    %7471 = vmatpush1.msra.mxu0 %v245
    %7472 = vmatprep.subr.mxu0 %v260
    %7473 = vmatpush1.msra.mxu0 %v259
    %7474 = vmatprep.subr.mxu0 %v274
    %7475 = vmatpush1.msra.mxu0 %v273
    %7476 = vmatprep.subr.mxu0 %v288
    %7477 = vmatpush1.msra.mxu0 %v287
    %7478 = vmatprep.subr.mxu0 %v302
    %7479 = vmatpush1.msra.mxu0 %v301
    %7480 = vmatprep.subr.mxu0 %v316
    %7481 = vmatpush1.msra.mxu0 %v315
    %7482 = vmatprep.subr.mxu0 %v330
    %7483 = vmatpush1.msra.mxu0 %v329
    %7484 = vmatprep.subr.mxu0 %v344
    %7485 = vmatpush1.msra.mxu0 %v343
    %7486 = vmatprep.subr.mxu0 %v358
    %7487 = vmatpush1.msra.mxu0 %v357
    %7488 = vmatprep.subr.mxu0 %v372
    %7489 = vmatpush1.msra.mxu0 %v371
    %7490 = vmatprep.subr.mxu0 %v386
    %7491 = vmatpush1.msra.mxu0 %v385
    %7492 = vmatprep.subr.mxu0 %v400
    %7493 = vmatpush1.msra.mxu0 %v399
    %7494 = vmatprep.subr.mxu0 %v414
    %7495 = vmatpush1.msra.mxu0 %v413
    %7496 = vmatprep.subr.mxu0 %v428
    %7497 = vmatpush1.msra.mxu0 %v427
    %7498 = vmatprep.subr.mxu0 %v442
    %7499 = vmatpush1.msra.mxu0 %v441
    %7500 = vmatprep.subr.mxu0 %v456
    %7501 = vmatpush1.msra.mxu0 %v455
    %7502 = vmatprep.subr.mxu0 %v470
    %7503 = vmatpush1.msra.mxu0 %v469
    %7504 = vmatprep.subr.mxu0 %v484
    %7505 = vmatpush1.msra.mxu0 %v483
    %7506 = vmatprep.subr.mxu0 %v498
    %7507 = vmatpush1.msra.mxu0 %v497
    %7508 = vmatprep.subr.mxu0 %v512
    %7509 = vmatpush1.msra.mxu0 %v511
    %7510 = vmatprep.subr.mxu0 %v526
    %7511 = vmatpush1.msra.mxu0 %v525
    %7512 = vmatprep.subr.mxu0 %v540
    %7513 = vmatpush1.msra.mxu0 %v539
    %7514 = vmatprep.subr.mxu0 %v554
    %7515 = vmatpush1.msra.mxu0 %v553
    %7516 = vmatprep.subr.mxu0 %v568
    %7517 = vmatpush1.msra.mxu0 %v567
    %7518 = vmatprep.subr.mxu0 %v582
    %7519 = vmatpush1.msra.mxu0 %v581
    %7520 = vmatprep.subr.mxu0 %v596
    %7521 = vmatpush1.msra.mxu0 %v595
    %7522 = vmatprep.subr.mxu0 %v610
    %7523 = vmatpush1.msra.mxu0 %v609
    %7524 = vmatprep.mubr.f32.mxu0 %v7457
    %7525 = vmatmul.mubr.f32.gmra.mrb[0].mxu0 %v7456
    %v7526 = vpop.f32.mrb[0].mxu0
    %v7527 = vadd.f32 0.0, %v7526
    %v7528 = vpop.f32.mrb[0].mxu0
    %v7529 = vadd.f32 0.0, %v7528
    %7530 = vdwg.mxu0
    %7531 = vmatprep.subr.mxu0 %v624
    %7532 = vmatpush1.msra.mxu0 %v623
    %7533 = vmatprep.subr.mxu0 %v638
    %7534 = vmatpush1.msra.mxu0 %v637
    %7535 = vmatprep.subr.mxu0 %v652
    %7536 = vmatpush1.msra.mxu0 %v651
    %7537 = vmatprep.subr.mxu0 %v666
    %7538 = vmatpush1.msra.mxu0 %v665
    %7539 = vmatprep.subr.mxu0 %v680
    %7540 = vmatpush1.msra.mxu0 %v679
    %7541 = vmatprep.subr.mxu0 %v694
    %7542 = vmatpush1.msra.mxu0 %v693
    %7543 = vmatprep.subr.mxu0 %v708
    %7544 = vmatpush1.msra.mxu0 %v707
    %7545 = vmatprep.subr.mxu0 %v722
    %7546 = vmatpush1.msra.mxu0 %v721
    %7547 = vmatprep.subr.mxu0 %v736
    %7548 = vmatpush1.msra.mxu0 %v735
    %7549 = vmatprep.subr.mxu0 %v750
    %7550 = vmatpush1.msra.mxu0 %v749
    %7551 = vmatprep.subr.mxu0 %v764
    %7552 = vmatpush1.msra.mxu0 %v763
    %7553 = vmatprep.subr.mxu0 %v778
    %7554 = vmatpush1.msra.mxu0 %v777
    %7555 = vmatprep.subr.mxu0 %v792
    %7556 = vmatpush1.msra.mxu0 %v791
    %7557 = vmatprep.subr.mxu0 %v806
    %7558 = vmatpush1.msra.mxu0 %v805
    %7559 = vmatprep.subr.mxu0 %v820
    %7560 = vmatpush1.msra.mxu0 %v819
    %7561 = vmatprep.subr.mxu0 %v834
    %7562 = vmatpush1.msra.mxu0 %v833
    %7563 = vmatprep.subr.mxu0 %v848
    %7564 = vmatpush1.msra.mxu0 %v847
    %7565 = vmatprep.subr.mxu0 %v862
    %7566 = vmatpush1.msra.mxu0 %v861
    %7567 = vmatprep.subr.mxu0 %v876
    %7568 = vmatpush1.msra.mxu0 %v875
    %7569 = vmatprep.subr.mxu0 %v890
    %7570 = vmatpush1.msra.mxu0 %v889
    %7571 = vmatprep.subr.mxu0 %v904
    %7572 = vmatpush1.msra.mxu0 %v903
    %7573 = vmatprep.subr.mxu0 %v918
    %7574 = vmatpush1.msra.mxu0 %v917
    %7575 = vmatprep.subr.mxu0 %v932
    %7576 = vmatpush1.msra.mxu0 %v931
    %7577 = vmatprep.subr.mxu0 %v946
    %7578 = vmatpush1.msra.mxu0 %v945
    %7579 = vmatprep.subr.mxu0 %v960
    %7580 = vmatpush1.msra.mxu0 %v959
    %7581 = vmatprep.subr.mxu0 %v974
    %7582 = vmatpush1.msra.mxu0 %v973
    %7583 = vmatprep.subr.mxu0 %v988
    %7584 = vmatpush1.msra.mxu0 %v987
    %7585 = vmatprep.subr.mxu0 %v1002
    %7586 = vmatpush1.msra.mxu0 %v1001
    %7587 = vmatprep.subr.mxu0 %v1016
    %7588 = vmatpush1.msra.mxu0 %v1015
    %7589 = vmatprep.subr.mxu0 %v1030
    %7590 = vmatpush1.msra.mxu0 %v1029
    %7591 = vmatprep.subr.mxu0 %v1044
    %7592 = vmatpush1.msra.mxu0 %v1043
    %7593 = vmatprep.subr.mxu0 %v1058
    %7594 = vmatpush1.msra.mxu0 %v1057
    %7595 = vmatprep.mubr.f32.mxu0 %v7386
    %7596 = vmatmul.mubr.f32.gmra.mrb[0].mxu0 %v7385
    %v7597 = vpop.f32.mrb[0].mxu0
    %v7598 = vadd.f32 %v7527, %v7597
    %v7599 = vpop.f32.mrb[0].mxu0
    %v7600 = vadd.f32 %v7529, %v7599
    %7601 = vdwg.mxu0
    %7602 = vmatprep.subr.mxu0 %v178
    %7603 = vmatpush1.msra.mxu0 %v177
    %7604 = vmatprep.subr.mxu0 %v192
    %7605 = vmatpush1.msra.mxu0 %v191
    %7606 = vmatprep.subr.mxu0 %v206
    %7607 = vmatpush1.msra.mxu0 %v205
    %7608 = vmatprep.subr.mxu0 %v220
    %7609 = vmatpush1.msra.mxu0 %v219
    %7610 = vmatprep.subr.mxu0 %v234
    %7611 = vmatpush1.msra.mxu0 %v233
    %7612 = vmatprep.subr.mxu0 %v248
    %7613 = vmatpush1.msra.mxu0 %v247
    %7614 = vmatprep.subr.mxu0 %v262
    %7615 = vmatpush1.msra.mxu0 %v261
    %7616 = vmatprep.subr.mxu0 %v276
    %7617 = vmatpush1.msra.mxu0 %v275
    %7618 = vmatprep.subr.mxu0 %v290
    %7619 = vmatpush1.msra.mxu0 %v289
    %7620 = vmatprep.subr.mxu0 %v304
    %7621 = vmatpush1.msra.mxu0 %v303
    %7622 = vmatprep.subr.mxu0 %v318
    %7623 = vmatpush1.msra.mxu0 %v317
    %7624 = vmatprep.subr.mxu0 %v332
    %7625 = vmatpush1.msra.mxu0 %v331
    %7626 = vmatprep.subr.mxu0 %v346
    %7627 = vmatpush1.msra.mxu0 %v345
    %7628 = vmatprep.subr.mxu0 %v360
    %7629 = vmatpush1.msra.mxu0 %v359
    %7630 = vmatprep.subr.mxu0 %v374
    %7631 = vmatpush1.msra.mxu0 %v373
    %7632 = vmatprep.subr.mxu0 %v388
    %7633 = vmatpush1.msra.mxu0 %v387
    %7634 = vmatprep.subr.mxu0 %v402
    %7635 = vmatpush1.msra.mxu0 %v401
    %7636 = vmatprep.subr.mxu0 %v416
    %7637 = vmatpush1.msra.mxu0 %v415
    %7638 = vmatprep.subr.mxu0 %v430
    %7639 = vmatpush1.msra.mxu0 %v429
    %7640 = vmatprep.subr.mxu0 %v444
    %7641 = vmatpush1.msra.mxu0 %v443
    %7642 = vmatprep.subr.mxu0 %v458
    %7643 = vmatpush1.msra.mxu0 %v457
    %7644 = vmatprep.subr.mxu0 %v472
    %7645 = vmatpush1.msra.mxu0 %v471
    %7646 = vmatprep.subr.mxu0 %v486
    %7647 = vmatpush1.msra.mxu0 %v485
    %7648 = vmatprep.subr.mxu0 %v500
    %7649 = vmatpush1.msra.mxu0 %v499
    %7650 = vmatprep.subr.mxu0 %v514
    %7651 = vmatpush1.msra.mxu0 %v513
    %7652 = vmatprep.subr.mxu0 %v528
    %7653 = vmatpush1.msra.mxu0 %v527
    %7654 = vmatprep.subr.mxu0 %v542
    %7655 = vmatpush1.msra.mxu0 %v541
    %7656 = vmatprep.subr.mxu0 %v556
    %7657 = vmatpush1.msra.mxu0 %v555
    %7658 = vmatprep.subr.mxu0 %v570
    %7659 = vmatpush1.msra.mxu0 %v569
    %7660 = vmatprep.subr.mxu0 %v584
    %7661 = vmatpush1.msra.mxu0 %v583
    %7662 = vmatprep.subr.mxu0 %v598
    %7663 = vmatpush1.msra.mxu0 %v597
    %7664 = vmatprep.subr.mxu0 %v612
    %7665 = vmatpush1.msra.mxu0 %v611
    %7666 = vmatprep.mubr.f32.mxu0 %v7457
    %7667 = vmatmul.mubr.f32.gmra.mrb[0].mxu0 %v7456
    %v7668 = vpop.f32.mrb[0].mxu0
    %v7669 = vadd.f32 0.0, %v7668
    %v7670 = vpop.f32.mrb[0].mxu0
    %v7671 = vadd.f32 0.0, %v7670
    %7672 = vdwg.mxu0
    %7673 = vmatprep.subr.mxu0 %v626
    %7674 = vmatpush1.msra.mxu0 %v625
    %7675 = vmatprep.subr.mxu0 %v640
    %7676 = vmatpush1.msra.mxu0 %v639
    %7677 = vmatprep.subr.mxu0 %v654
    %7678 = vmatpush1.msra.mxu0 %v653
    %7679 = vmatprep.subr.mxu0 %v668
    %7680 = vmatpush1.msra.mxu0 %v667
    %7681 = vmatprep.subr.mxu0 %v682
    %7682 = vmatpush1.msra.mxu0 %v681
    %7683 = vmatprep.subr.mxu0 %v696
    %7684 = vmatpush1.msra.mxu0 %v695
    %7685 = vmatprep.subr.mxu0 %v710
    %7686 = vmatpush1.msra.mxu0 %v709
    %7687 = vmatprep.subr.mxu0 %v724
    %7688 = vmatpush1.msra.mxu0 %v723
    %7689 = vmatprep.subr.mxu0 %v738
    %7690 = vmatpush1.msra.mxu0 %v737
    %7691 = vmatprep.subr.mxu0 %v752
    %7692 = vmatpush1.msra.mxu0 %v751
    %7693 = vmatprep.subr.mxu0 %v766
    %7694 = vmatpush1.msra.mxu0 %v765
    %7695 = vmatprep.subr.mxu0 %v780
    %7696 = vmatpush1.msra.mxu0 %v779
    %7697 = vmatprep.subr.mxu0 %v794
    %7698 = vmatpush1.msra.mxu0 %v793
    %7699 = vmatprep.subr.mxu0 %v808
    %7700 = vmatpush1.msra.mxu0 %v807
    %7701 = vmatprep.subr.mxu0 %v822
    %7702 = vmatpush1.msra.mxu0 %v821
    %7703 = vmatprep.subr.mxu0 %v836
    %7704 = vmatpush1.msra.mxu0 %v835
    %7705 = vmatprep.subr.mxu0 %v850
    %7706 = vmatpush1.msra.mxu0 %v849
    %7707 = vmatprep.subr.mxu0 %v864
    %7708 = vmatpush1.msra.mxu0 %v863
    %7709 = vmatprep.subr.mxu0 %v878
    %7710 = vmatpush1.msra.mxu0 %v877
    %7711 = vmatprep.subr.mxu0 %v892
    %7712 = vmatpush1.msra.mxu0 %v891
    %7713 = vmatprep.subr.mxu0 %v906
    %7714 = vmatpush1.msra.mxu0 %v905
    %7715 = vmatprep.subr.mxu0 %v920
    %7716 = vmatpush1.msra.mxu0 %v919
    %7717 = vmatprep.subr.mxu0 %v934
    %7718 = vmatpush1.msra.mxu0 %v933
    %7719 = vmatprep.subr.mxu0 %v948
    %7720 = vmatpush1.msra.mxu0 %v947
    %7721 = vmatprep.subr.mxu0 %v962
    %7722 = vmatpush1.msra.mxu0 %v961
    %7723 = vmatprep.subr.mxu0 %v976
    %7724 = vmatpush1.msra.mxu0 %v975
    %7725 = vmatprep.subr.mxu0 %v990
    %7726 = vmatpush1.msra.mxu0 %v989
    %7727 = vmatprep.subr.mxu0 %v1004
    %7728 = vmatpush1.msra.mxu0 %v1003
    %7729 = vmatprep.subr.mxu0 %v1018
    %7730 = vmatpush1.msra.mxu0 %v1017
    %7731 = vmatprep.subr.mxu0 %v1032
    %7732 = vmatpush1.msra.mxu0 %v1031
    %7733 = vmatprep.subr.mxu0 %v1046
    %7734 = vmatpush1.msra.mxu0 %v1045
    %7735 = vmatprep.subr.mxu0 %v1060
    %7736 = vmatpush1.msra.mxu0 %v1059
    %7737 = vmatprep.mubr.f32.mxu0 %v7386
    %7738 = vmatmul.mubr.f32.gmra.mrb[0].mxu0 %v7385
    %v7739 = vpop.f32.mrb[0].mxu0
    %v7740 = vadd.f32 %v7669, %v7739
    %v7741 = vpop.f32.mrb[0].mxu0
    %v7742 = vadd.f32 %v7671, %v7741
    %7743 = vdwg.mxu0
    %7744 = vmatprep.subr.mxu0 %v180
    %7745 = vmatpush1.msra.mxu0 %v179
    %7746 = vmatprep.subr.mxu0 %v194
    %7747 = vmatpush1.msra.mxu0 %v193
    %7748 = vmatprep.subr.mxu0 %v208
    %7749 = vmatpush1.msra.mxu0 %v207
    %7750 = vmatprep.subr.mxu0 %v222
    %7751 = vmatpush1.msra.mxu0 %v221
    %7752 = vmatprep.subr.mxu0 %v236
    %7753 = vmatpush1.msra.mxu0 %v235
    %7754 = vmatprep.subr.mxu0 %v250
    %7755 = vmatpush1.msra.mxu0 %v249
    %7756 = vmatprep.subr.mxu0 %v264
    %7757 = vmatpush1.msra.mxu0 %v263
    %7758 = vmatprep.subr.mxu0 %v278
    %7759 = vmatpush1.msra.mxu0 %v277
    %7760 = vmatprep.subr.mxu0 %v292
    %7761 = vmatpush1.msra.mxu0 %v291
    %7762 = vmatprep.subr.mxu0 %v306
    %7763 = vmatpush1.msra.mxu0 %v305
    %7764 = vmatprep.subr.mxu0 %v320
    %7765 = vmatpush1.msra.mxu0 %v319
    %7766 = vmatprep.subr.mxu0 %v334
    %7767 = vmatpush1.msra.mxu0 %v333
    %7768 = vmatprep.subr.mxu0 %v348
    %7769 = vmatpush1.msra.mxu0 %v347
    %7770 = vmatprep.subr.mxu0 %v362
    %7771 = vmatpush1.msra.mxu0 %v361
    %7772 = vmatprep.subr.mxu0 %v376
    %7773 = vmatpush1.msra.mxu0 %v375
    %7774 = vmatprep.subr.mxu0 %v390
    %7775 = vmatpush1.msra.mxu0 %v389
    %7776 = vmatprep.subr.mxu0 %v404
    %7777 = vmatpush1.msra.mxu0 %v403
    %7778 = vmatprep.subr.mxu0 %v418
    %7779 = vmatpush1.msra.mxu0 %v417
    %7780 = vmatprep.subr.mxu0 %v432
    %7781 = vmatpush1.msra.mxu0 %v431
    %7782 = vmatprep.subr.mxu0 %v446
    %7783 = vmatpush1.msra.mxu0 %v445
    %7784 = vmatprep.subr.mxu0 %v460
    %7785 = vmatpush1.msra.mxu0 %v459
    %7786 = vmatprep.subr.mxu0 %v474
    %7787 = vmatpush1.msra.mxu0 %v473
    %7788 = vmatprep.subr.mxu0 %v488
    %7789 = vmatpush1.msra.mxu0 %v487
    %7790 = vmatprep.subr.mxu0 %v502
    %7791 = vmatpush1.msra.mxu0 %v501
    %7792 = vmatprep.subr.mxu0 %v516
    %7793 = vmatpush1.msra.mxu0 %v515
    %7794 = vmatprep.subr.mxu0 %v530
    %7795 = vmatpush1.msra.mxu0 %v529
    %7796 = vmatprep.subr.mxu0 %v544
    %7797 = vmatpush1.msra.mxu0 %v543
    %7798 = vmatprep.subr.mxu0 %v558
    %7799 = vmatpush1.msra.mxu0 %v557
    %7800 = vmatprep.subr.mxu0 %v572
    %7801 = vmatpush1.msra.mxu0 %v571
    %7802 = vmatprep.subr.mxu0 %v586
    %7803 = vmatpush1.msra.mxu0 %v585
    %7804 = vmatprep.subr.mxu0 %v600
    %7805 = vmatpush1.msra.mxu0 %v599
    %7806 = vmatprep.subr.mxu0 %v614
    %7807 = vmatpush1.msra.mxu0 %v613
    %7808 = vmatprep.mubr.f32.mxu0 %v7457
    %7809 = vmatmul.mubr.f32.gmra.mrb[0].mxu0 %v7456
    %v7810 = vpop.f32.mrb[0].mxu0
    %v7811 = vadd.f32 0.0, %v7810
    %v7812 = vpop.f32.mrb[0].mxu0
    %v7813 = vadd.f32 0.0, %v7812
    %7814 = vdwg.mxu0
    %7815 = vmatprep.subr.mxu0 %v628
    %7816 = vmatpush1.msra.mxu0 %v627
    %7817 = vmatprep.subr.mxu0 %v642
    %7818 = vmatpush1.msra.mxu0 %v641
    %7819 = vmatprep.subr.mxu0 %v656
    %7820 = vmatpush1.msra.mxu0 %v655
    %7821 = vmatprep.subr.mxu0 %v670
    %7822 = vmatpush1.msra.mxu0 %v669
    %7823 = vmatprep.subr.mxu0 %v684
    %7824 = vmatpush1.msra.mxu0 %v683
    %7825 = vmatprep.subr.mxu0 %v698
    %7826 = vmatpush1.msra.mxu0 %v697
    %7827 = vmatprep.subr.mxu0 %v712
    %7828 = vmatpush1.msra.mxu0 %v711
    %7829 = vmatprep.subr.mxu0 %v726
    %7830 = vmatpush1.msra.mxu0 %v725
    %7831 = vmatprep.subr.mxu0 %v740
    %7832 = vmatpush1.msra.mxu0 %v739
    %7833 = vmatprep.subr.mxu0 %v754
    %7834 = vmatpush1.msra.mxu0 %v753
    %7835 = vmatprep.subr.mxu0 %v768
    %7836 = vmatpush1.msra.mxu0 %v767
    %7837 = vmatprep.subr.mxu0 %v782
    %7838 = vmatpush1.msra.mxu0 %v781
    %7839 = vmatprep.subr.mxu0 %v796
    %7840 = vmatpush1.msra.mxu0 %v795
    %7841 = vmatprep.subr.mxu0 %v810
    %7842 = vmatpush1.msra.mxu0 %v809
    %7843 = vmatprep.subr.mxu0 %v824
    %7844 = vmatpush1.msra.mxu0 %v823
    %7845 = vmatprep.subr.mxu0 %v838
    %7846 = vmatpush1.msra.mxu0 %v837
    %7847 = vmatprep.subr.mxu0 %v852
    %7848 = vmatpush1.msra.mxu0 %v851
    %7849 = vmatprep.subr.mxu0 %v866
    %7850 = vmatpush1.msra.mxu0 %v865
    %7851 = vmatprep.subr.mxu0 %v880
    %7852 = vmatpush1.msra.mxu0 %v879
    %7853 = vmatprep.subr.mxu0 %v894
    %7854 = vmatpush1.msra.mxu0 %v893
    %7855 = vmatprep.subr.mxu0 %v908
    %7856 = vmatpush1.msra.mxu0 %v907
    %7857 = vmatprep.subr.mxu0 %v922
    %7858 = vmatpush1.msra.mxu0 %v921
    %7859 = vmatprep.subr.mxu0 %v936
    %7860 = vmatpush1.msra.mxu0 %v935
    %7861 = vmatprep.subr.mxu0 %v950
    %7862 = vmatpush1.msra.mxu0 %v949
    %7863 = vmatprep.subr.mxu0 %v964
    %7864 = vmatpush1.msra.mxu0 %v963
    %7865 = vmatprep.subr.mxu0 %v978
    %7866 = vmatpush1.msra.mxu0 %v977
    %7867 = vmatprep.subr.mxu0 %v992
    %7868 = vmatpush1.msra.mxu0 %v991
    %7869 = vmatprep.subr.mxu0 %v1006
    %7870 = vmatpush1.msra.mxu0 %v1005
    %7871 = vmatprep.subr.mxu0 %v1020
    %7872 = vmatpush1.msra.mxu0 %v1019
    %7873 = vmatprep.subr.mxu0 %v1034
    %7874 = vmatpush1.msra.mxu0 %v1033
    %7875 = vmatprep.subr.mxu0 %v1048
    %7876 = vmatpush1.msra.mxu0 %v1047
    %7877 = vmatprep.subr.mxu0 %v1062
    %7878 = vmatpush1.msra.mxu0 %v1061
    %7879 = vmatprep.mubr.f32.mxu0 %v7386
    %7880 = vmatmul.mubr.f32.gmra.mrb[0].mxu0 %v7385
    %v7881 = vpop.f32.mrb[0].mxu0
    %v7882 = vadd.f32 %v7811, %v7881
    %v7883 = vpop.f32.mrb[0].mxu0
    %v7884 = vadd.f32 %v7813, %v7883
    %7885 = vdwg.mxu0
    %7886 = vmatprep.subr.mxu0 %v182
    %7887 = vmatpush1.msra.mxu0 %v181
    %7888 = vmatprep.subr.mxu0 %v196
    %7889 = vmatpush1.msra.mxu0 %v195
    %7890 = vmatprep.subr.mxu0 %v210
    %7891 = vmatpush1.msra.mxu0 %v209
    %7892 = vmatprep.subr.mxu0 %v224
    %7893 = vmatpush1.msra.mxu0 %v223
    %7894 = vmatprep.subr.mxu0 %v238
    %7895 = vmatpush1.msra.mxu0 %v237
    %7896 = vmatprep.subr.mxu0 %v252
    %7897 = vmatpush1.msra.mxu0 %v251
    %7898 = vmatprep.subr.mxu0 %v266
    %7899 = vmatpush1.msra.mxu0 %v265
    %7900 = vmatprep.subr.mxu0 %v280
    %7901 = vmatpush1.msra.mxu0 %v279
    %7902 = vmatprep.subr.mxu0 %v294
    %7903 = vmatpush1.msra.mxu0 %v293
    %7904 = vmatprep.subr.mxu0 %v308
    %7905 = vmatpush1.msra.mxu0 %v307
    %7906 = vmatprep.subr.mxu0 %v322
    %7907 = vmatpush1.msra.mxu0 %v321
    %7908 = vmatprep.subr.mxu0 %v336
    %7909 = vmatpush1.msra.mxu0 %v335
    %7910 = vmatprep.subr.mxu0 %v350
    %7911 = vmatpush1.msra.mxu0 %v349
    %7912 = vmatprep.subr.mxu0 %v364
    %7913 = vmatpush1.msra.mxu0 %v363
    %7914 = vmatprep.subr.mxu0 %v378
    %7915 = vmatpush1.msra.mxu0 %v377
    %7916 = vmatprep.subr.mxu0 %v392
    %7917 = vmatpush1.msra.mxu0 %v391
    %7918 = vmatprep.subr.mxu0 %v406
    %7919 = vmatpush1.msra.mxu0 %v405
    %7920 = vmatprep.subr.mxu0 %v420
    %7921 = vmatpush1.msra.mxu0 %v419
    %7922 = vmatprep.subr.mxu0 %v434
    %7923 = vmatpush1.msra.mxu0 %v433
    %7924 = vmatprep.subr.mxu0 %v448
    %7925 = vmatpush1.msra.mxu0 %v447
    %7926 = vmatprep.subr.mxu0 %v462
    %7927 = vmatpush1.msra.mxu0 %v461
    %7928 = vmatprep.subr.mxu0 %v476
    %7929 = vmatpush1.msra.mxu0 %v475
    %7930 = vmatprep.subr.mxu0 %v490
    %7931 = vmatpush1.msra.mxu0 %v489
    %7932 = vmatprep.subr.mxu0 %v504
    %7933 = vmatpush1.msra.mxu0 %v503
    %7934 = vmatprep.subr.mxu0 %v518
    %7935 = vmatpush1.msra.mxu0 %v517
    %7936 = vmatprep.subr.mxu0 %v532
    %7937 = vmatpush1.msra.mxu0 %v531
    %7938 = vmatprep.subr.mxu0 %v546
    %7939 = vmatpush1.msra.mxu0 %v545
    %7940 = vmatprep.subr.mxu0 %v560
    %7941 = vmatpush1.msra.mxu0 %v559
    %7942 = vmatprep.subr.mxu0 %v574
    %7943 = vmatpush1.msra.mxu0 %v573
    %7944 = vmatprep.subr.mxu0 %v588
    %7945 = vmatpush1.msra.mxu0 %v587
    %7946 = vmatprep.subr.mxu0 %v602
    %7947 = vmatpush1.msra.mxu0 %v601
    %7948 = vmatprep.subr.mxu0 %v616
    %7949 = vmatpush1.msra.mxu0 %v615
    %7950 = vmatprep.mubr.f32.mxu0 %v7457
    %7951 = vmatmul.mubr.f32.gmra.mrb[0].mxu0 %v7456
    %v7952 = vpop.f32.mrb[0].mxu0
    %v7953 = vadd.f32 0.0, %v7952
    %v7954 = vpop.f32.mrb[0].mxu0
    %v7955 = vadd.f32 0.0, %v7954
    %7956 = vdwg.mxu0
    %7957 = vmatprep.subr.mxu0 %v630
    %7958 = vmatpush1.msra.mxu0 %v629
    %7959 = vmatprep.subr.mxu0 %v644
    %7960 = vmatpush1.msra.mxu0 %v643
    %7961 = vmatprep.subr.mxu0 %v658
    %7962 = vmatpush1.msra.mxu0 %v657
    %7963 = vmatprep.subr.mxu0 %v672
    %7964 = vmatpush1.msra.mxu0 %v671
    %7965 = vmatprep.subr.mxu0 %v686
    %7966 = vmatpush1.msra.mxu0 %v685
    %7967 = vmatprep.subr.mxu0 %v700
    %7968 = vmatpush1.msra.mxu0 %v699
    %7969 = vmatprep.subr.mxu0 %v714
    %7970 = vmatpush1.msra.mxu0 %v713
    %7971 = vmatprep.subr.mxu0 %v728
    %7972 = vmatpush1.msra.mxu0 %v727
    %7973 = vmatprep.subr.mxu0 %v742
    %7974 = vmatpush1.msra.mxu0 %v741
    %7975 = vmatprep.subr.mxu0 %v756
    %7976 = vmatpush1.msra.mxu0 %v755
    %7977 = vmatprep.subr.mxu0 %v770
    %7978 = vmatpush1.msra.mxu0 %v769
    %7979 = vmatprep.subr.mxu0 %v784
    %7980 = vmatpush1.msra.mxu0 %v783
    %7981 = vmatprep.subr.mxu0 %v798
    %7982 = vmatpush1.msra.mxu0 %v797
    %7983 = vmatprep.subr.mxu0 %v812
    %7984 = vmatpush1.msra.mxu0 %v811
    %7985 = vmatprep.subr.mxu0 %v826
    %7986 = vmatpush1.msra.mxu0 %v825
    %7987 = vmatprep.subr.mxu0 %v840
    %7988 = vmatpush1.msra.mxu0 %v839
    %7989 = vmatprep.subr.mxu0 %v854
    %7990 = vmatpush1.msra.mxu0 %v853
    %7991 = vmatprep.subr.mxu0 %v868
    %7992 = vmatpush1.msra.mxu0 %v867
    %7993 = vmatprep.subr.mxu0 %v882
    %7994 = vmatpush1.msra.mxu0 %v881
    %7995 = vmatprep.subr.mxu0 %v896
    %7996 = vmatpush1.msra.mxu0 %v895
    %7997 = vmatprep.subr.mxu0 %v910
    %7998 = vmatpush1.msra.mxu0 %v909
    %7999 = vmatprep.subr.mxu0 %v924
    %8000 = vmatpush1.msra.mxu0 %v923
    %8001 = vmatprep.subr.mxu0 %v938
    %8002 = vmatpush1.msra.mxu0 %v937
    %8003 = vmatprep.subr.mxu0 %v952
    %8004 = vmatpush1.msra.mxu0 %v951
    %8005 = vmatprep.subr.mxu0 %v966
    %8006 = vmatpush1.msra.mxu0 %v965
    %8007 = vmatprep.subr.mxu0 %v980
    %8008 = vmatpush1.msra.mxu0 %v979
    %8009 = vmatprep.subr.mxu0 %v994
    %8010 = vmatpush1.msra.mxu0 %v993
    %8011 = vmatprep.subr.mxu0 %v1008
    %8012 = vmatpush1.msra.mxu0 %v1007
    %8013 = vmatprep.subr.mxu0 %v1022
    %8014 = vmatpush1.msra.mxu0 %v1021
    %8015 = vmatprep.subr.mxu0 %v1036
    %8016 = vmatpush1.msra.mxu0 %v1035
    %8017 = vmatprep.subr.mxu0 %v1050
    %8018 = vmatpush1.msra.mxu0 %v1049
    %8019 = vmatprep.subr.mxu0 %v1064
    %8020 = vmatpush1.msra.mxu0 %v1063
    %8021 = vmatprep.mubr.f32.mxu0 %v7386
    %8022 = vmatmul.mubr.f32.gmra.mrb[0].mxu0 %v7385
    %v8023 = vpop.f32.mrb[0].mxu0
    %v8024 = vadd.f32 %v7953, %v8023
    %v8025 = vpop.f32.mrb[0].mxu0
    %v8026 = vadd.f32 %v7955, %v8025
    %8027 = vdwg.mxu0
    %8028 = vmatprep.subr.mxu0 %v184
    %8029 = vmatpush1.msra.mxu0 %v183
    %8030 = vmatprep.subr.mxu0 %v198
    %8031 = vmatpush1.msra.mxu0 %v197
    %8032 = vmatprep.subr.mxu0 %v212
    %8033 = vmatpush1.msra.mxu0 %v211
    %8034 = vmatprep.subr.mxu0 %v226
    %8035 = vmatpush1.msra.mxu0 %v225
    %8036 = vmatprep.subr.mxu0 %v240
    %8037 = vmatpush1.msra.mxu0 %v239
    %8038 = vmatprep.subr.mxu0 %v254
    %8039 = vmatpush1.msra.mxu0 %v253
    %8040 = vmatprep.subr.mxu0 %v268
    %8041 = vmatpush1.msra.mxu0 %v267
    %8042 = vmatprep.subr.mxu0 %v282
    %8043 = vmatpush1.msra.mxu0 %v281
    %8044 = vmatprep.subr.mxu0 %v296
    %8045 = vmatpush1.msra.mxu0 %v295
    %8046 = vmatprep.subr.mxu0 %v310
    %8047 = vmatpush1.msra.mxu0 %v309
    %8048 = vmatprep.subr.mxu0 %v324
    %8049 = vmatpush1.msra.mxu0 %v323
    %8050 = vmatprep.subr.mxu0 %v338
    %8051 = vmatpush1.msra.mxu0 %v337
    %8052 = vmatprep.subr.mxu0 %v352
    %8053 = vmatpush1.msra.mxu0 %v351
    %8054 = vmatprep.subr.mxu0 %v366
    %8055 = vmatpush1.msra.mxu0 %v365
    %8056 = vmatprep.subr.mxu0 %v380
    %8057 = vmatpush1.msra.mxu0 %v379
    %8058 = vmatprep.subr.mxu0 %v394
    %8059 = vmatpush1.msra.mxu0 %v393
    %8060 = vmatprep.subr.mxu0 %v408
    %8061 = vmatpush1.msra.mxu0 %v407
    %8062 = vmatprep.subr.mxu0 %v422
    %8063 = vmatpush1.msra.mxu0 %v421
    %8064 = vmatprep.subr.mxu0 %v436
    %8065 = vmatpush1.msra.mxu0 %v435
    %8066 = vmatprep.subr.mxu0 %v450
    %8067 = vmatpush1.msra.mxu0 %v449
    %8068 = vmatprep.subr.mxu0 %v464
    %8069 = vmatpush1.msra.mxu0 %v463
    %8070 = vmatprep.subr.mxu0 %v478
    %8071 = vmatpush1.msra.mxu0 %v477
    %8072 = vmatprep.subr.mxu0 %v492
    %8073 = vmatpush1.msra.mxu0 %v491
    %8074 = vmatprep.subr.mxu0 %v506
    %8075 = vmatpush1.msra.mxu0 %v505
    %8076 = vmatprep.subr.mxu0 %v520
    %8077 = vmatpush1.msra.mxu0 %v519
    %8078 = vmatprep.subr.mxu0 %v534
    %8079 = vmatpush1.msra.mxu0 %v533
    %8080 = vmatprep.subr.mxu0 %v548
    %8081 = vmatpush1.msra.mxu0 %v547
    %8082 = vmatprep.subr.mxu0 %v562
    %8083 = vmatpush1.msra.mxu0 %v561
    %8084 = vmatprep.subr.mxu0 %v576
    %8085 = vmatpush1.msra.mxu0 %v575
    %8086 = vmatprep.subr.mxu0 %v590
    %8087 = vmatpush1.msra.mxu0 %v589
    %8088 = vmatprep.subr.mxu0 %v604
    %8089 = vmatpush1.msra.mxu0 %v603
    %8090 = vmatprep.subr.mxu0 %v618
    %8091 = vmatpush1.msra.mxu0 %v617
    %8092 = vmatprep.mubr.f32.mxu0 %v7457
    %8093 = vmatmul.mubr.f32.gmra.mrb[0].mxu0 %v7456
    %v8094 = vpop.f32.mrb[0].mxu0
    %v8095 = vadd.f32 0.0, %v8094
    %v8096 = vpop.f32.mrb[0].mxu0
    %v8097 = vadd.f32 0.0, %v8096
    %8098 = vdwg.mxu0
    %8099 = vmatprep.subr.mxu0 %v632
    %8100 = vmatpush1.msra.mxu0 %v631
    %8101 = vmatprep.subr.mxu0 %v646
    %8102 = vmatpush1.msra.mxu0 %v645
    %8103 = vmatprep.subr.mxu0 %v660
    %8104 = vmatpush1.msra.mxu0 %v659
    %8105 = vmatprep.subr.mxu0 %v674
    %8106 = vmatpush1.msra.mxu0 %v673
    %8107 = vmatprep.subr.mxu0 %v688
    %8108 = vmatpush1.msra.mxu0 %v687
    %8109 = vmatprep.subr.mxu0 %v702
    %8110 = vmatpush1.msra.mxu0 %v701
    %8111 = vmatprep.subr.mxu0 %v716
    %8112 = vmatpush1.msra.mxu0 %v715
    %8113 = vmatprep.subr.mxu0 %v730
    %8114 = vmatpush1.msra.mxu0 %v729
    %8115 = vmatprep.subr.mxu0 %v744
    %8116 = vmatpush1.msra.mxu0 %v743
    %8117 = vmatprep.subr.mxu0 %v758
    %8118 = vmatpush1.msra.mxu0 %v757
    %8119 = vmatprep.subr.mxu0 %v772
    %8120 = vmatpush1.msra.mxu0 %v771
    %8121 = vmatprep.subr.mxu0 %v786
    %8122 = vmatpush1.msra.mxu0 %v785
    %8123 = vmatprep.subr.mxu0 %v800
    %8124 = vmatpush1.msra.mxu0 %v799
    %8125 = vmatprep.subr.mxu0 %v814
    %8126 = vmatpush1.msra.mxu0 %v813
    %8127 = vmatprep.subr.mxu0 %v828
    %8128 = vmatpush1.msra.mxu0 %v827
    %8129 = vmatprep.subr.mxu0 %v842
    %8130 = vmatpush1.msra.mxu0 %v841
    %8131 = vmatprep.subr.mxu0 %v856
    %8132 = vmatpush1.msra.mxu0 %v855
    %8133 = vmatprep.subr.mxu0 %v870
    %8134 = vmatpush1.msra.mxu0 %v869
    %8135 = vmatprep.subr.mxu0 %v884
    %8136 = vmatpush1.msra.mxu0 %v883
    %8137 = vmatprep.subr.mxu0 %v898
    %8138 = vmatpush1.msra.mxu0 %v897
    %8139 = vmatprep.subr.mxu0 %v912
    %8140 = vmatpush1.msra.mxu0 %v911
    %8141 = vmatprep.subr.mxu0 %v926
    %8142 = vmatpush1.msra.mxu0 %v925
    %8143 = vmatprep.subr.mxu0 %v940
    %8144 = vmatpush1.msra.mxu0 %v939
    %8145 = vmatprep.subr.mxu0 %v954
    %8146 = vmatpush1.msra.mxu0 %v953
    %8147 = vmatprep.subr.mxu0 %v968
    %8148 = vmatpush1.msra.mxu0 %v967
    %8149 = vmatprep.subr.mxu0 %v982
    %8150 = vmatpush1.msra.mxu0 %v981
    %8151 = vmatprep.subr.mxu0 %v996
    %8152 = vmatpush1.msra.mxu0 %v995
    %8153 = vmatprep.subr.mxu0 %v1010
    %8154 = vmatpush1.msra.mxu0 %v1009
    %8155 = vmatprep.subr.mxu0 %v1024
    %8156 = vmatpush1.msra.mxu0 %v1023
    %8157 = vmatprep.subr.mxu0 %v1038
    %8158 = vmatpush1.msra.mxu0 %v1037
    %8159 = vmatprep.subr.mxu0 %v1052
    %8160 = vmatpush1.msra.mxu0 %v1051
    %8161 = vmatprep.subr.mxu0 %v1066
    %8162 = vmatpush1.msra.mxu0 %v1065
    %8163 = vmatprep.mubr.f32.mxu0 %v7386
    %8164 = vmatmul.mubr.f32.gmra.mrb[0].mxu0 %v7385
    %v8165 = vpop.f32.mrb[0].mxu0
    %v8166 = vadd.f32 %v8095, %v8165
    %v8167 = vpop.f32.mrb[0].mxu0
    %v8168 = vadd.f32 %v8097, %v8167
    %8169 = vdwg.mxu0
    %8170 = vmatprep.subr.mxu0 %v186
    %8171 = vmatpush1.msra.mxu0 %v185
    %8172 = vmatprep.subr.mxu0 %v200
    %8173 = vmatpush1.msra.mxu0 %v199
    %8174 = vmatprep.subr.mxu0 %v214
    %8175 = vmatpush1.msra.mxu0 %v213
    %8176 = vmatprep.subr.mxu0 %v228
    %8177 = vmatpush1.msra.mxu0 %v227
    %8178 = vmatprep.subr.mxu0 %v242
    %8179 = vmatpush1.msra.mxu0 %v241
    %8180 = vmatprep.subr.mxu0 %v256
    %8181 = vmatpush1.msra.mxu0 %v255
    %8182 = vmatprep.subr.mxu0 %v270
    %8183 = vmatpush1.msra.mxu0 %v269
    %8184 = vmatprep.subr.mxu0 %v284
    %8185 = vmatpush1.msra.mxu0 %v283
    %8186 = vmatprep.subr.mxu0 %v298
    %8187 = vmatpush1.msra.mxu0 %v297
    %8188 = vmatprep.subr.mxu0 %v312
    %8189 = vmatpush1.msra.mxu0 %v311
    %8190 = vmatprep.subr.mxu0 %v326
    %8191 = vmatpush1.msra.mxu0 %v325
    %8192 = vmatprep.subr.mxu0 %v340
    %8193 = vmatpush1.msra.mxu0 %v339
    %8194 = vmatprep.subr.mxu0 %v354
    %8195 = vmatpush1.msra.mxu0 %v353
    %8196 = vmatprep.subr.mxu0 %v368
    %8197 = vmatpush1.msra.mxu0 %v367
    %8198 = vmatprep.subr.mxu0 %v382
    %8199 = vmatpush1.msra.mxu0 %v381
    %8200 = vmatprep.subr.mxu0 %v396
    %8201 = vmatpush1.msra.mxu0 %v395
    %8202 = vmatprep.subr.mxu0 %v410
    %8203 = vmatpush1.msra.mxu0 %v409
    %8204 = vmatprep.subr.mxu0 %v424
    %8205 = vmatpush1.msra.mxu0 %v423
    %8206 = vmatprep.subr.mxu0 %v438
    %8207 = vmatpush1.msra.mxu0 %v437
    %8208 = vmatprep.subr.mxu0 %v452
    %8209 = vmatpush1.msra.mxu0 %v451
    %8210 = vmatprep.subr.mxu0 %v466
    %8211 = vmatpush1.msra.mxu0 %v465
    %8212 = vmatprep.subr.mxu0 %v480
    %8213 = vmatpush1.msra.mxu0 %v479
    %8214 = vmatprep.subr.mxu0 %v494
    %8215 = vmatpush1.msra.mxu0 %v493
    %8216 = vmatprep.subr.mxu0 %v508
    %8217 = vmatpush1.msra.mxu0 %v507
    %8218 = vmatprep.subr.mxu0 %v522
    %8219 = vmatpush1.msra.mxu0 %v521
    %8220 = vmatprep.subr.mxu0 %v536
    %8221 = vmatpush1.msra.mxu0 %v535
    %8222 = vmatprep.subr.mxu0 %v550
    %8223 = vmatpush1.msra.mxu0 %v549
    %8224 = vmatprep.subr.mxu0 %v564
    %8225 = vmatpush1.msra.mxu0 %v563
    %8226 = vmatprep.subr.mxu0 %v578
    %8227 = vmatpush1.msra.mxu0 %v577
    %8228 = vmatprep.subr.mxu0 %v592
    %8229 = vmatpush1.msra.mxu0 %v591
    %8230 = vmatprep.subr.mxu0 %v606
    %8231 = vmatpush1.msra.mxu0 %v605
    %8232 = vmatprep.subr.mxu0 %v620
    %8233 = vmatpush1.msra.mxu0 %v619
    %8234 = vmatprep.mubr.f32.mxu0 %v7457
    %8235 = vmatmul.mubr.f32.gmra.mrb[0].mxu0 %v7456
    %v8236 = vpop.f32.mrb[0].mxu0
    %v8237 = vadd.f32 0.0, %v8236
    %v8238 = vpop.f32.mrb[0].mxu0
    %v8239 = vadd.f32 0.0, %v8238
    %8240 = vdwg.mxu0
    %8241 = vmatprep.subr.mxu0 %v634
    %8242 = vmatpush1.msra.mxu0 %v633
    %8243 = vmatprep.subr.mxu0 %v648
    %8244 = vmatpush1.msra.mxu0 %v647
    %8245 = vmatprep.subr.mxu0 %v662
    %8246 = vmatpush1.msra.mxu0 %v661
    %8247 = vmatprep.subr.mxu0 %v676
    %8248 = vmatpush1.msra.mxu0 %v675
    %8249 = vmatprep.subr.mxu0 %v690
    %8250 = vmatpush1.msra.mxu0 %v689
    %8251 = vmatprep.subr.mxu0 %v704
    %8252 = vmatpush1.msra.mxu0 %v703
    %8253 = vmatprep.subr.mxu0 %v718
    %8254 = vmatpush1.msra.mxu0 %v717
    %8255 = vmatprep.subr.mxu0 %v732
    %8256 = vmatpush1.msra.mxu0 %v731
    %8257 = vmatprep.subr.mxu0 %v746
    %8258 = vmatpush1.msra.mxu0 %v745
    %8259 = vmatprep.subr.mxu0 %v760
    %8260 = vmatpush1.msra.mxu0 %v759
    %8261 = vmatprep.subr.mxu0 %v774
    %8262 = vmatpush1.msra.mxu0 %v773
    %8263 = vmatprep.subr.mxu0 %v788
    %8264 = vmatpush1.msra.mxu0 %v787
    %8265 = vmatprep.subr.mxu0 %v802
    %8266 = vmatpush1.msra.mxu0 %v801
    %8267 = vmatprep.subr.mxu0 %v816
    %8268 = vmatpush1.msra.mxu0 %v815
    %8269 = vmatprep.subr.mxu0 %v830
    %8270 = vmatpush1.msra.mxu0 %v829
    %8271 = vmatprep.subr.mxu0 %v844
    %8272 = vmatpush1.msra.mxu0 %v843
    %8273 = vmatprep.subr.mxu0 %v858
    %8274 = vmatpush1.msra.mxu0 %v857
    %8275 = vmatprep.subr.mxu0 %v872
    %8276 = vmatpush1.msra.mxu0 %v871
    %8277 = vmatprep.subr.mxu0 %v886
    %8278 = vmatpush1.msra.mxu0 %v885
    %8279 = vmatprep.subr.mxu0 %v900
    %8280 = vmatpush1.msra.mxu0 %v899
    %8281 = vmatprep.subr.mxu0 %v914
    %8282 = vmatpush1.msra.mxu0 %v913
    %8283 = vmatprep.subr.mxu0 %v928
    %8284 = vmatpush1.msra.mxu0 %v927
    %8285 = vmatprep.subr.mxu0 %v942
    %8286 = vmatpush1.msra.mxu0 %v941
    %8287 = vmatprep.subr.mxu0 %v956
    %8288 = vmatpush1.msra.mxu0 %v955
    %8289 = vmatprep.subr.mxu0 %v970
    %8290 = vmatpush1.msra.mxu0 %v969
    %8291 = vmatprep.subr.mxu0 %v984
    %8292 = vmatpush1.msra.mxu0 %v983
    %8293 = vmatprep.subr.mxu0 %v998
    %8294 = vmatpush1.msra.mxu0 %v997
    %8295 = vmatprep.subr.mxu0 %v1012
    %8296 = vmatpush1.msra.mxu0 %v1011
    %8297 = vmatprep.subr.mxu0 %v1026
    %8298 = vmatpush1.msra.mxu0 %v1025
    %8299 = vmatprep.subr.mxu0 %v1040
    %8300 = vmatpush1.msra.mxu0 %v1039
    %8301 = vmatprep.subr.mxu0 %v1054
    %8302 = vmatpush1.msra.mxu0 %v1053
    %8303 = vmatprep.subr.mxu0 %v1068
    %8304 = vmatpush1.msra.mxu0 %v1067
    %8305 = vmatprep.mubr.f32.mxu0 %v7386
    %8306 = vmatmul.mubr.f32.gmra.mrb[0].mxu0 %v7385
    %v8307 = vpop.f32.mrb[0].mxu0
    %v8308 = vadd.f32 %v8237, %v8307
    %v8309 = vpop.f32.mrb[0].mxu0
    %v8310 = vadd.f32 %v8239, %v8309
    %8311 = vdwg.mxu0
    %8312 = vmatprep.subr.mxu0 %v188
    %8313 = vmatpush1.msra.mxu0 %v187
    %8314 = vmatprep.subr.mxu0 %v202
    %8315 = vmatpush1.msra.mxu0 %v201
    %8316 = vmatprep.subr.mxu0 %v216
    %8317 = vmatpush1.msra.mxu0 %v215
    %8318 = vmatprep.subr.mxu0 %v230
    %8319 = vmatpush1.msra.mxu0 %v229
    %8320 = vmatprep.subr.mxu0 %v244
    %8321 = vmatpush1.msra.mxu0 %v243
    %8322 = vmatprep.subr.mxu0 %v258
    %8323 = vmatpush1.msra.mxu0 %v257
    %8324 = vmatprep.subr.mxu0 %v272
    %8325 = vmatpush1.msra.mxu0 %v271
    %8326 = vmatprep.subr.mxu0 %v286
    %8327 = vmatpush1.msra.mxu0 %v285
    %8328 = vmatprep.subr.mxu0 %v300
    %8329 = vmatpush1.msra.mxu0 %v299
    %8330 = vmatprep.subr.mxu0 %v314
    %8331 = vmatpush1.msra.mxu0 %v313
    %8332 = vmatprep.subr.mxu0 %v328
    %8333 = vmatpush1.msra.mxu0 %v327
    %8334 = vmatprep.subr.mxu0 %v342
    %8335 = vmatpush1.msra.mxu0 %v341
    %8336 = vmatprep.subr.mxu0 %v356
    %8337 = vmatpush1.msra.mxu0 %v355
    %8338 = vmatprep.subr.mxu0 %v370
    %8339 = vmatpush1.msra.mxu0 %v369
    %8340 = vmatprep.subr.mxu0 %v384
    %8341 = vmatpush1.msra.mxu0 %v383
    %8342 = vmatprep.subr.mxu0 %v398
    %8343 = vmatpush1.msra.mxu0 %v397
    %8344 = vmatprep.subr.mxu0 %v412
    %8345 = vmatpush1.msra.mxu0 %v411
    %8346 = vmatprep.subr.mxu0 %v426
    %8347 = vmatpush1.msra.mxu0 %v425
    %8348 = vmatprep.subr.mxu0 %v440
    %8349 = vmatpush1.msra.mxu0 %v439
    %8350 = vmatprep.subr.mxu0 %v454
    %8351 = vmatpush1.msra.mxu0 %v453
    %8352 = vmatprep.subr.mxu0 %v468
    %8353 = vmatpush1.msra.mxu0 %v467
    %8354 = vmatprep.subr.mxu0 %v482
    %8355 = vmatpush1.msra.mxu0 %v481
    %8356 = vmatprep.subr.mxu0 %v496
    %8357 = vmatpush1.msra.mxu0 %v495
    %8358 = vmatprep.subr.mxu0 %v510
    %8359 = vmatpush1.msra.mxu0 %v509
    %8360 = vmatprep.subr.mxu0 %v524
    %8361 = vmatpush1.msra.mxu0 %v523
    %8362 = vmatprep.subr.mxu0 %v538
    %8363 = vmatpush1.msra.mxu0 %v537
    %8364 = vmatprep.subr.mxu0 %v552
    %8365 = vmatpush1.msra.mxu0 %v551
    %8366 = vmatprep.subr.mxu0 %v566
    %8367 = vmatpush1.msra.mxu0 %v565
    %8368 = vmatprep.subr.mxu0 %v580
    %8369 = vmatpush1.msra.mxu0 %v579
    %8370 = vmatprep.subr.mxu0 %v594
    %8371 = vmatpush1.msra.mxu0 %v593
    %8372 = vmatprep.subr.mxu0 %v608
    %8373 = vmatpush1.msra.mxu0 %v607
    %8374 = vmatprep.subr.mxu0 %v622
    %8375 = vmatpush1.msra.mxu0 %v621
    %8376 = vmatprep.mubr.f32.mxu0 %v7457
    %8377 = vmatmul.mubr.f32.gmra.mrb[0].mxu0 %v7456
    %v8378 = vpop.f32.mrb[0].mxu0
    %v8379 = vadd.f32 0.0, %v8378
    %v8380 = vpop.f32.mrb[0].mxu0
    %v8381 = vadd.f32 0.0, %v8380
    %8382 = vdwg.mxu0
    %8383 = vmatprep.subr.mxu0 %v636
    %8384 = vmatpush1.msra.mxu0 %v635
    %8385 = vmatprep.subr.mxu0 %v650
    %8386 = vmatpush1.msra.mxu0 %v649
    %8387 = vmatprep.subr.mxu0 %v664
    %8388 = vmatpush1.msra.mxu0 %v663
    %8389 = vmatprep.subr.mxu0 %v678
    %8390 = vmatpush1.msra.mxu0 %v677
    %8391 = vmatprep.subr.mxu0 %v692
    %8392 = vmatpush1.msra.mxu0 %v691
    %8393 = vmatprep.subr.mxu0 %v706
    %8394 = vmatpush1.msra.mxu0 %v705
    %8395 = vmatprep.subr.mxu0 %v720
    %8396 = vmatpush1.msra.mxu0 %v719
    %8397 = vmatprep.subr.mxu0 %v734
    %8398 = vmatpush1.msra.mxu0 %v733
    %8399 = vmatprep.subr.mxu0 %v748
    %8400 = vmatpush1.msra.mxu0 %v747
    %8401 = vmatprep.subr.mxu0 %v762
    %8402 = vmatpush1.msra.mxu0 %v761
    %8403 = vmatprep.subr.mxu0 %v776
    %8404 = vmatpush1.msra.mxu0 %v775
    %8405 = vmatprep.subr.mxu0 %v790
    %8406 = vmatpush1.msra.mxu0 %v789
    %8407 = vmatprep.subr.mxu0 %v804
    %8408 = vmatpush1.msra.mxu0 %v803
    %8409 = vmatprep.subr.mxu0 %v818
    %8410 = vmatpush1.msra.mxu0 %v817
    %8411 = vmatprep.subr.mxu0 %v832
    %8412 = vmatpush1.msra.mxu0 %v831
    %8413 = vmatprep.subr.mxu0 %v846
    %8414 = vmatpush1.msra.mxu0 %v845
    %8415 = vmatprep.subr.mxu0 %v860
    %8416 = vmatpush1.msra.mxu0 %v859
    %8417 = vmatprep.subr.mxu0 %v874
    %8418 = vmatpush1.msra.mxu0 %v873
    %8419 = vmatprep.subr.mxu0 %v888
    %8420 = vmatpush1.msra.mxu0 %v887
    %8421 = vmatprep.subr.mxu0 %v902
    %8422 = vmatpush1.msra.mxu0 %v901
    %8423 = vmatprep.subr.mxu0 %v916
    %8424 = vmatpush1.msra.mxu0 %v915
    %8425 = vmatprep.subr.mxu0 %v930
    %8426 = vmatpush1.msra.mxu0 %v929
    %8427 = vmatprep.subr.mxu0 %v944
    %8428 = vmatpush1.msra.mxu0 %v943
    %8429 = vmatprep.subr.mxu0 %v958
    %8430 = vmatpush1.msra.mxu0 %v957
    %8431 = vmatprep.subr.mxu0 %v972
    %8432 = vmatpush1.msra.mxu0 %v971
    %8433 = vmatprep.subr.mxu0 %v986
    %8434 = vmatpush1.msra.mxu0 %v985
    %8435 = vmatprep.subr.mxu0 %v1000
    %8436 = vmatpush1.msra.mxu0 %v999
    %8437 = vmatprep.subr.mxu0 %v1014
    %8438 = vmatpush1.msra.mxu0 %v1013
    %8439 = vmatprep.subr.mxu0 %v1028
    %8440 = vmatpush1.msra.mxu0 %v1027
    %8441 = vmatprep.subr.mxu0 %v1042
    %8442 = vmatpush1.msra.mxu0 %v1041
    %8443 = vmatprep.subr.mxu0 %v1056
    %8444 = vmatpush1.msra.mxu0 %v1055
    %8445 = vmatprep.subr.mxu0 %v1070
    %8446 = vmatpush1.msra.mxu0 %v1069
    %8447 = vmatprep.mubr.f32.mxu0 %v7386
    %8448 = vmatmul.mubr.f32.gmra.mrb[0].mxu0 %v7385
    %v8449 = vpop.f32.mrb[0].mxu0
    %v8450 = vadd.f32 %v8379, %v8449
    %v8451 = vpop.f32.mrb[0].mxu0
    %v8452 = vadd.f32 %v8381, %v8451
    %8453 = vdwg.mxu0
    %v8454 = vadd.f32 %v8024, %v1076
    %v8455 = vadd.f32 %v8026, %v1080
    %v8456 = vadd.f32 %v8166, %v1084
    %v8457 = vadd.f32 %v8168, %v1088
    %v8458 = vadd.f32 %v8308, %v1092
    %v8459 = vadd.f32 %v8310, %v1096
    %v8460 = vadd.f32 %v8450, %v1100
    %v8461 = vadd.f32 %v8452, %v1104
    %v8462 = vxor.u32 %v8454, 2147483648
    %v8463 = vxor.u32 %v8455, 2147483648
    %v8464 = vmul.f32 %v8462, 1.442695
    %v8465 = vpow.pop %v8464
    %v8466 = vmul.f32 %v8463, 1.442695
    %v8467 = vpow.pop %v8466
    %v8468 = vadd.f32 %v8465, 1.0
    %v8469 = vadd.f32 %v8467, 1.0
    %v8470 = vrcp.pop %v8468
    %v8471 = vmul.f32 1.0, %v8470
    %v8472 = vrcp.pop %v8469
    %v8473 = vmul.f32 1.0, %v8472
    %v8474 = vxor.u32 %v8456, 2147483648
    %v8475 = vxor.u32 %v8457, 2147483648
    %v8476 = vmul.f32 %v8474, 1.442695
    %v8477 = vpow.pop %v8476
    %v8478 = vmul.f32 %v8475, 1.442695
    %v8479 = vpow.pop %v8478
    %v8480 = vadd.f32 %v8477, 1.0
    %v8481 = vadd.f32 %v8479, 1.0
    %v8482 = vrcp.pop %v8480
    %v8483 = vmul.f32 1.0, %v8482
    %v8484 = vrcp.pop %v8481
    %v8485 = vmul.f32 1.0, %v8484
    %v8486 = vadd.f32 %v8460, %v1118
    %v8487 = vadd.f32 %v8461, %v1122
    %v8488 = vmul.f32 %v8471, %v8486
    %v8489 = vmul.f32 %v8473, %v8487
    %v8490 = vadd.f32 %v8458, %v8488
    %v8491 = vadd.f32 %v8459, %v8489
    %v8492 = vtanh.pop %v8490
    %v8493 = vtanh.pop %v8491
    %v8494 = vsub.f32 1.0, %v8483
    %v8495 = vsub.f32 1.0, %v8485
    %v8496 = vmul.f32 %v8494, %v8492
    %v8497 = vmul.f32 %v8495, %v8493
    %v8498 = vmul.f32 %v8483, %v7385
    %v8499 = vmul.f32 %v8485, %v7386
    %v8500 = vadd.f32 %v8496, %v8498
    %v8501 = vadd.f32 %v8497, %v8499
    %s8502 = scalar_lea.vmem [#allocation2], 72
    %v8503 = vld [vmem:[%s8502] sm:$0xff]
    %v8504 = vld [vmem:[%s8502 + $0x8] sm:$0xf]
    %v8507 = vcombine.low %v7598, %v7600
    %v8509 = vunpack.c.l.s4 1983009808
    %v8510 = vunpack.c.0.s8 %v8509
    %v8511 = vlaneseq
    %v8512 = vshrl.u32 %v8511, 7
    %v8513 = vsub.s32 %v8510, %v8512
    %v8514 = vrot.slane %v8507, %v8513
    %v8516 = vadd.f32 %v8503, %v8514
    %v8517 = vxor.u32 %v8516, 2147483648
    %v8518 = vmul.f32 %v8517, 1.442695
    %v8519 = vpow.pop %v8518
    %v8520 = vadd.f32 %v8519, 1.0
    %v8521 = vrcp.pop %v8520
    %v8522 = vmul.f32 1.0, %v8521
    %v8524 = vrot.slane %v8503, 4
    %v8528 = vcombine.low %v7740, %v7742
    %v8530 = vunpack.c.l.s4 1983009808
    %v8531 = vunpack.c.0.s8 %v8530
    %v8532 = vlaneseq
    %v8533 = vshrl.u32 %v8532, 7
    %v8534 = vsub.s32 %v8531, %v8533
    %v8535 = vrot.slane %v8528, %v8534
    %v8537 = vadd.f32 %v8524, %v8535
    %v8538 = vxor.u32 %v8537, 2147483648
    %v8539 = vmul.f32 %v8538, 1.442695
    %v8540 = vpow.pop %v8539
    %v8541 = vadd.f32 %v8540, 1.0
    %v8542 = vrcp.pop %v8541
    %v8543 = vmul.f32 1.0, %v8542
    %v8544 = vadd.f32 %v7882, %v168
    %v8545 = vadd.f32 %v7884, %v172
    %v8548 = vcombine.low %v8544, %v8545
    %v8550 = vunpack.c.l.s4 1983009808
    %v8551 = vunpack.c.0.s8 %v8550
    %v8552 = vlaneseq
    %v8553 = vshrl.u32 %v8552, 7
    %v8554 = vsub.s32 %v8551, %v8553
    %v8555 = vrot.slane %v8548, %v8554
    %v8557 = vmul.f32 %v8522, %v8555
    %v8558 = vadd.f32 %v8504, %v8557
    %v8559 = vtanh.pop %v8558
    %v8560 = vsub.f32 1.0, %v8543
    %v8561 = vmul.f32 %v8560, %v8559
    %v8562 = vmul.f32 %v8543, %v7448
    %v8563 = vadd.f32 %v8561, %v8562
    %v8566 = vunpack.c.l.s4 1983009808
    %v8567 = vunpack.c.0.s8 %v8566
    %v8568 = vlaneseq
    %v8569 = vshrl.u32 %v8568, 7
    %v8570 = vsub.s32 %v8567, %v8569
    %v8571 = vrot.slane %v8563, %v8570
    %v8572 = vcombine.high %v8571, %v8571
    %8575 = vmatprep.subr.mxu0 %v176
    %8576 = vmatpush1.msra.mxu0 %v175
    %8577 = vmatprep.subr.mxu0 %v190
    %8578 = vmatpush1.msra.mxu0 %v189
    %8579 = vmatprep.subr.mxu0 %v204
    %8580 = vmatpush1.msra.mxu0 %v203
    %8581 = vmatprep.subr.mxu0 %v218
    %8582 = vmatpush1.msra.mxu0 %v217
    %8583 = vmatprep.subr.mxu0 %v232
    %8584 = vmatpush1.msra.mxu0 %v231
    %8585 = vmatprep.subr.mxu0 %v246
    %8586 = vmatpush1.msra.mxu0 %v245
    %8587 = vmatprep.subr.mxu0 %v260
    %8588 = vmatpush1.msra.mxu0 %v259
    %8589 = vmatprep.subr.mxu0 %v274
    %8590 = vmatpush1.msra.mxu0 %v273
    %8591 = vmatprep.subr.mxu0 %v288
    %8592 = vmatpush1.msra.mxu0 %v287
    %8593 = vmatprep.subr.mxu0 %v302
    %8594 = vmatpush1.msra.mxu0 %v301
    %8595 = vmatprep.subr.mxu0 %v316
    %8596 = vmatpush1.msra.mxu0 %v315
    %8597 = vmatprep.subr.mxu0 %v330
    %8598 = vmatpush1.msra.mxu0 %v329
    %8599 = vmatprep.subr.mxu0 %v344
    %8600 = vmatpush1.msra.mxu0 %v343
    %8601 = vmatprep.subr.mxu0 %v358
    %8602 = vmatpush1.msra.mxu0 %v357
    %8603 = vmatprep.subr.mxu0 %v372
    %8604 = vmatpush1.msra.mxu0 %v371
    %8605 = vmatprep.subr.mxu0 %v386
    %8606 = vmatpush1.msra.mxu0 %v385
    %8607 = vmatprep.subr.mxu0 %v400
    %8608 = vmatpush1.msra.mxu0 %v399
    %8609 = vmatprep.subr.mxu0 %v414
    %8610 = vmatpush1.msra.mxu0 %v413
    %8611 = vmatprep.subr.mxu0 %v428
    %8612 = vmatpush1.msra.mxu0 %v427
    %8613 = vmatprep.subr.mxu0 %v442
    %8614 = vmatpush1.msra.mxu0 %v441
    %8615 = vmatprep.subr.mxu0 %v456
    %8616 = vmatpush1.msra.mxu0 %v455
    %8617 = vmatprep.subr.mxu0 %v470
    %8618 = vmatpush1.msra.mxu0 %v469
    %8619 = vmatprep.subr.mxu0 %v484
    %8620 = vmatpush1.msra.mxu0 %v483
    %8621 = vmatprep.subr.mxu0 %v498
    %8622 = vmatpush1.msra.mxu0 %v497
    %8623 = vmatprep.subr.mxu0 %v512
    %8624 = vmatpush1.msra.mxu0 %v511
    %8625 = vmatprep.subr.mxu0 %v526
    %8626 = vmatpush1.msra.mxu0 %v525
    %8627 = vmatprep.subr.mxu0 %v540
    %8628 = vmatpush1.msra.mxu0 %v539
    %8629 = vmatprep.subr.mxu0 %v554
    %8630 = vmatpush1.msra.mxu0 %v553
    %8631 = vmatprep.subr.mxu0 %v568
    %8632 = vmatpush1.msra.mxu0 %v567
    %8633 = vmatprep.subr.mxu0 %v582
    %8634 = vmatpush1.msra.mxu0 %v581
    %8635 = vmatprep.subr.mxu0 %v596
    %8636 = vmatpush1.msra.mxu0 %v595
    %8637 = vmatprep.subr.mxu0 %v610
    %8638 = vmatpush1.msra.mxu0 %v609
    %8639 = vmatprep.mubr.f32.mxu0 %v8572
    %8640 = vmatmul.mubr.f32.gmra.mrb[0].mxu0 %v8571
    %v8641 = vpop.f32.mrb[0].mxu0
    %v8642 = vadd.f32 0.0, %v8641
    %v8643 = vpop.f32.mrb[0].mxu0
    %v8644 = vadd.f32 0.0, %v8643
    %8645 = vdwg.mxu0
    %8646 = vmatprep.subr.mxu0 %v624
    %8647 = vmatpush1.msra.mxu0 %v623
    %8648 = vmatprep.subr.mxu0 %v638
    %8649 = vmatpush1.msra.mxu0 %v637
    %8650 = vmatprep.subr.mxu0 %v652
    %8651 = vmatpush1.msra.mxu0 %v651
    %8652 = vmatprep.subr.mxu0 %v666
    %8653 = vmatpush1.msra.mxu0 %v665
    %8654 = vmatprep.subr.mxu0 %v680
    %8655 = vmatpush1.msra.mxu0 %v679
    %8656 = vmatprep.subr.mxu0 %v694
    %8657 = vmatpush1.msra.mxu0 %v693
    %8658 = vmatprep.subr.mxu0 %v708
    %8659 = vmatpush1.msra.mxu0 %v707
    %8660 = vmatprep.subr.mxu0 %v722
    %8661 = vmatpush1.msra.mxu0 %v721
    %8662 = vmatprep.subr.mxu0 %v736
    %8663 = vmatpush1.msra.mxu0 %v735
    %8664 = vmatprep.subr.mxu0 %v750
    %8665 = vmatpush1.msra.mxu0 %v749
    %8666 = vmatprep.subr.mxu0 %v764
    %8667 = vmatpush1.msra.mxu0 %v763
    %8668 = vmatprep.subr.mxu0 %v778
    %8669 = vmatpush1.msra.mxu0 %v777
    %8670 = vmatprep.subr.mxu0 %v792
    %8671 = vmatpush1.msra.mxu0 %v791
    %8672 = vmatprep.subr.mxu0 %v806
    %8673 = vmatpush1.msra.mxu0 %v805
    %8674 = vmatprep.subr.mxu0 %v820
    %8675 = vmatpush1.msra.mxu0 %v819
    %8676 = vmatprep.subr.mxu0 %v834
    %8677 = vmatpush1.msra.mxu0 %v833
    %8678 = vmatprep.subr.mxu0 %v848
    %8679 = vmatpush1.msra.mxu0 %v847
    %8680 = vmatprep.subr.mxu0 %v862
    %8681 = vmatpush1.msra.mxu0 %v861
    %8682 = vmatprep.subr.mxu0 %v876
    %8683 = vmatpush1.msra.mxu0 %v875
    %8684 = vmatprep.subr.mxu0 %v890
    %8685 = vmatpush1.msra.mxu0 %v889
    %8686 = vmatprep.subr.mxu0 %v904
    %8687 = vmatpush1.msra.mxu0 %v903
    %8688 = vmatprep.subr.mxu0 %v918
    %8689 = vmatpush1.msra.mxu0 %v917
    %8690 = vmatprep.subr.mxu0 %v932
    %8691 = vmatpush1.msra.mxu0 %v931
    %8692 = vmatprep.subr.mxu0 %v946
    %8693 = vmatpush1.msra.mxu0 %v945
    %8694 = vmatprep.subr.mxu0 %v960
    %8695 = vmatpush1.msra.mxu0 %v959
    %8696 = vmatprep.subr.mxu0 %v974
    %8697 = vmatpush1.msra.mxu0 %v973
    %8698 = vmatprep.subr.mxu0 %v988
    %8699 = vmatpush1.msra.mxu0 %v987
    %8700 = vmatprep.subr.mxu0 %v1002
    %8701 = vmatpush1.msra.mxu0 %v1001
    %8702 = vmatprep.subr.mxu0 %v1016
    %8703 = vmatpush1.msra.mxu0 %v1015
    %8704 = vmatprep.subr.mxu0 %v1030
    %8705 = vmatpush1.msra.mxu0 %v1029
    %8706 = vmatprep.subr.mxu0 %v1044
    %8707 = vmatpush1.msra.mxu0 %v1043
    %8708 = vmatprep.subr.mxu0 %v1058
    %8709 = vmatpush1.msra.mxu0 %v1057
    %8710 = vmatprep.mubr.f32.mxu0 %v8501
    %8711 = vmatmul.mubr.f32.gmra.mrb[0].mxu0 %v8500
    %v8712 = vpop.f32.mrb[0].mxu0
    %v8713 = vadd.f32 %v8642, %v8712
    %v8714 = vpop.f32.mrb[0].mxu0
    %v8715 = vadd.f32 %v8644, %v8714
    %8716 = vdwg.mxu0
    %8717 = vmatprep.subr.mxu0 %v178
    %8718 = vmatpush1.msra.mxu0 %v177
    %8719 = vmatprep.subr.mxu0 %v192
    %8720 = vmatpush1.msra.mxu0 %v191
    %8721 = vmatprep.subr.mxu0 %v206
    %8722 = vmatpush1.msra.mxu0 %v205
    %8723 = vmatprep.subr.mxu0 %v220
    %8724 = vmatpush1.msra.mxu0 %v219
    %8725 = vmatprep.subr.mxu0 %v234
    %8726 = vmatpush1.msra.mxu0 %v233
    %8727 = vmatprep.subr.mxu0 %v248
    %8728 = vmatpush1.msra.mxu0 %v247
    %8729 = vmatprep.subr.mxu0 %v262
    %8730 = vmatpush1.msra.mxu0 %v261
    %8731 = vmatprep.subr.mxu0 %v276
    %8732 = vmatpush1.msra.mxu0 %v275
    %8733 = vmatprep.subr.mxu0 %v290
    %8734 = vmatpush1.msra.mxu0 %v289
    %8735 = vmatprep.subr.mxu0 %v304
    %8736 = vmatpush1.msra.mxu0 %v303
    %8737 = vmatprep.subr.mxu0 %v318
    %8738 = vmatpush1.msra.mxu0 %v317
    %8739 = vmatprep.subr.mxu0 %v332
    %8740 = vmatpush1.msra.mxu0 %v331
    %8741 = vmatprep.subr.mxu0 %v346
    %8742 = vmatpush1.msra.mxu0 %v345
    %8743 = vmatprep.subr.mxu0 %v360
    %8744 = vmatpush1.msra.mxu0 %v359
    %8745 = vmatprep.subr.mxu0 %v374
    %8746 = vmatpush1.msra.mxu0 %v373
    %8747 = vmatprep.subr.mxu0 %v388
    %8748 = vmatpush1.msra.mxu0 %v387
    %8749 = vmatprep.subr.mxu0 %v402
    %8750 = vmatpush1.msra.mxu0 %v401
    %8751 = vmatprep.subr.mxu0 %v416
    %8752 = vmatpush1.msra.mxu0 %v415
    %8753 = vmatprep.subr.mxu0 %v430
    %8754 = vmatpush1.msra.mxu0 %v429
    %8755 = vmatprep.subr.mxu0 %v444
    %8756 = vmatpush1.msra.mxu0 %v443
    %8757 = vmatprep.subr.mxu0 %v458
    %8758 = vmatpush1.msra.mxu0 %v457
    %8759 = vmatprep.subr.mxu0 %v472
    %8760 = vmatpush1.msra.mxu0 %v471
    %8761 = vmatprep.subr.mxu0 %v486
    %8762 = vmatpush1.msra.mxu0 %v485
    %8763 = vmatprep.subr.mxu0 %v500
    %8764 = vmatpush1.msra.mxu0 %v499
    %8765 = vmatprep.subr.mxu0 %v514
    %8766 = vmatpush1.msra.mxu0 %v513
    %8767 = vmatprep.subr.mxu0 %v528
    %8768 = vmatpush1.msra.mxu0 %v527
    %8769 = vmatprep.subr.mxu0 %v542
    %8770 = vmatpush1.msra.mxu0 %v541
    %8771 = vmatprep.subr.mxu0 %v556
    %8772 = vmatpush1.msra.mxu0 %v555
    %8773 = vmatprep.subr.mxu0 %v570
    %8774 = vmatpush1.msra.mxu0 %v569
    %8775 = vmatprep.subr.mxu0 %v584
    %8776 = vmatpush1.msra.mxu0 %v583
    %8777 = vmatprep.subr.mxu0 %v598
    %8778 = vmatpush1.msra.mxu0 %v597
    %8779 = vmatprep.subr.mxu0 %v612
    %8780 = vmatpush1.msra.mxu0 %v611
    %8781 = vmatprep.mubr.f32.mxu0 %v8572
    %8782 = vmatmul.mubr.f32.gmra.mrb[0].mxu0 %v8571
    %v8783 = vpop.f32.mrb[0].mxu0
    %v8784 = vadd.f32 0.0, %v8783
    %v8785 = vpop.f32.mrb[0].mxu0
    %v8786 = vadd.f32 0.0, %v8785
    %8787 = vdwg.mxu0
    %8788 = vmatprep.subr.mxu0 %v626
    %8789 = vmatpush1.msra.mxu0 %v625
    %8790 = vmatprep.subr.mxu0 %v640
    %8791 = vmatpush1.msra.mxu0 %v639
    %8792 = vmatprep.subr.mxu0 %v654
    %8793 = vmatpush1.msra.mxu0 %v653
    %8794 = vmatprep.subr.mxu0 %v668
    %8795 = vmatpush1.msra.mxu0 %v667
    %8796 = vmatprep.subr.mxu0 %v682
    %8797 = vmatpush1.msra.mxu0 %v681
    %8798 = vmatprep.subr.mxu0 %v696
    %8799 = vmatpush1.msra.mxu0 %v695
    %8800 = vmatprep.subr.mxu0 %v710
    %8801 = vmatpush1.msra.mxu0 %v709
    %8802 = vmatprep.subr.mxu0 %v724
    %8803 = vmatpush1.msra.mxu0 %v723
    %8804 = vmatprep.subr.mxu0 %v738
    %8805 = vmatpush1.msra.mxu0 %v737
    %8806 = vmatprep.subr.mxu0 %v752
    %8807 = vmatpush1.msra.mxu0 %v751
    %8808 = vmatprep.subr.mxu0 %v766
    %8809 = vmatpush1.msra.mxu0 %v765
    %8810 = vmatprep.subr.mxu0 %v780
    %8811 = vmatpush1.msra.mxu0 %v779
    %8812 = vmatprep.subr.mxu0 %v794
    %8813 = vmatpush1.msra.mxu0 %v793
    %8814 = vmatprep.subr.mxu0 %v808
    %8815 = vmatpush1.msra.mxu0 %v807
    %8816 = vmatprep.subr.mxu0 %v822
    %8817 = vmatpush1.msra.mxu0 %v821
    %8818 = vmatprep.subr.mxu0 %v836
    %8819 = vmatpush1.msra.mxu0 %v835
    %8820 = vmatprep.subr.mxu0 %v850
    %8821 = vmatpush1.msra.mxu0 %v849
    %8822 = vmatprep.subr.mxu0 %v864
    %8823 = vmatpush1.msra.mxu0 %v863
    %8824 = vmatprep.subr.mxu0 %v878
    %8825 = vmatpush1.msra.mxu0 %v877
    %8826 = vmatprep.subr.mxu0 %v892
    %8827 = vmatpush1.msra.mxu0 %v891
    %8828 = vmatprep.subr.mxu0 %v906
    %8829 = vmatpush1.msra.mxu0 %v905
    %8830 = vmatprep.subr.mxu0 %v920
    %8831 = vmatpush1.msra.mxu0 %v919
    %8832 = vmatprep.subr.mxu0 %v934
    %8833 = vmatpush1.msra.mxu0 %v933
    %8834 = vmatprep.subr.mxu0 %v948
    %8835 = vmatpush1.msra.mxu0 %v947
    %8836 = vmatprep.subr.mxu0 %v962
    %8837 = vmatpush1.msra.mxu0 %v961
    %8838 = vmatprep.subr.mxu0 %v976
    %8839 = vmatpush1.msra.mxu0 %v975
    %8840 = vmatprep.subr.mxu0 %v990
    %8841 = vmatpush1.msra.mxu0 %v989
    %8842 = vmatprep.subr.mxu0 %v1004
    %8843 = vmatpush1.msra.mxu0 %v1003
    %8844 = vmatprep.subr.mxu0 %v1018
    %8845 = vmatpush1.msra.mxu0 %v1017
    %8846 = vmatprep.subr.mxu0 %v1032
    %8847 = vmatpush1.msra.mxu0 %v1031
    %8848 = vmatprep.subr.mxu0 %v1046
    %8849 = vmatpush1.msra.mxu0 %v1045
    %8850 = vmatprep.subr.mxu0 %v1060
    %8851 = vmatpush1.msra.mxu0 %v1059
    %8852 = vmatprep.mubr.f32.mxu0 %v8501
    %8853 = vmatmul.mubr.f32.gmra.mrb[0].mxu0 %v8500
    %v8854 = vpop.f32.mrb[0].mxu0
    %v8855 = vadd.f32 %v8784, %v8854
    %v8856 = vpop.f32.mrb[0].mxu0
    %v8857 = vadd.f32 %v8786, %v8856
    %8858 = vdwg.mxu0
    %8859 = vmatprep.subr.mxu0 %v180
    %8860 = vmatpush1.msra.mxu0 %v179
    %8861 = vmatprep.subr.mxu0 %v194
    %8862 = vmatpush1.msra.mxu0 %v193
    %8863 = vmatprep.subr.mxu0 %v208
    %8864 = vmatpush1.msra.mxu0 %v207
    %8865 = vmatprep.subr.mxu0 %v222
    %8866 = vmatpush1.msra.mxu0 %v221
    %8867 = vmatprep.subr.mxu0 %v236
    %8868 = vmatpush1.msra.mxu0 %v235
    %8869 = vmatprep.subr.mxu0 %v250
    %8870 = vmatpush1.msra.mxu0 %v249
    %8871 = vmatprep.subr.mxu0 %v264
    %8872 = vmatpush1.msra.mxu0 %v263
    %8873 = vmatprep.subr.mxu0 %v278
    %8874 = vmatpush1.msra.mxu0 %v277
    %8875 = vmatprep.subr.mxu0 %v292
    %8876 = vmatpush1.msra.mxu0 %v291
    %8877 = vmatprep.subr.mxu0 %v306
    %8878 = vmatpush1.msra.mxu0 %v305
    %8879 = vmatprep.subr.mxu0 %v320
    %8880 = vmatpush1.msra.mxu0 %v319
    %8881 = vmatprep.subr.mxu0 %v334
    %8882 = vmatpush1.msra.mxu0 %v333
    %8883 = vmatprep.subr.mxu0 %v348
    %8884 = vmatpush1.msra.mxu0 %v347
    %8885 = vmatprep.subr.mxu0 %v362
    %8886 = vmatpush1.msra.mxu0 %v361
    %8887 = vmatprep.subr.mxu0 %v376
    %8888 = vmatpush1.msra.mxu0 %v375
    %8889 = vmatprep.subr.mxu0 %v390
    %8890 = vmatpush1.msra.mxu0 %v389
    %8891 = vmatprep.subr.mxu0 %v404
    %8892 = vmatpush1.msra.mxu0 %v403
    %8893 = vmatprep.subr.mxu0 %v418
    %8894 = vmatpush1.msra.mxu0 %v417
    %8895 = vmatprep.subr.mxu0 %v432
    %8896 = vmatpush1.msra.mxu0 %v431
    %8897 = vmatprep.subr.mxu0 %v446
    %8898 = vmatpush1.msra.mxu0 %v445
    %8899 = vmatprep.subr.mxu0 %v460
    %8900 = vmatpush1.msra.mxu0 %v459
    %8901 = vmatprep.subr.mxu0 %v474
    %8902 = vmatpush1.msra.mxu0 %v473
    %8903 = vmatprep.subr.mxu0 %v488
    %8904 = vmatpush1.msra.mxu0 %v487
    %8905 = vmatprep.subr.mxu0 %v502
    %8906 = vmatpush1.msra.mxu0 %v501
    %8907 = vmatprep.subr.mxu0 %v516
    %8908 = vmatpush1.msra.mxu0 %v515
    %8909 = vmatprep.subr.mxu0 %v530
    %8910 = vmatpush1.msra.mxu0 %v529
    %8911 = vmatprep.subr.mxu0 %v544
    %8912 = vmatpush1.msra.mxu0 %v543
    %8913 = vmatprep.subr.mxu0 %v558
    %8914 = vmatpush1.msra.mxu0 %v557
    %8915 = vmatprep.subr.mxu0 %v572
    %8916 = vmatpush1.msra.mxu0 %v571
    %8917 = vmatprep.subr.mxu0 %v586
    %8918 = vmatpush1.msra.mxu0 %v585
    %8919 = vmatprep.subr.mxu0 %v600
    %8920 = vmatpush1.msra.mxu0 %v599
    %8921 = vmatprep.subr.mxu0 %v614
    %8922 = vmatpush1.msra.mxu0 %v613
    %8923 = vmatprep.mubr.f32.mxu0 %v8572
    %8924 = vmatmul.mubr.f32.gmra.mrb[0].mxu0 %v8571
    %v8925 = vpop.f32.mrb[0].mxu0
    %v8926 = vadd.f32 0.0, %v8925
    %v8927 = vpop.f32.mrb[0].mxu0
    %v8928 = vadd.f32 0.0, %v8927
    %8929 = vdwg.mxu0
    %8930 = vmatprep.subr.mxu0 %v628
    %8931 = vmatpush1.msra.mxu0 %v627
    %8932 = vmatprep.subr.mxu0 %v642
    %8933 = vmatpush1.msra.mxu0 %v641
    %8934 = vmatprep.subr.mxu0 %v656
    %8935 = vmatpush1.msra.mxu0 %v655
    %8936 = vmatprep.subr.mxu0 %v670
    %8937 = vmatpush1.msra.mxu0 %v669
    %8938 = vmatprep.subr.mxu0 %v684
    %8939 = vmatpush1.msra.mxu0 %v683
    %8940 = vmatprep.subr.mxu0 %v698
    %8941 = vmatpush1.msra.mxu0 %v697
    %8942 = vmatprep.subr.mxu0 %v712
    %8943 = vmatpush1.msra.mxu0 %v711
    %8944 = vmatprep.subr.mxu0 %v726
    %8945 = vmatpush1.msra.mxu0 %v725
    %8946 = vmatprep.subr.mxu0 %v740
    %8947 = vmatpush1.msra.mxu0 %v739
    %8948 = vmatprep.subr.mxu0 %v754
    %8949 = vmatpush1.msra.mxu0 %v753
    %8950 = vmatprep.subr.mxu0 %v768
    %8951 = vmatpush1.msra.mxu0 %v767
    %8952 = vmatprep.subr.mxu0 %v782
    %8953 = vmatpush1.msra.mxu0 %v781
    %8954 = vmatprep.subr.mxu0 %v796
    %8955 = vmatpush1.msra.mxu0 %v795
    %8956 = vmatprep.subr.mxu0 %v810
    %8957 = vmatpush1.msra.mxu0 %v809
    %8958 = vmatprep.subr.mxu0 %v824
    %8959 = vmatpush1.msra.mxu0 %v823
    %8960 = vmatprep.subr.mxu0 %v838
    %8961 = vmatpush1.msra.mxu0 %v837
    %8962 = vmatprep.subr.mxu0 %v852
    %8963 = vmatpush1.msra.mxu0 %v851
    %8964 = vmatprep.subr.mxu0 %v866
    %8965 = vmatpush1.msra.mxu0 %v865
    %8966 = vmatprep.subr.mxu0 %v880
    %8967 = vmatpush1.msra.mxu0 %v879
    %8968 = vmatprep.subr.mxu0 %v894
    %8969 = vmatpush1.msra.mxu0 %v893
    %8970 = vmatprep.subr.mxu0 %v908
    %8971 = vmatpush1.msra.mxu0 %v907
    %8972 = vmatprep.subr.mxu0 %v922
    %8973 = vmatpush1.msra.mxu0 %v921
    %8974 = vmatprep.subr.mxu0 %v936
    %8975 = vmatpush1.msra.mxu0 %v935
    %8976 = vmatprep.subr.mxu0 %v950
    %8977 = vmatpush1.msra.mxu0 %v949
    %8978 = vmatprep.subr.mxu0 %v964
    %8979 = vmatpush1.msra.mxu0 %v963
    %8980 = vmatprep.subr.mxu0 %v978
    %8981 = vmatpush1.msra.mxu0 %v977
    %8982 = vmatprep.subr.mxu0 %v992
    %8983 = vmatpush1.msra.mxu0 %v991
    %8984 = vmatprep.subr.mxu0 %v1006
    %8985 = vmatpush1.msra.mxu0 %v1005
    %8986 = vmatprep.subr.mxu0 %v1020
    %8987 = vmatpush1.msra.mxu0 %v1019
    %8988 = vmatprep.subr.mxu0 %v1034
    %8989 = vmatpush1.msra.mxu0 %v1033
    %8990 = vmatprep.subr.mxu0 %v1048
    %8991 = vmatpush1.msra.mxu0 %v1047
    %8992 = vmatprep.subr.mxu0 %v1062
    %8993 = vmatpush1.msra.mxu0 %v1061
    %8994 = vmatprep.mubr.f32.mxu0 %v8501
    %8995 = vmatmul.mubr.f32.gmra.mrb[0].mxu0 %v8500
    %v8996 = vpop.f32.mrb[0].mxu0
    %v8997 = vadd.f32 %v8926, %v8996
    %v8998 = vpop.f32.mrb[0].mxu0
    %v8999 = vadd.f32 %v8928, %v8998
    %9000 = vdwg.mxu0
    %9001 = vmatprep.subr.mxu0 %v182
    %9002 = vmatpush1.msra.mxu0 %v181
    %9003 = vmatprep.subr.mxu0 %v196
    %9004 = vmatpush1.msra.mxu0 %v195
    %9005 = vmatprep.subr.mxu0 %v210
    %9006 = vmatpush1.msra.mxu0 %v209
    %9007 = vmatprep.subr.mxu0 %v224
    %9008 = vmatpush1.msra.mxu0 %v223
    %9009 = vmatprep.subr.mxu0 %v238
    %9010 = vmatpush1.msra.mxu0 %v237
    %9011 = vmatprep.subr.mxu0 %v252
    %9012 = vmatpush1.msra.mxu0 %v251
    %9013 = vmatprep.subr.mxu0 %v266
    %9014 = vmatpush1.msra.mxu0 %v265
    %9015 = vmatprep.subr.mxu0 %v280
    %9016 = vmatpush1.msra.mxu0 %v279
    %9017 = vmatprep.subr.mxu0 %v294
    %9018 = vmatpush1.msra.mxu0 %v293
    %9019 = vmatprep.subr.mxu0 %v308
    %9020 = vmatpush1.msra.mxu0 %v307
    %9021 = vmatprep.subr.mxu0 %v322
    %9022 = vmatpush1.msra.mxu0 %v321
    %9023 = vmatprep.subr.mxu0 %v336
    %9024 = vmatpush1.msra.mxu0 %v335
    %9025 = vmatprep.subr.mxu0 %v350
    %9026 = vmatpush1.msra.mxu0 %v349
    %9027 = vmatprep.subr.mxu0 %v364
    %9028 = vmatpush1.msra.mxu0 %v363
    %9029 = vmatprep.subr.mxu0 %v378
    %9030 = vmatpush1.msra.mxu0 %v377
    %9031 = vmatprep.subr.mxu0 %v392
    %9032 = vmatpush1.msra.mxu0 %v391
    %9033 = vmatprep.subr.mxu0 %v406
    %9034 = vmatpush1.msra.mxu0 %v405
    %9035 = vmatprep.subr.mxu0 %v420
    %9036 = vmatpush1.msra.mxu0 %v419
    %9037 = vmatprep.subr.mxu0 %v434
    %9038 = vmatpush1.msra.mxu0 %v433
    %9039 = vmatprep.subr.mxu0 %v448
    %9040 = vmatpush1.msra.mxu0 %v447
    %9041 = vmatprep.subr.mxu0 %v462
    %9042 = vmatpush1.msra.mxu0 %v461
    %9043 = vmatprep.subr.mxu0 %v476
    %9044 = vmatpush1.msra.mxu0 %v475
    %9045 = vmatprep.subr.mxu0 %v490
    %9046 = vmatpush1.msra.mxu0 %v489
    %9047 = vmatprep.subr.mxu0 %v504
    %9048 = vmatpush1.msra.mxu0 %v503
    %9049 = vmatprep.subr.mxu0 %v518
    %9050 = vmatpush1.msra.mxu0 %v517
    %9051 = vmatprep.subr.mxu0 %v532
    %9052 = vmatpush1.msra.mxu0 %v531
    %9053 = vmatprep.subr.mxu0 %v546
    %9054 = vmatpush1.msra.mxu0 %v545
    %9055 = vmatprep.subr.mxu0 %v560
    %9056 = vmatpush1.msra.mxu0 %v559
    %9057 = vmatprep.subr.mxu0 %v574
    %9058 = vmatpush1.msra.mxu0 %v573
    %9059 = vmatprep.subr.mxu0 %v588
    %9060 = vmatpush1.msra.mxu0 %v587
    %9061 = vmatprep.subr.mxu0 %v602
    %9062 = vmatpush1.msra.mxu0 %v601
    %9063 = vmatprep.subr.mxu0 %v616
    %9064 = vmatpush1.msra.mxu0 %v615
    %9065 = vmatprep.mubr.f32.mxu0 %v8572
    %9066 = vmatmul.mubr.f32.gmra.mrb[0].mxu0 %v8571
    %v9067 = vpop.f32.mrb[0].mxu0
    %v9068 = vadd.f32 0.0, %v9067
    %v9069 = vpop.f32.mrb[0].mxu0
    %v9070 = vadd.f32 0.0, %v9069
    %9071 = vdwg.mxu0
    %9072 = vmatprep.subr.mxu0 %v630
    %9073 = vmatpush1.msra.mxu0 %v629
    %9074 = vmatprep.subr.mxu0 %v644
    %9075 = vmatpush1.msra.mxu0 %v643
    %9076 = vmatprep.subr.mxu0 %v658
    %9077 = vmatpush1.msra.mxu0 %v657
    %9078 = vmatprep.subr.mxu0 %v672
    %9079 = vmatpush1.msra.mxu0 %v671
    %9080 = vmatprep.subr.mxu0 %v686
    %9081 = vmatpush1.msra.mxu0 %v685
    %9082 = vmatprep.subr.mxu0 %v700
    %9083 = vmatpush1.msra.mxu0 %v699
    %9084 = vmatprep.subr.mxu0 %v714
    %9085 = vmatpush1.msra.mxu0 %v713
    %9086 = vmatprep.subr.mxu0 %v728
    %9087 = vmatpush1.msra.mxu0 %v727
    %9088 = vmatprep.subr.mxu0 %v742
    %9089 = vmatpush1.msra.mxu0 %v741
    %9090 = vmatprep.subr.mxu0 %v756
    %9091 = vmatpush1.msra.mxu0 %v755
    %9092 = vmatprep.subr.mxu0 %v770
    %9093 = vmatpush1.msra.mxu0 %v769
    %9094 = vmatprep.subr.mxu0 %v784
    %9095 = vmatpush1.msra.mxu0 %v783
    %9096 = vmatprep.subr.mxu0 %v798
    %9097 = vmatpush1.msra.mxu0 %v797
    %9098 = vmatprep.subr.mxu0 %v812
    %9099 = vmatpush1.msra.mxu0 %v811
    %9100 = vmatprep.subr.mxu0 %v826
    %9101 = vmatpush1.msra.mxu0 %v825
    %9102 = vmatprep.subr.mxu0 %v840
    %9103 = vmatpush1.msra.mxu0 %v839
    %9104 = vmatprep.subr.mxu0 %v854
    %9105 = vmatpush1.msra.mxu0 %v853
    %9106 = vmatprep.subr.mxu0 %v868
    %9107 = vmatpush1.msra.mxu0 %v867
    %9108 = vmatprep.subr.mxu0 %v882
    %9109 = vmatpush1.msra.mxu0 %v881
    %9110 = vmatprep.subr.mxu0 %v896
    %9111 = vmatpush1.msra.mxu0 %v895
    %9112 = vmatprep.subr.mxu0 %v910
    %9113 = vmatpush1.msra.mxu0 %v909
    %9114 = vmatprep.subr.mxu0 %v924
    %9115 = vmatpush1.msra.mxu0 %v923
    %9116 = vmatprep.subr.mxu0 %v938
    %9117 = vmatpush1.msra.mxu0 %v937
    %9118 = vmatprep.subr.mxu0 %v952
    %9119 = vmatpush1.msra.mxu0 %v951
    %9120 = vmatprep.subr.mxu0 %v966
    %9121 = vmatpush1.msra.mxu0 %v965
    %9122 = vmatprep.subr.mxu0 %v980
    %9123 = vmatpush1.msra.mxu0 %v979
    %9124 = vmatprep.subr.mxu0 %v994
    %9125 = vmatpush1.msra.mxu0 %v993
    %9126 = vmatprep.subr.mxu0 %v1008
    %9127 = vmatpush1.msra.mxu0 %v1007
    %9128 = vmatprep.subr.mxu0 %v1022
    %9129 = vmatpush1.msra.mxu0 %v1021
    %9130 = vmatprep.subr.mxu0 %v1036
    %9131 = vmatpush1.msra.mxu0 %v1035
    %9132 = vmatprep.subr.mxu0 %v1050
    %9133 = vmatpush1.msra.mxu0 %v1049
    %9134 = vmatprep.subr.mxu0 %v1064
    %9135 = vmatpush1.msra.mxu0 %v1063
    %9136 = vmatprep.mubr.f32.mxu0 %v8501
    %9137 = vmatmul.mubr.f32.gmra.mrb[0].mxu0 %v8500
    %v9138 = vpop.f32.mrb[0].mxu0
    %v9139 = vadd.f32 %v9068, %v9138
    %v9140 = vpop.f32.mrb[0].mxu0
    %v9141 = vadd.f32 %v9070, %v9140
    %9142 = vdwg.mxu0
    %9143 = vmatprep.subr.mxu0 %v184
    %9144 = vmatpush1.msra.mxu0 %v183
    %9145 = vmatprep.subr.mxu0 %v198
    %9146 = vmatpush1.msra.mxu0 %v197
    %9147 = vmatprep.subr.mxu0 %v212
    %9148 = vmatpush1.msra.mxu0 %v211
    %9149 = vmatprep.subr.mxu0 %v226
    %9150 = vmatpush1.msra.mxu0 %v225
    %9151 = vmatprep.subr.mxu0 %v240
    %9152 = vmatpush1.msra.mxu0 %v239
    %9153 = vmatprep.subr.mxu0 %v254
    %9154 = vmatpush1.msra.mxu0 %v253
    %9155 = vmatprep.subr.mxu0 %v268
    %9156 = vmatpush1.msra.mxu0 %v267
    %9157 = vmatprep.subr.mxu0 %v282
    %9158 = vmatpush1.msra.mxu0 %v281
    %9159 = vmatprep.subr.mxu0 %v296
    %9160 = vmatpush1.msra.mxu0 %v295
    %9161 = vmatprep.subr.mxu0 %v310
    %9162 = vmatpush1.msra.mxu0 %v309
    %9163 = vmatprep.subr.mxu0 %v324
    %9164 = vmatpush1.msra.mxu0 %v323
    %9165 = vmatprep.subr.mxu0 %v338
    %9166 = vmatpush1.msra.mxu0 %v337
    %9167 = vmatprep.subr.mxu0 %v352
    %9168 = vmatpush1.msra.mxu0 %v351
    %9169 = vmatprep.subr.mxu0 %v366
    %9170 = vmatpush1.msra.mxu0 %v365
    %9171 = vmatprep.subr.mxu0 %v380
    %9172 = vmatpush1.msra.mxu0 %v379
    %9173 = vmatprep.subr.mxu0 %v394
    %9174 = vmatpush1.msra.mxu0 %v393
    %9175 = vmatprep.subr.mxu0 %v408
    %9176 = vmatpush1.msra.mxu0 %v407
    %9177 = vmatprep.subr.mxu0 %v422
    %9178 = vmatpush1.msra.mxu0 %v421
    %9179 = vmatprep.subr.mxu0 %v436
    %9180 = vmatpush1.msra.mxu0 %v435
    %9181 = vmatprep.subr.mxu0 %v450
    %9182 = vmatpush1.msra.mxu0 %v449
    %9183 = vmatprep.subr.mxu0 %v464
    %9184 = vmatpush1.msra.mxu0 %v463
    %9185 = vmatprep.subr.mxu0 %v478
    %9186 = vmatpush1.msra.mxu0 %v477
    %9187 = vmatprep.subr.mxu0 %v492
    %9188 = vmatpush1.msra.mxu0 %v491
    %9189 = vmatprep.subr.mxu0 %v506
    %9190 = vmatpush1.msra.mxu0 %v505
    %9191 = vmatprep.subr.mxu0 %v520
    %9192 = vmatpush1.msra.mxu0 %v519
    %9193 = vmatprep.subr.mxu0 %v534
    %9194 = vmatpush1.msra.mxu0 %v533
    %9195 = vmatprep.subr.mxu0 %v548
    %9196 = vmatpush1.msra.mxu0 %v547
    %9197 = vmatprep.subr.mxu0 %v562
    %9198 = vmatpush1.msra.mxu0 %v561
    %9199 = vmatprep.subr.mxu0 %v576
    %9200 = vmatpush1.msra.mxu0 %v575
    %9201 = vmatprep.subr.mxu0 %v590
    %9202 = vmatpush1.msra.mxu0 %v589
    %9203 = vmatprep.subr.mxu0 %v604
    %9204 = vmatpush1.msra.mxu0 %v603
    %9205 = vmatprep.subr.mxu0 %v618
    %9206 = vmatpush1.msra.mxu0 %v617
    %9207 = vmatprep.mubr.f32.mxu0 %v8572
    %9208 = vmatmul.mubr.f32.gmra.mrb[0].mxu0 %v8571
    %v9209 = vpop.f32.mrb[0].mxu0
    %v9210 = vadd.f32 0.0, %v9209
    %v9211 = vpop.f32.mrb[0].mxu0
    %v9212 = vadd.f32 0.0, %v9211
    %9213 = vdwg.mxu0
    %9214 = vmatprep.subr.mxu0 %v632
    %9215 = vmatpush1.msra.mxu0 %v631
    %9216 = vmatprep.subr.mxu0 %v646
    %9217 = vmatpush1.msra.mxu0 %v645
    %9218 = vmatprep.subr.mxu0 %v660
    %9219 = vmatpush1.msra.mxu0 %v659
    %9220 = vmatprep.subr.mxu0 %v674
    %9221 = vmatpush1.msra.mxu0 %v673
    %9222 = vmatprep.subr.mxu0 %v688
    %9223 = vmatpush1.msra.mxu0 %v687
    %9224 = vmatprep.subr.mxu0 %v702
    %9225 = vmatpush1.msra.mxu0 %v701
    %9226 = vmatprep.subr.mxu0 %v716
    %9227 = vmatpush1.msra.mxu0 %v715
    %9228 = vmatprep.subr.mxu0 %v730
    %9229 = vmatpush1.msra.mxu0 %v729
    %9230 = vmatprep.subr.mxu0 %v744
    %9231 = vmatpush1.msra.mxu0 %v743
    %9232 = vmatprep.subr.mxu0 %v758
    %9233 = vmatpush1.msra.mxu0 %v757
    %9234 = vmatprep.subr.mxu0 %v772
    %9235 = vmatpush1.msra.mxu0 %v771
    %9236 = vmatprep.subr.mxu0 %v786
    %9237 = vmatpush1.msra.mxu0 %v785
    %9238 = vmatprep.subr.mxu0 %v800
    %9239 = vmatpush1.msra.mxu0 %v799
    %9240 = vmatprep.subr.mxu0 %v814
    %9241 = vmatpush1.msra.mxu0 %v813
    %9242 = vmatprep.subr.mxu0 %v828
    %9243 = vmatpush1.msra.mxu0 %v827
    %9244 = vmatprep.subr.mxu0 %v842
    %9245 = vmatpush1.msra.mxu0 %v841
    %9246 = vmatprep.subr.mxu0 %v856
    %9247 = vmatpush1.msra.mxu0 %v855
    %9248 = vmatprep.subr.mxu0 %v870
    %9249 = vmatpush1.msra.mxu0 %v869
    %9250 = vmatprep.subr.mxu0 %v884
    %9251 = vmatpush1.msra.mxu0 %v883
    %9252 = vmatprep.subr.mxu0 %v898
    %9253 = vmatpush1.msra.mxu0 %v897
    %9254 = vmatprep.subr.mxu0 %v912
    %9255 = vmatpush1.msra.mxu0 %v911
    %9256 = vmatprep.subr.mxu0 %v926
    %9257 = vmatpush1.msra.mxu0 %v925
    %9258 = vmatprep.subr.mxu0 %v940
    %9259 = vmatpush1.msra.mxu0 %v939
    %9260 = vmatprep.subr.mxu0 %v954
    %9261 = vmatpush1.msra.mxu0 %v953
    %9262 = vmatprep.subr.mxu0 %v968
    %9263 = vmatpush1.msra.mxu0 %v967
    %9264 = vmatprep.subr.mxu0 %v982
    %9265 = vmatpush1.msra.mxu0 %v981
    %9266 = vmatprep.subr.mxu0 %v996
    %9267 = vmatpush1.msra.mxu0 %v995
    %9268 = vmatprep.subr.mxu0 %v1010
    %9269 = vmatpush1.msra.mxu0 %v1009
    %9270 = vmatprep.subr.mxu0 %v1024
    %9271 = vmatpush1.msra.mxu0 %v1023
    %9272 = vmatprep.subr.mxu0 %v1038
    %9273 = vmatpush1.msra.mxu0 %v1037
    %9274 = vmatprep.subr.mxu0 %v1052
    %9275 = vmatpush1.msra.mxu0 %v1051
    %9276 = vmatprep.subr.mxu0 %v1066
    %9277 = vmatpush1.msra.mxu0 %v1065
    %9278 = vmatprep.mubr.f32.mxu0 %v8501
    %9279 = vmatmul.mubr.f32.gmra.mrb[0].mxu0 %v8500
    %v9280 = vpop.f32.mrb[0].mxu0
    %v9281 = vadd.f32 %v9210, %v9280
    %v9282 = vpop.f32.mrb[0].mxu0
    %v9283 = vadd.f32 %v9212, %v9282
    %9284 = vdwg.mxu0
    %9285 = vmatprep.subr.mxu0 %v186
    %9286 = vmatpush1.msra.mxu0 %v185
    %9287 = vmatprep.subr.mxu0 %v200
    %9288 = vmatpush1.msra.mxu0 %v199
    %9289 = vmatprep.subr.mxu0 %v214
    %9290 = vmatpush1.msra.mxu0 %v213
    %9291 = vmatprep.subr.mxu0 %v228
    %9292 = vmatpush1.msra.mxu0 %v227
    %9293 = vmatprep.subr.mxu0 %v242
    %9294 = vmatpush1.msra.mxu0 %v241
    %9295 = vmatprep.subr.mxu0 %v256
    %9296 = vmatpush1.msra.mxu0 %v255
    %9297 = vmatprep.subr.mxu0 %v270
    %9298 = vmatpush1.msra.mxu0 %v269
    %9299 = vmatprep.subr.mxu0 %v284
    %9300 = vmatpush1.msra.mxu0 %v283
    %9301 = vmatprep.subr.mxu0 %v298
    %9302 = vmatpush1.msra.mxu0 %v297
    %9303 = vmatprep.subr.mxu0 %v312
    %9304 = vmatpush1.msra.mxu0 %v311
    %9305 = vmatprep.subr.mxu0 %v326
    %9306 = vmatpush1.msra.mxu0 %v325
    %9307 = vmatprep.subr.mxu0 %v340
    %9308 = vmatpush1.msra.mxu0 %v339
    %9309 = vmatprep.subr.mxu0 %v354
    %9310 = vmatpush1.msra.mxu0 %v353
    %9311 = vmatprep.subr.mxu0 %v368
    %9312 = vmatpush1.msra.mxu0 %v367
    %9313 = vmatprep.subr.mxu0 %v382
    %9314 = vmatpush1.msra.mxu0 %v381
    %9315 = vmatprep.subr.mxu0 %v396
    %9316 = vmatpush1.msra.mxu0 %v395
    %9317 = vmatprep.subr.mxu0 %v410
    %9318 = vmatpush1.msra.mxu0 %v409
    %9319 = vmatprep.subr.mxu0 %v424
    %9320 = vmatpush1.msra.mxu0 %v423
    %9321 = vmatprep.subr.mxu0 %v438
    %9322 = vmatpush1.msra.mxu0 %v437
    %9323 = vmatprep.subr.mxu0 %v452
    %9324 = vmatpush1.msra.mxu0 %v451
    %9325 = vmatprep.subr.mxu0 %v466
    %9326 = vmatpush1.msra.mxu0 %v465
    %9327 = vmatprep.subr.mxu0 %v480
    %9328 = vmatpush1.msra.mxu0 %v479
    %9329 = vmatprep.subr.mxu0 %v494
    %9330 = vmatpush1.msra.mxu0 %v493
    %9331 = vmatprep.subr.mxu0 %v508
    %9332 = vmatpush1.msra.mxu0 %v507
    %9333 = vmatprep.subr.mxu0 %v522
    %9334 = vmatpush1.msra.mxu0 %v521
    %9335 = vmatprep.subr.mxu0 %v536
    %9336 = vmatpush1.msra.mxu0 %v535
    %9337 = vmatprep.subr.mxu0 %v550
    %9338 = vmatpush1.msra.mxu0 %v549
    %9339 = vmatprep.subr.mxu0 %v564
    %9340 = vmatpush1.msra.mxu0 %v563
    %9341 = vmatprep.subr.mxu0 %v578
    %9342 = vmatpush1.msra.mxu0 %v577
    %9343 = vmatprep.subr.mxu0 %v592
    %9344 = vmatpush1.msra.mxu0 %v591
    %9345 = vmatprep.subr.mxu0 %v606
    %9346 = vmatpush1.msra.mxu0 %v605
    %9347 = vmatprep.subr.mxu0 %v620
    %9348 = vmatpush1.msra.mxu0 %v619
    %9349 = vmatprep.mubr.f32.mxu0 %v8572
    %9350 = vmatmul.mubr.f32.gmra.mrb[0].mxu0 %v8571
    %v9351 = vpop.f32.mrb[0].mxu0
    %v9352 = vadd.f32 0.0, %v9351
    %v9353 = vpop.f32.mrb[0].mxu0
    %v9354 = vadd.f32 0.0, %v9353
    %9355 = vdwg.mxu0
    %9356 = vmatprep.subr.mxu0 %v634
    %9357 = vmatpush1.msra.mxu0 %v633
    %9358 = vmatprep.subr.mxu0 %v648
    %9359 = vmatpush1.msra.mxu0 %v647
    %9360 = vmatprep.subr.mxu0 %v662
    %9361 = vmatpush1.msra.mxu0 %v661
    %9362 = vmatprep.subr.mxu0 %v676
    %9363 = vmatpush1.msra.mxu0 %v675
    %9364 = vmatprep.subr.mxu0 %v690
    %9365 = vmatpush1.msra.mxu0 %v689
    %9366 = vmatprep.subr.mxu0 %v704
    %9367 = vmatpush1.msra.mxu0 %v703
    %9368 = vmatprep.subr.mxu0 %v718
    %9369 = vmatpush1.msra.mxu0 %v717
    %9370 = vmatprep.subr.mxu0 %v732
    %9371 = vmatpush1.msra.mxu0 %v731
    %9372 = vmatprep.subr.mxu0 %v746
    %9373 = vmatpush1.msra.mxu0 %v745
    %9374 = vmatprep.subr.mxu0 %v760
    %9375 = vmatpush1.msra.mxu0 %v759
    %9376 = vmatprep.subr.mxu0 %v774
    %9377 = vmatpush1.msra.mxu0 %v773
    %9378 = vmatprep.subr.mxu0 %v788
    %9379 = vmatpush1.msra.mxu0 %v787
    %9380 = vmatprep.subr.mxu0 %v802
    %9381 = vmatpush1.msra.mxu0 %v801
    %9382 = vmatprep.subr.mxu0 %v816
    %9383 = vmatpush1.msra.mxu0 %v815
    %9384 = vmatprep.subr.mxu0 %v830
    %9385 = vmatpush1.msra.mxu0 %v829
    %9386 = vmatprep.subr.mxu0 %v844
    %9387 = vmatpush1.msra.mxu0 %v843
    %9388 = vmatprep.subr.mxu0 %v858
    %9389 = vmatpush1.msra.mxu0 %v857
    %9390 = vmatprep.subr.mxu0 %v872
    %9391 = vmatpush1.msra.mxu0 %v871
    %9392 = vmatprep.subr.mxu0 %v886
    %9393 = vmatpush1.msra.mxu0 %v885
    %9394 = vmatprep.subr.mxu0 %v900
    %9395 = vmatpush1.msra.mxu0 %v899
    %9396 = vmatprep.subr.mxu0 %v914
    %9397 = vmatpush1.msra.mxu0 %v913
    %9398 = vmatprep.subr.mxu0 %v928
    %9399 = vmatpush1.msra.mxu0 %v927
    %9400 = vmatprep.subr.mxu0 %v942
    %9401 = vmatpush1.msra.mxu0 %v941
    %9402 = vmatprep.subr.mxu0 %v956
    %9403 = vmatpush1.msra.mxu0 %v955
    %9404 = vmatprep.subr.mxu0 %v970
    %9405 = vmatpush1.msra.mxu0 %v969
    %9406 = vmatprep.subr.mxu0 %v984
    %9407 = vmatpush1.msra.mxu0 %v983
    %9408 = vmatprep.subr.mxu0 %v998
    %9409 = vmatpush1.msra.mxu0 %v997
    %9410 = vmatprep.subr.mxu0 %v1012
    %9411 = vmatpush1.msra.mxu0 %v1011
    %9412 = vmatprep.subr.mxu0 %v1026
    %9413 = vmatpush1.msra.mxu0 %v1025
    %9414 = vmatprep.subr.mxu0 %v1040
    %9415 = vmatpush1.msra.mxu0 %v1039
    %9416 = vmatprep.subr.mxu0 %v1054
    %9417 = vmatpush1.msra.mxu0 %v1053
    %9418 = vmatprep.subr.mxu0 %v1068
    %9419 = vmatpush1.msra.mxu0 %v1067
    %9420 = vmatprep.mubr.f32.mxu0 %v8501
    %9421 = vmatmul.mubr.f32.gmra.mrb[0].mxu0 %v8500
    %v9422 = vpop.f32.mrb[0].mxu0
    %v9423 = vadd.f32 %v9352, %v9422
    %v9424 = vpop.f32.mrb[0].mxu0
    %v9425 = vadd.f32 %v9354, %v9424
    %9426 = vdwg.mxu0
    %9427 = vmatprep.subr.mxu0 %v188
    %9428 = vmatpush1.msra.mxu0 %v187
    %9429 = vmatprep.subr.mxu0 %v202
    %9430 = vmatpush1.msra.mxu0 %v201
    %9431 = vmatprep.subr.mxu0 %v216
    %9432 = vmatpush1.msra.mxu0 %v215
    %9433 = vmatprep.subr.mxu0 %v230
    %9434 = vmatpush1.msra.mxu0 %v229
    %9435 = vmatprep.subr.mxu0 %v244
    %9436 = vmatpush1.msra.mxu0 %v243
    %9437 = vmatprep.subr.mxu0 %v258
    %9438 = vmatpush1.msra.mxu0 %v257
    %9439 = vmatprep.subr.mxu0 %v272
    %9440 = vmatpush1.msra.mxu0 %v271
    %9441 = vmatprep.subr.mxu0 %v286
    %9442 = vmatpush1.msra.mxu0 %v285
    %9443 = vmatprep.subr.mxu0 %v300
    %9444 = vmatpush1.msra.mxu0 %v299
    %9445 = vmatprep.subr.mxu0 %v314
    %9446 = vmatpush1.msra.mxu0 %v313
    %9447 = vmatprep.subr.mxu0 %v328
    %9448 = vmatpush1.msra.mxu0 %v327
    %9449 = vmatprep.subr.mxu0 %v342
    %9450 = vmatpush1.msra.mxu0 %v341
    %9451 = vmatprep.subr.mxu0 %v356
    %9452 = vmatpush1.msra.mxu0 %v355
    %9453 = vmatprep.subr.mxu0 %v370
    %9454 = vmatpush1.msra.mxu0 %v369
    %9455 = vmatprep.subr.mxu0 %v384
    %9456 = vmatpush1.msra.mxu0 %v383
    %9457 = vmatprep.subr.mxu0 %v398
    %9458 = vmatpush1.msra.mxu0 %v397
    %9459 = vmatprep.subr.mxu0 %v412
    %9460 = vmatpush1.msra.mxu0 %v411
    %9461 = vmatprep.subr.mxu0 %v426
    %9462 = vmatpush1.msra.mxu0 %v425
    %9463 = vmatprep.subr.mxu0 %v440
    %9464 = vmatpush1.msra.mxu0 %v439
    %9465 = vmatprep.subr.mxu0 %v454
    %9466 = vmatpush1.msra.mxu0 %v453
    %9467 = vmatprep.subr.mxu0 %v468
    %9468 = vmatpush1.msra.mxu0 %v467
    %9469 = vmatprep.subr.mxu0 %v482
    %9470 = vmatpush1.msra.mxu0 %v481
    %9471 = vmatprep.subr.mxu0 %v496
    %9472 = vmatpush1.msra.mxu0 %v495
    %9473 = vmatprep.subr.mxu0 %v510
    %9474 = vmatpush1.msra.mxu0 %v509
    %9475 = vmatprep.subr.mxu0 %v524
    %9476 = vmatpush1.msra.mxu0 %v523
    %9477 = vmatprep.subr.mxu0 %v538
    %9478 = vmatpush1.msra.mxu0 %v537
    %9479 = vmatprep.subr.mxu0 %v552
    %9480 = vmatpush1.msra.mxu0 %v551
    %9481 = vmatprep.subr.mxu0 %v566
    %9482 = vmatpush1.msra.mxu0 %v565
    %9483 = vmatprep.subr.mxu0 %v580
    %9484 = vmatpush1.msra.mxu0 %v579
    %9485 = vmatprep.subr.mxu0 %v594
    %9486 = vmatpush1.msra.mxu0 %v593
    %9487 = vmatprep.subr.mxu0 %v608
    %9488 = vmatpush1.msra.mxu0 %v607
    %9489 = vmatprep.subr.mxu0 %v622
    %9490 = vmatpush1.msra.mxu0 %v621
    %9491 = vmatprep.mubr.f32.mxu0 %v8572
    %9492 = vmatmul.mubr.f32.gmra.mrb[0].mxu0 %v8571
    %v9493 = vpop.f32.mrb[0].mxu0
    %v9494 = vadd.f32 0.0, %v9493
    %v9495 = vpop.f32.mrb[0].mxu0
    %v9496 = vadd.f32 0.0, %v9495
    %9497 = vdwg.mxu0
    %9498 = vmatprep.subr.mxu0 %v636
    %9499 = vmatpush1.msra.mxu0 %v635
    %9500 = vmatprep.subr.mxu0 %v650
    %9501 = vmatpush1.msra.mxu0 %v649
    %9502 = vmatprep.subr.mxu0 %v664
    %9503 = vmatpush1.msra.mxu0 %v663
    %9504 = vmatprep.subr.mxu0 %v678
    %9505 = vmatpush1.msra.mxu0 %v677
    %9506 = vmatprep.subr.mxu0 %v692
    %9507 = vmatpush1.msra.mxu0 %v691
    %9508 = vmatprep.subr.mxu0 %v706
    %9509 = vmatpush1.msra.mxu0 %v705
    %9510 = vmatprep.subr.mxu0 %v720
    %9511 = vmatpush1.msra.mxu0 %v719
    %9512 = vmatprep.subr.mxu0 %v734
    %9513 = vmatpush1.msra.mxu0 %v733
    %9514 = vmatprep.subr.mxu0 %v748
    %9515 = vmatpush1.msra.mxu0 %v747
    %9516 = vmatprep.subr.mxu0 %v762
    %9517 = vmatpush1.msra.mxu0 %v761
    %9518 = vmatprep.subr.mxu0 %v776
    %9519 = vmatpush1.msra.mxu0 %v775
    %9520 = vmatprep.subr.mxu0 %v790
    %9521 = vmatpush1.msra.mxu0 %v789
    %9522 = vmatprep.subr.mxu0 %v804
    %9523 = vmatpush1.msra.mxu0 %v803
    %9524 = vmatprep.subr.mxu0 %v818
    %9525 = vmatpush1.msra.mxu0 %v817
    %9526 = vmatprep.subr.mxu0 %v832
    %9527 = vmatpush1.msra.mxu0 %v831
    %9528 = vmatprep.subr.mxu0 %v846
    %9529 = vmatpush1.msra.mxu0 %v845
    %9530 = vmatprep.subr.mxu0 %v860
    %9531 = vmatpush1.msra.mxu0 %v859
    %9532 = vmatprep.subr.mxu0 %v874
    %9533 = vmatpush1.msra.mxu0 %v873
    %9534 = vmatprep.subr.mxu0 %v888
    %9535 = vmatpush1.msra.mxu0 %v887
    %9536 = vmatprep.subr.mxu0 %v902
    %9537 = vmatpush1.msra.mxu0 %v901
    %9538 = vmatprep.subr.mxu0 %v916
    %9539 = vmatpush1.msra.mxu0 %v915
    %9540 = vmatprep.subr.mxu0 %v930
    %9541 = vmatpush1.msra.mxu0 %v929
    %9542 = vmatprep.subr.mxu0 %v944
    %9543 = vmatpush1.msra.mxu0 %v943
    %9544 = vmatprep.subr.mxu0 %v958
    %9545 = vmatpush1.msra.mxu0 %v957
    %9546 = vmatprep.subr.mxu0 %v972
    %9547 = vmatpush1.msra.mxu0 %v971
    %9548 = vmatprep.subr.mxu0 %v986
    %9549 = vmatpush1.msra.mxu0 %v985
    %9550 = vmatprep.subr.mxu0 %v1000
    %9551 = vmatpush1.msra.mxu0 %v999
    %9552 = vmatprep.subr.mxu0 %v1014
    %9553 = vmatpush1.msra.mxu0 %v1013
    %9554 = vmatprep.subr.mxu0 %v1028
    %9555 = vmatpush1.msra.mxu0 %v1027
    %9556 = vmatprep.subr.mxu0 %v1042
    %9557 = vmatpush1.msra.mxu0 %v1041
    %9558 = vmatprep.subr.mxu0 %v1056
    %9559 = vmatpush1.msra.mxu0 %v1055
    %9560 = vmatprep.subr.mxu0 %v1070
    %9561 = vmatpush1.msra.mxu0 %v1069
    %9562 = vmatprep.mubr.f32.mxu0 %v8501
    %9563 = vmatmul.mubr.f32.gmra.mrb[0].mxu0 %v8500
    %v9564 = vpop.f32.mrb[0].mxu0
    %v9565 = vadd.f32 %v9494, %v9564
    %v9566 = vpop.f32.mrb[0].mxu0
    %v9567 = vadd.f32 %v9496, %v9566
    %9568 = vdwg.mxu0
    %v9569 = vadd.f32 %v9139, %v1076
    %v9570 = vadd.f32 %v9141, %v1080
    %v9571 = vadd.f32 %v9281, %v1084
    %v9572 = vadd.f32 %v9283, %v1088
    %v9573 = vadd.f32 %v9423, %v1092
    %v9574 = vadd.f32 %v9425, %v1096
    %v9575 = vadd.f32 %v9565, %v1100
    %v9576 = vadd.f32 %v9567, %v1104
    %v9577 = vxor.u32 %v9569, 2147483648
    %v9578 = vxor.u32 %v9570, 2147483648
    %v9579 = vmul.f32 %v9577, 1.442695
    %v9580 = vpow.pop %v9579
    %v9581 = vmul.f32 %v9578, 1.442695
    %v9582 = vpow.pop %v9581
    %v9583 = vadd.f32 %v9580, 1.0
    %v9584 = vadd.f32 %v9582, 1.0
    %v9585 = vrcp.pop %v9583
    %v9586 = vmul.f32 1.0, %v9585
    %v9587 = vrcp.pop %v9584
    %v9588 = vmul.f32 1.0, %v9587
    %v9589 = vxor.u32 %v9571, 2147483648
    %v9590 = vxor.u32 %v9572, 2147483648
    %v9591 = vmul.f32 %v9589, 1.442695
    %v9592 = vpow.pop %v9591
    %v9593 = vmul.f32 %v9590, 1.442695
    %v9594 = vpow.pop %v9593
    %v9595 = vadd.f32 %v9592, 1.0
    %v9596 = vadd.f32 %v9594, 1.0
    %v9597 = vrcp.pop %v9595
    %v9598 = vmul.f32 1.0, %v9597
    %v9599 = vrcp.pop %v9596
    %v9600 = vmul.f32 1.0, %v9599
    %v9601 = vadd.f32 %v9575, %v1118
    %v9602 = vadd.f32 %v9576, %v1122
    %v9603 = vmul.f32 %v9586, %v9601
    %v9604 = vmul.f32 %v9588, %v9602
    %v9605 = vadd.f32 %v9573, %v9603
    %v9606 = vadd.f32 %v9574, %v9604
    %v9607 = vtanh.pop %v9605
    %v9608 = vtanh.pop %v9606
    %v9609 = vsub.f32 1.0, %v9598
    %v9610 = vsub.f32 1.0, %v9600
    %v9611 = vmul.f32 %v9609, %v9607
    %v9612 = vmul.f32 %v9610, %v9608
    %v9613 = vmul.f32 %v9598, %v8500
    %v9614 = vmul.f32 %v9600, %v8501
    %v9615 = vadd.f32 %v9611, %v9613
    %v9616 = vadd.f32 %v9612, %v9614
    %s9617 = scalar_lea.vmem [#allocation2], 84
    %v9618 = vld [vmem:[%s9617] sm:$0xff]
    %v9619 = vld [vmem:[%s9617 + $0x8] sm:$0xf]
    %v9622 = vcombine.low %v8713, %v8715
    %v9624 = vunpack.c.l.s4 1983009808
    %v9625 = vunpack.c.0.s8 %v9624
    %v9626 = vlaneseq
    %v9627 = vshrl.u32 %v9626, 7
    %v9628 = vsub.s32 %v9625, %v9627
    %v9629 = vrot.slane %v9622, %v9628
    %v9631 = vadd.f32 %v9618, %v9629
    %v9632 = vxor.u32 %v9631, 2147483648
    %v9633 = vmul.f32 %v9632, 1.442695
    %v9634 = vpow.pop %v9633
    %v9635 = vadd.f32 %v9634, 1.0
    %v9636 = vrcp.pop %v9635
    %v9637 = vmul.f32 1.0, %v9636
    %v9639 = vrot.slane %v9618, 4
    %v9643 = vcombine.low %v8855, %v8857
    %v9645 = vunpack.c.l.s4 1983009808
    %v9646 = vunpack.c.0.s8 %v9645
    %v9647 = vlaneseq
    %v9648 = vshrl.u32 %v9647, 7
    %v9649 = vsub.s32 %v9646, %v9648
    %v9650 = vrot.slane %v9643, %v9649
    %v9652 = vadd.f32 %v9639, %v9650
    %v9653 = vxor.u32 %v9652, 2147483648
    %v9654 = vmul.f32 %v9653, 1.442695
    %v9655 = vpow.pop %v9654
    %v9656 = vadd.f32 %v9655, 1.0
    %v9657 = vrcp.pop %v9656
    %v9658 = vmul.f32 1.0, %v9657
    %v9659 = vadd.f32 %v8997, %v168
    %v9660 = vadd.f32 %v8999, %v172
    %v9663 = vcombine.low %v9659, %v9660
    %v9665 = vunpack.c.l.s4 1983009808
    %v9666 = vunpack.c.0.s8 %v9665
    %v9667 = vlaneseq
    %v9668 = vshrl.u32 %v9667, 7
    %v9669 = vsub.s32 %v9666, %v9668
    %v9670 = vrot.slane %v9663, %v9669
    %v9672 = vmul.f32 %v9637, %v9670
    %v9673 = vadd.f32 %v9619, %v9672
    %v9674 = vtanh.pop %v9673
    %v9675 = vsub.f32 1.0, %v9658
    %v9676 = vmul.f32 %v9675, %v9674
    %v9677 = vmul.f32 %v9658, %v8563
    %v9678 = vadd.f32 %v9676, %v9677
    %v9681 = vunpack.c.l.s4 1983009808
    %v9682 = vunpack.c.0.s8 %v9681
    %v9683 = vlaneseq
    %v9684 = vshrl.u32 %v9683, 7
    %v9685 = vsub.s32 %v9682, %v9684
    %v9686 = vrot.slane %v9678, %v9685
    %v9687 = vcombine.high %v9686, %v9686
    %9690 = vmatprep.subr.mxu0 %v182
    %9691 = vmatpush1.msra.mxu0 %v181
    %9692 = vmatprep.subr.mxu0 %v196
    %9693 = vmatpush1.msra.mxu0 %v195
    %9694 = vmatprep.subr.mxu0 %v210
    %9695 = vmatpush1.msra.mxu0 %v209
    %9696 = vmatprep.subr.mxu0 %v224
    %9697 = vmatpush1.msra.mxu0 %v223
    %9698 = vmatprep.subr.mxu0 %v238
    %9699 = vmatpush1.msra.mxu0 %v237
    %9700 = vmatprep.subr.mxu0 %v252
    %9701 = vmatpush1.msra.mxu0 %v251
    %9702 = vmatprep.subr.mxu0 %v266
    %9703 = vmatpush1.msra.mxu0 %v265
    %9704 = vmatprep.subr.mxu0 %v280
    %9705 = vmatpush1.msra.mxu0 %v279
    %9706 = vmatprep.subr.mxu0 %v294
    %9707 = vmatpush1.msra.mxu0 %v293
    %9708 = vmatprep.subr.mxu0 %v308
    %9709 = vmatpush1.msra.mxu0 %v307
    %9710 = vmatprep.subr.mxu0 %v322
    %9711 = vmatpush1.msra.mxu0 %v321
    %9712 = vmatprep.subr.mxu0 %v336
    %9713 = vmatpush1.msra.mxu0 %v335
    %9714 = vmatprep.subr.mxu0 %v350
    %9715 = vmatpush1.msra.mxu0 %v349
    %9716 = vmatprep.subr.mxu0 %v364
    %9717 = vmatpush1.msra.mxu0 %v363
    %9718 = vmatprep.subr.mxu0 %v378
    %9719 = vmatpush1.msra.mxu0 %v377
    %9720 = vmatprep.subr.mxu0 %v392
    %9721 = vmatpush1.msra.mxu0 %v391
    %9722 = vmatprep.subr.mxu0 %v406
    %9723 = vmatpush1.msra.mxu0 %v405
    %9724 = vmatprep.subr.mxu0 %v420
    %9725 = vmatpush1.msra.mxu0 %v419
    %9726 = vmatprep.subr.mxu0 %v434
    %9727 = vmatpush1.msra.mxu0 %v433
    %9728 = vmatprep.subr.mxu0 %v448
    %9729 = vmatpush1.msra.mxu0 %v447
    %9730 = vmatprep.subr.mxu0 %v462
    %9731 = vmatpush1.msra.mxu0 %v461
    %9732 = vmatprep.subr.mxu0 %v476
    %9733 = vmatpush1.msra.mxu0 %v475
    %9734 = vmatprep.subr.mxu0 %v490
    %9735 = vmatpush1.msra.mxu0 %v489
    %9736 = vmatprep.subr.mxu0 %v504
    %9737 = vmatpush1.msra.mxu0 %v503
    %9738 = vmatprep.subr.mxu0 %v518
    %9739 = vmatpush1.msra.mxu0 %v517
    %9740 = vmatprep.subr.mxu0 %v532
    %9741 = vmatpush1.msra.mxu0 %v531
    %9742 = vmatprep.subr.mxu0 %v546
    %9743 = vmatpush1.msra.mxu0 %v545
    %9744 = vmatprep.subr.mxu0 %v560
    %9745 = vmatpush1.msra.mxu0 %v559
    %9746 = vmatprep.subr.mxu0 %v574
    %9747 = vmatpush1.msra.mxu0 %v573
    %9748 = vmatprep.subr.mxu0 %v588
    %9749 = vmatpush1.msra.mxu0 %v587
    %9750 = vmatprep.subr.mxu0 %v602
    %9751 = vmatpush1.msra.mxu0 %v601
    %9752 = vmatprep.subr.mxu0 %v616
    %9753 = vmatpush1.msra.mxu0 %v615
    %9754 = vmatprep.mubr.f32.mxu0 %v9687
    %9755 = vmatmul.mubr.f32.gmra.mrb[0].mxu0 %v9686
    %v9756 = vpop.f32.mrb[0].mxu0
    %v9757 = vadd.f32 0.0, %v9756
    %v9758 = vpop.f32.mrb[0].mxu0
    %v9759 = vadd.f32 0.0, %v9758
    %9760 = vdwg.mxu0
    %9761 = vmatprep.subr.mxu0 %v630
    %9762 = vmatpush1.msra.mxu0 %v629
    %9763 = vmatprep.subr.mxu0 %v644
    %9764 = vmatpush1.msra.mxu0 %v643
    %9765 = vmatprep.subr.mxu0 %v658
    %9766 = vmatpush1.msra.mxu0 %v657
    %9767 = vmatprep.subr.mxu0 %v672
    %9768 = vmatpush1.msra.mxu0 %v671
    %9769 = vmatprep.subr.mxu0 %v686
    %9770 = vmatpush1.msra.mxu0 %v685
    %9771 = vmatprep.subr.mxu0 %v700
    %9772 = vmatpush1.msra.mxu0 %v699
    %9773 = vmatprep.subr.mxu0 %v714
    %9774 = vmatpush1.msra.mxu0 %v713
    %9775 = vmatprep.subr.mxu0 %v728
    %9776 = vmatpush1.msra.mxu0 %v727
    %9777 = vmatprep.subr.mxu0 %v742
    %9778 = vmatpush1.msra.mxu0 %v741
    %9779 = vmatprep.subr.mxu0 %v756
    %9780 = vmatpush1.msra.mxu0 %v755
    %9781 = vmatprep.subr.mxu0 %v770
    %9782 = vmatpush1.msra.mxu0 %v769
    %9783 = vmatprep.subr.mxu0 %v784
    %9784 = vmatpush1.msra.mxu0 %v783
    %9785 = vmatprep.subr.mxu0 %v798
    %9786 = vmatpush1.msra.mxu0 %v797
    %9787 = vmatprep.subr.mxu0 %v812
    %9788 = vmatpush1.msra.mxu0 %v811
    %9789 = vmatprep.subr.mxu0 %v826
    %9790 = vmatpush1.msra.mxu0 %v825
    %9791 = vmatprep.subr.mxu0 %v840
    %9792 = vmatpush1.msra.mxu0 %v839
    %9793 = vmatprep.subr.mxu0 %v854
    %9794 = vmatpush1.msra.mxu0 %v853
    %9795 = vmatprep.subr.mxu0 %v868
    %9796 = vmatpush1.msra.mxu0 %v867
    %9797 = vmatprep.subr.mxu0 %v882
    %9798 = vmatpush1.msra.mxu0 %v881
    %9799 = vmatprep.subr.mxu0 %v896
    %9800 = vmatpush1.msra.mxu0 %v895
    %9801 = vmatprep.subr.mxu0 %v910
    %9802 = vmatpush1.msra.mxu0 %v909
    %9803 = vmatprep.subr.mxu0 %v924
    %9804 = vmatpush1.msra.mxu0 %v923
    %9805 = vmatprep.subr.mxu0 %v938
    %9806 = vmatpush1.msra.mxu0 %v937
    %9807 = vmatprep.subr.mxu0 %v952
    %9808 = vmatpush1.msra.mxu0 %v951
    %9809 = vmatprep.subr.mxu0 %v966
    %9810 = vmatpush1.msra.mxu0 %v965
    %9811 = vmatprep.subr.mxu0 %v980
    %9812 = vmatpush1.msra.mxu0 %v979
    %9813 = vmatprep.subr.mxu0 %v994
    %9814 = vmatpush1.msra.mxu0 %v993
    %9815 = vmatprep.subr.mxu0 %v1008
    %9816 = vmatpush1.msra.mxu0 %v1007
    %9817 = vmatprep.subr.mxu0 %v1022
    %9818 = vmatpush1.msra.mxu0 %v1021
    %9819 = vmatprep.subr.mxu0 %v1036
    %9820 = vmatpush1.msra.mxu0 %v1035
    %9821 = vmatprep.subr.mxu0 %v1050
    %9822 = vmatpush1.msra.mxu0 %v1049
    %9823 = vmatprep.subr.mxu0 %v1064
    %9824 = vmatpush1.msra.mxu0 %v1063
    %9825 = vmatprep.mubr.f32.mxu0 %v9616
    %9826 = vmatmul.mubr.f32.gmra.mrb[0].mxu0 %v9615
    %v9827 = vpop.f32.mrb[0].mxu0
    %v9828 = vadd.f32 %v9757, %v9827
    %v9829 = vpop.f32.mrb[0].mxu0
    %v9830 = vadd.f32 %v9759, %v9829
    %9831 = vdwg.mxu0
    %9832 = vmatprep.subr.mxu0 %v184
    %9833 = vmatpush1.msra.mxu0 %v183
    %9834 = vmatprep.subr.mxu0 %v198
    %9835 = vmatpush1.msra.mxu0 %v197
    %9836 = vmatprep.subr.mxu0 %v212
    %9837 = vmatpush1.msra.mxu0 %v211
    %9838 = vmatprep.subr.mxu0 %v226
    %9839 = vmatpush1.msra.mxu0 %v225
    %9840 = vmatprep.subr.mxu0 %v240
    %9841 = vmatpush1.msra.mxu0 %v239
    %9842 = vmatprep.subr.mxu0 %v254
    %9843 = vmatpush1.msra.mxu0 %v253
    %9844 = vmatprep.subr.mxu0 %v268
    %9845 = vmatpush1.msra.mxu0 %v267
    %9846 = vmatprep.subr.mxu0 %v282
    %9847 = vmatpush1.msra.mxu0 %v281
    %9848 = vmatprep.subr.mxu0 %v296
    %9849 = vmatpush1.msra.mxu0 %v295
    %9850 = vmatprep.subr.mxu0 %v310
    %9851 = vmatpush1.msra.mxu0 %v309
    %9852 = vmatprep.subr.mxu0 %v324
    %9853 = vmatpush1.msra.mxu0 %v323
    %9854 = vmatprep.subr.mxu0 %v338
    %9855 = vmatpush1.msra.mxu0 %v337
    %9856 = vmatprep.subr.mxu0 %v352
    %9857 = vmatpush1.msra.mxu0 %v351
    %9858 = vmatprep.subr.mxu0 %v366
    %9859 = vmatpush1.msra.mxu0 %v365
    %9860 = vmatprep.subr.mxu0 %v380
    %9861 = vmatpush1.msra.mxu0 %v379
    %9862 = vmatprep.subr.mxu0 %v394
    %9863 = vmatpush1.msra.mxu0 %v393
    %9864 = vmatprep.subr.mxu0 %v408
    %9865 = vmatpush1.msra.mxu0 %v407
    %9866 = vmatprep.subr.mxu0 %v422
    %9867 = vmatpush1.msra.mxu0 %v421
    %9868 = vmatprep.subr.mxu0 %v436
    %9869 = vmatpush1.msra.mxu0 %v435
    %9870 = vmatprep.subr.mxu0 %v450
    %9871 = vmatpush1.msra.mxu0 %v449
    %9872 = vmatprep.subr.mxu0 %v464
    %9873 = vmatpush1.msra.mxu0 %v463
    %9874 = vmatprep.subr.mxu0 %v478
    %9875 = vmatpush1.msra.mxu0 %v477
    %9876 = vmatprep.subr.mxu0 %v492
    %9877 = vmatpush1.msra.mxu0 %v491
    %9878 = vmatprep.subr.mxu0 %v506
    %9879 = vmatpush1.msra.mxu0 %v505
    %9880 = vmatprep.subr.mxu0 %v520
    %9881 = vmatpush1.msra.mxu0 %v519
    %9882 = vmatprep.subr.mxu0 %v534
    %9883 = vmatpush1.msra.mxu0 %v533
    %9884 = vmatprep.subr.mxu0 %v548
    %9885 = vmatpush1.msra.mxu0 %v547
    %9886 = vmatprep.subr.mxu0 %v562
    %9887 = vmatpush1.msra.mxu0 %v561
    %9888 = vmatprep.subr.mxu0 %v576
    %9889 = vmatpush1.msra.mxu0 %v575
    %9890 = vmatprep.subr.mxu0 %v590
    %9891 = vmatpush1.msra.mxu0 %v589
    %9892 = vmatprep.subr.mxu0 %v604
    %9893 = vmatpush1.msra.mxu0 %v603
    %9894 = vmatprep.subr.mxu0 %v618
    %9895 = vmatpush1.msra.mxu0 %v617
    %9896 = vmatprep.mubr.f32.mxu0 %v9687
    %9897 = vmatmul.mubr.f32.gmra.mrb[0].mxu0 %v9686
    %v9898 = vpop.f32.mrb[0].mxu0
    %v9899 = vadd.f32 0.0, %v9898
    %v9900 = vpop.f32.mrb[0].mxu0
    %v9901 = vadd.f32 0.0, %v9900
    %9902 = vdwg.mxu0
    %9903 = vmatprep.subr.mxu0 %v632
    %9904 = vmatpush1.msra.mxu0 %v631
    %9905 = vmatprep.subr.mxu0 %v646
    %9906 = vmatpush1.msra.mxu0 %v645
    %9907 = vmatprep.subr.mxu0 %v660
    %9908 = vmatpush1.msra.mxu0 %v659
    %9909 = vmatprep.subr.mxu0 %v674
    %9910 = vmatpush1.msra.mxu0 %v673
    %9911 = vmatprep.subr.mxu0 %v688
    %9912 = vmatpush1.msra.mxu0 %v687
    %9913 = vmatprep.subr.mxu0 %v702
    %9914 = vmatpush1.msra.mxu0 %v701
    %9915 = vmatprep.subr.mxu0 %v716
    %9916 = vmatpush1.msra.mxu0 %v715
    %9917 = vmatprep.subr.mxu0 %v730
    %9918 = vmatpush1.msra.mxu0 %v729
    %9919 = vmatprep.subr.mxu0 %v744
    %9920 = vmatpush1.msra.mxu0 %v743
    %9921 = vmatprep.subr.mxu0 %v758
    %9922 = vmatpush1.msra.mxu0 %v757
    %9923 = vmatprep.subr.mxu0 %v772
    %9924 = vmatpush1.msra.mxu0 %v771
    %9925 = vmatprep.subr.mxu0 %v786
    %9926 = vmatpush1.msra.mxu0 %v785
    %9927 = vmatprep.subr.mxu0 %v800
    %9928 = vmatpush1.msra.mxu0 %v799
    %9929 = vmatprep.subr.mxu0 %v814
    %9930 = vmatpush1.msra.mxu0 %v813
    %9931 = vmatprep.subr.mxu0 %v828
    %9932 = vmatpush1.msra.mxu0 %v827
    %9933 = vmatprep.subr.mxu0 %v842
    %9934 = vmatpush1.msra.mxu0 %v841
    %9935 = vmatprep.subr.mxu0 %v856
    %9936 = vmatpush1.msra.mxu0 %v855
    %9937 = vmatprep.subr.mxu0 %v870
    %9938 = vmatpush1.msra.mxu0 %v869
    %9939 = vmatprep.subr.mxu0 %v884
    %9940 = vmatpush1.msra.mxu0 %v883
    %9941 = vmatprep.subr.mxu0 %v898
    %9942 = vmatpush1.msra.mxu0 %v897
    %9943 = vmatprep.subr.mxu0 %v912
    %9944 = vmatpush1.msra.mxu0 %v911
    %9945 = vmatprep.subr.mxu0 %v926
    %9946 = vmatpush1.msra.mxu0 %v925
    %9947 = vmatprep.subr.mxu0 %v940
    %9948 = vmatpush1.msra.mxu0 %v939
    %9949 = vmatprep.subr.mxu0 %v954
    %9950 = vmatpush1.msra.mxu0 %v953
    %9951 = vmatprep.subr.mxu0 %v968
    %9952 = vmatpush1.msra.mxu0 %v967
    %9953 = vmatprep.subr.mxu0 %v982
    %9954 = vmatpush1.msra.mxu0 %v981
    %9955 = vmatprep.subr.mxu0 %v996
    %9956 = vmatpush1.msra.mxu0 %v995
    %9957 = vmatprep.subr.mxu0 %v1010
    %9958 = vmatpush1.msra.mxu0 %v1009
    %9959 = vmatprep.subr.mxu0 %v1024
    %9960 = vmatpush1.msra.mxu0 %v1023
    %9961 = vmatprep.subr.mxu0 %v1038
    %9962 = vmatpush1.msra.mxu0 %v1037
    %9963 = vmatprep.subr.mxu0 %v1052
    %9964 = vmatpush1.msra.mxu0 %v1051
    %9965 = vmatprep.subr.mxu0 %v1066
    %9966 = vmatpush1.msra.mxu0 %v1065
    %9967 = vmatprep.mubr.f32.mxu0 %v9616
    %9968 = vmatmul.mubr.f32.gmra.mrb[0].mxu0 %v9615
    %v9969 = vpop.f32.mrb[0].mxu0
    %v9970 = vadd.f32 %v9899, %v9969
    %v9971 = vpop.f32.mrb[0].mxu0
    %v9972 = vadd.f32 %v9901, %v9971
    %9973 = vdwg.mxu0
    %9974 = vmatprep.subr.mxu0 %v186
    %9975 = vmatpush1.msra.mxu0 %v185
    %9976 = vmatprep.subr.mxu0 %v200
    %9977 = vmatpush1.msra.mxu0 %v199
    %9978 = vmatprep.subr.mxu0 %v214
    %9979 = vmatpush1.msra.mxu0 %v213
    %9980 = vmatprep.subr.mxu0 %v228
    %9981 = vmatpush1.msra.mxu0 %v227
    %9982 = vmatprep.subr.mxu0 %v242
    %9983 = vmatpush1.msra.mxu0 %v241
    %9984 = vmatprep.subr.mxu0 %v256
    %9985 = vmatpush1.msra.mxu0 %v255
    %9986 = vmatprep.subr.mxu0 %v270
    %9987 = vmatpush1.msra.mxu0 %v269
    %9988 = vmatprep.subr.mxu0 %v284
    %9989 = vmatpush1.msra.mxu0 %v283
    %9990 = vmatprep.subr.mxu0 %v298
    %9991 = vmatpush1.msra.mxu0 %v297
    %9992 = vmatprep.subr.mxu0 %v312
    %9993 = vmatpush1.msra.mxu0 %v311
    %9994 = vmatprep.subr.mxu0 %v326
    %9995 = vmatpush1.msra.mxu0 %v325
    %9996 = vmatprep.subr.mxu0 %v340
    %9997 = vmatpush1.msra.mxu0 %v339
    %9998 = vmatprep.subr.mxu0 %v354
    %9999 = vmatpush1.msra.mxu0 %v353
    %10000 = vmatprep.subr.mxu0 %v368
    %10001 = vmatpush1.msra.mxu0 %v367
    %10002 = vmatprep.subr.mxu0 %v382
    %10003 = vmatpush1.msra.mxu0 %v381
    %10004 = vmatprep.subr.mxu0 %v396
    %10005 = vmatpush1.msra.mxu0 %v395
    %10006 = vmatprep.subr.mxu0 %v410
    %10007 = vmatpush1.msra.mxu0 %v409
    %10008 = vmatprep.subr.mxu0 %v424
    %10009 = vmatpush1.msra.mxu0 %v423
    %10010 = vmatprep.subr.mxu0 %v438
    %10011 = vmatpush1.msra.mxu0 %v437
    %10012 = vmatprep.subr.mxu0 %v452
    %10013 = vmatpush1.msra.mxu0 %v451
    %10014 = vmatprep.subr.mxu0 %v466
    %10015 = vmatpush1.msra.mxu0 %v465
    %10016 = vmatprep.subr.mxu0 %v480
    %10017 = vmatpush1.msra.mxu0 %v479
    %10018 = vmatprep.subr.mxu0 %v494
    %10019 = vmatpush1.msra.mxu0 %v493
    %10020 = vmatprep.subr.mxu0 %v508
    %10021 = vmatpush1.msra.mxu0 %v507
    %10022 = vmatprep.subr.mxu0 %v522
    %10023 = vmatpush1.msra.mxu0 %v521
    %10024 = vmatprep.subr.mxu0 %v536
    %10025 = vmatpush1.msra.mxu0 %v535
    %10026 = vmatprep.subr.mxu0 %v550
    %10027 = vmatpush1.msra.mxu0 %v549
    %10028 = vmatprep.subr.mxu0 %v564
    %10029 = vmatpush1.msra.mxu0 %v563
    %10030 = vmatprep.subr.mxu0 %v578
    %10031 = vmatpush1.msra.mxu0 %v577
    %10032 = vmatprep.subr.mxu0 %v592
    %10033 = vmatpush1.msra.mxu0 %v591
    %10034 = vmatprep.subr.mxu0 %v606
    %10035 = vmatpush1.msra.mxu0 %v605
    %10036 = vmatprep.subr.mxu0 %v620
    %10037 = vmatpush1.msra.mxu0 %v619
    %10038 = vmatprep.mubr.f32.mxu0 %v9687
    %10039 = vmatmul.mubr.f32.gmra.mrb[0].mxu0 %v9686
    %v10040 = vpop.f32.mrb[0].mxu0
    %v10041 = vadd.f32 0.0, %v10040
    %v10042 = vpop.f32.mrb[0].mxu0
    %v10043 = vadd.f32 0.0, %v10042
    %10044 = vdwg.mxu0
    %10045 = vmatprep.subr.mxu0 %v634
    %10046 = vmatpush1.msra.mxu0 %v633
    %10047 = vmatprep.subr.mxu0 %v648
    %10048 = vmatpush1.msra.mxu0 %v647
    %10049 = vmatprep.subr.mxu0 %v662
    %10050 = vmatpush1.msra.mxu0 %v661
    %10051 = vmatprep.subr.mxu0 %v676
    %10052 = vmatpush1.msra.mxu0 %v675
    %10053 = vmatprep.subr.mxu0 %v690
    %10054 = vmatpush1.msra.mxu0 %v689
    %10055 = vmatprep.subr.mxu0 %v704
    %10056 = vmatpush1.msra.mxu0 %v703
    %10057 = vmatprep.subr.mxu0 %v718
    %10058 = vmatpush1.msra.mxu0 %v717
    %10059 = vmatprep.subr.mxu0 %v732
    %10060 = vmatpush1.msra.mxu0 %v731
    %10061 = vmatprep.subr.mxu0 %v746
    %10062 = vmatpush1.msra.mxu0 %v745
    %10063 = vmatprep.subr.mxu0 %v760
    %10064 = vmatpush1.msra.mxu0 %v759
    %10065 = vmatprep.subr.mxu0 %v774
    %10066 = vmatpush1.msra.mxu0 %v773
    %10067 = vmatprep.subr.mxu0 %v788
    %10068 = vmatpush1.msra.mxu0 %v787
    %10069 = vmatprep.subr.mxu0 %v802
    %10070 = vmatpush1.msra.mxu0 %v801
    %10071 = vmatprep.subr.mxu0 %v816
    %10072 = vmatpush1.msra.mxu0 %v815
    %10073 = vmatprep.subr.mxu0 %v830
    %10074 = vmatpush1.msra.mxu0 %v829
    %10075 = vmatprep.subr.mxu0 %v844
    %10076 = vmatpush1.msra.mxu0 %v843
    %10077 = vmatprep.subr.mxu0 %v858
    %10078 = vmatpush1.msra.mxu0 %v857
    %10079 = vmatprep.subr.mxu0 %v872
    %10080 = vmatpush1.msra.mxu0 %v871
    %10081 = vmatprep.subr.mxu0 %v886
    %10082 = vmatpush1.msra.mxu0 %v885
    %10083 = vmatprep.subr.mxu0 %v900
    %10084 = vmatpush1.msra.mxu0 %v899
    %10085 = vmatprep.subr.mxu0 %v914
    %10086 = vmatpush1.msra.mxu0 %v913
    %10087 = vmatprep.subr.mxu0 %v928
    %10088 = vmatpush1.msra.mxu0 %v927
    %10089 = vmatprep.subr.mxu0 %v942
    %10090 = vmatpush1.msra.mxu0 %v941
    %10091 = vmatprep.subr.mxu0 %v956
    %10092 = vmatpush1.msra.mxu0 %v955
    %10093 = vmatprep.subr.mxu0 %v970
    %10094 = vmatpush1.msra.mxu0 %v969
    %10095 = vmatprep.subr.mxu0 %v984
    %10096 = vmatpush1.msra.mxu0 %v983
    %10097 = vmatprep.subr.mxu0 %v998
    %10098 = vmatpush1.msra.mxu0 %v997
    %10099 = vmatprep.subr.mxu0 %v1012
    %10100 = vmatpush1.msra.mxu0 %v1011
    %10101 = vmatprep.subr.mxu0 %v1026
    %10102 = vmatpush1.msra.mxu0 %v1025
    %10103 = vmatprep.subr.mxu0 %v1040
    %10104 = vmatpush1.msra.mxu0 %v1039
    %10105 = vmatprep.subr.mxu0 %v1054
    %10106 = vmatpush1.msra.mxu0 %v1053
    %10107 = vmatprep.subr.mxu0 %v1068
    %10108 = vmatpush1.msra.mxu0 %v1067
    %10109 = vmatprep.mubr.f32.mxu0 %v9616
    %10110 = vmatmul.mubr.f32.gmra.mrb[0].mxu0 %v9615
    %v10111 = vpop.f32.mrb[0].mxu0
    %v10112 = vadd.f32 %v10041, %v10111
    %v10113 = vpop.f32.mrb[0].mxu0
    %v10114 = vadd.f32 %v10043, %v10113
    %10115 = vdwg.mxu0
    %10116 = vmatprep.subr.mxu0 %v188
    %10117 = vmatpush1.msra.mxu0 %v187
    %10118 = vmatprep.subr.mxu0 %v202
    %10119 = vmatpush1.msra.mxu0 %v201
    %10120 = vmatprep.subr.mxu0 %v216
    %10121 = vmatpush1.msra.mxu0 %v215
    %10122 = vmatprep.subr.mxu0 %v230
    %10123 = vmatpush1.msra.mxu0 %v229
    %10124 = vmatprep.subr.mxu0 %v244
    %10125 = vmatpush1.msra.mxu0 %v243
    %10126 = vmatprep.subr.mxu0 %v258
    %10127 = vmatpush1.msra.mxu0 %v257
    %10128 = vmatprep.subr.mxu0 %v272
    %10129 = vmatpush1.msra.mxu0 %v271
    %10130 = vmatprep.subr.mxu0 %v286
    %10131 = vmatpush1.msra.mxu0 %v285
    %10132 = vmatprep.subr.mxu0 %v300
    %10133 = vmatpush1.msra.mxu0 %v299
    %10134 = vmatprep.subr.mxu0 %v314
    %10135 = vmatpush1.msra.mxu0 %v313
    %10136 = vmatprep.subr.mxu0 %v328
    %10137 = vmatpush1.msra.mxu0 %v327
    %10138 = vmatprep.subr.mxu0 %v342
    %10139 = vmatpush1.msra.mxu0 %v341
    %10140 = vmatprep.subr.mxu0 %v356
    %10141 = vmatpush1.msra.mxu0 %v355
    %10142 = vmatprep.subr.mxu0 %v370
    %10143 = vmatpush1.msra.mxu0 %v369
    %10144 = vmatprep.subr.mxu0 %v384
    %10145 = vmatpush1.msra.mxu0 %v383
    %10146 = vmatprep.subr.mxu0 %v398
    %10147 = vmatpush1.msra.mxu0 %v397
    %10148 = vmatprep.subr.mxu0 %v412
    %10149 = vmatpush1.msra.mxu0 %v411
    %10150 = vmatprep.subr.mxu0 %v426
    %10151 = vmatpush1.msra.mxu0 %v425
    %10152 = vmatprep.subr.mxu0 %v440
    %10153 = vmatpush1.msra.mxu0 %v439
    %10154 = vmatprep.subr.mxu0 %v454
    %10155 = vmatpush1.msra.mxu0 %v453
    %10156 = vmatprep.subr.mxu0 %v468
    %10157 = vmatpush1.msra.mxu0 %v467
    %10158 = vmatprep.subr.mxu0 %v482
    %10159 = vmatpush1.msra.mxu0 %v481
    %10160 = vmatprep.subr.mxu0 %v496
    %10161 = vmatpush1.msra.mxu0 %v495
    %10162 = vmatprep.subr.mxu0 %v510
    %10163 = vmatpush1.msra.mxu0 %v509
    %10164 = vmatprep.subr.mxu0 %v524
    %10165 = vmatpush1.msra.mxu0 %v523
    %10166 = vmatprep.subr.mxu0 %v538
    %10167 = vmatpush1.msra.mxu0 %v537
    %10168 = vmatprep.subr.mxu0 %v552
    %10169 = vmatpush1.msra.mxu0 %v551
    %10170 = vmatprep.subr.mxu0 %v566
    %10171 = vmatpush1.msra.mxu0 %v565
    %10172 = vmatprep.subr.mxu0 %v580
    %10173 = vmatpush1.msra.mxu0 %v579
    %10174 = vmatprep.subr.mxu0 %v594
    %10175 = vmatpush1.msra.mxu0 %v593
    %10176 = vmatprep.subr.mxu0 %v608
    %10177 = vmatpush1.msra.mxu0 %v607
    %10178 = vmatprep.subr.mxu0 %v622
    %10179 = vmatpush1.msra.mxu0 %v621
    %10180 = vmatprep.mubr.f32.mxu0 %v9687
    %10181 = vmatmul.mubr.f32.gmra.mrb[0].mxu0 %v9686
    %v10182 = vpop.f32.mrb[0].mxu0
    %v10183 = vadd.f32 0.0, %v10182
    %v10184 = vpop.f32.mrb[0].mxu0
    %v10185 = vadd.f32 0.0, %v10184
    %10186 = vdwg.mxu0
    %10187 = vmatprep.subr.mxu0 %v636
    %10188 = vmatpush1.msra.mxu0 %v635
    %10189 = vmatprep.subr.mxu0 %v650
    %10190 = vmatpush1.msra.mxu0 %v649
    %10191 = vmatprep.subr.mxu0 %v664
    %10192 = vmatpush1.msra.mxu0 %v663
    %10193 = vmatprep.subr.mxu0 %v678
    %10194 = vmatpush1.msra.mxu0 %v677
    %10195 = vmatprep.subr.mxu0 %v692
    %10196 = vmatpush1.msra.mxu0 %v691
    %10197 = vmatprep.subr.mxu0 %v706
    %10198 = vmatpush1.msra.mxu0 %v705
    %10199 = vmatprep.subr.mxu0 %v720
    %10200 = vmatpush1.msra.mxu0 %v719
    %10201 = vmatprep.subr.mxu0 %v734
    %10202 = vmatpush1.msra.mxu0 %v733
    %10203 = vmatprep.subr.mxu0 %v748
    %10204 = vmatpush1.msra.mxu0 %v747
    %10205 = vmatprep.subr.mxu0 %v762
    %10206 = vmatpush1.msra.mxu0 %v761
    %10207 = vmatprep.subr.mxu0 %v776
    %10208 = vmatpush1.msra.mxu0 %v775
    %10209 = vmatprep.subr.mxu0 %v790
    %10210 = vmatpush1.msra.mxu0 %v789
    %10211 = vmatprep.subr.mxu0 %v804
    %10212 = vmatpush1.msra.mxu0 %v803
    %10213 = vmatprep.subr.mxu0 %v818
    %10214 = vmatpush1.msra.mxu0 %v817
    %10215 = vmatprep.subr.mxu0 %v832
    %10216 = vmatpush1.msra.mxu0 %v831
    %10217 = vmatprep.subr.mxu0 %v846
    %10218 = vmatpush1.msra.mxu0 %v845
    %10219 = vmatprep.subr.mxu0 %v860
    %10220 = vmatpush1.msra.mxu0 %v859
    %10221 = vmatprep.subr.mxu0 %v874
    %10222 = vmatpush1.msra.mxu0 %v873
    %10223 = vmatprep.subr.mxu0 %v888
    %10224 = vmatpush1.msra.mxu0 %v887
    %10225 = vmatprep.subr.mxu0 %v902
    %10226 = vmatpush1.msra.mxu0 %v901
    %10227 = vmatprep.subr.mxu0 %v916
    %10228 = vmatpush1.msra.mxu0 %v915
    %10229 = vmatprep.subr.mxu0 %v930
    %10230 = vmatpush1.msra.mxu0 %v929
    %10231 = vmatprep.subr.mxu0 %v944
    %10232 = vmatpush1.msra.mxu0 %v943
    %10233 = vmatprep.subr.mxu0 %v958
    %10234 = vmatpush1.msra.mxu0 %v957
    %10235 = vmatprep.subr.mxu0 %v972
    %10236 = vmatpush1.msra.mxu0 %v971
    %10237 = vmatprep.subr.mxu0 %v986
    %10238 = vmatpush1.msra.mxu0 %v985
    %10239 = vmatprep.subr.mxu0 %v1000
    %10240 = vmatpush1.msra.mxu0 %v999
    %10241 = vmatprep.subr.mxu0 %v1014
    %10242 = vmatpush1.msra.mxu0 %v1013
    %10243 = vmatprep.subr.mxu0 %v1028
    %10244 = vmatpush1.msra.mxu0 %v1027
    %10245 = vmatprep.subr.mxu0 %v1042
    %10246 = vmatpush1.msra.mxu0 %v1041
    %10247 = vmatprep.subr.mxu0 %v1056
    %10248 = vmatpush1.msra.mxu0 %v1055
    %10249 = vmatprep.subr.mxu0 %v1070
    %10250 = vmatpush1.msra.mxu0 %v1069
    %10251 = vmatprep.mubr.f32.mxu0 %v9616
    %10252 = vmatmul.mubr.f32.gmra.mrb[0].mxu0 %v9615
    %v10253 = vpop.f32.mrb[0].mxu0
    %v10254 = vadd.f32 %v10183, %v10253
    %v10255 = vpop.f32.mrb[0].mxu0
    %v10256 = vadd.f32 %v10185, %v10255
    %10257 = vdwg.mxu0
    %v10258 = vadd.f32 %v9828, %v1076
    %v10259 = vadd.f32 %v9830, %v1080
    %v10260 = vadd.f32 %v9970, %v1084
    %v10261 = vadd.f32 %v9972, %v1088
    %v10262 = vadd.f32 %v10112, %v1092
    %v10263 = vadd.f32 %v10114, %v1096
    %v10264 = vadd.f32 %v10254, %v1100
    %v10265 = vadd.f32 %v10256, %v1104
    %v10266 = vxor.u32 %v10258, 2147483648
    %v10267 = vxor.u32 %v10259, 2147483648
    %v10268 = vmul.f32 %v10266, 1.442695
    %v10269 = vpow.pop %v10268
    %v10270 = vmul.f32 %v10267, 1.442695
    %v10271 = vpow.pop %v10270
    %v10272 = vadd.f32 %v10269, 1.0
    %v10273 = vadd.f32 %v10271, 1.0
    %v10274 = vrcp.pop %v10272
    %v10275 = vmul.f32 1.0, %v10274
    %v10276 = vrcp.pop %v10273
    %v10277 = vmul.f32 1.0, %v10276
    %v10278 = vxor.u32 %v10260, 2147483648
    %v10279 = vxor.u32 %v10261, 2147483648
    %v10280 = vmul.f32 %v10278, 1.442695
    %v10281 = vpow.pop %v10280
    %v10282 = vmul.f32 %v10279, 1.442695
    %v10283 = vpow.pop %v10282
    %v10284 = vadd.f32 %v10281, 1.0
    %v10285 = vadd.f32 %v10283, 1.0
    %v10286 = vrcp.pop %v10284
    %v10287 = vmul.f32 1.0, %v10286
    %v10288 = vrcp.pop %v10285
    %v10289 = vmul.f32 1.0, %v10288
    %v10290 = vadd.f32 %v10264, %v1118
    %v10291 = vadd.f32 %v10265, %v1122
    %v10292 = vmul.f32 %v10275, %v10290
    %v10293 = vmul.f32 %v10277, %v10291
    %v10294 = vadd.f32 %v10262, %v10292
    %v10295 = vadd.f32 %v10263, %v10293
    %v10296 = vtanh.pop %v10294
    %v10297 = vtanh.pop %v10295
    %v10298 = vsub.f32 1.0, %v10287
    %v10299 = vsub.f32 1.0, %v10289
    %v10300 = vmul.f32 %v10298, %v10296
    %v10301 = vmul.f32 %v10299, %v10297
    %v10302 = vmul.f32 %v10287, %v9615
    %v10303 = vmul.f32 %v10289, %v9616
    %v10304 = vadd.f32 %v10300, %v10302
    %v10305 = vadd.f32 %v10301, %v10303
    %v10306 = vld [vmem:[%s10] sm:$0xff]
    %v10307 = vld [vmem:[%s10 + $0x8] sm:$0xff]
    %v10308 = vld [vmem:[%s10 + $0x10] sm:$0xff]
    %v10309 = vld [vmem:[%s10 + $0x18] sm:$0xff]
    %v10310 = vld [vmem:[%s10 + $0x20] sm:$0xff]
    %v10311 = vld [vmem:[%s10 + $0x28] sm:$0xff]
    %v10312 = vld [vmem:[%s10 + $0x30] sm:$0xff]
    %v10313 = vld [vmem:[%s10 + $0x38] sm:$0xff]
    %v10314 = vld [vmem:[%s10 + $0x40] sm:$0xff]
    %v10315 = vld [vmem:[%s10 + $0x48] sm:$0xff]
    %v10316 = vld [vmem:[%s10 + $0x50] sm:$0xff]
    %v10317 = vld [vmem:[%s10 + $0x58] sm:$0xff]
    %v10318 = vld [vmem:[%s10 + $0x60] sm:$0xff]
    %v10319 = vld [vmem:[%s10 + $0x68] sm:$0xff]
    %v10320 = vld [vmem:[%s10 + $0x70] sm:$0xff]
    %v10321 = vld [vmem:[%s10 + $0x78] sm:$0xff]
    %v10322 = vld [vmem:[%s10 + $0x80] sm:$0xff]
    %v10323 = vld [vmem:[%s10 + $0x88] sm:$0xff]
    %v10324 = vld [vmem:[%s10 + $0x90] sm:$0xff]
    %v10325 = vld [vmem:[%s10 + $0x98] sm:$0xff]
    %v10326 = vld [vmem:[%s10 + $0xa0] sm:$0xff]
    %v10327 = vld [vmem:[%s10 + $0xa8] sm:$0xff]
    %v10328 = vld [vmem:[%s10 + $0xb0] sm:$0xff]
    %v10329 = vld [vmem:[%s10 + $0xb8] sm:$0xff]
    %v10330 = vld [vmem:[%s10 + $0xc0] sm:$0xff]
    %v10331 = vld [vmem:[%s10 + $0xc8] sm:$0xff]
    %v10332 = vld [vmem:[%s10 + $0xd0] sm:$0xff]
    %v10333 = vld [vmem:[%s10 + $0xd8] sm:$0xff]
    %v10334 = vld [vmem:[%s10 + $0xe0] sm:$0xff]
    %v10335 = vld [vmem:[%s10 + $0xe8] sm:$0xff]
    %v10336 = vld [vmem:[%s10 + $0xf0] sm:$0xff]
    %v10337 = vld [vmem:[%s10 + $0xf8] sm:$0xff]
    %v10338 = vld [vmem:[#allocation18] sm:$0x1]
    %v10340 = vlaneseq
    %v10341 = vshrl.u32 %v10340, 7
    %v10342 = vsub.s32 0, %v10341
    %v10343 = vrot.slane %v10338, %v10342
    %10345 = vmatprep.subr.mxu0 0.0
    %10346 = vmatpush1.msra.mxu0 %v10306
    %10347 = vmatprep.subr.mxu0 0.0
    %10348 = vmatpush1.msra.mxu0 %v10307
    %10349 = vmatprep.subr.mxu0 0.0
    %10350 = vmatpush1.msra.mxu0 %v10308
    %10351 = vmatprep.subr.mxu0 0.0
    %10352 = vmatpush1.msra.mxu0 %v10309
    %10353 = vmatprep.subr.mxu0 0.0
    %10354 = vmatpush1.msra.mxu0 %v10310
    %10355 = vmatprep.subr.mxu0 0.0
    %10356 = vmatpush1.msra.mxu0 %v10311
    %10357 = vmatprep.subr.mxu0 0.0
    %10358 = vmatpush1.msra.mxu0 %v10312
    %10359 = vmatprep.subr.mxu0 0.0
    %10360 = vmatpush1.msra.mxu0 %v10313
    %10361 = vmatprep.subr.mxu0 0.0
    %10362 = vmatpush1.msra.mxu0 %v10314
    %10363 = vmatprep.subr.mxu0 0.0
    %10364 = vmatpush1.msra.mxu0 %v10315
    %10365 = vmatprep.subr.mxu0 0.0
    %10366 = vmatpush1.msra.mxu0 %v10316
    %10367 = vmatprep.subr.mxu0 0.0
    %10368 = vmatpush1.msra.mxu0 %v10317
    %10369 = vmatprep.subr.mxu0 0.0
    %10370 = vmatpush1.msra.mxu0 %v10318
    %10371 = vmatprep.subr.mxu0 0.0
    %10372 = vmatpush1.msra.mxu0 %v10319
    %10373 = vmatprep.subr.mxu0 0.0
    %10374 = vmatpush1.msra.mxu0 %v10320
    %10375 = vmatprep.subr.mxu0 0.0
    %10376 = vmatpush1.msra.mxu0 %v10321
    %10377 = vmatprep.subr.mxu0 0.0
    %10378 = vmatpush1.msra.mxu0 %v10322
    %10379 = vmatprep.subr.mxu0 0.0
    %10380 = vmatpush1.msra.mxu0 %v10323
    %10381 = vmatprep.subr.mxu0 0.0
    %10382 = vmatpush1.msra.mxu0 %v10324
    %10383 = vmatprep.subr.mxu0 0.0
    %10384 = vmatpush1.msra.mxu0 %v10325
    %10385 = vmatprep.subr.mxu0 0.0
    %10386 = vmatpush1.msra.mxu0 %v10326
    %10387 = vmatprep.subr.mxu0 0.0
    %10388 = vmatpush1.msra.mxu0 %v10327
    %10389 = vmatprep.subr.mxu0 0.0
    %10390 = vmatpush1.msra.mxu0 %v10328
    %10391 = vmatprep.subr.mxu0 0.0
    %10392 = vmatpush1.msra.mxu0 %v10329
    %10393 = vmatprep.subr.mxu0 0.0
    %10394 = vmatpush1.msra.mxu0 %v10330
    %10395 = vmatprep.subr.mxu0 0.0
    %10396 = vmatpush1.msra.mxu0 %v10331
    %10397 = vmatprep.subr.mxu0 0.0
    %10398 = vmatpush1.msra.mxu0 %v10332
    %10399 = vmatprep.subr.mxu0 0.0
    %10400 = vmatpush1.msra.mxu0 %v10333
    %10401 = vmatprep.subr.mxu0 0.0
    %10402 = vmatpush1.msra.mxu0 %v10334
    %10403 = vmatprep.subr.mxu0 0.0
    %10404 = vmatpush1.msra.mxu0 %v10335
    %10405 = vmatprep.subr.mxu0 0.0
    %10406 = vmatpush1.msra.mxu0 %v10336
    %10407 = vmatprep.subr.mxu0 0.0
    %10408 = vmatpush1.msra.mxu0 %v10337
    %10409 = vmatprep.mubr.f32.mxu0 %v10305
    %10410 = vmatmul.mubr.f32.gmra.mrb[0].mxu0 %v10304
    %v10411 = vpop.f32.mrb[0].mxu0
    %v10412 = vadd.f32 %v10343, %v10411
    %v10413 = vpop.f32.mrb[0].mxu0
    %10414 = vdwg.mxu0
    %vm10415 = vcmask 25600
    %v10416 = vsel %vm10415, %v10412, -inf
    %10417 = vmax.xlane.f32.xlu0 %v10416
    %v10418 = vpop.xlane.xlu0 %10417
    %v10419 = vsub.f32 %v10412, %v10418
    %v10420 = vmul.f32 %v10419, 1.442695
    %v10421 = vpow.pop %v10420
    %v10422 = vsel %vm10415, %v10421, 0.0
    %10423 = vadd.xlane.f32.xlu0 %v10422
    %v10424 = vpop.xlane.xlu0 %10423
    %v10425 = vlog2.pop %v10424
    %v10426 = vmul.f32 %v10425, 0.6931472
    %v10427 = vadd.f32 %v10418, %v10426
    %v10428 = vsub.f32 %v10412, %v10427
    %10429 = vst.msk [vmem:[#allocation20] sm:$0x3] %vm10415, %v10428
    // Predicated region
    $region90: #{tpu_custom_call.1} parent=1 // pred_check
      _
    $region91: #{tpu_custom_call.1} parent=1 // pred_check_branch
      %10431 = sbr.rel (0) target = $region93
    $region92: #{tpu_custom_call.1} parent=1 // pred_region
      %s10433 = ssub.s32 32, 32
      %10434 = vsyncadd [#allocation5], %s10433
      %s10436 = sshll.u32 [#allocation20], 4
      %s10437 = int_to_ptr.vmem [resolvable:$true] %s10436
      %10439 = dma.vmem_to_hbm [thread:$0]  %s10437, 32, %s12, [#allocation5]
    $region93: #{tpu_custom_call.1} parent=1 // pred_fallthru
      _
    // Predicated region
    $region94: #{tpu_custom_call.1} parent=1 // pred_check
      _
    $region95: #{tpu_custom_call.1} parent=1 // pred_check_branch
      %10441 = sbr.rel (0) target = $region97
    $region96: #{tpu_custom_call.1} parent=1 // pred_region
      %10442 = dma.done [#allocation5], 32
    $region97: #{tpu_custom_call.1} parent=1 // pred_fallthru
      _
    %10443 = vsyncpa [#allocation4], 1
    %10444 = vsyncpa [#allocation7], 1
    %10445 = vsyncpa [#allocation10], 1
    %10446 = vsyncpa [#allocation13], 1
    %10447 = vsyncpa [#allocation16], 1
    %10448 = vsyncpa [#allocation19], 1
    %10449 = vsyncpa [#allocation5], 1

</llo_original>
